<compile_context>
chip_gen: v7x
topology: tpu7x:2x2x1
jax: 0.10.0
libtpu: 0.0.40
codegen_flags: <defaults>
</compile_context>

<pallas_src>
import jax
import jax.numpy as jnp
from jax import lax
from jax.experimental import pallas as pl
from jax.experimental.pallas import tpu as pltpu


def _round_up(a, b):
    return (a + b - 1) // b * b


# ----------------------------- Pallas kernel ------------------------------- #
def _make_conv3d_kernel(KD, KH, KW, W, L_out):
    """Kernel for one (batch, output-depth) grid step.

    x_ref: (1, D, Cin, L_in)        bf16  full per-sample volume, each depth plane
                                          flattened over (H, W) and zero-padded to L_in.
    w_ref: (KD, KH, KW, Cout, Cin)  bf16
    b_ref: (Cout, 1)                f32
    o_ref: (1, 1, Cout, L_out)      f32   lane-dense output plane (garbage lanes are
                                          discarded on the host).
    """
    def kernel(x_ref, w_ref, b_ref, o_ref):
        do = pl.program_id(1)
        cout = o_ref.shape[2]
        acc = jnp.zeros((cout, L_out), dtype=jnp.float32)
        for kd in range(KD):
            # (Cin, L_in) plane at input depth do + kd (dynamic index on a leading dim).
            slab = x_ref[0, do + kd]
            for kh in range(KH):
                for kw in range(KW):
                    t = kh * W + kw                      # static in-plane tap shift
                    w_tap = w_ref[kd, kh, kw]            # (Cout, Cin)
                    acc = acc + jnp.dot(w_tap, slab[:, t:t + L_out],
                                        preferred_element_type=jnp.float32)
        o_ref[0, 0] = acc + b_ref[...]
    return kernel


# ------------------------------ Host wrapper -------------------------------- #
@jax.jit
def conv3dnet_forward(x_ncdhw, weight_oidhw, bias):
    """Forward pass matching PyTorch nn.Conv3d(3, 8, 5) (stride 1, no padding).

    x_ncdhw:       (N, Cin, D, H, W)
    weight_oidhw:  (Cout, Cin, KD, KH, KW)
    bias:          (Cout,)
    returns:       (N, Cout, Do, Ho, Wo) with Do = D-KD+1 etc.
    """
    N, Cin, D, H, W = x_ncdhw.shape
    Cout, Cin_w, KD, KH, KW = weight_oidhw.shape
    assert Cin == Cin_w
    Do, Ho, Wo = D - KD + 1, H - KH + 1, W - KW + 1

    HW = H * W
    t_max = (KH - 1) * W + (KW - 1)           # largest in-plane tap shift
    L_out = _round_up(HW, 128)                # lane-dense output plane width
    L_in = _round_up(L_out + t_max, 128)      # padded input plane width

    # x: NCDHW -> (N, D, Cin, H*W) (depth leading, channel on sublanes, plane on lanes),
    # cast to bf16 and zero-pad the lane axis.
    x_p = jnp.transpose(x_ncdhw, (0, 2, 1, 3, 4)).reshape(N, D, Cin, HW)
    x_p = jnp.pad(x_p.astype(jnp.bfloat16),
                  ((0, 0), (0, 0), (0, 0), (0, L_in - HW)))

    # weights: OIDHW -> (KD, KH, KW, Cout, Cin) bf16; bias -> (Cout, 1) f32.
    w_p = jnp.transpose(weight_oidhw, (2, 3, 4, 0, 1)).astype(jnp.bfloat16)
    b_p = bias.reshape(Cout, 1).astype(jnp.float32)

    kernel = _make_conv3d_kernel(KD, KH, KW, W, L_out)

    out = pl.pallas_call(
        kernel,
        out_shape=jax.ShapeDtypeStruct((N, Do, Cout, L_out), jnp.float32),
        grid=(N, Do),
        in_specs=[
            # Per-sample volume; index_map ignores the depth grid axis, so the block
            # is revisited (no re-DMA) across all Do steps of a given sample.
            pl.BlockSpec((1, D, Cin, L_in), lambda n, d: (n, 0, 0, 0)),
            pl.BlockSpec((KD, KH, KW, Cout, Cin), lambda n, d: (0, 0, 0, 0, 0)),
            pl.BlockSpec((Cout, 1), lambda n, d: (0, 0)),
        ],
        out_specs=pl.BlockSpec((1, 1, Cout, L_out), lambda n, d: (n, d, 0, 0)),
        compiler_params=pltpu.CompilerParams(
            dimension_semantics=("parallel", "parallel"),
            vmem_limit_bytes=64 * 1024 * 1024,
        ),
        cost_estimate=pl.CostEstimate(
            flops=2 * N * Do * Cout * L_out * KD * KH * KW * Cin,
            transcendentals=0,
            bytes_accessed=(x_p.size * 2 + w_p.size * 2 + b_p.size * 4
                            + N * Do * Cout * L_out * 4),
        ),
    )(x_p, w_p, b_p)

    # Strip lane padding and invalid (row/column-wrapped) positions; back to NCDHW.
    out = out[:, :, :, :HW].reshape(N, Do, Cout, H, W)[:, :, :, :Ho, :Wo]
    return jnp.transpose(out, (0, 2, 1, 3, 4))        # (N, Cout, Do, Ho, Wo)


# --------------------------------- Main ------------------------------------- #
if __name__ == "__main__":
    key = jax.random.PRNGKey(0)
    k_x, k_w, k_b = jax.random.split(key, 3)

    # Shapes consistent with Conv3d(3, 8, 5): N=2, Cin=3, D=H=W=8 -> 4x4x4 output.
    N, Cin, D, H, W = 2, 3, 8, 8, 8
    Cout, K = 8, 5

    x = jax.random.normal(k_x, (N, Cin, D, H, W), dtype=jnp.float32)

    # PyTorch-style init: U(-k, k), k = 1/sqrt(Cin*K^3)
    fan_in = Cin * K * K * K
    bound = 1.0 / (fan_in ** 0.5)
    weight = jax.random.uniform(k_w, (Cout, Cin, K, K, K),
                                minval=-bound, maxval=bound, dtype=jnp.float32)
    bias = jax.random.uniform(k_b, (Cout,),
                              minval=-bound, maxval=bound, dtype=jnp.float32)

    out = jax.block_until_ready(conv3dnet_forward(x, weight, bias))
    assert out.shape == (N, Cout, D - K + 1, H - K + 1, W - K + 1)

    # Check 1 (tight): reference with the same operand precision (bf16 inputs,
    # f32 accumulation) -> only accumulation-order differences.
    xb = x.astype(jnp.bfloat16).astype(jnp.float32)
    wb = weight.astype(jnp.bfloat16).astype(jnp.float32)
    ref_bf16 = lax.conv_general_dilated(
        xb, wb, window_strides=(1, 1, 1), padding="VALID",
        dimension_numbers=("NCDHW", "OIDHW", "NCDHW"),
        precision=lax.Precision.HIGHEST,
    ) + bias.reshape(1, Cout, 1, 1, 1)
    ref_bf16 = jax.block_until_ready(ref_bf16)
    assert jnp.allclose(out, ref_bf16, atol=1e-3, rtol=1e-3), \
        float(jnp.max(jnp.abs(out - ref_bf16)))

    # Check 2 (loose): full-f32 conv (torch.nn.Conv3d semantics); kernel uses bf16
    # operands, so tolerance is relaxed per the perf review.
    ref_f32 = lax.conv_general_dilated(
        x, weight, window_strides=(1, 1, 1), padding="VALID",
        dimension_numbers=("NCDHW", "OIDHW", "NCDHW"),
        precision=lax.Precision.HIGHEST,
    ) + bias.reshape(1, Cout, 1, 1, 1)
    ref_f32 = jax.block_until_ready(ref_f32)
    assert jnp.allclose(out, ref_f32, atol=2e-2, rtol=2e-2), \
        float(jnp.max(jnp.abs(out - ref_f32)))

    print("KERNEL_OK")
</pallas_src>

<mosaic_0001>
module attributes {stable_mosaic.version = 11 : i64} {
  func.func @kernel(%arg0: i32, %arg1: i32, %arg2: memref<1x8x3x256xbf16, #tpu.memory_space<vmem>>, %arg3: memref<5x5x5x8x3xbf16, #tpu.memory_space<vmem>>, %arg4: memref<8x1xf32, #tpu.memory_space<vmem>>, %arg5: memref<1x1x8x128xf32, #tpu.memory_space<vmem>>) attributes {dimension_semantics = [#tpu.dimension_semantics<parallel>, #tpu.dimension_semantics<parallel>], iteration_bounds = array<i64: 2, 4>, scalar_prefetch = 0 : i64, scratch_operands = 0 : i64, tpu.core_type = #tpu.core_type<tc>, window_params = [{transform_indices = @transform_0, window_bounds = array<i64: 1, 8, 3, 256>}, {pipeline_mode = #tpu.pipeline_mode<synchronous>, transform_indices = @transform_1, window_bounds = array<i64: 5, 5, 5, 8, 3>}, {pipeline_mode = #tpu.pipeline_mode<synchronous>, transform_indices = @transform_2, window_bounds = array<i64: 8, 1>}, {transform_indices = @transform_3, window_bounds = array<i64: 1, 1, 8, 128>}]} {
    %cst = arith.constant 0.000000e+00 : f32
    %0 = vector.broadcast %cst : f32 to vector<8x128xf32>
    %c0_i32 = arith.constant 0 : i32
    %1 = arith.addi %arg1, %c0_i32 : i32
    %c0 = arith.constant 0 : index
    %2 = arith.index_cast %1 : i32 to index
    %c0_0 = arith.constant 0 : index
    %c0_1 = arith.constant 0 : index
    %3 = vector.load %arg2[%c0, %2, %c0_0, %c0_1] : memref<1x8x3x256xbf16, #tpu.memory_space<vmem>>, vector<1x1x3x256xbf16>
    %4 = vector.shape_cast %3 : vector<1x1x3x256xbf16> to vector<3x256xbf16>
    %c0_2 = arith.constant 0 : index
    %c0_3 = arith.constant 0 : index
    %c0_4 = arith.constant 0 : index
    %c0_5 = arith.constant 0 : index
    %c0_6 = arith.constant 0 : index
    %5 = vector.load %arg3[%c0_2, %c0_3, %c0_4, %c0_5, %c0_6] : memref<5x5x5x8x3xbf16, #tpu.memory_space<vmem>>, vector<1x1x1x8x3xbf16>
    %6 = vector.shape_cast %5 : vector<1x1x1x8x3xbf16> to vector<8x3xbf16>
    %7 = vector.extract_strided_slice %4 {offsets = [0, 0], sizes = [3, 128], strides = [1, 1]} : vector<3x256xbf16> to vector<3x128xbf16>
    %cst_7 = arith.constant dense<0.000000e+00> : vector<8x128xf32>
    %8 = tpu.matmul %6, %7, %cst_7 {dimension_numbers = #tpu.dot_dimension_numbers<[1], [0], [0], [1], [0, 0, 1, 1], [], []>} : vector<8x3xbf16>, vector<3x128xbf16>, vector<8x128xf32> -> vector<8x128xf32>
    %9 = arith.addf %0, %8 : vector<8x128xf32>
    %c0_8 = arith.constant 0 : index
    %c0_9 = arith.constant 0 : index
    %c1 = arith.constant 1 : index
    %c0_10 = arith.constant 0 : index
    %c0_11 = arith.constant 0 : index
    %10 = vector.load %arg3[%c0_8, %c0_9, %c1, %c0_10, %c0_11] : memref<5x5x5x8x3xbf16, #tpu.memory_space<vmem>>, vector<1x1x1x8x3xbf16>
    %11 = vector.shape_cast %10 : vector<1x1x1x8x3xbf16> to vector<8x3xbf16>
    %12 = vector.extract_strided_slice %4 {offsets = [0, 1], sizes = [3, 128], strides = [1, 1]} : vector<3x256xbf16> to vector<3x128xbf16>
    %cst_12 = arith.constant dense<0.000000e+00> : vector<8x128xf32>
    %13 = tpu.matmul %11, %12, %cst_12 {dimension_numbers = #tpu.dot_dimension_numbers<[1], [0], [0], [1], [0, 0, 1, 1], [], []>} : vector<8x3xbf16>, vector<3x128xbf16>, vector<8x128xf32> -> vector<8x128xf32>
    %14 = arith.addf %9, %13 : vector<8x128xf32>
    %c0_13 = arith.constant 0 : index
    %c0_14 = arith.constant 0 : index
    %c2 = arith.constant 2 : index
    %c0_15 = arith.constant 0 : index
    %c0_16 = arith.constant 0 : index
    %15 = vector.load %arg3[%c0_13, %c0_14, %c2, %c0_15, %c0_16] : memref<5x5x5x8x3xbf16, #tpu.memory_space<vmem>>, vector<1x1x1x8x3xbf16>
    %16 = vector.shape_cast %15 : vector<1x1x1x8x3xbf16> to vector<8x3xbf16>
    %17 = vector.extract_strided_slice %4 {offsets = [0, 2], sizes = [3, 128], strides = [1, 1]} : vector<3x256xbf16> to vector<3x128xbf16>
    %cst_17 = arith.constant dense<0.000000e+00> : vector<8x128xf32>
    %18 = tpu.matmul %16, %17, %cst_17 {dimension_numbers = #tpu.dot_dimension_numbers<[1], [0], [0], [1], [0, 0, 1, 1], [], []>} : vector<8x3xbf16>, vector<3x128xbf16>, vector<8x128xf32> -> vector<8x128xf32>
    %19 = arith.addf %14, %18 : vector<8x128xf32>
    %c0_18 = arith.constant 0 : index
    %c0_19 = arith.constant 0 : index
    %c3 = arith.constant 3 : index
    %c0_20 = arith.constant 0 : index
    %c0_21 = arith.constant 0 : index
    %20 = vector.load %arg3[%c0_18, %c0_19, %c3, %c0_20, %c0_21] : memref<5x5x5x8x3xbf16, #tpu.memory_space<vmem>>, vector<1x1x1x8x3xbf16>
    %21 = vector.shape_cast %20 : vector<1x1x1x8x3xbf16> to vector<8x3xbf16>
    %22 = vector.extract_strided_slice %4 {offsets = [0, 3], sizes = [3, 128], strides = [1, 1]} : vector<3x256xbf16> to vector<3x128xbf16>
    %cst_22 = arith.constant dense<0.000000e+00> : vector<8x128xf32>
    %23 = tpu.matmul %21, %22, %cst_22 {dimension_numbers = #tpu.dot_dimension_numbers<[1], [0], [0], [1], [0, 0, 1, 1], [], []>} : vector<8x3xbf16>, vector<3x128xbf16>, vector<8x128xf32> -> vector<8x128xf32>
    %24 = arith.addf %19, %23 : vector<8x128xf32>
    %c0_23 = arith.constant 0 : index
    %c0_24 = arith.constant 0 : index
    %c4 = arith.constant 4 : index
    %c0_25 = arith.constant 0 : index
    %c0_26 = arith.constant 0 : index
    %25 = vector.load %arg3[%c0_23, %c0_24, %c4, %c0_25, %c0_26] : memref<5x5x5x8x3xbf16, #tpu.memory_space<vmem>>, vector<1x1x1x8x3xbf16>
    %26 = vector.shape_cast %25 : vector<1x1x1x8x3xbf16> to vector<8x3xbf16>
    %27 = vector.extract_strided_slice %4 {offsets = [0, 4], sizes = [3, 128], strides = [1, 1]} : vector<3x256xbf16> to vector<3x128xbf16>
    %cst_27 = arith.constant dense<0.000000e+00> : vector<8x128xf32>
    %28 = tpu.matmul %26, %27, %cst_27 {dimension_numbers = #tpu.dot_dimension_numbers<[1], [0], [0], [1], [0, 0, 1, 1], [], []>} : vector<8x3xbf16>, vector<3x128xbf16>, vector<8x128xf32> -> vector<8x128xf32>
    %29 = arith.addf %24, %28 : vector<8x128xf32>
    %c0_28 = arith.constant 0 : index
    %c1_29 = arith.constant 1 : index
    %c0_30 = arith.constant 0 : index
    %c0_31 = arith.constant 0 : index
    %c0_32 = arith.constant 0 : index
    %30 = vector.load %arg3[%c0_28, %c1_29, %c0_30, %c0_31, %c0_32] : memref<5x5x5x8x3xbf16, #tpu.memory_space<vmem>>, vector<1x1x1x8x3xbf16>
    %31 = vector.shape_cast %30 : vector<1x1x1x8x3xbf16> to vector<8x3xbf16>
    %32 = vector.extract_strided_slice %4 {offsets = [0, 8], sizes = [3, 128], strides = [1, 1]} : vector<3x256xbf16> to vector<3x128xbf16>
    %cst_33 = arith.constant dense<0.000000e+00> : vector<8x128xf32>
    %33 = tpu.matmul %31, %32, %cst_33 {dimension_numbers = #tpu.dot_dimension_numbers<[1], [0], [0], [1], [0, 0, 1, 1], [], []>} : vector<8x3xbf16>, vector<3x128xbf16>, vector<8x128xf32> -> vector<8x128xf32>
    %34 = arith.addf %29, %33 : vector<8x128xf32>
    %c0_34 = arith.constant 0 : index
    %c1_35 = arith.constant 1 : index
    %c1_36 = arith.constant 1 : index
    %c0_37 = arith.constant 0 : index
    %c0_38 = arith.constant 0 : index
    %35 = vector.load %arg3[%c0_34, %c1_35, %c1_36, %c0_37, %c0_38] : memref<5x5x5x8x3xbf16, #tpu.memory_space<vmem>>, vector<1x1x1x8x3xbf16>
    %36 = vector.shape_cast %35 : vector<1x1x1x8x3xbf16> to vector<8x3xbf16>
    %37 = vector.extract_strided_slice %4 {offsets = [0, 9], sizes = [3, 128], strides = [1, 1]} : vector<3x256xbf16> to vector<3x128xbf16>
    %cst_39 = arith.constant dense<0.000000e+00> : vector<8x128xf32>
    %38 = tpu.matmul %36, %37, %cst_39 {dimension_numbers = #tpu.dot_dimension_numbers<[1], [0], [0], [1], [0, 0, 1, 1], [], []>} : vector<8x3xbf16>, vector<3x128xbf16>, vector<8x128xf32> -> vector<8x128xf32>
    %39 = arith.addf %34, %38 : vector<8x128xf32>
    %c0_40 = arith.constant 0 : index
    %c1_41 = arith.constant 1 : index
    %c2_42 = arith.constant 2 : index
    %c0_43 = arith.constant 0 : index
    %c0_44 = arith.constant 0 : index
    %40 = vector.load %arg3[%c0_40, %c1_41, %c2_42, %c0_43, %c0_44] : memref<5x5x5x8x3xbf16, #tpu.memory_space<vmem>>, vector<1x1x1x8x3xbf16>
    %41 = vector.shape_cast %40 : vector<1x1x1x8x3xbf16> to vector<8x3xbf16>
    %42 = vector.extract_strided_slice %4 {offsets = [0, 10], sizes = [3, 128], strides = [1, 1]} : vector<3x256xbf16> to vector<3x128xbf16>
    %cst_45 = arith.constant dense<0.000000e+00> : vector<8x128xf32>
    %43 = tpu.matmul %41, %42, %cst_45 {dimension_numbers = #tpu.dot_dimension_numbers<[1], [0], [0], [1], [0, 0, 1, 1], [], []>} : vector<8x3xbf16>, vector<3x128xbf16>, vector<8x128xf32> -> vector<8x128xf32>
    %44 = arith.addf %39, %43 : vector<8x128xf32>
    %c0_46 = arith.constant 0 : index
    %c1_47 = arith.constant 1 : index
    %c3_48 = arith.constant 3 : index
    %c0_49 = arith.constant 0 : index
    %c0_50 = arith.constant 0 : index
    %45 = vector.load %arg3[%c0_46, %c1_47, %c3_48, %c0_49, %c0_50] : memref<5x5x5x8x3xbf16, #tpu.memory_space<vmem>>, vector<1x1x1x8x3xbf16>
    %46 = vector.shape_cast %45 : vector<1x1x1x8x3xbf16> to vector<8x3xbf16>
    %47 = vector.extract_strided_slice %4 {offsets = [0, 11], sizes = [3, 128], strides = [1, 1]} : vector<3x256xbf16> to vector<3x128xbf16>
    %cst_51 = arith.constant dense<0.000000e+00> : vector<8x128xf32>
    %48 = tpu.matmul %46, %47, %cst_51 {dimension_numbers = #tpu.dot_dimension_numbers<[1], [0], [0], [1], [0, 0, 1, 1], [], []>} : vector<8x3xbf16>, vector<3x128xbf16>, vector<8x128xf32> -> vector<8x128xf32>
    %49 = arith.addf %44, %48 : vector<8x128xf32>
    %c0_52 = arith.constant 0 : index
    %c1_53 = arith.constant 1 : index
    %c4_54 = arith.constant 4 : index
    %c0_55 = arith.constant 0 : index
    %c0_56 = arith.constant 0 : index
    %50 = vector.load %arg3[%c0_52, %c1_53, %c4_54, %c0_55, %c0_56] : memref<5x5x5x8x3xbf16, #tpu.memory_space<vmem>>, vector<1x1x1x8x3xbf16>
    %51 = vector.shape_cast %50 : vector<1x1x1x8x3xbf16> to vector<8x3xbf16>
    %52 = vector.extract_strided_slice %4 {offsets = [0, 12], sizes = [3, 128], strides = [1, 1]} : vector<3x256xbf16> to vector<3x128xbf16>
    %cst_57 = arith.constant dense<0.000000e+00> : vector<8x128xf32>
    %53 = tpu.matmul %51, %52, %cst_57 {dimension_numbers = #tpu.dot_dimension_numbers<[1], [0], [0], [1], [0, 0, 1, 1], [], []>} : vector<8x3xbf16>, vector<3x128xbf16>, vector<8x128xf32> -> vector<8x128xf32>
    %54 = arith.addf %49, %53 : vector<8x128xf32>
    %c0_58 = arith.constant 0 : index
    %c2_59 = arith.constant 2 : index
    %c0_60 = arith.constant 0 : index
    %c0_61 = arith.constant 0 : index
    %c0_62 = arith.constant 0 : index
    %55 = vector.load %arg3[%c0_58, %c2_59, %c0_60, %c0_61, %c0_62] : memref<5x5x5x8x3xbf16, #tpu.memory_space<vmem>>, vector<1x1x1x8x3xbf16>
    %56 = vector.shape_cast %55 : vector<1x1x1x8x3xbf16> to vector<8x3xbf16>
    %57 = vector.extract_strided_slice %4 {offsets = [0, 16], sizes = [3, 128], strides = [1, 1]} : vector<3x256xbf16> to vector<3x128xbf16>
    %cst_63 = arith.constant dense<0.000000e+00> : vector<8x128xf32>
    %58 = tpu.matmul %56, %57, %cst_63 {dimension_numbers = #tpu.dot_dimension_numbers<[1], [0], [0], [1], [0, 0, 1, 1], [], []>} : vector<8x3xbf16>, vector<3x128xbf16>, vector<8x128xf32> -> vector<8x128xf32>
    %59 = arith.addf %54, %58 : vector<8x128xf32>
    %c0_64 = arith.constant 0 : index
    %c2_65 = arith.constant 2 : index
    %c1_66 = arith.constant 1 : index
    %c0_67 = arith.constant 0 : index
    %c0_68 = arith.constant 0 : index
    %60 = vector.load %arg3[%c0_64, %c2_65, %c1_66, %c0_67, %c0_68] : memref<5x5x5x8x3xbf16, #tpu.memory_space<vmem>>, vector<1x1x1x8x3xbf16>
    %61 = vector.shape_cast %60 : vector<1x1x1x8x3xbf16> to vector<8x3xbf16>
    %62 = vector.extract_strided_slice %4 {offsets = [0, 17], sizes = [3, 128], strides = [1, 1]} : vector<3x256xbf16> to vector<3x128xbf16>
    %cst_69 = arith.constant dense<0.000000e+00> : vector<8x128xf32>
    %63 = tpu.matmul %61, %62, %cst_69 {dimension_numbers = #tpu.dot_dimension_numbers<[1], [0], [0], [1], [0, 0, 1, 1], [], []>} : vector<8x3xbf16>, vector<3x128xbf16>, vector<8x128xf32> -> vector<8x128xf32>
    %64 = arith.addf %59, %63 : vector<8x128xf32>
    %c0_70 = arith.constant 0 : index
    %c2_71 = arith.constant 2 : index
    %c2_72 = arith.constant 2 : index
    %c0_73 = arith.constant 0 : index
    %c0_74 = arith.constant 0 : index
    %65 = vector.load %arg3[%c0_70, %c2_71, %c2_72, %c0_73, %c0_74] : memref<5x5x5x8x3xbf16, #tpu.memory_space<vmem>>, vector<1x1x1x8x3xbf16>
    %66 = vector.shape_cast %65 : vector<1x1x1x8x3xbf16> to vector<8x3xbf16>
    %67 = vector.extract_strided_slice %4 {offsets = [0, 18], sizes = [3, 128], strides = [1, 1]} : vector<3x256xbf16> to vector<3x128xbf16>
    %cst_75 = arith.constant dense<0.000000e+00> : vector<8x128xf32>
    %68 = tpu.matmul %66, %67, %cst_75 {dimension_numbers = #tpu.dot_dimension_numbers<[1], [0], [0], [1], [0, 0, 1, 1], [], []>} : vector<8x3xbf16>, vector<3x128xbf16>, vector<8x128xf32> -> vector<8x128xf32>
    %69 = arith.addf %64, %68 : vector<8x128xf32>
    %c0_76 = arith.constant 0 : index
    %c2_77 = arith.constant 2 : index
    %c3_78 = arith.constant 3 : index
    %c0_79 = arith.constant 0 : index
    %c0_80 = arith.constant 0 : index
    %70 = vector.load %arg3[%c0_76, %c2_77, %c3_78, %c0_79, %c0_80] : memref<5x5x5x8x3xbf16, #tpu.memory_space<vmem>>, vector<1x1x1x8x3xbf16>
    %71 = vector.shape_cast %70 : vector<1x1x1x8x3xbf16> to vector<8x3xbf16>
    %72 = vector.extract_strided_slice %4 {offsets = [0, 19], sizes = [3, 128], strides = [1, 1]} : vector<3x256xbf16> to vector<3x128xbf16>
    %cst_81 = arith.constant dense<0.000000e+00> : vector<8x128xf32>
    %73 = tpu.matmul %71, %72, %cst_81 {dimension_numbers = #tpu.dot_dimension_numbers<[1], [0], [0], [1], [0, 0, 1, 1], [], []>} : vector<8x3xbf16>, vector<3x128xbf16>, vector<8x128xf32> -> vector<8x128xf32>
    %74 = arith.addf %69, %73 : vector<8x128xf32>
    %c0_82 = arith.constant 0 : index
    %c2_83 = arith.constant 2 : index
    %c4_84 = arith.constant 4 : index
    %c0_85 = arith.constant 0 : index
    %c0_86 = arith.constant 0 : index
    %75 = vector.load %arg3[%c0_82, %c2_83, %c4_84, %c0_85, %c0_86] : memref<5x5x5x8x3xbf16, #tpu.memory_space<vmem>>, vector<1x1x1x8x3xbf16>
    %76 = vector.shape_cast %75 : vector<1x1x1x8x3xbf16> to vector<8x3xbf16>
    %77 = vector.extract_strided_slice %4 {offsets = [0, 20], sizes = [3, 128], strides = [1, 1]} : vector<3x256xbf16> to vector<3x128xbf16>
    %cst_87 = arith.constant dense<0.000000e+00> : vector<8x128xf32>
    %78 = tpu.matmul %76, %77, %cst_87 {dimension_numbers = #tpu.dot_dimension_numbers<[1], [0], [0], [1], [0, 0, 1, 1], [], []>} : vector<8x3xbf16>, vector<3x128xbf16>, vector<8x128xf32> -> vector<8x128xf32>
    %79 = arith.addf %74, %78 : vector<8x128xf32>
    %c0_88 = arith.constant 0 : index
    %c3_89 = arith.constant 3 : index
    %c0_90 = arith.constant 0 : index
    %c0_91 = arith.constant 0 : index
    %c0_92 = arith.constant 0 : index
    %80 = vector.load %arg3[%c0_88, %c3_89, %c0_90, %c0_91, %c0_92] : memref<5x5x5x8x3xbf16, #tpu.memory_space<vmem>>, vector<1x1x1x8x3xbf16>
    %81 = vector.shape_cast %80 : vector<1x1x1x8x3xbf16> to vector<8x3xbf16>
    %82 = vector.extract_strided_slice %4 {offsets = [0, 24], sizes = [3, 128], strides = [1, 1]} : vector<3x256xbf16> to vector<3x128xbf16>
    %cst_93 = arith.constant dense<0.000000e+00> : vector<8x128xf32>
    %83 = tpu.matmul %81, %82, %cst_93 {dimension_numbers = #tpu.dot_dimension_numbers<[1], [0], [0], [1], [0, 0, 1, 1], [], []>} : vector<8x3xbf16>, vector<3x128xbf16>, vector<8x128xf32> -> vector<8x128xf32>
    %84 = arith.addf %79, %83 : vector<8x128xf32>
    %c0_94 = arith.constant 0 : index
    %c3_95 = arith.constant 3 : index
    %c1_96 = arith.constant 1 : index
    %c0_97 = arith.constant 0 : index
    %c0_98 = arith.constant 0 : index
    %85 = vector.load %arg3[%c0_94, %c3_95, %c1_96, %c0_97, %c0_98] : memref<5x5x5x8x3xbf16, #tpu.memory_space<vmem>>, vector<1x1x1x8x3xbf16>
    %86 = vector.shape_cast %85 : vector<1x1x1x8x3xbf16> to vector<8x3xbf16>
    %87 = vector.extract_strided_slice %4 {offsets = [0, 25], sizes = [3, 128], strides = [1, 1]} : vector<3x256xbf16> to vector<3x128xbf16>
    %cst_99 = arith.constant dense<0.000000e+00> : vector<8x128xf32>
    %88 = tpu.matmul %86, %87, %cst_99 {dimension_numbers = #tpu.dot_dimension_numbers<[1], [0], [0], [1], [0, 0, 1, 1], [], []>} : vector<8x3xbf16>, vector<3x128xbf16>, vector<8x128xf32> -> vector<8x128xf32>
    %89 = arith.addf %84, %88 : vector<8x128xf32>
    %c0_100 = arith.constant 0 : index
    %c3_101 = arith.constant 3 : index
    %c2_102 = arith.constant 2 : index
    %c0_103 = arith.constant 0 : index
    %c0_104 = arith.constant 0 : index
    %90 = vector.load %arg3[%c0_100, %c3_101, %c2_102, %c0_103, %c0_104] : memref<5x5x5x8x3xbf16, #tpu.memory_space<vmem>>, vector<1x1x1x8x3xbf16>
    %91 = vector.shape_cast %90 : vector<1x1x1x8x3xbf16> to vector<8x3xbf16>
    %92 = vector.extract_strided_slice %4 {offsets = [0, 26], sizes = [3, 128], strides = [1, 1]} : vector<3x256xbf16> to vector<3x128xbf16>
    %cst_105 = arith.constant dense<0.000000e+00> : vector<8x128xf32>
    %93 = tpu.matmul %91, %92, %cst_105 {dimension_numbers = #tpu.dot_dimension_numbers<[1], [0], [0], [1], [0, 0, 1, 1], [], []>} : vector<8x3xbf16>, vector<3x128xbf16>, vector<8x128xf32> -> vector<8x128xf32>
    %94 = arith.addf %89, %93 : vector<8x128xf32>
    %c0_106 = arith.constant 0 : index
    %c3_107 = arith.constant 3 : index
    %c3_108 = arith.constant 3 : index
    %c0_109 = arith.constant 0 : index
    %c0_110 = arith.constant 0 : index
    %95 = vector.load %arg3[%c0_106, %c3_107, %c3_108, %c0_109, %c0_110] : memref<5x5x5x8x3xbf16, #tpu.memory_space<vmem>>, vector<1x1x1x8x3xbf16>
    %96 = vector.shape_cast %95 : vector<1x1x1x8x3xbf16> to vector<8x3xbf16>
    %97 = vector.extract_strided_slice %4 {offsets = [0, 27], sizes = [3, 128], strides = [1, 1]} : vector<3x256xbf16> to vector<3x128xbf16>
    %cst_111 = arith.constant dense<0.000000e+00> : vector<8x128xf32>
    %98 = tpu.matmul %96, %97, %cst_111 {dimension_numbers = #tpu.dot_dimension_numbers<[1], [0], [0], [1], [0, 0, 1, 1], [], []>} : vector<8x3xbf16>, vector<3x128xbf16>, vector<8x128xf32> -> vector<8x128xf32>
    %99 = arith.addf %94, %98 : vector<8x128xf32>
    %c0_112 = arith.constant 0 : index
    %c3_113 = arith.constant 3 : index
    %c4_114 = arith.constant 4 : index
    %c0_115 = arith.constant 0 : index
    %c0_116 = arith.constant 0 : index
    %100 = vector.load %arg3[%c0_112, %c3_113, %c4_114, %c0_115, %c0_116] : memref<5x5x5x8x3xbf16, #tpu.memory_space<vmem>>, vector<1x1x1x8x3xbf16>
    %101 = vector.shape_cast %100 : vector<1x1x1x8x3xbf16> to vector<8x3xbf16>
    %102 = vector.extract_strided_slice %4 {offsets = [0, 28], sizes = [3, 128], strides = [1, 1]} : vector<3x256xbf16> to vector<3x128xbf16>
    %cst_117 = arith.constant dense<0.000000e+00> : vector<8x128xf32>
    %103 = tpu.matmul %101, %102, %cst_117 {dimension_numbers = #tpu.dot_dimension_numbers<[1], [0], [0], [1], [0, 0, 1, 1], [], []>} : vector<8x3xbf16>, vector<3x128xbf16>, vector<8x128xf32> -> vector<8x128xf32>
    %104 = arith.addf %99, %103 : vector<8x128xf32>
    %c0_118 = arith.constant 0 : index
    %c4_119 = arith.constant 4 : index
    %c0_120 = arith.constant 0 : index
    %c0_121 = arith.constant 0 : index
    %c0_122 = arith.constant 0 : index
    %105 = vector.load %arg3[%c0_118, %c4_119, %c0_120, %c0_121, %c0_122] : memref<5x5x5x8x3xbf16, #tpu.memory_space<vmem>>, vector<1x1x1x8x3xbf16>
    %106 = vector.shape_cast %105 : vector<1x1x1x8x3xbf16> to vector<8x3xbf16>
    %107 = vector.extract_strided_slice %4 {offsets = [0, 32], sizes = [3, 128], strides = [1, 1]} : vector<3x256xbf16> to vector<3x128xbf16>
    %cst_123 = arith.constant dense<0.000000e+00> : vector<8x128xf32>
    %108 = tpu.matmul %106, %107, %cst_123 {dimension_numbers = #tpu.dot_dimension_numbers<[1], [0], [0], [1], [0, 0, 1, 1], [], []>} : vector<8x3xbf16>, vector<3x128xbf16>, vector<8x128xf32> -> vector<8x128xf32>
    %109 = arith.addf %104, %108 : vector<8x128xf32>
    %c0_124 = arith.constant 0 : index
    %c4_125 = arith.constant 4 : index
    %c1_126 = arith.constant 1 : index
    %c0_127 = arith.constant 0 : index
    %c0_128 = arith.constant 0 : index
    %110 = vector.load %arg3[%c0_124, %c4_125, %c1_126, %c0_127, %c0_128] : memref<5x5x5x8x3xbf16, #tpu.memory_space<vmem>>, vector<1x1x1x8x3xbf16>
    %111 = vector.shape_cast %110 : vector<1x1x1x8x3xbf16> to vector<8x3xbf16>
    %112 = vector.extract_strided_slice %4 {offsets = [0, 33], sizes = [3, 128], strides = [1, 1]} : vector<3x256xbf16> to vector<3x128xbf16>
    %cst_129 = arith.constant dense<0.000000e+00> : vector<8x128xf32>
    %113 = tpu.matmul %111, %112, %cst_129 {dimension_numbers = #tpu.dot_dimension_numbers<[1], [0], [0], [1], [0, 0, 1, 1], [], []>} : vector<8x3xbf16>, vector<3x128xbf16>, vector<8x128xf32> -> vector<8x128xf32>
    %114 = arith.addf %109, %113 : vector<8x128xf32>
    %c0_130 = arith.constant 0 : index
    %c4_131 = arith.constant 4 : index
    %c2_132 = arith.constant 2 : index
    %c0_133 = arith.constant 0 : index
    %c0_134 = arith.constant 0 : index
    %115 = vector.load %arg3[%c0_130, %c4_131, %c2_132, %c0_133, %c0_134] : memref<5x5x5x8x3xbf16, #tpu.memory_space<vmem>>, vector<1x1x1x8x3xbf16>
    %116 = vector.shape_cast %115 : vector<1x1x1x8x3xbf16> to vector<8x3xbf16>
    %117 = vector.extract_strided_slice %4 {offsets = [0, 34], sizes = [3, 128], strides = [1, 1]} : vector<3x256xbf16> to vector<3x128xbf16>
    %cst_135 = arith.constant dense<0.000000e+00> : vector<8x128xf32>
    %118 = tpu.matmul %116, %117, %cst_135 {dimension_numbers = #tpu.dot_dimension_numbers<[1], [0], [0], [1], [0, 0, 1, 1], [], []>} : vector<8x3xbf16>, vector<3x128xbf16>, vector<8x128xf32> -> vector<8x128xf32>
    %119 = arith.addf %114, %118 : vector<8x128xf32>
    %c0_136 = arith.constant 0 : index
    %c4_137 = arith.constant 4 : index
    %c3_138 = arith.constant 3 : index
    %c0_139 = arith.constant 0 : index
    %c0_140 = arith.constant 0 : index
    %120 = vector.load %arg3[%c0_136, %c4_137, %c3_138, %c0_139, %c0_140] : memref<5x5x5x8x3xbf16, #tpu.memory_space<vmem>>, vector<1x1x1x8x3xbf16>
    %121 = vector.shape_cast %120 : vector<1x1x1x8x3xbf16> to vector<8x3xbf16>
    %122 = vector.extract_strided_slice %4 {offsets = [0, 35], sizes = [3, 128], strides = [1, 1]} : vector<3x256xbf16> to vector<3x128xbf16>
    %cst_141 = arith.constant dense<0.000000e+00> : vector<8x128xf32>
    %123 = tpu.matmul %121, %122, %cst_141 {dimension_numbers = #tpu.dot_dimension_numbers<[1], [0], [0], [1], [0, 0, 1, 1], [], []>} : vector<8x3xbf16>, vector<3x128xbf16>, vector<8x128xf32> -> vector<8x128xf32>
    %124 = arith.addf %119, %123 : vector<8x128xf32>
    %c0_142 = arith.constant 0 : index
    %c4_143 = arith.constant 4 : index
    %c4_144 = arith.constant 4 : index
    %c0_145 = arith.constant 0 : index
    %c0_146 = arith.constant 0 : index
    %125 = vector.load %arg3[%c0_142, %c4_143, %c4_144, %c0_145, %c0_146] : memref<5x5x5x8x3xbf16, #tpu.memory_space<vmem>>, vector<1x1x1x8x3xbf16>
    %126 = vector.shape_cast %125 : vector<1x1x1x8x3xbf16> to vector<8x3xbf16>
    %127 = vector.extract_strided_slice %4 {offsets = [0, 36], sizes = [3, 128], strides = [1, 1]} : vector<3x256xbf16> to vector<3x128xbf16>
    %cst_147 = arith.constant dense<0.000000e+00> : vector<8x128xf32>
    %128 = tpu.matmul %126, %127, %cst_147 {dimension_numbers = #tpu.dot_dimension_numbers<[1], [0], [0], [1], [0, 0, 1, 1], [], []>} : vector<8x3xbf16>, vector<3x128xbf16>, vector<8x128xf32> -> vector<8x128xf32>
    %129 = arith.addf %124, %128 : vector<8x128xf32>
    %c1_i32 = arith.constant 1 : i32
    %130 = arith.addi %arg1, %c1_i32 : i32
    %c0_148 = arith.constant 0 : index
    %131 = arith.index_cast %130 : i32 to index
    %c0_149 = arith.constant 0 : index
    %c0_150 = arith.constant 0 : index
    %132 = vector.load %arg2[%c0_148, %131, %c0_149, %c0_150] : memref<1x8x3x256xbf16, #tpu.memory_space<vmem>>, vector<1x1x3x256xbf16>
    %133 = vector.shape_cast %132 : vector<1x1x3x256xbf16> to vector<3x256xbf16>
    %c1_151 = arith.constant 1 : index
    %c0_152 = arith.constant 0 : index
    %c0_153 = arith.constant 0 : index
    %c0_154 = arith.constant 0 : index
    %c0_155 = arith.constant 0 : index
    %134 = vector.load %arg3[%c1_151, %c0_152, %c0_153, %c0_154, %c0_155] : memref<5x5x5x8x3xbf16, #tpu.memory_space<vmem>>, vector<1x1x1x8x3xbf16>
    %135 = vector.shape_cast %134 : vector<1x1x1x8x3xbf16> to vector<8x3xbf16>
    %136 = vector.extract_strided_slice %133 {offsets = [0, 0], sizes = [3, 128], strides = [1, 1]} : vector<3x256xbf16> to vector<3x128xbf16>
    %cst_156 = arith.constant dense<0.000000e+00> : vector<8x128xf32>
    %137 = tpu.matmul %135, %136, %cst_156 {dimension_numbers = #tpu.dot_dimension_numbers<[1], [0], [0], [1], [0, 0, 1, 1], [], []>} : vector<8x3xbf16>, vector<3x128xbf16>, vector<8x128xf32> -> vector<8x128xf32>
    %138 = arith.addf %129, %137 : vector<8x128xf32>
    %c1_157 = arith.constant 1 : index
    %c0_158 = arith.constant 0 : index
    %c1_159 = arith.constant 1 : index
    %c0_160 = arith.constant 0 : index
    %c0_161 = arith.constant 0 : index
    %139 = vector.load %arg3[%c1_157, %c0_158, %c1_159, %c0_160, %c0_161] : memref<5x5x5x8x3xbf16, #tpu.memory_space<vmem>>, vector<1x1x1x8x3xbf16>
    %140 = vector.shape_cast %139 : vector<1x1x1x8x3xbf16> to vector<8x3xbf16>
    %141 = vector.extract_strided_slice %133 {offsets = [0, 1], sizes = [3, 128], strides = [1, 1]} : vector<3x256xbf16> to vector<3x128xbf16>
    %cst_162 = arith.constant dense<0.000000e+00> : vector<8x128xf32>
    %142 = tpu.matmul %140, %141, %cst_162 {dimension_numbers = #tpu.dot_dimension_numbers<[1], [0], [0], [1], [0, 0, 1, 1], [], []>} : vector<8x3xbf16>, vector<3x128xbf16>, vector<8x128xf32> -> vector<8x128xf32>
    %143 = arith.addf %138, %142 : vector<8x128xf32>
    %c1_163 = arith.constant 1 : index
    %c0_164 = arith.constant 0 : index
    %c2_165 = arith.constant 2 : index
    %c0_166 = arith.constant 0 : index
    %c0_167 = arith.constant 0 : index
    %144 = vector.load %arg3[%c1_163, %c0_164, %c2_165, %c0_166, %c0_167] : memref<5x5x5x8x3xbf16, #tpu.memory_space<vmem>>, vector<1x1x1x8x3xbf16>
    %145 = vector.shape_cast %144 : vector<1x1x1x8x3xbf16> to vector<8x3xbf16>
    %146 = vector.extract_strided_slice %133 {offsets = [0, 2], sizes = [3, 128], strides = [1, 1]} : vector<3x256xbf16> to vector<3x128xbf16>
    %cst_168 = arith.constant dense<0.000000e+00> : vector<8x128xf32>
    %147 = tpu.matmul %145, %146, %cst_168 {dimension_numbers = #tpu.dot_dimension_numbers<[1], [0], [0], [1], [0, 0, 1, 1], [], []>} : vector<8x3xbf16>, vector<3x128xbf16>, vector<8x128xf32> -> vector<8x128xf32>
    %148 = arith.addf %143, %147 : vector<8x128xf32>
    %c1_169 = arith.constant 1 : index
    %c0_170 = arith.constant 0 : index
    %c3_171 = arith.constant 3 : index
    %c0_172 = arith.constant 0 : index
    %c0_173 = arith.constant 0 : index
    %149 = vector.load %arg3[%c1_169, %c0_170, %c3_171, %c0_172, %c0_173] : memref<5x5x5x8x3xbf16, #tpu.memory_space<vmem>>, vector<1x1x1x8x3xbf16>
    %150 = vector.shape_cast %149 : vector<1x1x1x8x3xbf16> to vector<8x3xbf16>
    %151 = vector.extract_strided_slice %133 {offsets = [0, 3], sizes = [3, 128], strides = [1, 1]} : vector<3x256xbf16> to vector<3x128xbf16>
    %cst_174 = arith.constant dense<0.000000e+00> : vector<8x128xf32>
    %152 = tpu.matmul %150, %151, %cst_174 {dimension_numbers = #tpu.dot_dimension_numbers<[1], [0], [0], [1], [0, 0, 1, 1], [], []>} : vector<8x3xbf16>, vector<3x128xbf16>, vector<8x128xf32> -> vector<8x128xf32>
    %153 = arith.addf %148, %152 : vector<8x128xf32>
    %c1_175 = arith.constant 1 : index
    %c0_176 = arith.constant 0 : index
    %c4_177 = arith.constant 4 : index
    %c0_178 = arith.constant 0 : index
    %c0_179 = arith.constant 0 : index
    %154 = vector.load %arg3[%c1_175, %c0_176, %c4_177, %c0_178, %c0_179] : memref<5x5x5x8x3xbf16, #tpu.memory_space<vmem>>, vector<1x1x1x8x3xbf16>
    %155 = vector.shape_cast %154 : vector<1x1x1x8x3xbf16> to vector<8x3xbf16>
    %156 = vector.extract_strided_slice %133 {offsets = [0, 4], sizes = [3, 128], strides = [1, 1]} : vector<3x256xbf16> to vector<3x128xbf16>
    %cst_180 = arith.constant dense<0.000000e+00> : vector<8x128xf32>
    %157 = tpu.matmul %155, %156, %cst_180 {dimension_numbers = #tpu.dot_dimension_numbers<[1], [0], [0], [1], [0, 0, 1, 1], [], []>} : vector<8x3xbf16>, vector<3x128xbf16>, vector<8x128xf32> -> vector<8x128xf32>
    %158 = arith.addf %153, %157 : vector<8x128xf32>
    %c1_181 = arith.constant 1 : index
    %c1_182 = arith.constant 1 : index
    %c0_183 = arith.constant 0 : index
    %c0_184 = arith.constant 0 : index
    %c0_185 = arith.constant 0 : index
    %159 = vector.load %arg3[%c1_181, %c1_182, %c0_183, %c0_184, %c0_185] : memref<5x5x5x8x3xbf16, #tpu.memory_space<vmem>>, vector<1x1x1x8x3xbf16>
    %160 = vector.shape_cast %159 : vector<1x1x1x8x3xbf16> to vector<8x3xbf16>
    %161 = vector.extract_strided_slice %133 {offsets = [0, 8], sizes = [3, 128], strides = [1, 1]} : vector<3x256xbf16> to vector<3x128xbf16>
    %cst_186 = arith.constant dense<0.000000e+00> : vector<8x128xf32>
    %162 = tpu.matmul %160, %161, %cst_186 {dimension_numbers = #tpu.dot_dimension_numbers<[1], [0], [0], [1], [0, 0, 1, 1], [], []>} : vector<8x3xbf16>, vector<3x128xbf16>, vector<8x128xf32> -> vector<8x128xf32>
    %163 = arith.addf %158, %162 : vector<8x128xf32>
    %c1_187 = arith.constant 1 : index
    %c1_188 = arith.constant 1 : index
    %c1_189 = arith.constant 1 : index
    %c0_190 = arith.constant 0 : index
    %c0_191 = arith.constant 0 : index
    %164 = vector.load %arg3[%c1_187, %c1_188, %c1_189, %c0_190, %c0_191] : memref<5x5x5x8x3xbf16, #tpu.memory_space<vmem>>, vector<1x1x1x8x3xbf16>
    %165 = vector.shape_cast %164 : vector<1x1x1x8x3xbf16> to vector<8x3xbf16>
    %166 = vector.extract_strided_slice %133 {offsets = [0, 9], sizes = [3, 128], strides = [1, 1]} : vector<3x256xbf16> to vector<3x128xbf16>
    %cst_192 = arith.constant dense<0.000000e+00> : vector<8x128xf32>
    %167 = tpu.matmul %165, %166, %cst_192 {dimension_numbers = #tpu.dot_dimension_numbers<[1], [0], [0], [1], [0, 0, 1, 1], [], []>} : vector<8x3xbf16>, vector<3x128xbf16>, vector<8x128xf32> -> vector<8x128xf32>
    %168 = arith.addf %163, %167 : vector<8x128xf32>
    %c1_193 = arith.constant 1 : index
    %c1_194 = arith.constant 1 : index
    %c2_195 = arith.constant 2 : index
    %c0_196 = arith.constant 0 : index
    %c0_197 = arith.constant 0 : index
    %169 = vector.load %arg3[%c1_193, %c1_194, %c2_195, %c0_196, %c0_197] : memref<5x5x5x8x3xbf16, #tpu.memory_space<vmem>>, vector<1x1x1x8x3xbf16>
    %170 = vector.shape_cast %169 : vector<1x1x1x8x3xbf16> to vector<8x3xbf16>
    %171 = vector.extract_strided_slice %133 {offsets = [0, 10], sizes = [3, 128], strides = [1, 1]} : vector<3x256xbf16> to vector<3x128xbf16>
    %cst_198 = arith.constant dense<0.000000e+00> : vector<8x128xf32>
    %172 = tpu.matmul %170, %171, %cst_198 {dimension_numbers = #tpu.dot_dimension_numbers<[1], [0], [0], [1], [0, 0, 1, 1], [], []>} : vector<8x3xbf16>, vector<3x128xbf16>, vector<8x128xf32> -> vector<8x128xf32>
    %173 = arith.addf %168, %172 : vector<8x128xf32>
    %c1_199 = arith.constant 1 : index
    %c1_200 = arith.constant 1 : index
    %c3_201 = arith.constant 3 : index
    %c0_202 = arith.constant 0 : index
    %c0_203 = arith.constant 0 : index
    %174 = vector.load %arg3[%c1_199, %c1_200, %c3_201, %c0_202, %c0_203] : memref<5x5x5x8x3xbf16, #tpu.memory_space<vmem>>, vector<1x1x1x8x3xbf16>
    %175 = vector.shape_cast %174 : vector<1x1x1x8x3xbf16> to vector<8x3xbf16>
    %176 = vector.extract_strided_slice %133 {offsets = [0, 11], sizes = [3, 128], strides = [1, 1]} : vector<3x256xbf16> to vector<3x128xbf16>
    %cst_204 = arith.constant dense<0.000000e+00> : vector<8x128xf32>
    %177 = tpu.matmul %175, %176, %cst_204 {dimension_numbers = #tpu.dot_dimension_numbers<[1], [0], [0], [1], [0, 0, 1, 1], [], []>} : vector<8x3xbf16>, vector<3x128xbf16>, vector<8x128xf32> -> vector<8x128xf32>
    %178 = arith.addf %173, %177 : vector<8x128xf32>
    %c1_205 = arith.constant 1 : index
    %c1_206 = arith.constant 1 : index
    %c4_207 = arith.constant 4 : index
    %c0_208 = arith.constant 0 : index
    %c0_209 = arith.constant 0 : index
    %179 = vector.load %arg3[%c1_205, %c1_206, %c4_207, %c0_208, %c0_209] : memref<5x5x5x8x3xbf16, #tpu.memory_space<vmem>>, vector<1x1x1x8x3xbf16>
    %180 = vector.shape_cast %179 : vector<1x1x1x8x3xbf16> to vector<8x3xbf16>
    %181 = vector.extract_strided_slice %133 {offsets = [0, 12], sizes = [3, 128], strides = [1, 1]} : vector<3x256xbf16> to vector<3x128xbf16>
    %cst_210 = arith.constant dense<0.000000e+00> : vector<8x128xf32>
    %182 = tpu.matmul %180, %181, %cst_210 {dimension_numbers = #tpu.dot_dimension_numbers<[1], [0], [0], [1], [0, 0, 1, 1], [], []>} : vector<8x3xbf16>, vector<3x128xbf16>, vector<8x128xf32> -> vector<8x128xf32>
    %183 = arith.addf %178, %182 : vector<8x128xf32>
    %c1_211 = arith.constant 1 : index
    %c2_212 = arith.constant 2 : index
    %c0_213 = arith.constant 0 : index
    %c0_214 = arith.constant 0 : index
    %c0_215 = arith.constant 0 : index
    %184 = vector.load %arg3[%c1_211, %c2_212, %c0_213, %c0_214, %c0_215] : memref<5x5x5x8x3xbf16, #tpu.memory_space<vmem>>, vector<1x1x1x8x3xbf16>
    %185 = vector.shape_cast %184 : vector<1x1x1x8x3xbf16> to vector<8x3xbf16>
    %186 = vector.extract_strided_slice %133 {offsets = [0, 16], sizes = [3, 128], strides = [1, 1]} : vector<3x256xbf16> to vector<3x128xbf16>
    %cst_216 = arith.constant dense<0.000000e+00> : vector<8x128xf32>
    %187 = tpu.matmul %185, %186, %cst_216 {dimension_numbers = #tpu.dot_dimension_numbers<[1], [0], [0], [1], [0, 0, 1, 1], [], []>} : vector<8x3xbf16>, vector<3x128xbf16>, vector<8x128xf32> -> vector<8x128xf32>
    %188 = arith.addf %183, %187 : vector<8x128xf32>
    %c1_217 = arith.constant 1 : index
    %c2_218 = arith.constant 2 : index
    %c1_219 = arith.constant 1 : index
    %c0_220 = arith.constant 0 : index
    %c0_221 = arith.constant 0 : index
    %189 = vector.load %arg3[%c1_217, %c2_218, %c1_219, %c0_220, %c0_221] : memref<5x5x5x8x3xbf16, #tpu.memory_space<vmem>>, vector<1x1x1x8x3xbf16>
    %190 = vector.shape_cast %189 : vector<1x1x1x8x3xbf16> to vector<8x3xbf16>
    %191 = vector.extract_strided_slice %133 {offsets = [0, 17], sizes = [3, 128], strides = [1, 1]} : vector<3x256xbf16> to vector<3x128xbf16>
    %cst_222 = arith.constant dense<0.000000e+00> : vector<8x128xf32>
    %192 = tpu.matmul %190, %191, %cst_222 {dimension_numbers = #tpu.dot_dimension_numbers<[1], [0], [0], [1], [0, 0, 1, 1], [], []>} : vector<8x3xbf16>, vector<3x128xbf16>, vector<8x128xf32> -> vector<8x128xf32>
    %193 = arith.addf %188, %192 : vector<8x128xf32>
    %c1_223 = arith.constant 1 : index
    %c2_224 = arith.constant 2 : index
    %c2_225 = arith.constant 2 : index
    %c0_226 = arith.constant 0 : index
    %c0_227 = arith.constant 0 : index
    %194 = vector.load %arg3[%c1_223, %c2_224, %c2_225, %c0_226, %c0_227] : memref<5x5x5x8x3xbf16, #tpu.memory_space<vmem>>, vector<1x1x1x8x3xbf16>
    %195 = vector.shape_cast %194 : vector<1x1x1x8x3xbf16> to vector<8x3xbf16>
    %196 = vector.extract_strided_slice %133 {offsets = [0, 18], sizes = [3, 128], strides = [1, 1]} : vector<3x256xbf16> to vector<3x128xbf16>
    %cst_228 = arith.constant dense<0.000000e+00> : vector<8x128xf32>
    %197 = tpu.matmul %195, %196, %cst_228 {dimension_numbers = #tpu.dot_dimension_numbers<[1], [0], [0], [1], [0, 0, 1, 1], [], []>} : vector<8x3xbf16>, vector<3x128xbf16>, vector<8x128xf32> -> vector<8x128xf32>
    %198 = arith.addf %193, %197 : vector<8x128xf32>
    %c1_229 = arith.constant 1 : index
    %c2_230 = arith.constant 2 : index
    %c3_231 = arith.constant 3 : index
    %c0_232 = arith.constant 0 : index
    %c0_233 = arith.constant 0 : index
    %199 = vector.load %arg3[%c1_229, %c2_230, %c3_231, %c0_232, %c0_233] : memref<5x5x5x8x3xbf16, #tpu.memory_space<vmem>>, vector<1x1x1x8x3xbf16>
    %200 = vector.shape_cast %199 : vector<1x1x1x8x3xbf16> to vector<8x3xbf16>
    %201 = vector.extract_strided_slice %133 {offsets = [0, 19], sizes = [3, 128], strides = [1, 1]} : vector<3x256xbf16> to vector<3x128xbf16>
    %cst_234 = arith.constant dense<0.000000e+00> : vector<8x128xf32>
    %202 = tpu.matmul %200, %201, %cst_234 {dimension_numbers = #tpu.dot_dimension_numbers<[1], [0], [0], [1], [0, 0, 1, 1], [], []>} : vector<8x3xbf16>, vector<3x128xbf16>, vector<8x128xf32> -> vector<8x128xf32>
    %203 = arith.addf %198, %202 : vector<8x128xf32>
    %c1_235 = arith.constant 1 : index
    %c2_236 = arith.constant 2 : index
    %c4_237 = arith.constant 4 : index
    %c0_238 = arith.constant 0 : index
    %c0_239 = arith.constant 0 : index
    %204 = vector.load %arg3[%c1_235, %c2_236, %c4_237, %c0_238, %c0_239] : memref<5x5x5x8x3xbf16, #tpu.memory_space<vmem>>, vector<1x1x1x8x3xbf16>
    %205 = vector.shape_cast %204 : vector<1x1x1x8x3xbf16> to vector<8x3xbf16>
    %206 = vector.extract_strided_slice %133 {offsets = [0, 20], sizes = [3, 128], strides = [1, 1]} : vector<3x256xbf16> to vector<3x128xbf16>
    %cst_240 = arith.constant dense<0.000000e+00> : vector<8x128xf32>
    %207 = tpu.matmul %205, %206, %cst_240 {dimension_numbers = #tpu.dot_dimension_numbers<[1], [0], [0], [1], [0, 0, 1, 1], [], []>} : vector<8x3xbf16>, vector<3x128xbf16>, vector<8x128xf32> -> vector<8x128xf32>
    %208 = arith.addf %203, %207 : vector<8x128xf32>
    %c1_241 = arith.constant 1 : index
    %c3_242 = arith.constant 3 : index
    %c0_243 = arith.constant 0 : index
    %c0_244 = arith.constant 0 : index
    %c0_245 = arith.constant 0 : index
    %209 = vector.load %arg3[%c1_241, %c3_242, %c0_243, %c0_244, %c0_245] : memref<5x5x5x8x3xbf16, #tpu.memory_space<vmem>>, vector<1x1x1x8x3xbf16>
    %210 = vector.shape_cast %209 : vector<1x1x1x8x3xbf16> to vector<8x3xbf16>
    %211 = vector.extract_strided_slice %133 {offsets = [0, 24], sizes = [3, 128], strides = [1, 1]} : vector<3x256xbf16> to vector<3x128xbf16>
    %cst_246 = arith.constant dense<0.000000e+00> : vector<8x128xf32>
    %212 = tpu.matmul %210, %211, %cst_246 {dimension_numbers = #tpu.dot_dimension_numbers<[1], [0], [0], [1], [0, 0, 1, 1], [], []>} : vector<8x3xbf16>, vector<3x128xbf16>, vector<8x128xf32> -> vector<8x128xf32>
    %213 = arith.addf %208, %212 : vector<8x128xf32>
    %c1_247 = arith.constant 1 : index
    %c3_248 = arith.constant 3 : index
    %c1_249 = arith.constant 1 : index
    %c0_250 = arith.constant 0 : index
    %c0_251 = arith.constant 0 : index
    %214 = vector.load %arg3[%c1_247, %c3_248, %c1_249, %c0_250, %c0_251] : memref<5x5x5x8x3xbf16, #tpu.memory_space<vmem>>, vector<1x1x1x8x3xbf16>
    %215 = vector.shape_cast %214 : vector<1x1x1x8x3xbf16> to vector<8x3xbf16>
    %216 = vector.extract_strided_slice %133 {offsets = [0, 25], sizes = [3, 128], strides = [1, 1]} : vector<3x256xbf16> to vector<3x128xbf16>
    %cst_252 = arith.constant dense<0.000000e+00> : vector<8x128xf32>
    %217 = tpu.matmul %215, %216, %cst_252 {dimension_numbers = #tpu.dot_dimension_numbers<[1], [0], [0], [1], [0, 0, 1, 1], [], []>} : vector<8x3xbf16>, vector<3x128xbf16>, vector<8x128xf32> -> vector<8x128xf32>
    %218 = arith.addf %213, %217 : vector<8x128xf32>
    %c1_253 = arith.constant 1 : index
    %c3_254 = arith.constant 3 : index
    %c2_255 = arith.constant 2 : index
    %c0_256 = arith.constant 0 : index
    %c0_257 = arith.constant 0 : index
    %219 = vector.load %arg3[%c1_253, %c3_254, %c2_255, %c0_256, %c0_257] : memref<5x5x5x8x3xbf16, #tpu.memory_space<vmem>>, vector<1x1x1x8x3xbf16>
    %220 = vector.shape_cast %219 : vector<1x1x1x8x3xbf16> to vector<8x3xbf16>
    %221 = vector.extract_strided_slice %133 {offsets = [0, 26], sizes = [3, 128], strides = [1, 1]} : vector<3x256xbf16> to vector<3x128xbf16>
    %cst_258 = arith.constant dense<0.000000e+00> : vector<8x128xf32>
    %222 = tpu.matmul %220, %221, %cst_258 {dimension_numbers = #tpu.dot_dimension_numbers<[1], [0], [0], [1], [0, 0, 1, 1], [], []>} : vector<8x3xbf16>, vector<3x128xbf16>, vector<8x128xf32> -> vector<8x128xf32>
    %223 = arith.addf %218, %222 : vector<8x128xf32>
    %c1_259 = arith.constant 1 : index
    %c3_260 = arith.constant 3 : index
    %c3_261 = arith.constant 3 : index
    %c0_262 = arith.constant 0 : index
    %c0_263 = arith.constant 0 : index
    %224 = vector.load %arg3[%c1_259, %c3_260, %c3_261, %c0_262, %c0_263] : memref<5x5x5x8x3xbf16, #tpu.memory_space<vmem>>, vector<1x1x1x8x3xbf16>
    %225 = vector.shape_cast %224 : vector<1x1x1x8x3xbf16> to vector<8x3xbf16>
    %226 = vector.extract_strided_slice %133 {offsets = [0, 27], sizes = [3, 128], strides = [1, 1]} : vector<3x256xbf16> to vector<3x128xbf16>
    %cst_264 = arith.constant dense<0.000000e+00> : vector<8x128xf32>
    %227 = tpu.matmul %225, %226, %cst_264 {dimension_numbers = #tpu.dot_dimension_numbers<[1], [0], [0], [1], [0, 0, 1, 1], [], []>} : vector<8x3xbf16>, vector<3x128xbf16>, vector<8x128xf32> -> vector<8x128xf32>
    %228 = arith.addf %223, %227 : vector<8x128xf32>
    %c1_265 = arith.constant 1 : index
    %c3_266 = arith.constant 3 : index
    %c4_267 = arith.constant 4 : index
    %c0_268 = arith.constant 0 : index
    %c0_269 = arith.constant 0 : index
    %229 = vector.load %arg3[%c1_265, %c3_266, %c4_267, %c0_268, %c0_269] : memref<5x5x5x8x3xbf16, #tpu.memory_space<vmem>>, vector<1x1x1x8x3xbf16>
    %230 = vector.shape_cast %229 : vector<1x1x1x8x3xbf16> to vector<8x3xbf16>
    %231 = vector.extract_strided_slice %133 {offsets = [0, 28], sizes = [3, 128], strides = [1, 1]} : vector<3x256xbf16> to vector<3x128xbf16>
    %cst_270 = arith.constant dense<0.000000e+00> : vector<8x128xf32>
    %232 = tpu.matmul %230, %231, %cst_270 {dimension_numbers = #tpu.dot_dimension_numbers<[1], [0], [0], [1], [0, 0, 1, 1], [], []>} : vector<8x3xbf16>, vector<3x128xbf16>, vector<8x128xf32> -> vector<8x128xf32>
    %233 = arith.addf %228, %232 : vector<8x128xf32>
    %c1_271 = arith.constant 1 : index
    %c4_272 = arith.constant 4 : index
    %c0_273 = arith.constant 0 : index
    %c0_274 = arith.constant 0 : index
    %c0_275 = arith.constant 0 : index
    %234 = vector.load %arg3[%c1_271, %c4_272, %c0_273, %c0_274, %c0_275] : memref<5x5x5x8x3xbf16, #tpu.memory_space<vmem>>, vector<1x1x1x8x3xbf16>
    %235 = vector.shape_cast %234 : vector<1x1x1x8x3xbf16> to vector<8x3xbf16>
    %236 = vector.extract_strided_slice %133 {offsets = [0, 32], sizes = [3, 128], strides = [1, 1]} : vector<3x256xbf16> to vector<3x128xbf16>
    %cst_276 = arith.constant dense<0.000000e+00> : vector<8x128xf32>
    %237 = tpu.matmul %235, %236, %cst_276 {dimension_numbers = #tpu.dot_dimension_numbers<[1], [0], [0], [1], [0, 0, 1, 1], [], []>} : vector<8x3xbf16>, vector<3x128xbf16>, vector<8x128xf32> -> vector<8x128xf32>
    %238 = arith.addf %233, %237 : vector<8x128xf32>
    %c1_277 = arith.constant 1 : index
    %c4_278 = arith.constant 4 : index
    %c1_279 = arith.constant 1 : index
    %c0_280 = arith.constant 0 : index
    %c0_281 = arith.constant 0 : index
    %239 = vector.load %arg3[%c1_277, %c4_278, %c1_279, %c0_280, %c0_281] : memref<5x5x5x8x3xbf16, #tpu.memory_space<vmem>>, vector<1x1x1x8x3xbf16>
    %240 = vector.shape_cast %239 : vector<1x1x1x8x3xbf16> to vector<8x3xbf16>
    %241 = vector.extract_strided_slice %133 {offsets = [0, 33], sizes = [3, 128], strides = [1, 1]} : vector<3x256xbf16> to vector<3x128xbf16>
    %cst_282 = arith.constant dense<0.000000e+00> : vector<8x128xf32>
    %242 = tpu.matmul %240, %241, %cst_282 {dimension_numbers = #tpu.dot_dimension_numbers<[1], [0], [0], [1], [0, 0, 1, 1], [], []>} : vector<8x3xbf16>, vector<3x128xbf16>, vector<8x128xf32> -> vector<8x128xf32>
    %243 = arith.addf %238, %242 : vector<8x128xf32>
    %c1_283 = arith.constant 1 : index
    %c4_284 = arith.constant 4 : index
    %c2_285 = arith.constant 2 : index
    %c0_286 = arith.constant 0 : index
    %c0_287 = arith.constant 0 : index
    %244 = vector.load %arg3[%c1_283, %c4_284, %c2_285, %c0_286, %c0_287] : memref<5x5x5x8x3xbf16, #tpu.memory_space<vmem>>, vector<1x1x1x8x3xbf16>
    %245 = vector.shape_cast %244 : vector<1x1x1x8x3xbf16> to vector<8x3xbf16>
    %246 = vector.extract_strided_slice %133 {offsets = [0, 34], sizes = [3, 128], strides = [1, 1]} : vector<3x256xbf16> to vector<3x128xbf16>
    %cst_288 = arith.constant dense<0.000000e+00> : vector<8x128xf32>
    %247 = tpu.matmul %245, %246, %cst_288 {dimension_numbers = #tpu.dot_dimension_numbers<[1], [0], [0], [1], [0, 0, 1, 1], [], []>} : vector<8x3xbf16>, vector<3x128xbf16>, vector<8x128xf32> -> vector<8x128xf32>
    %248 = arith.addf %243, %247 : vector<8x128xf32>
    %c1_289 = arith.constant 1 : index
    %c4_290 = arith.constant 4 : index
    %c3_291 = arith.constant 3 : index
    %c0_292 = arith.constant 0 : index
    %c0_293 = arith.constant 0 : index
    %249 = vector.load %arg3[%c1_289, %c4_290, %c3_291, %c0_292, %c0_293] : memref<5x5x5x8x3xbf16, #tpu.memory_space<vmem>>, vector<1x1x1x8x3xbf16>
    %250 = vector.shape_cast %249 : vector<1x1x1x8x3xbf16> to vector<8x3xbf16>
    %251 = vector.extract_strided_slice %133 {offsets = [0, 35], sizes = [3, 128], strides = [1, 1]} : vector<3x256xbf16> to vector<3x128xbf16>
    %cst_294 = arith.constant dense<0.000000e+00> : vector<8x128xf32>
    %252 = tpu.matmul %250, %251, %cst_294 {dimension_numbers = #tpu.dot_dimension_numbers<[1], [0], [0], [1], [0, 0, 1, 1], [], []>} : vector<8x3xbf16>, vector<3x128xbf16>, vector<8x128xf32> -> vector<8x128xf32>
    %253 = arith.addf %248, %252 : vector<8x128xf32>
    %c1_295 = arith.constant 1 : index
    %c4_296 = arith.constant 4 : index
    %c4_297 = arith.constant 4 : index
    %c0_298 = arith.constant 0 : index
    %c0_299 = arith.constant 0 : index
    %254 = vector.load %arg3[%c1_295, %c4_296, %c4_297, %c0_298, %c0_299] : memref<5x5x5x8x3xbf16, #tpu.memory_space<vmem>>, vector<1x1x1x8x3xbf16>
    %255 = vector.shape_cast %254 : vector<1x1x1x8x3xbf16> to vector<8x3xbf16>
    %256 = vector.extract_strided_slice %133 {offsets = [0, 36], sizes = [3, 128], strides = [1, 1]} : vector<3x256xbf16> to vector<3x128xbf16>
    %cst_300 = arith.constant dense<0.000000e+00> : vector<8x128xf32>
    %257 = tpu.matmul %255, %256, %cst_300 {dimension_numbers = #tpu.dot_dimension_numbers<[1], [0], [0], [1], [0, 0, 1, 1], [], []>} : vector<8x3xbf16>, vector<3x128xbf16>, vector<8x128xf32> -> vector<8x128xf32>
    %258 = arith.addf %253, %257 : vector<8x128xf32>
    %c2_i32 = arith.constant 2 : i32
    %259 = arith.addi %arg1, %c2_i32 : i32
    %c0_301 = arith.constant 0 : index
    %260 = arith.index_cast %259 : i32 to index
    %c0_302 = arith.constant 0 : index
    %c0_303 = arith.constant 0 : index
    %261 = vector.load %arg2[%c0_301, %260, %c0_302, %c0_303] : memref<1x8x3x256xbf16, #tpu.memory_space<vmem>>, vector<1x1x3x256xbf16>
    %262 = vector.shape_cast %261 : vector<1x1x3x256xbf16> to vector<3x256xbf16>
    %c2_304 = arith.constant 2 : index
    %c0_305 = arith.constant 0 : index
    %c0_306 = arith.constant 0 : index
    %c0_307 = arith.constant 0 : index
    %c0_308 = arith.constant 0 : index
    %263 = vector.load %arg3[%c2_304, %c0_305, %c0_306, %c0_307, %c0_308] : memref<5x5x5x8x3xbf16, #tpu.memory_space<vmem>>, vector<1x1x1x8x3xbf16>
    %264 = vector.shape_cast %263 : vector<1x1x1x8x3xbf16> to vector<8x3xbf16>
    %265 = vector.extract_strided_slice %262 {offsets = [0, 0], sizes = [3, 128], strides = [1, 1]} : vector<3x256xbf16> to vector<3x128xbf16>
    %cst_309 = arith.constant dense<0.000000e+00> : vector<8x128xf32>
    %266 = tpu.matmul %264, %265, %cst_309 {dimension_numbers = #tpu.dot_dimension_numbers<[1], [0], [0], [1], [0, 0, 1, 1], [], []>} : vector<8x3xbf16>, vector<3x128xbf16>, vector<8x128xf32> -> vector<8x128xf32>
    %267 = arith.addf %258, %266 : vector<8x128xf32>
    %c2_310 = arith.constant 2 : index
    %c0_311 = arith.constant 0 : index
    %c1_312 = arith.constant 1 : index
    %c0_313 = arith.constant 0 : index
    %c0_314 = arith.constant 0 : index
    %268 = vector.load %arg3[%c2_310, %c0_311, %c1_312, %c0_313, %c0_314] : memref<5x5x5x8x3xbf16, #tpu.memory_space<vmem>>, vector<1x1x1x8x3xbf16>
    %269 = vector.shape_cast %268 : vector<1x1x1x8x3xbf16> to vector<8x3xbf16>
    %270 = vector.extract_strided_slice %262 {offsets = [0, 1], sizes = [3, 128], strides = [1, 1]} : vector<3x256xbf16> to vector<3x128xbf16>
    %cst_315 = arith.constant dense<0.000000e+00> : vector<8x128xf32>
    %271 = tpu.matmul %269, %270, %cst_315 {dimension_numbers = #tpu.dot_dimension_numbers<[1], [0], [0], [1], [0, 0, 1, 1], [], []>} : vector<8x3xbf16>, vector<3x128xbf16>, vector<8x128xf32> -> vector<8x128xf32>
    %272 = arith.addf %267, %271 : vector<8x128xf32>
    %c2_316 = arith.constant 2 : index
    %c0_317 = arith.constant 0 : index
    %c2_318 = arith.constant 2 : index
    %c0_319 = arith.constant 0 : index
    %c0_320 = arith.constant 0 : index
    %273 = vector.load %arg3[%c2_316, %c0_317, %c2_318, %c0_319, %c0_320] : memref<5x5x5x8x3xbf16, #tpu.memory_space<vmem>>, vector<1x1x1x8x3xbf16>
    %274 = vector.shape_cast %273 : vector<1x1x1x8x3xbf16> to vector<8x3xbf16>
    %275 = vector.extract_strided_slice %262 {offsets = [0, 2], sizes = [3, 128], strides = [1, 1]} : vector<3x256xbf16> to vector<3x128xbf16>
    %cst_321 = arith.constant dense<0.000000e+00> : vector<8x128xf32>
    %276 = tpu.matmul %274, %275, %cst_321 {dimension_numbers = #tpu.dot_dimension_numbers<[1], [0], [0], [1], [0, 0, 1, 1], [], []>} : vector<8x3xbf16>, vector<3x128xbf16>, vector<8x128xf32> -> vector<8x128xf32>
    %277 = arith.addf %272, %276 : vector<8x128xf32>
    %c2_322 = arith.constant 2 : index
    %c0_323 = arith.constant 0 : index
    %c3_324 = arith.constant 3 : index
    %c0_325 = arith.constant 0 : index
    %c0_326 = arith.constant 0 : index
    %278 = vector.load %arg3[%c2_322, %c0_323, %c3_324, %c0_325, %c0_326] : memref<5x5x5x8x3xbf16, #tpu.memory_space<vmem>>, vector<1x1x1x8x3xbf16>
    %279 = vector.shape_cast %278 : vector<1x1x1x8x3xbf16> to vector<8x3xbf16>
    %280 = vector.extract_strided_slice %262 {offsets = [0, 3], sizes = [3, 128], strides = [1, 1]} : vector<3x256xbf16> to vector<3x128xbf16>
    %cst_327 = arith.constant dense<0.000000e+00> : vector<8x128xf32>
    %281 = tpu.matmul %279, %280, %cst_327 {dimension_numbers = #tpu.dot_dimension_numbers<[1], [0], [0], [1], [0, 0, 1, 1], [], []>} : vector<8x3xbf16>, vector<3x128xbf16>, vector<8x128xf32> -> vector<8x128xf32>
    %282 = arith.addf %277, %281 : vector<8x128xf32>
    %c2_328 = arith.constant 2 : index
    %c0_329 = arith.constant 0 : index
    %c4_330 = arith.constant 4 : index
    %c0_331 = arith.constant 0 : index
    %c0_332 = arith.constant 0 : index
    %283 = vector.load %arg3[%c2_328, %c0_329, %c4_330, %c0_331, %c0_332] : memref<5x5x5x8x3xbf16, #tpu.memory_space<vmem>>, vector<1x1x1x8x3xbf16>
    %284 = vector.shape_cast %283 : vector<1x1x1x8x3xbf16> to vector<8x3xbf16>
    %285 = vector.extract_strided_slice %262 {offsets = [0, 4], sizes = [3, 128], strides = [1, 1]} : vector<3x256xbf16> to vector<3x128xbf16>
    %cst_333 = arith.constant dense<0.000000e+00> : vector<8x128xf32>
    %286 = tpu.matmul %284, %285, %cst_333 {dimension_numbers = #tpu.dot_dimension_numbers<[1], [0], [0], [1], [0, 0, 1, 1], [], []>} : vector<8x3xbf16>, vector<3x128xbf16>, vector<8x128xf32> -> vector<8x128xf32>
    %287 = arith.addf %282, %286 : vector<8x128xf32>
    %c2_334 = arith.constant 2 : index
    %c1_335 = arith.constant 1 : index
    %c0_336 = arith.constant 0 : index
    %c0_337 = arith.constant 0 : index
    %c0_338 = arith.constant 0 : index
    %288 = vector.load %arg3[%c2_334, %c1_335, %c0_336, %c0_337, %c0_338] : memref<5x5x5x8x3xbf16, #tpu.memory_space<vmem>>, vector<1x1x1x8x3xbf16>
    %289 = vector.shape_cast %288 : vector<1x1x1x8x3xbf16> to vector<8x3xbf16>
    %290 = vector.extract_strided_slice %262 {offsets = [0, 8], sizes = [3, 128], strides = [1, 1]} : vector<3x256xbf16> to vector<3x128xbf16>
    %cst_339 = arith.constant dense<0.000000e+00> : vector<8x128xf32>
    %291 = tpu.matmul %289, %290, %cst_339 {dimension_numbers = #tpu.dot_dimension_numbers<[1], [0], [0], [1], [0, 0, 1, 1], [], []>} : vector<8x3xbf16>, vector<3x128xbf16>, vector<8x128xf32> -> vector<8x128xf32>
    %292 = arith.addf %287, %291 : vector<8x128xf32>
    %c2_340 = arith.constant 2 : index
    %c1_341 = arith.constant 1 : index
    %c1_342 = arith.constant 1 : index
    %c0_343 = arith.constant 0 : index
    %c0_344 = arith.constant 0 : index
    %293 = vector.load %arg3[%c2_340, %c1_341, %c1_342, %c0_343, %c0_344] : memref<5x5x5x8x3xbf16, #tpu.memory_space<vmem>>, vector<1x1x1x8x3xbf16>
    %294 = vector.shape_cast %293 : vector<1x1x1x8x3xbf16> to vector<8x3xbf16>
    %295 = vector.extract_strided_slice %262 {offsets = [0, 9], sizes = [3, 128], strides = [1, 1]} : vector<3x256xbf16> to vector<3x128xbf16>
    %cst_345 = arith.constant dense<0.000000e+00> : vector<8x128xf32>
    %296 = tpu.matmul %294, %295, %cst_345 {dimension_numbers = #tpu.dot_dimension_numbers<[1], [0], [0], [1], [0, 0, 1, 1], [], []>} : vector<8x3xbf16>, vector<3x128xbf16>, vector<8x128xf32> -> vector<8x128xf32>
    %297 = arith.addf %292, %296 : vector<8x128xf32>
    %c2_346 = arith.constant 2 : index
    %c1_347 = arith.constant 1 : index
    %c2_348 = arith.constant 2 : index
    %c0_349 = arith.constant 0 : index
    %c0_350 = arith.constant 0 : index
    %298 = vector.load %arg3[%c2_346, %c1_347, %c2_348, %c0_349, %c0_350] : memref<5x5x5x8x3xbf16, #tpu.memory_space<vmem>>, vector<1x1x1x8x3xbf16>
    %299 = vector.shape_cast %298 : vector<1x1x1x8x3xbf16> to vector<8x3xbf16>
    %300 = vector.extract_strided_slice %262 {offsets = [0, 10], sizes = [3, 128], strides = [1, 1]} : vector<3x256xbf16> to vector<3x128xbf16>
    %cst_351 = arith.constant dense<0.000000e+00> : vector<8x128xf32>
    %301 = tpu.matmul %299, %300, %cst_351 {dimension_numbers = #tpu.dot_dimension_numbers<[1], [0], [0], [1], [0, 0, 1, 1], [], []>} : vector<8x3xbf16>, vector<3x128xbf16>, vector<8x128xf32> -> vector<8x128xf32>
    %302 = arith.addf %297, %301 : vector<8x128xf32>
    %c2_352 = arith.constant 2 : index
    %c1_353 = arith.constant 1 : index
    %c3_354 = arith.constant 3 : index
    %c0_355 = arith.constant 0 : index
    %c0_356 = arith.constant 0 : index
    %303 = vector.load %arg3[%c2_352, %c1_353, %c3_354, %c0_355, %c0_356] : memref<5x5x5x8x3xbf16, #tpu.memory_space<vmem>>, vector<1x1x1x8x3xbf16>
    %304 = vector.shape_cast %303 : vector<1x1x1x8x3xbf16> to vector<8x3xbf16>
    %305 = vector.extract_strided_slice %262 {offsets = [0, 11], sizes = [3, 128], strides = [1, 1]} : vector<3x256xbf16> to vector<3x128xbf16>
    %cst_357 = arith.constant dense<0.000000e+00> : vector<8x128xf32>
    %306 = tpu.matmul %304, %305, %cst_357 {dimension_numbers = #tpu.dot_dimension_numbers<[1], [0], [0], [1], [0, 0, 1, 1], [], []>} : vector<8x3xbf16>, vector<3x128xbf16>, vector<8x128xf32> -> vector<8x128xf32>
    %307 = arith.addf %302, %306 : vector<8x128xf32>
    %c2_358 = arith.constant 2 : index
    %c1_359 = arith.constant 1 : index
    %c4_360 = arith.constant 4 : index
    %c0_361 = arith.constant 0 : index
    %c0_362 = arith.constant 0 : index
    %308 = vector.load %arg3[%c2_358, %c1_359, %c4_360, %c0_361, %c0_362] : memref<5x5x5x8x3xbf16, #tpu.memory_space<vmem>>, vector<1x1x1x8x3xbf16>
    %309 = vector.shape_cast %308 : vector<1x1x1x8x3xbf16> to vector<8x3xbf16>
    %310 = vector.extract_strided_slice %262 {offsets = [0, 12], sizes = [3, 128], strides = [1, 1]} : vector<3x256xbf16> to vector<3x128xbf16>
    %cst_363 = arith.constant dense<0.000000e+00> : vector<8x128xf32>
    %311 = tpu.matmul %309, %310, %cst_363 {dimension_numbers = #tpu.dot_dimension_numbers<[1], [0], [0], [1], [0, 0, 1, 1], [], []>} : vector<8x3xbf16>, vector<3x128xbf16>, vector<8x128xf32> -> vector<8x128xf32>
    %312 = arith.addf %307, %311 : vector<8x128xf32>
    %c2_364 = arith.constant 2 : index
    %c2_365 = arith.constant 2 : index
    %c0_366 = arith.constant 0 : index
    %c0_367 = arith.constant 0 : index
    %c0_368 = arith.constant 0 : index
    %313 = vector.load %arg3[%c2_364, %c2_365, %c0_366, %c0_367, %c0_368] : memref<5x5x5x8x3xbf16, #tpu.memory_space<vmem>>, vector<1x1x1x8x3xbf16>
    %314 = vector.shape_cast %313 : vector<1x1x1x8x3xbf16> to vector<8x3xbf16>
    %315 = vector.extract_strided_slice %262 {offsets = [0, 16], sizes = [3, 128], strides = [1, 1]} : vector<3x256xbf16> to vector<3x128xbf16>
    %cst_369 = arith.constant dense<0.000000e+00> : vector<8x128xf32>
    %316 = tpu.matmul %314, %315, %cst_369 {dimension_numbers = #tpu.dot_dimension_numbers<[1], [0], [0], [1], [0, 0, 1, 1], [], []>} : vector<8x3xbf16>, vector<3x128xbf16>, vector<8x128xf32> -> vector<8x128xf32>
    %317 = arith.addf %312, %316 : vector<8x128xf32>
    %c2_370 = arith.constant 2 : index
    %c2_371 = arith.constant 2 : index
    %c1_372 = arith.constant 1 : index
    %c0_373 = arith.constant 0 : index
    %c0_374 = arith.constant 0 : index
    %318 = vector.load %arg3[%c2_370, %c2_371, %c1_372, %c0_373, %c0_374] : memref<5x5x5x8x3xbf16, #tpu.memory_space<vmem>>, vector<1x1x1x8x3xbf16>
    %319 = vector.shape_cast %318 : vector<1x1x1x8x3xbf16> to vector<8x3xbf16>
    %320 = vector.extract_strided_slice %262 {offsets = [0, 17], sizes = [3, 128], strides = [1, 1]} : vector<3x256xbf16> to vector<3x128xbf16>
    %cst_375 = arith.constant dense<0.000000e+00> : vector<8x128xf32>
    %321 = tpu.matmul %319, %320, %cst_375 {dimension_numbers = #tpu.dot_dimension_numbers<[1], [0], [0], [1], [0, 0, 1, 1], [], []>} : vector<8x3xbf16>, vector<3x128xbf16>, vector<8x128xf32> -> vector<8x128xf32>
    %322 = arith.addf %317, %321 : vector<8x128xf32>
    %c2_376 = arith.constant 2 : index
    %c2_377 = arith.constant 2 : index
    %c2_378 = arith.constant 2 : index
    %c0_379 = arith.constant 0 : index
    %c0_380 = arith.constant 0 : index
    %323 = vector.load %arg3[%c2_376, %c2_377, %c2_378, %c0_379, %c0_380] : memref<5x5x5x8x3xbf16, #tpu.memory_space<vmem>>, vector<1x1x1x8x3xbf16>
    %324 = vector.shape_cast %323 : vector<1x1x1x8x3xbf16> to vector<8x3xbf16>
    %325 = vector.extract_strided_slice %262 {offsets = [0, 18], sizes = [3, 128], strides = [1, 1]} : vector<3x256xbf16> to vector<3x128xbf16>
    %cst_381 = arith.constant dense<0.000000e+00> : vector<8x128xf32>
    %326 = tpu.matmul %324, %325, %cst_381 {dimension_numbers = #tpu.dot_dimension_numbers<[1], [0], [0], [1], [0, 0, 1, 1], [], []>} : vector<8x3xbf16>, vector<3x128xbf16>, vector<8x128xf32> -> vector<8x128xf32>
    %327 = arith.addf %322, %326 : vector<8x128xf32>
    %c2_382 = arith.constant 2 : index
    %c2_383 = arith.constant 2 : index
    %c3_384 = arith.constant 3 : index
    %c0_385 = arith.constant 0 : index
    %c0_386 = arith.constant 0 : index
    %328 = vector.load %arg3[%c2_382, %c2_383, %c3_384, %c0_385, %c0_386] : memref<5x5x5x8x3xbf16, #tpu.memory_space<vmem>>, vector<1x1x1x8x3xbf16>
    %329 = vector.shape_cast %328 : vector<1x1x1x8x3xbf16> to vector<8x3xbf16>
    %330 = vector.extract_strided_slice %262 {offsets = [0, 19], sizes = [3, 128], strides = [1, 1]} : vector<3x256xbf16> to vector<3x128xbf16>
    %cst_387 = arith.constant dense<0.000000e+00> : vector<8x128xf32>
    %331 = tpu.matmul %329, %330, %cst_387 {dimension_numbers = #tpu.dot_dimension_numbers<[1], [0], [0], [1], [0, 0, 1, 1], [], []>} : vector<8x3xbf16>, vector<3x128xbf16>, vector<8x128xf32> -> vector<8x128xf32>
    %332 = arith.addf %327, %331 : vector<8x128xf32>
    %c2_388 = arith.constant 2 : index
    %c2_389 = arith.constant 2 : index
    %c4_390 = arith.constant 4 : index
    %c0_391 = arith.constant 0 : index
    %c0_392 = arith.constant 0 : index
    %333 = vector.load %arg3[%c2_388, %c2_389, %c4_390, %c0_391, %c0_392] : memref<5x5x5x8x3xbf16, #tpu.memory_space<vmem>>, vector<1x1x1x8x3xbf16>
    %334 = vector.shape_cast %333 : vector<1x1x1x8x3xbf16> to vector<8x3xbf16>
    %335 = vector.extract_strided_slice %262 {offsets = [0, 20], sizes = [3, 128], strides = [1, 1]} : vector<3x256xbf16> to vector<3x128xbf16>
    %cst_393 = arith.constant dense<0.000000e+00> : vector<8x128xf32>
    %336 = tpu.matmul %334, %335, %cst_393 {dimension_numbers = #tpu.dot_dimension_numbers<[1], [0], [0], [1], [0, 0, 1, 1], [], []>} : vector<8x3xbf16>, vector<3x128xbf16>, vector<8x128xf32> -> vector<8x128xf32>
    %337 = arith.addf %332, %336 : vector<8x128xf32>
    %c2_394 = arith.constant 2 : index
    %c3_395 = arith.constant 3 : index
    %c0_396 = arith.constant 0 : index
    %c0_397 = arith.constant 0 : index
    %c0_398 = arith.constant 0 : index
    %338 = vector.load %arg3[%c2_394, %c3_395, %c0_396, %c0_397, %c0_398] : memref<5x5x5x8x3xbf16, #tpu.memory_space<vmem>>, vector<1x1x1x8x3xbf16>
    %339 = vector.shape_cast %338 : vector<1x1x1x8x3xbf16> to vector<8x3xbf16>
    %340 = vector.extract_strided_slice %262 {offsets = [0, 24], sizes = [3, 128], strides = [1, 1]} : vector<3x256xbf16> to vector<3x128xbf16>
    %cst_399 = arith.constant dense<0.000000e+00> : vector<8x128xf32>
    %341 = tpu.matmul %339, %340, %cst_399 {dimension_numbers = #tpu.dot_dimension_numbers<[1], [0], [0], [1], [0, 0, 1, 1], [], []>} : vector<8x3xbf16>, vector<3x128xbf16>, vector<8x128xf32> -> vector<8x128xf32>
    %342 = arith.addf %337, %341 : vector<8x128xf32>
    %c2_400 = arith.constant 2 : index
    %c3_401 = arith.constant 3 : index
    %c1_402 = arith.constant 1 : index
    %c0_403 = arith.constant 0 : index
    %c0_404 = arith.constant 0 : index
    %343 = vector.load %arg3[%c2_400, %c3_401, %c1_402, %c0_403, %c0_404] : memref<5x5x5x8x3xbf16, #tpu.memory_space<vmem>>, vector<1x1x1x8x3xbf16>
    %344 = vector.shape_cast %343 : vector<1x1x1x8x3xbf16> to vector<8x3xbf16>
    %345 = vector.extract_strided_slice %262 {offsets = [0, 25], sizes = [3, 128], strides = [1, 1]} : vector<3x256xbf16> to vector<3x128xbf16>
    %cst_405 = arith.constant dense<0.000000e+00> : vector<8x128xf32>
    %346 = tpu.matmul %344, %345, %cst_405 {dimension_numbers = #tpu.dot_dimension_numbers<[1], [0], [0], [1], [0, 0, 1, 1], [], []>} : vector<8x3xbf16>, vector<3x128xbf16>, vector<8x128xf32> -> vector<8x128xf32>
    %347 = arith.addf %342, %346 : vector<8x128xf32>
    %c2_406 = arith.constant 2 : index
    %c3_407 = arith.constant 3 : index
    %c2_408 = arith.constant 2 : index
    %c0_409 = arith.constant 0 : index
    %c0_410 = arith.constant 0 : index
    %348 = vector.load %arg3[%c2_406, %c3_407, %c2_408, %c0_409, %c0_410] : memref<5x5x5x8x3xbf16, #tpu.memory_space<vmem>>, vector<1x1x1x8x3xbf16>
    %349 = vector.shape_cast %348 : vector<1x1x1x8x3xbf16> to vector<8x3xbf16>
    %350 = vector.extract_strided_slice %262 {offsets = [0, 26], sizes = [3, 128], strides = [1, 1]} : vector<3x256xbf16> to vector<3x128xbf16>
    %cst_411 = arith.constant dense<0.000000e+00> : vector<8x128xf32>
    %351 = tpu.matmul %349, %350, %cst_411 {dimension_numbers = #tpu.dot_dimension_numbers<[1], [0], [0], [1], [0, 0, 1, 1], [], []>} : vector<8x3xbf16>, vector<3x128xbf16>, vector<8x128xf32> -> vector<8x128xf32>
    %352 = arith.addf %347, %351 : vector<8x128xf32>
    %c2_412 = arith.constant 2 : index
    %c3_413 = arith.constant 3 : index
    %c3_414 = arith.constant 3 : index
    %c0_415 = arith.constant 0 : index
    %c0_416 = arith.constant 0 : index
    %353 = vector.load %arg3[%c2_412, %c3_413, %c3_414, %c0_415, %c0_416] : memref<5x5x5x8x3xbf16, #tpu.memory_space<vmem>>, vector<1x1x1x8x3xbf16>
    %354 = vector.shape_cast %353 : vector<1x1x1x8x3xbf16> to vector<8x3xbf16>
    %355 = vector.extract_strided_slice %262 {offsets = [0, 27], sizes = [3, 128], strides = [1, 1]} : vector<3x256xbf16> to vector<3x128xbf16>
    %cst_417 = arith.constant dense<0.000000e+00> : vector<8x128xf32>
    %356 = tpu.matmul %354, %355, %cst_417 {dimension_numbers = #tpu.dot_dimension_numbers<[1], [0], [0], [1], [0, 0, 1, 1], [], []>} : vector<8x3xbf16>, vector<3x128xbf16>, vector<8x128xf32> -> vector<8x128xf32>
    %357 = arith.addf %352, %356 : vector<8x128xf32>
    %c2_418 = arith.constant 2 : index
    %c3_419 = arith.constant 3 : index
    %c4_420 = arith.constant 4 : index
    %c0_421 = arith.constant 0 : index
    %c0_422 = arith.constant 0 : index
    %358 = vector.load %arg3[%c2_418, %c3_419, %c4_420, %c0_421, %c0_422] : memref<5x5x5x8x3xbf16, #tpu.memory_space<vmem>>, vector<1x1x1x8x3xbf16>
    %359 = vector.shape_cast %358 : vector<1x1x1x8x3xbf16> to vector<8x3xbf16>
    %360 = vector.extract_strided_slice %262 {offsets = [0, 28], sizes = [3, 128], strides = [1, 1]} : vector<3x256xbf16> to vector<3x128xbf16>
    %cst_423 = arith.constant dense<0.000000e+00> : vector<8x128xf32>
    %361 = tpu.matmul %359, %360, %cst_423 {dimension_numbers = #tpu.dot_dimension_numbers<[1], [0], [0], [1], [0, 0, 1, 1], [], []>} : vector<8x3xbf16>, vector<3x128xbf16>, vector<8x128xf32> -> vector<8x128xf32>
    %362 = arith.addf %357, %361 : vector<8x128xf32>
    %c2_424 = arith.constant 2 : index
    %c4_425 = arith.constant 4 : index
    %c0_426 = arith.constant 0 : index
    %c0_427 = arith.constant 0 : index
    %c0_428 = arith.constant 0 : index
    %363 = vector.load %arg3[%c2_424, %c4_425, %c0_426, %c0_427, %c0_428] : memref<5x5x5x8x3xbf16, #tpu.memory_space<vmem>>, vector<1x1x1x8x3xbf16>
    %364 = vector.shape_cast %363 : vector<1x1x1x8x3xbf16> to vector<8x3xbf16>
    %365 = vector.extract_strided_slice %262 {offsets = [0, 32], sizes = [3, 128], strides = [1, 1]} : vector<3x256xbf16> to vector<3x128xbf16>
    %cst_429 = arith.constant dense<0.000000e+00> : vector<8x128xf32>
    %366 = tpu.matmul %364, %365, %cst_429 {dimension_numbers = #tpu.dot_dimension_numbers<[1], [0], [0], [1], [0, 0, 1, 1], [], []>} : vector<8x3xbf16>, vector<3x128xbf16>, vector<8x128xf32> -> vector<8x128xf32>
    %367 = arith.addf %362, %366 : vector<8x128xf32>
    %c2_430 = arith.constant 2 : index
    %c4_431 = arith.constant 4 : index
    %c1_432 = arith.constant 1 : index
    %c0_433 = arith.constant 0 : index
    %c0_434 = arith.constant 0 : index
    %368 = vector.load %arg3[%c2_430, %c4_431, %c1_432, %c0_433, %c0_434] : memref<5x5x5x8x3xbf16, #tpu.memory_space<vmem>>, vector<1x1x1x8x3xbf16>
    %369 = vector.shape_cast %368 : vector<1x1x1x8x3xbf16> to vector<8x3xbf16>
    %370 = vector.extract_strided_slice %262 {offsets = [0, 33], sizes = [3, 128], strides = [1, 1]} : vector<3x256xbf16> to vector<3x128xbf16>
    %cst_435 = arith.constant dense<0.000000e+00> : vector<8x128xf32>
    %371 = tpu.matmul %369, %370, %cst_435 {dimension_numbers = #tpu.dot_dimension_numbers<[1], [0], [0], [1], [0, 0, 1, 1], [], []>} : vector<8x3xbf16>, vector<3x128xbf16>, vector<8x128xf32> -> vector<8x128xf32>
    %372 = arith.addf %367, %371 : vector<8x128xf32>
    %c2_436 = arith.constant 2 : index
    %c4_437 = arith.constant 4 : index
    %c2_438 = arith.constant 2 : index
    %c0_439 = arith.constant 0 : index
    %c0_440 = arith.constant 0 : index
    %373 = vector.load %arg3[%c2_436, %c4_437, %c2_438, %c0_439, %c0_440] : memref<5x5x5x8x3xbf16, #tpu.memory_space<vmem>>, vector<1x1x1x8x3xbf16>
    %374 = vector.shape_cast %373 : vector<1x1x1x8x3xbf16> to vector<8x3xbf16>
    %375 = vector.extract_strided_slice %262 {offsets = [0, 34], sizes = [3, 128], strides = [1, 1]} : vector<3x256xbf16> to vector<3x128xbf16>
    %cst_441 = arith.constant dense<0.000000e+00> : vector<8x128xf32>
    %376 = tpu.matmul %374, %375, %cst_441 {dimension_numbers = #tpu.dot_dimension_numbers<[1], [0], [0], [1], [0, 0, 1, 1], [], []>} : vector<8x3xbf16>, vector<3x128xbf16>, vector<8x128xf32> -> vector<8x128xf32>
    %377 = arith.addf %372, %376 : vector<8x128xf32>
    %c2_442 = arith.constant 2 : index
    %c4_443 = arith.constant 4 : index
    %c3_444 = arith.constant 3 : index
    %c0_445 = arith.constant 0 : index
    %c0_446 = arith.constant 0 : index
    %378 = vector.load %arg3[%c2_442, %c4_443, %c3_444, %c0_445, %c0_446] : memref<5x5x5x8x3xbf16, #tpu.memory_space<vmem>>, vector<1x1x1x8x3xbf16>
    %379 = vector.shape_cast %378 : vector<1x1x1x8x3xbf16> to vector<8x3xbf16>
    %380 = vector.extract_strided_slice %262 {offsets = [0, 35], sizes = [3, 128], strides = [1, 1]} : vector<3x256xbf16> to vector<3x128xbf16>
    %cst_447 = arith.constant dense<0.000000e+00> : vector<8x128xf32>
    %381 = tpu.matmul %379, %380, %cst_447 {dimension_numbers = #tpu.dot_dimension_numbers<[1], [0], [0], [1], [0, 0, 1, 1], [], []>} : vector<8x3xbf16>, vector<3x128xbf16>, vector<8x128xf32> -> vector<8x128xf32>
    %382 = arith.addf %377, %381 : vector<8x128xf32>
    %c2_448 = arith.constant 2 : index
    %c4_449 = arith.constant 4 : index
    %c4_450 = arith.constant 4 : index
    %c0_451 = arith.constant 0 : index
    %c0_452 = arith.constant 0 : index
    %383 = vector.load %arg3[%c2_448, %c4_449, %c4_450, %c0_451, %c0_452] : memref<5x5x5x8x3xbf16, #tpu.memory_space<vmem>>, vector<1x1x1x8x3xbf16>
    %384 = vector.shape_cast %383 : vector<1x1x1x8x3xbf16> to vector<8x3xbf16>
    %385 = vector.extract_strided_slice %262 {offsets = [0, 36], sizes = [3, 128], strides = [1, 1]} : vector<3x256xbf16> to vector<3x128xbf16>
    %cst_453 = arith.constant dense<0.000000e+00> : vector<8x128xf32>
    %386 = tpu.matmul %384, %385, %cst_453 {dimension_numbers = #tpu.dot_dimension_numbers<[1], [0], [0], [1], [0, 0, 1, 1], [], []>} : vector<8x3xbf16>, vector<3x128xbf16>, vector<8x128xf32> -> vector<8x128xf32>
    %387 = arith.addf %382, %386 : vector<8x128xf32>
    %c3_i32 = arith.constant 3 : i32
    %388 = arith.addi %arg1, %c3_i32 : i32
    %c0_454 = arith.constant 0 : index
    %389 = arith.index_cast %388 : i32 to index
    %c0_455 = arith.constant 0 : index
    %c0_456 = arith.constant 0 : index
    %390 = vector.load %arg2[%c0_454, %389, %c0_455, %c0_456] : memref<1x8x3x256xbf16, #tpu.memory_space<vmem>>, vector<1x1x3x256xbf16>
    %391 = vector.shape_cast %390 : vector<1x1x3x256xbf16> to vector<3x256xbf16>
    %c3_457 = arith.constant 3 : index
    %c0_458 = arith.constant 0 : index
    %c0_459 = arith.constant 0 : index
    %c0_460 = arith.constant 0 : index
    %c0_461 = arith.constant 0 : index
    %392 = vector.load %arg3[%c3_457, %c0_458, %c0_459, %c0_460, %c0_461] : memref<5x5x5x8x3xbf16, #tpu.memory_space<vmem>>, vector<1x1x1x8x3xbf16>
    %393 = vector.shape_cast %392 : vector<1x1x1x8x3xbf16> to vector<8x3xbf16>
    %394 = vector.extract_strided_slice %391 {offsets = [0, 0], sizes = [3, 128], strides = [1, 1]} : vector<3x256xbf16> to vector<3x128xbf16>
    %cst_462 = arith.constant dense<0.000000e+00> : vector<8x128xf32>
    %395 = tpu.matmul %393, %394, %cst_462 {dimension_numbers = #tpu.dot_dimension_numbers<[1], [0], [0], [1], [0, 0, 1, 1], [], []>} : vector<8x3xbf16>, vector<3x128xbf16>, vector<8x128xf32> -> vector<8x128xf32>
    %396 = arith.addf %387, %395 : vector<8x128xf32>
    %c3_463 = arith.constant 3 : index
    %c0_464 = arith.constant 0 : index
    %c1_465 = arith.constant 1 : index
    %c0_466 = arith.constant 0 : index
    %c0_467 = arith.constant 0 : index
    %397 = vector.load %arg3[%c3_463, %c0_464, %c1_465, %c0_466, %c0_467] : memref<5x5x5x8x3xbf16, #tpu.memory_space<vmem>>, vector<1x1x1x8x3xbf16>
    %398 = vector.shape_cast %397 : vector<1x1x1x8x3xbf16> to vector<8x3xbf16>
    %399 = vector.extract_strided_slice %391 {offsets = [0, 1], sizes = [3, 128], strides = [1, 1]} : vector<3x256xbf16> to vector<3x128xbf16>
    %cst_468 = arith.constant dense<0.000000e+00> : vector<8x128xf32>
    %400 = tpu.matmul %398, %399, %cst_468 {dimension_numbers = #tpu.dot_dimension_numbers<[1], [0], [0], [1], [0, 0, 1, 1], [], []>} : vector<8x3xbf16>, vector<3x128xbf16>, vector<8x128xf32> -> vector<8x128xf32>
    %401 = arith.addf %396, %400 : vector<8x128xf32>
    %c3_469 = arith.constant 3 : index
    %c0_470 = arith.constant 0 : index
    %c2_471 = arith.constant 2 : index
    %c0_472 = arith.constant 0 : index
    %c0_473 = arith.constant 0 : index
    %402 = vector.load %arg3[%c3_469, %c0_470, %c2_471, %c0_472, %c0_473] : memref<5x5x5x8x3xbf16, #tpu.memory_space<vmem>>, vector<1x1x1x8x3xbf16>
    %403 = vector.shape_cast %402 : vector<1x1x1x8x3xbf16> to vector<8x3xbf16>
    %404 = vector.extract_strided_slice %391 {offsets = [0, 2], sizes = [3, 128], strides = [1, 1]} : vector<3x256xbf16> to vector<3x128xbf16>
    %cst_474 = arith.constant dense<0.000000e+00> : vector<8x128xf32>
    %405 = tpu.matmul %403, %404, %cst_474 {dimension_numbers = #tpu.dot_dimension_numbers<[1], [0], [0], [1], [0, 0, 1, 1], [], []>} : vector<8x3xbf16>, vector<3x128xbf16>, vector<8x128xf32> -> vector<8x128xf32>
    %406 = arith.addf %401, %405 : vector<8x128xf32>
    %c3_475 = arith.constant 3 : index
    %c0_476 = arith.constant 0 : index
    %c3_477 = arith.constant 3 : index
    %c0_478 = arith.constant 0 : index
    %c0_479 = arith.constant 0 : index
    %407 = vector.load %arg3[%c3_475, %c0_476, %c3_477, %c0_478, %c0_479] : memref<5x5x5x8x3xbf16, #tpu.memory_space<vmem>>, vector<1x1x1x8x3xbf16>
    %408 = vector.shape_cast %407 : vector<1x1x1x8x3xbf16> to vector<8x3xbf16>
    %409 = vector.extract_strided_slice %391 {offsets = [0, 3], sizes = [3, 128], strides = [1, 1]} : vector<3x256xbf16> to vector<3x128xbf16>
    %cst_480 = arith.constant dense<0.000000e+00> : vector<8x128xf32>
    %410 = tpu.matmul %408, %409, %cst_480 {dimension_numbers = #tpu.dot_dimension_numbers<[1], [0], [0], [1], [0, 0, 1, 1], [], []>} : vector<8x3xbf16>, vector<3x128xbf16>, vector<8x128xf32> -> vector<8x128xf32>
    %411 = arith.addf %406, %410 : vector<8x128xf32>
    %c3_481 = arith.constant 3 : index
    %c0_482 = arith.constant 0 : index
    %c4_483 = arith.constant 4 : index
    %c0_484 = arith.constant 0 : index
    %c0_485 = arith.constant 0 : index
    %412 = vector.load %arg3[%c3_481, %c0_482, %c4_483, %c0_484, %c0_485] : memref<5x5x5x8x3xbf16, #tpu.memory_space<vmem>>, vector<1x1x1x8x3xbf16>
    %413 = vector.shape_cast %412 : vector<1x1x1x8x3xbf16> to vector<8x3xbf16>
    %414 = vector.extract_strided_slice %391 {offsets = [0, 4], sizes = [3, 128], strides = [1, 1]} : vector<3x256xbf16> to vector<3x128xbf16>
    %cst_486 = arith.constant dense<0.000000e+00> : vector<8x128xf32>
    %415 = tpu.matmul %413, %414, %cst_486 {dimension_numbers = #tpu.dot_dimension_numbers<[1], [0], [0], [1], [0, 0, 1, 1], [], []>} : vector<8x3xbf16>, vector<3x128xbf16>, vector<8x128xf32> -> vector<8x128xf32>
    %416 = arith.addf %411, %415 : vector<8x128xf32>
    %c3_487 = arith.constant 3 : index
    %c1_488 = arith.constant 1 : index
    %c0_489 = arith.constant 0 : index
    %c0_490 = arith.constant 0 : index
    %c0_491 = arith.constant 0 : index
    %417 = vector.load %arg3[%c3_487, %c1_488, %c0_489, %c0_490, %c0_491] : memref<5x5x5x8x3xbf16, #tpu.memory_space<vmem>>, vector<1x1x1x8x3xbf16>
    %418 = vector.shape_cast %417 : vector<1x1x1x8x3xbf16> to vector<8x3xbf16>
    %419 = vector.extract_strided_slice %391 {offsets = [0, 8], sizes = [3, 128], strides = [1, 1]} : vector<3x256xbf16> to vector<3x128xbf16>
    %cst_492 = arith.constant dense<0.000000e+00> : vector<8x128xf32>
    %420 = tpu.matmul %418, %419, %cst_492 {dimension_numbers = #tpu.dot_dimension_numbers<[1], [0], [0], [1], [0, 0, 1, 1], [], []>} : vector<8x3xbf16>, vector<3x128xbf16>, vector<8x128xf32> -> vector<8x128xf32>
    %421 = arith.addf %416, %420 : vector<8x128xf32>
    %c3_493 = arith.constant 3 : index
    %c1_494 = arith.constant 1 : index
    %c1_495 = arith.constant 1 : index
    %c0_496 = arith.constant 0 : index
    %c0_497 = arith.constant 0 : index
    %422 = vector.load %arg3[%c3_493, %c1_494, %c1_495, %c0_496, %c0_497] : memref<5x5x5x8x3xbf16, #tpu.memory_space<vmem>>, vector<1x1x1x8x3xbf16>
    %423 = vector.shape_cast %422 : vector<1x1x1x8x3xbf16> to vector<8x3xbf16>
    %424 = vector.extract_strided_slice %391 {offsets = [0, 9], sizes = [3, 128], strides = [1, 1]} : vector<3x256xbf16> to vector<3x128xbf16>
    %cst_498 = arith.constant dense<0.000000e+00> : vector<8x128xf32>
    %425 = tpu.matmul %423, %424, %cst_498 {dimension_numbers = #tpu.dot_dimension_numbers<[1], [0], [0], [1], [0, 0, 1, 1], [], []>} : vector<8x3xbf16>, vector<3x128xbf16>, vector<8x128xf32> -> vector<8x128xf32>
    %426 = arith.addf %421, %425 : vector<8x128xf32>
    %c3_499 = arith.constant 3 : index
    %c1_500 = arith.constant 1 : index
    %c2_501 = arith.constant 2 : index
    %c0_502 = arith.constant 0 : index
    %c0_503 = arith.constant 0 : index
    %427 = vector.load %arg3[%c3_499, %c1_500, %c2_501, %c0_502, %c0_503] : memref<5x5x5x8x3xbf16, #tpu.memory_space<vmem>>, vector<1x1x1x8x3xbf16>
    %428 = vector.shape_cast %427 : vector<1x1x1x8x3xbf16> to vector<8x3xbf16>
    %429 = vector.extract_strided_slice %391 {offsets = [0, 10], sizes = [3, 128], strides = [1, 1]} : vector<3x256xbf16> to vector<3x128xbf16>
    %cst_504 = arith.constant dense<0.000000e+00> : vector<8x128xf32>
    %430 = tpu.matmul %428, %429, %cst_504 {dimension_numbers = #tpu.dot_dimension_numbers<[1], [0], [0], [1], [0, 0, 1, 1], [], []>} : vector<8x3xbf16>, vector<3x128xbf16>, vector<8x128xf32> -> vector<8x128xf32>
    %431 = arith.addf %426, %430 : vector<8x128xf32>
    %c3_505 = arith.constant 3 : index
    %c1_506 = arith.constant 1 : index
    %c3_507 = arith.constant 3 : index
    %c0_508 = arith.constant 0 : index
    %c0_509 = arith.constant 0 : index
    %432 = vector.load %arg3[%c3_505, %c1_506, %c3_507, %c0_508, %c0_509] : memref<5x5x5x8x3xbf16, #tpu.memory_space<vmem>>, vector<1x1x1x8x3xbf16>
    %433 = vector.shape_cast %432 : vector<1x1x1x8x3xbf16> to vector<8x3xbf16>
    %434 = vector.extract_strided_slice %391 {offsets = [0, 11], sizes = [3, 128], strides = [1, 1]} : vector<3x256xbf16> to vector<3x128xbf16>
    %cst_510 = arith.constant dense<0.000000e+00> : vector<8x128xf32>
    %435 = tpu.matmul %433, %434, %cst_510 {dimension_numbers = #tpu.dot_dimension_numbers<[1], [0], [0], [1], [0, 0, 1, 1], [], []>} : vector<8x3xbf16>, vector<3x128xbf16>, vector<8x128xf32> -> vector<8x128xf32>
    %436 = arith.addf %431, %435 : vector<8x128xf32>
    %c3_511 = arith.constant 3 : index
    %c1_512 = arith.constant 1 : index
    %c4_513 = arith.constant 4 : index
    %c0_514 = arith.constant 0 : index
    %c0_515 = arith.constant 0 : index
    %437 = vector.load %arg3[%c3_511, %c1_512, %c4_513, %c0_514, %c0_515] : memref<5x5x5x8x3xbf16, #tpu.memory_space<vmem>>, vector<1x1x1x8x3xbf16>
    %438 = vector.shape_cast %437 : vector<1x1x1x8x3xbf16> to vector<8x3xbf16>
    %439 = vector.extract_strided_slice %391 {offsets = [0, 12], sizes = [3, 128], strides = [1, 1]} : vector<3x256xbf16> to vector<3x128xbf16>
    %cst_516 = arith.constant dense<0.000000e+00> : vector<8x128xf32>
    %440 = tpu.matmul %438, %439, %cst_516 {dimension_numbers = #tpu.dot_dimension_numbers<[1], [0], [0], [1], [0, 0, 1, 1], [], []>} : vector<8x3xbf16>, vector<3x128xbf16>, vector<8x128xf32> -> vector<8x128xf32>
    %441 = arith.addf %436, %440 : vector<8x128xf32>
    %c3_517 = arith.constant 3 : index
    %c2_518 = arith.constant 2 : index
    %c0_519 = arith.constant 0 : index
    %c0_520 = arith.constant 0 : index
    %c0_521 = arith.constant 0 : index
    %442 = vector.load %arg3[%c3_517, %c2_518, %c0_519, %c0_520, %c0_521] : memref<5x5x5x8x3xbf16, #tpu.memory_space<vmem>>, vector<1x1x1x8x3xbf16>
    %443 = vector.shape_cast %442 : vector<1x1x1x8x3xbf16> to vector<8x3xbf16>
    %444 = vector.extract_strided_slice %391 {offsets = [0, 16], sizes = [3, 128], strides = [1, 1]} : vector<3x256xbf16> to vector<3x128xbf16>
    %cst_522 = arith.constant dense<0.000000e+00> : vector<8x128xf32>
    %445 = tpu.matmul %443, %444, %cst_522 {dimension_numbers = #tpu.dot_dimension_numbers<[1], [0], [0], [1], [0, 0, 1, 1], [], []>} : vector<8x3xbf16>, vector<3x128xbf16>, vector<8x128xf32> -> vector<8x128xf32>
    %446 = arith.addf %441, %445 : vector<8x128xf32>
    %c3_523 = arith.constant 3 : index
    %c2_524 = arith.constant 2 : index
    %c1_525 = arith.constant 1 : index
    %c0_526 = arith.constant 0 : index
    %c0_527 = arith.constant 0 : index
    %447 = vector.load %arg3[%c3_523, %c2_524, %c1_525, %c0_526, %c0_527] : memref<5x5x5x8x3xbf16, #tpu.memory_space<vmem>>, vector<1x1x1x8x3xbf16>
    %448 = vector.shape_cast %447 : vector<1x1x1x8x3xbf16> to vector<8x3xbf16>
    %449 = vector.extract_strided_slice %391 {offsets = [0, 17], sizes = [3, 128], strides = [1, 1]} : vector<3x256xbf16> to vector<3x128xbf16>
    %cst_528 = arith.constant dense<0.000000e+00> : vector<8x128xf32>
    %450 = tpu.matmul %448, %449, %cst_528 {dimension_numbers = #tpu.dot_dimension_numbers<[1], [0], [0], [1], [0, 0, 1, 1], [], []>} : vector<8x3xbf16>, vector<3x128xbf16>, vector<8x128xf32> -> vector<8x128xf32>
    %451 = arith.addf %446, %450 : vector<8x128xf32>
    %c3_529 = arith.constant 3 : index
    %c2_530 = arith.constant 2 : index
    %c2_531 = arith.constant 2 : index
    %c0_532 = arith.constant 0 : index
    %c0_533 = arith.constant 0 : index
    %452 = vector.load %arg3[%c3_529, %c2_530, %c2_531, %c0_532, %c0_533] : memref<5x5x5x8x3xbf16, #tpu.memory_space<vmem>>, vector<1x1x1x8x3xbf16>
    %453 = vector.shape_cast %452 : vector<1x1x1x8x3xbf16> to vector<8x3xbf16>
    %454 = vector.extract_strided_slice %391 {offsets = [0, 18], sizes = [3, 128], strides = [1, 1]} : vector<3x256xbf16> to vector<3x128xbf16>
    %cst_534 = arith.constant dense<0.000000e+00> : vector<8x128xf32>
    %455 = tpu.matmul %453, %454, %cst_534 {dimension_numbers = #tpu.dot_dimension_numbers<[1], [0], [0], [1], [0, 0, 1, 1], [], []>} : vector<8x3xbf16>, vector<3x128xbf16>, vector<8x128xf32> -> vector<8x128xf32>
    %456 = arith.addf %451, %455 : vector<8x128xf32>
    %c3_535 = arith.constant 3 : index
    %c2_536 = arith.constant 2 : index
    %c3_537 = arith.constant 3 : index
    %c0_538 = arith.constant 0 : index
    %c0_539 = arith.constant 0 : index
    %457 = vector.load %arg3[%c3_535, %c2_536, %c3_537, %c0_538, %c0_539] : memref<5x5x5x8x3xbf16, #tpu.memory_space<vmem>>, vector<1x1x1x8x3xbf16>
    %458 = vector.shape_cast %457 : vector<1x1x1x8x3xbf16> to vector<8x3xbf16>
    %459 = vector.extract_strided_slice %391 {offsets = [0, 19], sizes = [3, 128], strides = [1, 1]} : vector<3x256xbf16> to vector<3x128xbf16>
    %cst_540 = arith.constant dense<0.000000e+00> : vector<8x128xf32>
    %460 = tpu.matmul %458, %459, %cst_540 {dimension_numbers = #tpu.dot_dimension_numbers<[1], [0], [0], [1], [0, 0, 1, 1], [], []>} : vector<8x3xbf16>, vector<3x128xbf16>, vector<8x128xf32> -> vector<8x128xf32>
    %461 = arith.addf %456, %460 : vector<8x128xf32>
    %c3_541 = arith.constant 3 : index
    %c2_542 = arith.constant 2 : index
    %c4_543 = arith.constant 4 : index
    %c0_544 = arith.constant 0 : index
    %c0_545 = arith.constant 0 : index
    %462 = vector.load %arg3[%c3_541, %c2_542, %c4_543, %c0_544, %c0_545] : memref<5x5x5x8x3xbf16, #tpu.memory_space<vmem>>, vector<1x1x1x8x3xbf16>
    %463 = vector.shape_cast %462 : vector<1x1x1x8x3xbf16> to vector<8x3xbf16>
    %464 = vector.extract_strided_slice %391 {offsets = [0, 20], sizes = [3, 128], strides = [1, 1]} : vector<3x256xbf16> to vector<3x128xbf16>
    %cst_546 = arith.constant dense<0.000000e+00> : vector<8x128xf32>
    %465 = tpu.matmul %463, %464, %cst_546 {dimension_numbers = #tpu.dot_dimension_numbers<[1], [0], [0], [1], [0, 0, 1, 1], [], []>} : vector<8x3xbf16>, vector<3x128xbf16>, vector<8x128xf32> -> vector<8x128xf32>
    %466 = arith.addf %461, %465 : vector<8x128xf32>
    %c3_547 = arith.constant 3 : index
    %c3_548 = arith.constant 3 : index
    %c0_549 = arith.constant 0 : index
    %c0_550 = arith.constant 0 : index
    %c0_551 = arith.constant 0 : index
    %467 = vector.load %arg3[%c3_547, %c3_548, %c0_549, %c0_550, %c0_551] : memref<5x5x5x8x3xbf16, #tpu.memory_space<vmem>>, vector<1x1x1x8x3xbf16>
    %468 = vector.shape_cast %467 : vector<1x1x1x8x3xbf16> to vector<8x3xbf16>
    %469 = vector.extract_strided_slice %391 {offsets = [0, 24], sizes = [3, 128], strides = [1, 1]} : vector<3x256xbf16> to vector<3x128xbf16>
    %cst_552 = arith.constant dense<0.000000e+00> : vector<8x128xf32>
    %470 = tpu.matmul %468, %469, %cst_552 {dimension_numbers = #tpu.dot_dimension_numbers<[1], [0], [0], [1], [0, 0, 1, 1], [], []>} : vector<8x3xbf16>, vector<3x128xbf16>, vector<8x128xf32> -> vector<8x128xf32>
    %471 = arith.addf %466, %470 : vector<8x128xf32>
    %c3_553 = arith.constant 3 : index
    %c3_554 = arith.constant 3 : index
    %c1_555 = arith.constant 1 : index
    %c0_556 = arith.constant 0 : index
    %c0_557 = arith.constant 0 : index
    %472 = vector.load %arg3[%c3_553, %c3_554, %c1_555, %c0_556, %c0_557] : memref<5x5x5x8x3xbf16, #tpu.memory_space<vmem>>, vector<1x1x1x8x3xbf16>
    %473 = vector.shape_cast %472 : vector<1x1x1x8x3xbf16> to vector<8x3xbf16>
    %474 = vector.extract_strided_slice %391 {offsets = [0, 25], sizes = [3, 128], strides = [1, 1]} : vector<3x256xbf16> to vector<3x128xbf16>
    %cst_558 = arith.constant dense<0.000000e+00> : vector<8x128xf32>
    %475 = tpu.matmul %473, %474, %cst_558 {dimension_numbers = #tpu.dot_dimension_numbers<[1], [0], [0], [1], [0, 0, 1, 1], [], []>} : vector<8x3xbf16>, vector<3x128xbf16>, vector<8x128xf32> -> vector<8x128xf32>
    %476 = arith.addf %471, %475 : vector<8x128xf32>
    %c3_559 = arith.constant 3 : index
    %c3_560 = arith.constant 3 : index
    %c2_561 = arith.constant 2 : index
    %c0_562 = arith.constant 0 : index
    %c0_563 = arith.constant 0 : index
    %477 = vector.load %arg3[%c3_559, %c3_560, %c2_561, %c0_562, %c0_563] : memref<5x5x5x8x3xbf16, #tpu.memory_space<vmem>>, vector<1x1x1x8x3xbf16>
    %478 = vector.shape_cast %477 : vector<1x1x1x8x3xbf16> to vector<8x3xbf16>
    %479 = vector.extract_strided_slice %391 {offsets = [0, 26], sizes = [3, 128], strides = [1, 1]} : vector<3x256xbf16> to vector<3x128xbf16>
    %cst_564 = arith.constant dense<0.000000e+00> : vector<8x128xf32>
    %480 = tpu.matmul %478, %479, %cst_564 {dimension_numbers = #tpu.dot_dimension_numbers<[1], [0], [0], [1], [0, 0, 1, 1], [], []>} : vector<8x3xbf16>, vector<3x128xbf16>, vector<8x128xf32> -> vector<8x128xf32>
    %481 = arith.addf %476, %480 : vector<8x128xf32>
    %c3_565 = arith.constant 3 : index
    %c3_566 = arith.constant 3 : index
    %c3_567 = arith.constant 3 : index
    %c0_568 = arith.constant 0 : index
    %c0_569 = arith.constant 0 : index
    %482 = vector.load %arg3[%c3_565, %c3_566, %c3_567, %c0_568, %c0_569] : memref<5x5x5x8x3xbf16, #tpu.memory_space<vmem>>, vector<1x1x1x8x3xbf16>
    %483 = vector.shape_cast %482 : vector<1x1x1x8x3xbf16> to vector<8x3xbf16>
    %484 = vector.extract_strided_slice %391 {offsets = [0, 27], sizes = [3, 128], strides = [1, 1]} : vector<3x256xbf16> to vector<3x128xbf16>
    %cst_570 = arith.constant dense<0.000000e+00> : vector<8x128xf32>
    %485 = tpu.matmul %483, %484, %cst_570 {dimension_numbers = #tpu.dot_dimension_numbers<[1], [0], [0], [1], [0, 0, 1, 1], [], []>} : vector<8x3xbf16>, vector<3x128xbf16>, vector<8x128xf32> -> vector<8x128xf32>
    %486 = arith.addf %481, %485 : vector<8x128xf32>
    %c3_571 = arith.constant 3 : index
    %c3_572 = arith.constant 3 : index
    %c4_573 = arith.constant 4 : index
    %c0_574 = arith.constant 0 : index
    %c0_575 = arith.constant 0 : index
    %487 = vector.load %arg3[%c3_571, %c3_572, %c4_573, %c0_574, %c0_575] : memref<5x5x5x8x3xbf16, #tpu.memory_space<vmem>>, vector<1x1x1x8x3xbf16>
    %488 = vector.shape_cast %487 : vector<1x1x1x8x3xbf16> to vector<8x3xbf16>
    %489 = vector.extract_strided_slice %391 {offsets = [0, 28], sizes = [3, 128], strides = [1, 1]} : vector<3x256xbf16> to vector<3x128xbf16>
    %cst_576 = arith.constant dense<0.000000e+00> : vector<8x128xf32>
    %490 = tpu.matmul %488, %489, %cst_576 {dimension_numbers = #tpu.dot_dimension_numbers<[1], [0], [0], [1], [0, 0, 1, 1], [], []>} : vector<8x3xbf16>, vector<3x128xbf16>, vector<8x128xf32> -> vector<8x128xf32>
    %491 = arith.addf %486, %490 : vector<8x128xf32>
    %c3_577 = arith.constant 3 : index
    %c4_578 = arith.constant 4 : index
    %c0_579 = arith.constant 0 : index
    %c0_580 = arith.constant 0 : index
    %c0_581 = arith.constant 0 : index
    %492 = vector.load %arg3[%c3_577, %c4_578, %c0_579, %c0_580, %c0_581] : memref<5x5x5x8x3xbf16, #tpu.memory_space<vmem>>, vector<1x1x1x8x3xbf16>
    %493 = vector.shape_cast %492 : vector<1x1x1x8x3xbf16> to vector<8x3xbf16>
    %494 = vector.extract_strided_slice %391 {offsets = [0, 32], sizes = [3, 128], strides = [1, 1]} : vector<3x256xbf16> to vector<3x128xbf16>
    %cst_582 = arith.constant dense<0.000000e+00> : vector<8x128xf32>
    %495 = tpu.matmul %493, %494, %cst_582 {dimension_numbers = #tpu.dot_dimension_numbers<[1], [0], [0], [1], [0, 0, 1, 1], [], []>} : vector<8x3xbf16>, vector<3x128xbf16>, vector<8x128xf32> -> vector<8x128xf32>
    %496 = arith.addf %491, %495 : vector<8x128xf32>
    %c3_583 = arith.constant 3 : index
    %c4_584 = arith.constant 4 : index
    %c1_585 = arith.constant 1 : index
    %c0_586 = arith.constant 0 : index
    %c0_587 = arith.constant 0 : index
    %497 = vector.load %arg3[%c3_583, %c4_584, %c1_585, %c0_586, %c0_587] : memref<5x5x5x8x3xbf16, #tpu.memory_space<vmem>>, vector<1x1x1x8x3xbf16>
    %498 = vector.shape_cast %497 : vector<1x1x1x8x3xbf16> to vector<8x3xbf16>
    %499 = vector.extract_strided_slice %391 {offsets = [0, 33], sizes = [3, 128], strides = [1, 1]} : vector<3x256xbf16> to vector<3x128xbf16>
    %cst_588 = arith.constant dense<0.000000e+00> : vector<8x128xf32>
    %500 = tpu.matmul %498, %499, %cst_588 {dimension_numbers = #tpu.dot_dimension_numbers<[1], [0], [0], [1], [0, 0, 1, 1], [], []>} : vector<8x3xbf16>, vector<3x128xbf16>, vector<8x128xf32> -> vector<8x128xf32>
    %501 = arith.addf %496, %500 : vector<8x128xf32>
    %c3_589 = arith.constant 3 : index
    %c4_590 = arith.constant 4 : index
    %c2_591 = arith.constant 2 : index
    %c0_592 = arith.constant 0 : index
    %c0_593 = arith.constant 0 : index
    %502 = vector.load %arg3[%c3_589, %c4_590, %c2_591, %c0_592, %c0_593] : memref<5x5x5x8x3xbf16, #tpu.memory_space<vmem>>, vector<1x1x1x8x3xbf16>
    %503 = vector.shape_cast %502 : vector<1x1x1x8x3xbf16> to vector<8x3xbf16>
    %504 = vector.extract_strided_slice %391 {offsets = [0, 34], sizes = [3, 128], strides = [1, 1]} : vector<3x256xbf16> to vector<3x128xbf16>
    %cst_594 = arith.constant dense<0.000000e+00> : vector<8x128xf32>
    %505 = tpu.matmul %503, %504, %cst_594 {dimension_numbers = #tpu.dot_dimension_numbers<[1], [0], [0], [1], [0, 0, 1, 1], [], []>} : vector<8x3xbf16>, vector<3x128xbf16>, vector<8x128xf32> -> vector<8x128xf32>
    %506 = arith.addf %501, %505 : vector<8x128xf32>
    %c3_595 = arith.constant 3 : index
    %c4_596 = arith.constant 4 : index
    %c3_597 = arith.constant 3 : index
    %c0_598 = arith.constant 0 : index
    %c0_599 = arith.constant 0 : index
    %507 = vector.load %arg3[%c3_595, %c4_596, %c3_597, %c0_598, %c0_599] : memref<5x5x5x8x3xbf16, #tpu.memory_space<vmem>>, vector<1x1x1x8x3xbf16>
    %508 = vector.shape_cast %507 : vector<1x1x1x8x3xbf16> to vector<8x3xbf16>
    %509 = vector.extract_strided_slice %391 {offsets = [0, 35], sizes = [3, 128], strides = [1, 1]} : vector<3x256xbf16> to vector<3x128xbf16>
    %cst_600 = arith.constant dense<0.000000e+00> : vector<8x128xf32>
    %510 = tpu.matmul %508, %509, %cst_600 {dimension_numbers = #tpu.dot_dimension_numbers<[1], [0], [0], [1], [0, 0, 1, 1], [], []>} : vector<8x3xbf16>, vector<3x128xbf16>, vector<8x128xf32> -> vector<8x128xf32>
    %511 = arith.addf %506, %510 : vector<8x128xf32>
    %c3_601 = arith.constant 3 : index
    %c4_602 = arith.constant 4 : index
    %c4_603 = arith.constant 4 : index
    %c0_604 = arith.constant 0 : index
    %c0_605 = arith.constant 0 : index
    %512 = vector.load %arg3[%c3_601, %c4_602, %c4_603, %c0_604, %c0_605] : memref<5x5x5x8x3xbf16, #tpu.memory_space<vmem>>, vector<1x1x1x8x3xbf16>
    %513 = vector.shape_cast %512 : vector<1x1x1x8x3xbf16> to vector<8x3xbf16>
    %514 = vector.extract_strided_slice %391 {offsets = [0, 36], sizes = [3, 128], strides = [1, 1]} : vector<3x256xbf16> to vector<3x128xbf16>
    %cst_606 = arith.constant dense<0.000000e+00> : vector<8x128xf32>
    %515 = tpu.matmul %513, %514, %cst_606 {dimension_numbers = #tpu.dot_dimension_numbers<[1], [0], [0], [1], [0, 0, 1, 1], [], []>} : vector<8x3xbf16>, vector<3x128xbf16>, vector<8x128xf32> -> vector<8x128xf32>
    %516 = arith.addf %511, %515 : vector<8x128xf32>
    %c4_i32 = arith.constant 4 : i32
    %517 = arith.addi %arg1, %c4_i32 : i32
    %c0_607 = arith.constant 0 : index
    %518 = arith.index_cast %517 : i32 to index
    %c0_608 = arith.constant 0 : index
    %c0_609 = arith.constant 0 : index
    %519 = vector.load %arg2[%c0_607, %518, %c0_608, %c0_609] : memref<1x8x3x256xbf16, #tpu.memory_space<vmem>>, vector<1x1x3x256xbf16>
    %520 = vector.shape_cast %519 : vector<1x1x3x256xbf16> to vector<3x256xbf16>
    %c4_610 = arith.constant 4 : index
    %c0_611 = arith.constant 0 : index
    %c0_612 = arith.constant 0 : index
    %c0_613 = arith.constant 0 : index
    %c0_614 = arith.constant 0 : index
    %521 = vector.load %arg3[%c4_610, %c0_611, %c0_612, %c0_613, %c0_614] : memref<5x5x5x8x3xbf16, #tpu.memory_space<vmem>>, vector<1x1x1x8x3xbf16>
    %522 = vector.shape_cast %521 : vector<1x1x1x8x3xbf16> to vector<8x3xbf16>
    %523 = vector.extract_strided_slice %520 {offsets = [0, 0], sizes = [3, 128], strides = [1, 1]} : vector<3x256xbf16> to vector<3x128xbf16>
    %cst_615 = arith.constant dense<0.000000e+00> : vector<8x128xf32>
    %524 = tpu.matmul %522, %523, %cst_615 {dimension_numbers = #tpu.dot_dimension_numbers<[1], [0], [0], [1], [0, 0, 1, 1], [], []>} : vector<8x3xbf16>, vector<3x128xbf16>, vector<8x128xf32> -> vector<8x128xf32>
    %525 = arith.addf %516, %524 : vector<8x128xf32>
    %c4_616 = arith.constant 4 : index
    %c0_617 = arith.constant 0 : index
    %c1_618 = arith.constant 1 : index
    %c0_619 = arith.constant 0 : index
    %c0_620 = arith.constant 0 : index
    %526 = vector.load %arg3[%c4_616, %c0_617, %c1_618, %c0_619, %c0_620] : memref<5x5x5x8x3xbf16, #tpu.memory_space<vmem>>, vector<1x1x1x8x3xbf16>
    %527 = vector.shape_cast %526 : vector<1x1x1x8x3xbf16> to vector<8x3xbf16>
    %528 = vector.extract_strided_slice %520 {offsets = [0, 1], sizes = [3, 128], strides = [1, 1]} : vector<3x256xbf16> to vector<3x128xbf16>
    %cst_621 = arith.constant dense<0.000000e+00> : vector<8x128xf32>
    %529 = tpu.matmul %527, %528, %cst_621 {dimension_numbers = #tpu.dot_dimension_numbers<[1], [0], [0], [1], [0, 0, 1, 1], [], []>} : vector<8x3xbf16>, vector<3x128xbf16>, vector<8x128xf32> -> vector<8x128xf32>
    %530 = arith.addf %525, %529 : vector<8x128xf32>
    %c4_622 = arith.constant 4 : index
    %c0_623 = arith.constant 0 : index
    %c2_624 = arith.constant 2 : index
    %c0_625 = arith.constant 0 : index
    %c0_626 = arith.constant 0 : index
    %531 = vector.load %arg3[%c4_622, %c0_623, %c2_624, %c0_625, %c0_626] : memref<5x5x5x8x3xbf16, #tpu.memory_space<vmem>>, vector<1x1x1x8x3xbf16>
    %532 = vector.shape_cast %531 : vector<1x1x1x8x3xbf16> to vector<8x3xbf16>
    %533 = vector.extract_strided_slice %520 {offsets = [0, 2], sizes = [3, 128], strides = [1, 1]} : vector<3x256xbf16> to vector<3x128xbf16>
    %cst_627 = arith.constant dense<0.000000e+00> : vector<8x128xf32>
    %534 = tpu.matmul %532, %533, %cst_627 {dimension_numbers = #tpu.dot_dimension_numbers<[1], [0], [0], [1], [0, 0, 1, 1], [], []>} : vector<8x3xbf16>, vector<3x128xbf16>, vector<8x128xf32> -> vector<8x128xf32>
    %535 = arith.addf %530, %534 : vector<8x128xf32>
    %c4_628 = arith.constant 4 : index
    %c0_629 = arith.constant 0 : index
    %c3_630 = arith.constant 3 : index
    %c0_631 = arith.constant 0 : index
    %c0_632 = arith.constant 0 : index
    %536 = vector.load %arg3[%c4_628, %c0_629, %c3_630, %c0_631, %c0_632] : memref<5x5x5x8x3xbf16, #tpu.memory_space<vmem>>, vector<1x1x1x8x3xbf16>
    %537 = vector.shape_cast %536 : vector<1x1x1x8x3xbf16> to vector<8x3xbf16>
    %538 = vector.extract_strided_slice %520 {offsets = [0, 3], sizes = [3, 128], strides = [1, 1]} : vector<3x256xbf16> to vector<3x128xbf16>
    %cst_633 = arith.constant dense<0.000000e+00> : vector<8x128xf32>
    %539 = tpu.matmul %537, %538, %cst_633 {dimension_numbers = #tpu.dot_dimension_numbers<[1], [0], [0], [1], [0, 0, 1, 1], [], []>} : vector<8x3xbf16>, vector<3x128xbf16>, vector<8x128xf32> -> vector<8x128xf32>
    %540 = arith.addf %535, %539 : vector<8x128xf32>
    %c4_634 = arith.constant 4 : index
    %c0_635 = arith.constant 0 : index
    %c4_636 = arith.constant 4 : index
    %c0_637 = arith.constant 0 : index
    %c0_638 = arith.constant 0 : index
    %541 = vector.load %arg3[%c4_634, %c0_635, %c4_636, %c0_637, %c0_638] : memref<5x5x5x8x3xbf16, #tpu.memory_space<vmem>>, vector<1x1x1x8x3xbf16>
    %542 = vector.shape_cast %541 : vector<1x1x1x8x3xbf16> to vector<8x3xbf16>
    %543 = vector.extract_strided_slice %520 {offsets = [0, 4], sizes = [3, 128], strides = [1, 1]} : vector<3x256xbf16> to vector<3x128xbf16>
    %cst_639 = arith.constant dense<0.000000e+00> : vector<8x128xf32>
    %544 = tpu.matmul %542, %543, %cst_639 {dimension_numbers = #tpu.dot_dimension_numbers<[1], [0], [0], [1], [0, 0, 1, 1], [], []>} : vector<8x3xbf16>, vector<3x128xbf16>, vector<8x128xf32> -> vector<8x128xf32>
    %545 = arith.addf %540, %544 : vector<8x128xf32>
    %c4_640 = arith.constant 4 : index
    %c1_641 = arith.constant 1 : index
    %c0_642 = arith.constant 0 : index
    %c0_643 = arith.constant 0 : index
    %c0_644 = arith.constant 0 : index
    %546 = vector.load %arg3[%c4_640, %c1_641, %c0_642, %c0_643, %c0_644] : memref<5x5x5x8x3xbf16, #tpu.memory_space<vmem>>, vector<1x1x1x8x3xbf16>
    %547 = vector.shape_cast %546 : vector<1x1x1x8x3xbf16> to vector<8x3xbf16>
    %548 = vector.extract_strided_slice %520 {offsets = [0, 8], sizes = [3, 128], strides = [1, 1]} : vector<3x256xbf16> to vector<3x128xbf16>
    %cst_645 = arith.constant dense<0.000000e+00> : vector<8x128xf32>
    %549 = tpu.matmul %547, %548, %cst_645 {dimension_numbers = #tpu.dot_dimension_numbers<[1], [0], [0], [1], [0, 0, 1, 1], [], []>} : vector<8x3xbf16>, vector<3x128xbf16>, vector<8x128xf32> -> vector<8x128xf32>
    %550 = arith.addf %545, %549 : vector<8x128xf32>
    %c4_646 = arith.constant 4 : index
    %c1_647 = arith.constant 1 : index
    %c1_648 = arith.constant 1 : index
    %c0_649 = arith.constant 0 : index
    %c0_650 = arith.constant 0 : index
    %551 = vector.load %arg3[%c4_646, %c1_647, %c1_648, %c0_649, %c0_650] : memref<5x5x5x8x3xbf16, #tpu.memory_space<vmem>>, vector<1x1x1x8x3xbf16>
    %552 = vector.shape_cast %551 : vector<1x1x1x8x3xbf16> to vector<8x3xbf16>
    %553 = vector.extract_strided_slice %520 {offsets = [0, 9], sizes = [3, 128], strides = [1, 1]} : vector<3x256xbf16> to vector<3x128xbf16>
    %cst_651 = arith.constant dense<0.000000e+00> : vector<8x128xf32>
    %554 = tpu.matmul %552, %553, %cst_651 {dimension_numbers = #tpu.dot_dimension_numbers<[1], [0], [0], [1], [0, 0, 1, 1], [], []>} : vector<8x3xbf16>, vector<3x128xbf16>, vector<8x128xf32> -> vector<8x128xf32>
    %555 = arith.addf %550, %554 : vector<8x128xf32>
    %c4_652 = arith.constant 4 : index
    %c1_653 = arith.constant 1 : index
    %c2_654 = arith.constant 2 : index
    %c0_655 = arith.constant 0 : index
    %c0_656 = arith.constant 0 : index
    %556 = vector.load %arg3[%c4_652, %c1_653, %c2_654, %c0_655, %c0_656] : memref<5x5x5x8x3xbf16, #tpu.memory_space<vmem>>, vector<1x1x1x8x3xbf16>
    %557 = vector.shape_cast %556 : vector<1x1x1x8x3xbf16> to vector<8x3xbf16>
    %558 = vector.extract_strided_slice %520 {offsets = [0, 10], sizes = [3, 128], strides = [1, 1]} : vector<3x256xbf16> to vector<3x128xbf16>
    %cst_657 = arith.constant dense<0.000000e+00> : vector<8x128xf32>
    %559 = tpu.matmul %557, %558, %cst_657 {dimension_numbers = #tpu.dot_dimension_numbers<[1], [0], [0], [1], [0, 0, 1, 1], [], []>} : vector<8x3xbf16>, vector<3x128xbf16>, vector<8x128xf32> -> vector<8x128xf32>
    %560 = arith.addf %555, %559 : vector<8x128xf32>
    %c4_658 = arith.constant 4 : index
    %c1_659 = arith.constant 1 : index
    %c3_660 = arith.constant 3 : index
    %c0_661 = arith.constant 0 : index
    %c0_662 = arith.constant 0 : index
    %561 = vector.load %arg3[%c4_658, %c1_659, %c3_660, %c0_661, %c0_662] : memref<5x5x5x8x3xbf16, #tpu.memory_space<vmem>>, vector<1x1x1x8x3xbf16>
    %562 = vector.shape_cast %561 : vector<1x1x1x8x3xbf16> to vector<8x3xbf16>
    %563 = vector.extract_strided_slice %520 {offsets = [0, 11], sizes = [3, 128], strides = [1, 1]} : vector<3x256xbf16> to vector<3x128xbf16>
    %cst_663 = arith.constant dense<0.000000e+00> : vector<8x128xf32>
    %564 = tpu.matmul %562, %563, %cst_663 {dimension_numbers = #tpu.dot_dimension_numbers<[1], [0], [0], [1], [0, 0, 1, 1], [], []>} : vector<8x3xbf16>, vector<3x128xbf16>, vector<8x128xf32> -> vector<8x128xf32>
    %565 = arith.addf %560, %564 : vector<8x128xf32>
    %c4_664 = arith.constant 4 : index
    %c1_665 = arith.constant 1 : index
    %c4_666 = arith.constant 4 : index
    %c0_667 = arith.constant 0 : index
    %c0_668 = arith.constant 0 : index
    %566 = vector.load %arg3[%c4_664, %c1_665, %c4_666, %c0_667, %c0_668] : memref<5x5x5x8x3xbf16, #tpu.memory_space<vmem>>, vector<1x1x1x8x3xbf16>
    %567 = vector.shape_cast %566 : vector<1x1x1x8x3xbf16> to vector<8x3xbf16>
    %568 = vector.extract_strided_slice %520 {offsets = [0, 12], sizes = [3, 128], strides = [1, 1]} : vector<3x256xbf16> to vector<3x128xbf16>
    %cst_669 = arith.constant dense<0.000000e+00> : vector<8x128xf32>
    %569 = tpu.matmul %567, %568, %cst_669 {dimension_numbers = #tpu.dot_dimension_numbers<[1], [0], [0], [1], [0, 0, 1, 1], [], []>} : vector<8x3xbf16>, vector<3x128xbf16>, vector<8x128xf32> -> vector<8x128xf32>
    %570 = arith.addf %565, %569 : vector<8x128xf32>
    %c4_670 = arith.constant 4 : index
    %c2_671 = arith.constant 2 : index
    %c0_672 = arith.constant 0 : index
    %c0_673 = arith.constant 0 : index
    %c0_674 = arith.constant 0 : index
    %571 = vector.load %arg3[%c4_670, %c2_671, %c0_672, %c0_673, %c0_674] : memref<5x5x5x8x3xbf16, #tpu.memory_space<vmem>>, vector<1x1x1x8x3xbf16>
    %572 = vector.shape_cast %571 : vector<1x1x1x8x3xbf16> to vector<8x3xbf16>
    %573 = vector.extract_strided_slice %520 {offsets = [0, 16], sizes = [3, 128], strides = [1, 1]} : vector<3x256xbf16> to vector<3x128xbf16>
    %cst_675 = arith.constant dense<0.000000e+00> : vector<8x128xf32>
    %574 = tpu.matmul %572, %573, %cst_675 {dimension_numbers = #tpu.dot_dimension_numbers<[1], [0], [0], [1], [0, 0, 1, 1], [], []>} : vector<8x3xbf16>, vector<3x128xbf16>, vector<8x128xf32> -> vector<8x128xf32>
    %575 = arith.addf %570, %574 : vector<8x128xf32>
    %c4_676 = arith.constant 4 : index
    %c2_677 = arith.constant 2 : index
    %c1_678 = arith.constant 1 : index
    %c0_679 = arith.constant 0 : index
    %c0_680 = arith.constant 0 : index
    %576 = vector.load %arg3[%c4_676, %c2_677, %c1_678, %c0_679, %c0_680] : memref<5x5x5x8x3xbf16, #tpu.memory_space<vmem>>, vector<1x1x1x8x3xbf16>
    %577 = vector.shape_cast %576 : vector<1x1x1x8x3xbf16> to vector<8x3xbf16>
    %578 = vector.extract_strided_slice %520 {offsets = [0, 17], sizes = [3, 128], strides = [1, 1]} : vector<3x256xbf16> to vector<3x128xbf16>
    %cst_681 = arith.constant dense<0.000000e+00> : vector<8x128xf32>
    %579 = tpu.matmul %577, %578, %cst_681 {dimension_numbers = #tpu.dot_dimension_numbers<[1], [0], [0], [1], [0, 0, 1, 1], [], []>} : vector<8x3xbf16>, vector<3x128xbf16>, vector<8x128xf32> -> vector<8x128xf32>
    %580 = arith.addf %575, %579 : vector<8x128xf32>
    %c4_682 = arith.constant 4 : index
    %c2_683 = arith.constant 2 : index
    %c2_684 = arith.constant 2 : index
    %c0_685 = arith.constant 0 : index
    %c0_686 = arith.constant 0 : index
    %581 = vector.load %arg3[%c4_682, %c2_683, %c2_684, %c0_685, %c0_686] : memref<5x5x5x8x3xbf16, #tpu.memory_space<vmem>>, vector<1x1x1x8x3xbf16>
    %582 = vector.shape_cast %581 : vector<1x1x1x8x3xbf16> to vector<8x3xbf16>
    %583 = vector.extract_strided_slice %520 {offsets = [0, 18], sizes = [3, 128], strides = [1, 1]} : vector<3x256xbf16> to vector<3x128xbf16>
    %cst_687 = arith.constant dense<0.000000e+00> : vector<8x128xf32>
    %584 = tpu.matmul %582, %583, %cst_687 {dimension_numbers = #tpu.dot_dimension_numbers<[1], [0], [0], [1], [0, 0, 1, 1], [], []>} : vector<8x3xbf16>, vector<3x128xbf16>, vector<8x128xf32> -> vector<8x128xf32>
    %585 = arith.addf %580, %584 : vector<8x128xf32>
    %c4_688 = arith.constant 4 : index
    %c2_689 = arith.constant 2 : index
    %c3_690 = arith.constant 3 : index
    %c0_691 = arith.constant 0 : index
    %c0_692 = arith.constant 0 : index
    %586 = vector.load %arg3[%c4_688, %c2_689, %c3_690, %c0_691, %c0_692] : memref<5x5x5x8x3xbf16, #tpu.memory_space<vmem>>, vector<1x1x1x8x3xbf16>
    %587 = vector.shape_cast %586 : vector<1x1x1x8x3xbf16> to vector<8x3xbf16>
    %588 = vector.extract_strided_slice %520 {offsets = [0, 19], sizes = [3, 128], strides = [1, 1]} : vector<3x256xbf16> to vector<3x128xbf16>
    %cst_693 = arith.constant dense<0.000000e+00> : vector<8x128xf32>
    %589 = tpu.matmul %587, %588, %cst_693 {dimension_numbers = #tpu.dot_dimension_numbers<[1], [0], [0], [1], [0, 0, 1, 1], [], []>} : vector<8x3xbf16>, vector<3x128xbf16>, vector<8x128xf32> -> vector<8x128xf32>
    %590 = arith.addf %585, %589 : vector<8x128xf32>
    %c4_694 = arith.constant 4 : index
    %c2_695 = arith.constant 2 : index
    %c4_696 = arith.constant 4 : index
    %c0_697 = arith.constant 0 : index
    %c0_698 = arith.constant 0 : index
    %591 = vector.load %arg3[%c4_694, %c2_695, %c4_696, %c0_697, %c0_698] : memref<5x5x5x8x3xbf16, #tpu.memory_space<vmem>>, vector<1x1x1x8x3xbf16>
    %592 = vector.shape_cast %591 : vector<1x1x1x8x3xbf16> to vector<8x3xbf16>
    %593 = vector.extract_strided_slice %520 {offsets = [0, 20], sizes = [3, 128], strides = [1, 1]} : vector<3x256xbf16> to vector<3x128xbf16>
    %cst_699 = arith.constant dense<0.000000e+00> : vector<8x128xf32>
    %594 = tpu.matmul %592, %593, %cst_699 {dimension_numbers = #tpu.dot_dimension_numbers<[1], [0], [0], [1], [0, 0, 1, 1], [], []>} : vector<8x3xbf16>, vector<3x128xbf16>, vector<8x128xf32> -> vector<8x128xf32>
    %595 = arith.addf %590, %594 : vector<8x128xf32>
    %c4_700 = arith.constant 4 : index
    %c3_701 = arith.constant 3 : index
    %c0_702 = arith.constant 0 : index
    %c0_703 = arith.constant 0 : index
    %c0_704 = arith.constant 0 : index
    %596 = vector.load %arg3[%c4_700, %c3_701, %c0_702, %c0_703, %c0_704] : memref<5x5x5x8x3xbf16, #tpu.memory_space<vmem>>, vector<1x1x1x8x3xbf16>
    %597 = vector.shape_cast %596 : vector<1x1x1x8x3xbf16> to vector<8x3xbf16>
    %598 = vector.extract_strided_slice %520 {offsets = [0, 24], sizes = [3, 128], strides = [1, 1]} : vector<3x256xbf16> to vector<3x128xbf16>
    %cst_705 = arith.constant dense<0.000000e+00> : vector<8x128xf32>
    %599 = tpu.matmul %597, %598, %cst_705 {dimension_numbers = #tpu.dot_dimension_numbers<[1], [0], [0], [1], [0, 0, 1, 1], [], []>} : vector<8x3xbf16>, vector<3x128xbf16>, vector<8x128xf32> -> vector<8x128xf32>
    %600 = arith.addf %595, %599 : vector<8x128xf32>
    %c4_706 = arith.constant 4 : index
    %c3_707 = arith.constant 3 : index
    %c1_708 = arith.constant 1 : index
    %c0_709 = arith.constant 0 : index
    %c0_710 = arith.constant 0 : index
    %601 = vector.load %arg3[%c4_706, %c3_707, %c1_708, %c0_709, %c0_710] : memref<5x5x5x8x3xbf16, #tpu.memory_space<vmem>>, vector<1x1x1x8x3xbf16>
    %602 = vector.shape_cast %601 : vector<1x1x1x8x3xbf16> to vector<8x3xbf16>
    %603 = vector.extract_strided_slice %520 {offsets = [0, 25], sizes = [3, 128], strides = [1, 1]} : vector<3x256xbf16> to vector<3x128xbf16>
    %cst_711 = arith.constant dense<0.000000e+00> : vector<8x128xf32>
    %604 = tpu.matmul %602, %603, %cst_711 {dimension_numbers = #tpu.dot_dimension_numbers<[1], [0], [0], [1], [0, 0, 1, 1], [], []>} : vector<8x3xbf16>, vector<3x128xbf16>, vector<8x128xf32> -> vector<8x128xf32>
    %605 = arith.addf %600, %604 : vector<8x128xf32>
    %c4_712 = arith.constant 4 : index
    %c3_713 = arith.constant 3 : index
    %c2_714 = arith.constant 2 : index
    %c0_715 = arith.constant 0 : index
    %c0_716 = arith.constant 0 : index
    %606 = vector.load %arg3[%c4_712, %c3_713, %c2_714, %c0_715, %c0_716] : memref<5x5x5x8x3xbf16, #tpu.memory_space<vmem>>, vector<1x1x1x8x3xbf16>
    %607 = vector.shape_cast %606 : vector<1x1x1x8x3xbf16> to vector<8x3xbf16>
    %608 = vector.extract_strided_slice %520 {offsets = [0, 26], sizes = [3, 128], strides = [1, 1]} : vector<3x256xbf16> to vector<3x128xbf16>
    %cst_717 = arith.constant dense<0.000000e+00> : vector<8x128xf32>
    %609 = tpu.matmul %607, %608, %cst_717 {dimension_numbers = #tpu.dot_dimension_numbers<[1], [0], [0], [1], [0, 0, 1, 1], [], []>} : vector<8x3xbf16>, vector<3x128xbf16>, vector<8x128xf32> -> vector<8x128xf32>
    %610 = arith.addf %605, %609 : vector<8x128xf32>
    %c4_718 = arith.constant 4 : index
    %c3_719 = arith.constant 3 : index
    %c3_720 = arith.constant 3 : index
    %c0_721 = arith.constant 0 : index
    %c0_722 = arith.constant 0 : index
    %611 = vector.load %arg3[%c4_718, %c3_719, %c3_720, %c0_721, %c0_722] : memref<5x5x5x8x3xbf16, #tpu.memory_space<vmem>>, vector<1x1x1x8x3xbf16>
    %612 = vector.shape_cast %611 : vector<1x1x1x8x3xbf16> to vector<8x3xbf16>
    %613 = vector.extract_strided_slice %520 {offsets = [0, 27], sizes = [3, 128], strides = [1, 1]} : vector<3x256xbf16> to vector<3x128xbf16>
    %cst_723 = arith.constant dense<0.000000e+00> : vector<8x128xf32>
    %614 = tpu.matmul %612, %613, %cst_723 {dimension_numbers = #tpu.dot_dimension_numbers<[1], [0], [0], [1], [0, 0, 1, 1], [], []>} : vector<8x3xbf16>, vector<3x128xbf16>, vector<8x128xf32> -> vector<8x128xf32>
    %615 = arith.addf %610, %614 : vector<8x128xf32>
    %c4_724 = arith.constant 4 : index
    %c3_725 = arith.constant 3 : index
    %c4_726 = arith.constant 4 : index
    %c0_727 = arith.constant 0 : index
    %c0_728 = arith.constant 0 : index
    %616 = vector.load %arg3[%c4_724, %c3_725, %c4_726, %c0_727, %c0_728] : memref<5x5x5x8x3xbf16, #tpu.memory_space<vmem>>, vector<1x1x1x8x3xbf16>
    %617 = vector.shape_cast %616 : vector<1x1x1x8x3xbf16> to vector<8x3xbf16>
    %618 = vector.extract_strided_slice %520 {offsets = [0, 28], sizes = [3, 128], strides = [1, 1]} : vector<3x256xbf16> to vector<3x128xbf16>
    %cst_729 = arith.constant dense<0.000000e+00> : vector<8x128xf32>
    %619 = tpu.matmul %617, %618, %cst_729 {dimension_numbers = #tpu.dot_dimension_numbers<[1], [0], [0], [1], [0, 0, 1, 1], [], []>} : vector<8x3xbf16>, vector<3x128xbf16>, vector<8x128xf32> -> vector<8x128xf32>
    %620 = arith.addf %615, %619 : vector<8x128xf32>
    %c4_730 = arith.constant 4 : index
    %c4_731 = arith.constant 4 : index
    %c0_732 = arith.constant 0 : index
    %c0_733 = arith.constant 0 : index
    %c0_734 = arith.constant 0 : index
    %621 = vector.load %arg3[%c4_730, %c4_731, %c0_732, %c0_733, %c0_734] : memref<5x5x5x8x3xbf16, #tpu.memory_space<vmem>>, vector<1x1x1x8x3xbf16>
    %622 = vector.shape_cast %621 : vector<1x1x1x8x3xbf16> to vector<8x3xbf16>
    %623 = vector.extract_strided_slice %520 {offsets = [0, 32], sizes = [3, 128], strides = [1, 1]} : vector<3x256xbf16> to vector<3x128xbf16>
    %cst_735 = arith.constant dense<0.000000e+00> : vector<8x128xf32>
    %624 = tpu.matmul %622, %623, %cst_735 {dimension_numbers = #tpu.dot_dimension_numbers<[1], [0], [0], [1], [0, 0, 1, 1], [], []>} : vector<8x3xbf16>, vector<3x128xbf16>, vector<8x128xf32> -> vector<8x128xf32>
    %625 = arith.addf %620, %624 : vector<8x128xf32>
    %c4_736 = arith.constant 4 : index
    %c4_737 = arith.constant 4 : index
    %c1_738 = arith.constant 1 : index
    %c0_739 = arith.constant 0 : index
    %c0_740 = arith.constant 0 : index
    %626 = vector.load %arg3[%c4_736, %c4_737, %c1_738, %c0_739, %c0_740] : memref<5x5x5x8x3xbf16, #tpu.memory_space<vmem>>, vector<1x1x1x8x3xbf16>
    %627 = vector.shape_cast %626 : vector<1x1x1x8x3xbf16> to vector<8x3xbf16>
    %628 = vector.extract_strided_slice %520 {offsets = [0, 33], sizes = [3, 128], strides = [1, 1]} : vector<3x256xbf16> to vector<3x128xbf16>
    %cst_741 = arith.constant dense<0.000000e+00> : vector<8x128xf32>
    %629 = tpu.matmul %627, %628, %cst_741 {dimension_numbers = #tpu.dot_dimension_numbers<[1], [0], [0], [1], [0, 0, 1, 1], [], []>} : vector<8x3xbf16>, vector<3x128xbf16>, vector<8x128xf32> -> vector<8x128xf32>
    %630 = arith.addf %625, %629 : vector<8x128xf32>
    %c4_742 = arith.constant 4 : index
    %c4_743 = arith.constant 4 : index
    %c2_744 = arith.constant 2 : index
    %c0_745 = arith.constant 0 : index
    %c0_746 = arith.constant 0 : index
    %631 = vector.load %arg3[%c4_742, %c4_743, %c2_744, %c0_745, %c0_746] : memref<5x5x5x8x3xbf16, #tpu.memory_space<vmem>>, vector<1x1x1x8x3xbf16>
    %632 = vector.shape_cast %631 : vector<1x1x1x8x3xbf16> to vector<8x3xbf16>
    %633 = vector.extract_strided_slice %520 {offsets = [0, 34], sizes = [3, 128], strides = [1, 1]} : vector<3x256xbf16> to vector<3x128xbf16>
    %cst_747 = arith.constant dense<0.000000e+00> : vector<8x128xf32>
    %634 = tpu.matmul %632, %633, %cst_747 {dimension_numbers = #tpu.dot_dimension_numbers<[1], [0], [0], [1], [0, 0, 1, 1], [], []>} : vector<8x3xbf16>, vector<3x128xbf16>, vector<8x128xf32> -> vector<8x128xf32>
    %635 = arith.addf %630, %634 : vector<8x128xf32>
    %c4_748 = arith.constant 4 : index
    %c4_749 = arith.constant 4 : index
    %c3_750 = arith.constant 3 : index
    %c0_751 = arith.constant 0 : index
    %c0_752 = arith.constant 0 : index
    %636 = vector.load %arg3[%c4_748, %c4_749, %c3_750, %c0_751, %c0_752] : memref<5x5x5x8x3xbf16, #tpu.memory_space<vmem>>, vector<1x1x1x8x3xbf16>
    %637 = vector.shape_cast %636 : vector<1x1x1x8x3xbf16> to vector<8x3xbf16>
    %638 = vector.extract_strided_slice %520 {offsets = [0, 35], sizes = [3, 128], strides = [1, 1]} : vector<3x256xbf16> to vector<3x128xbf16>
    %cst_753 = arith.constant dense<0.000000e+00> : vector<8x128xf32>
    %639 = tpu.matmul %637, %638, %cst_753 {dimension_numbers = #tpu.dot_dimension_numbers<[1], [0], [0], [1], [0, 0, 1, 1], [], []>} : vector<8x3xbf16>, vector<3x128xbf16>, vector<8x128xf32> -> vector<8x128xf32>
    %640 = arith.addf %635, %639 : vector<8x128xf32>
    %c4_754 = arith.constant 4 : index
    %c4_755 = arith.constant 4 : index
    %c4_756 = arith.constant 4 : index
    %c0_757 = arith.constant 0 : index
    %c0_758 = arith.constant 0 : index
    %641 = vector.load %arg3[%c4_754, %c4_755, %c4_756, %c0_757, %c0_758] : memref<5x5x5x8x3xbf16, #tpu.memory_space<vmem>>, vector<1x1x1x8x3xbf16>
    %642 = vector.shape_cast %641 : vector<1x1x1x8x3xbf16> to vector<8x3xbf16>
    %643 = vector.extract_strided_slice %520 {offsets = [0, 36], sizes = [3, 128], strides = [1, 1]} : vector<3x256xbf16> to vector<3x128xbf16>
    %cst_759 = arith.constant dense<0.000000e+00> : vector<8x128xf32>
    %644 = tpu.matmul %642, %643, %cst_759 {dimension_numbers = #tpu.dot_dimension_numbers<[1], [0], [0], [1], [0, 0, 1, 1], [], []>} : vector<8x3xbf16>, vector<3x128xbf16>, vector<8x128xf32> -> vector<8x128xf32>
    %645 = arith.addf %640, %644 : vector<8x128xf32>
    %c0_760 = arith.constant 0 : index
    %c0_761 = arith.constant 0 : index
    %646 = vector.load %arg4[%c0_760, %c0_761] : memref<8x1xf32, #tpu.memory_space<vmem>>, vector<8x1xf32>
    %647 = vector.broadcast %646 : vector<8x1xf32> to vector<8x128xf32>
    %648 = arith.addf %645, %647 : vector<8x128xf32>
    %c0_762 = arith.constant 0 : index
    %c0_763 = arith.constant 0 : index
    %c0_764 = arith.constant 0 : index
    %c0_765 = arith.constant 0 : index
    %649 = vector.load %arg5[%c0_762, %c0_763, %c0_764, %c0_765] : memref<1x1x8x128xf32, #tpu.memory_space<vmem>>, vector<1x1x8x128xf32>
    %650 = vector.shape_cast %649 : vector<1x1x8x128xf32> to vector<8x128xf32>
    %651 = vector.shape_cast %648 : vector<8x128xf32> to vector<1x1x8x128xf32>
    tpu.vector_store %arg5[%c0_762, %c0_763, %c0_764, %c0_765], %651 {strides = array<i32>} : memref<1x1x8x128xf32, #tpu.memory_space<vmem>>, vector<1x1x8x128xf32>,
    return
  }
  func.func @transform_0(%arg0: i32, %arg1: i32) -> (i32, i32, i32, i32) {
    %c0_i32 = arith.constant 0 : i32
    %c0_i32_0 = arith.constant 0 : i32
    %c0_i32_1 = arith.constant 0 : i32
    %c0_i32_2 = arith.constant 0 : i32
    return %arg0, %c0_i32, %c0_i32_0, %c0_i32_1 : i32, i32, i32, i32
  }
  func.func @transform_1(%arg0: i32, %arg1: i32) -> (i32, i32, i32, i32, i32) {
    %c0_i32 = arith.constant 0 : i32
    %c0_i32_0 = arith.constant 0 : i32
    %c0_i32_1 = arith.constant 0 : i32
    %c0_i32_2 = arith.constant 0 : i32
    %c0_i32_3 = arith.constant 0 : i32
    %c0_i32_4 = arith.constant 0 : i32
    return %c0_i32, %c0_i32_0, %c0_i32_1, %c0_i32_2, %c0_i32_3 : i32, i32, i32, i32, i32
  }
  func.func @transform_2(%arg0: i32, %arg1: i32) -> (i32, i32) {
    %c0_i32 = arith.constant 0 : i32
    %c0_i32_0 = arith.constant 0 : i32
    %c0_i32_1 = arith.constant 0 : i32
    return %c0_i32, %c0_i32_0 : i32, i32
  }
  func.func @transform_3(%arg0: i32, %arg1: i32) -> (i32, i32, i32, i32) {
    %c0_i32 = arith.constant 0 : i32
    %c0_i32_0 = arith.constant 0 : i32
    %c0_i32_1 = arith.constant 0 : i32
    return %arg0, %arg1, %c0_i32, %c0_i32_0 : i32, i32, i32, i32
  }
}

</mosaic_0001>

<llo_original>
// kernel: conv3dnet_forward.1
$region0: #{conv3dnet_forward.1}
  #allocation0 [shape = 'u32[]', space=smem, size = 0x4, offset = 0x4, fixed_abs, tag = 'smem constant byte address 0x4 - core index']
  #allocation1 [shape = 'u32[144,128]{1,0:T(1,128)}', space=vmem, size = 0x12000, scoped, tag = 'internal scratch']
  %s0 = inlined_call_operand.hbm [shape: bf16[2,8,3,256], index: 0, kind: input, shape index: {}]
  %s1 = inlined_call_operand.hbm [shape: bf16[5,5,5,8,3], index: 1, kind: input, shape index: {}]
  %s2 = inlined_call_operand.hbm [shape: f32[8,1], index: 2, kind: input, shape index: {}]
  %s3 = inlined_call_operand.hbm [shape: f32[2,4,8,128], index: 3, kind: output, shape index: {}]
  %s4 = sld [smem:[#allocation0]]
  $region57: #{conv3dnet_forward.1} parent=0
    _
  %s6 = ssub.s32 1, %s4
  %s7 = scalar_select 0, %s6, %s4
  $region1: #{conv3dnet_forward.1} parent=0
    #allocation2 [shape = 'u8[32768]{0}', space=vmem, size = 0x8000, scoped, tag = 'input window, operand 0']
    #allocation3 [shape = 's32[2]{0}', space=sflag, size = 0x8, scoped, tag = 'scoped memory for conv3dnet_forward.1']
    #allocation4 [shape = 's32[2]{0}', space=sflag, size = 0x8, scoped, tag = 'scoped memory for conv3dnet_forward.1']
    #allocation5 [shape = 'u8[256000]{0}', space=vmem, size = 0x3e800, scoped, tag = 'input window, operand 1, single buffered']
    #allocation6 [shape = 's32[1]{0}', space=sflag, size = 0x4, scoped, tag = 'scoped memory for conv3dnet_forward.1']
    #allocation7 [shape = 'u8[4096]{0}', space=vmem, size = 0x1000, scoped, tag = 'input window, operand 2, single buffered']
    #allocation8 [shape = 'u8[8192]{0}', space=vmem, size = 0x2000, scoped, tag = 'output window, operand 0']
    %8 = vsyncpa [#allocation3], 0
    %s9 = scalar_lea.sflag [#allocation3], 1
    %10 = vsyncpa %s9, 0
    %11 = vsyncpa [#allocation6], 0
    %12 = vsyncpa [#allocation4], 0
    %s13 = scalar_lea.sflag [#allocation4], 1
    %14 = vsyncpa %s13, 0
    loop: start=0, step=1, limit=10
    $region2: #{conv3dnet_forward.1} parent=1 // loop_pre_header
      _
    $region3: #{conv3dnet_forward.1} parent=1 // loop_header
      %s16 = sphi 0, %s20
      %p17 = scmp.ge.s32.totalorder %s16, 10
      %s23 = sphi 0, %s35
      %s24 = sphi 0, %s31
      %s25 = sphi 0, %s23
      %s26 = sphi 0, %s24
      %s27 = sphi 0, %s25
      %s28 = sphi 0, %s26
      %s38 = sphi 0, %s40
      %s41 = sphi 0, %s38
      %s42 = sphi 0, %s41
      %s58 = sphi 0, %s42
      %s62 = sphi 0, %s62
      %s64 = sphi 0, %s62
      %s65 = sphi 0, %s64
      %s79 = sphi 0, %s65
      %s83 = sphi 0, %s83
      %s85 = sphi 0, %s83
      %s86 = sphi 0, %s85
      %s100 = sphi 0, %s86
      %s108 = sphi 0, %s110
      %s111 = sphi 0, %s108
      %s112 = sphi 0, %s111
      %s128 = sphi 0, %s112
    $region4: #{conv3dnet_forward.1} parent=1 // loop_header_branch
      %19 = sbr.rel (%p17) target = $region8
    $region5: #{conv3dnet_forward.1} parent=1 // loop_body
      %s21 = ssub.s32 %s16, 1
      %s22 = ssub.s32 %s16, 2
      %s29 = sadd.s32 1, %s24
      %p30 = scmp.ge.s32.totalorder %s29, 4
      %s31 = scalar_select %p30, 0, %s29
      %s32 = sadd.s32 1, %s23
      %s33 = scalar_select %p30, %s32, %s23
      %p34 = scmp.ge.s32.totalorder %s33, 2
      %s35 = scalar_select %p34, 0, %s33
      %s36 = ssub.s32 %s23, %s35
      %p37 = scmp.eq.s32.totalorder %s36, 0
      %s39 = sadd.s32 %s38, 1
      %s40 = scalar_select %p37, %s38, %s39
      %p43 = pneg %p37
      %p44 = scmp.eq.s32.totalorder %s16, 7
      %p45 = por %p43, %p44
      %p46 = scmp.ne.s32.totalorder %s38, %s41
      %p47 = scmp.eq.s32.totalorder %s16, 0
      %p48 = por %p46, %p47
      %p49 = scmp.ne.s32.totalorder %s38, %s41
      %p50 = scmp.eq.s32.totalorder %s21, 7
      %p51 = por %p49, %p50
      %p52 = scmp.ne.s32.totalorder %s41, %s42
      %p53 = scmp.eq.s32.totalorder %s21, 0
      %p54 = por %p52, %p53
      %p55 = scmp.ne.s32.totalorder %s41, %s42
      %p56 = scmp.eq.s32.totalorder %s22, 7
      %p57 = por %p55, %p56
      %p59 = scmp.ne.s32.totalorder %s42, %s58
      %p60 = scmp.eq.s32.totalorder %s22, 0
      %p61 = por %p59, %p60
      %s63 = sadd.s32 %s62, 1
      %p66 = scmp.eq.s32.totalorder %s16, 7
      %p67 = scmp.ne.s32.totalorder %s62, %s64
      %p68 = scmp.eq.s32.totalorder %s16, 0
      %p69 = por %p67, %p68
      %p70 = scmp.ne.s32.totalorder %s62, %s64
      %p71 = scmp.eq.s32.totalorder %s21, 7
      %p72 = por %p70, %p71
      %p73 = scmp.ne.s32.totalorder %s64, %s65
      %p74 = scmp.eq.s32.totalorder %s21, 0
      %p75 = por %p73, %p74
      %p76 = scmp.ne.s32.totalorder %s64, %s65
      %p77 = scmp.eq.s32.totalorder %s22, 7
      %p78 = por %p76, %p77
      %p80 = scmp.ne.s32.totalorder %s65, %s79
      %p81 = scmp.eq.s32.totalorder %s22, 0
      %p82 = por %p80, %p81
      %s84 = sadd.s32 %s83, 1
      %p87 = scmp.eq.s32.totalorder %s16, 7
      %p88 = scmp.ne.s32.totalorder %s83, %s85
      %p89 = scmp.eq.s32.totalorder %s16, 0
      %p90 = por %p88, %p89
      %p91 = scmp.ne.s32.totalorder %s83, %s85
      %p92 = scmp.eq.s32.totalorder %s21, 7
      %p93 = por %p91, %p92
      %p94 = scmp.ne.s32.totalorder %s85, %s86
      %p95 = scmp.eq.s32.totalorder %s21, 0
      %p96 = por %p94, %p95
      %p97 = scmp.ne.s32.totalorder %s85, %s86
      %p98 = scmp.eq.s32.totalorder %s22, 7
      %p99 = por %p97, %p98
      %p101 = scmp.ne.s32.totalorder %s86, %s100
      %p102 = scmp.eq.s32.totalorder %s22, 0
      %p103 = por %p101, %p102
      %s104 = ssub.s32 %s23, %s35
      %s105 = ssub.s32 %s24, %s31
      %s106 = sor.u32 %s104, %s105
      %p107 = scmp.eq.s32.totalorder %s106, 0
      %s109 = sadd.s32 %s108, 1
      %s110 = scalar_select %p107, %s108, %s109
      %p113 = pneg %p107
      %p114 = scmp.eq.s32.totalorder %s16, 7
      %p115 = por %p113, %p114
      %p116 = scmp.ne.s32.totalorder %s108, %s111
      %p117 = scmp.eq.s32.totalorder %s16, 0
      %p118 = por %p116, %p117
      %p119 = scmp.ne.s32.totalorder %s108, %s111
      %p120 = scmp.eq.s32.totalorder %s21, 7
      %p121 = por %p119, %p120
      %p122 = scmp.ne.s32.totalorder %s111, %s112
      %p123 = scmp.eq.s32.totalorder %s21, 0
      %p124 = por %p122, %p123
      %p125 = scmp.ne.s32.totalorder %s111, %s112
      %p126 = scmp.eq.s32.totalorder %s22, 7
      %p127 = por %p125, %p126
      %p129 = scmp.ne.s32.totalorder %s112, %s128
      %p130 = scmp.eq.s32.totalorder %s22, 0
      %p131 = por %p129, %p130
      %p132 = scmp.le.s32.totalorder 1, %s16
      %p133 = scmp.lt.s32.totalorder %s16, 9
      %p134 = pnand %p132, %p133
      %p135 = pneg %p134
      // Predicated region
      $region9: #{conv3dnet_forward.1} parent=5 // pred_check
        _
      $region10: #{conv3dnet_forward.1} parent=5 // pred_check_branch
        %137 = sbr.rel (%p134) target = $region12
      $region11: #{conv3dnet_forward.1} parent=5 // pred_region
        %s138 = ssub.s32 %s16, 1
        // Predicated region
        $region13: #{conv3dnet_forward.1} parent=11 // pred_check
          %p139 = pneg %p75
        $region14: #{conv3dnet_forward.1} parent=11 // pred_check_branch
          %141 = sbr.rel (%p139) target = $region16
        $region15: #{conv3dnet_forward.1} parent=11 // pred_region
          %s143 = ssub.s32 8000, 8000
          %144 = vsyncadd [#allocation6], %s143
          %s145 = sshll.u32 [#allocation5], 4
          %s146 = int_to_ptr.vmem [resolvable:$true] %s145
          %151 = dma.hbm_to_vmem [thread:$0]  %s1, 8000, %s146, [#allocation6], 64, 64, 4
        $region16: #{conv3dnet_forward.1} parent=11 // pred_fallthru
          _
        // Predicated region
        $region17: #{conv3dnet_forward.1} parent=11 // pred_check
          %p152 = pneg %p96
        $region18: #{conv3dnet_forward.1} parent=11 // pred_check_branch
          %154 = sbr.rel (%p152) target = $region20
        $region19: #{conv3dnet_forward.1} parent=11 // pred_region
          %s156 = ssub.s32 128, 128
          %157 = vsyncadd [#allocation6], %s156
          %s159 = sshll.u32 [#allocation7], 4
          %s160 = int_to_ptr.vmem [resolvable:$true] %s159
          %162 = dma.hbm_to_vmem [thread:$0]  %s2, 128, %s160, [#allocation6]
        $region20: #{conv3dnet_forward.1} parent=11 // pred_fallthru
          _
      $region12: #{conv3dnet_forward.1} parent=5 // pred_fallthru
        _
      %p163 = scmp.lt.s32.totalorder %s16, 8
      // Predicated region
      $region21: #{conv3dnet_forward.1} parent=5 // pred_check
        %p164 = pneg %p163
      $region22: #{conv3dnet_forward.1} parent=5 // pred_check_branch
        %166 = sbr.rel (%p164) target = $region24
      $region23: #{conv3dnet_forward.1} parent=5 // pred_region
        // Predicated region
        $region25: #{conv3dnet_forward.1} parent=23 // pred_check
          %p167 = pneg %p48
        $region26: #{conv3dnet_forward.1} parent=23 // pred_check_branch
          %169 = sbr.rel (%p167) target = $region28
        $region27: #{conv3dnet_forward.1} parent=23 // pred_region
          %s170 = sand.u32 %s38, 1
          %s171 = scalar_lea.sflag [#allocation3], %s170
          %s172 = sand.u32 %s38, 1
          %s173 = smul.addr %s172, 32
          %s174 = scalar_lea.vmem [#allocation2], %s173
          %s176 = ssub.s32 512, 512
          %177 = vsyncadd %s171, %s176
          %s178 = smul.addr %s23, 16
          %s179 = smul.addr %s178, 32
          %s180 = scalar_lea.hbm %s0, %s179
          %s181 = sshll.u32 %s174, 4
          %s182 = int_to_ptr.vmem [resolvable:$true] %s181
          %187 = dma.hbm_to_vmem [thread:$0]  %s180, 512, %s182, %s171, 64, 64, 4
        $region28: #{conv3dnet_forward.1} parent=23 // pred_fallthru
          _
      $region24: #{conv3dnet_forward.1} parent=5 // pred_fallthru
        _
      %p188 = scmp.le.s32.totalorder 1, %s16
      %p189 = scmp.lt.s32.totalorder %s16, 9
      %p190 = pnand %p188, %p189
      %p191 = pneg %p190
      // Predicated region
      $region29: #{conv3dnet_forward.1} parent=5 // pred_check
        _
      $region30: #{conv3dnet_forward.1} parent=5 // pred_check_branch
        %193 = sbr.rel (%p190) target = $region32
      $region31: #{conv3dnet_forward.1} parent=5 // pred_region
        %s194 = ssub.s32 %s16, 1
        %s195 = sand.u32 %s41, 1
        %s196 = scalar_lea.sflag [#allocation3], %s195
        %s197 = sand.u32 %s41, 1
        %s198 = smul.addr %s197, 32
        %s199 = scalar_lea.vmem [#allocation2], %s198
        // Predicated region
        $region33: #{conv3dnet_forward.1} parent=31 // pred_check
          %p200 = pneg %p54
        $region34: #{conv3dnet_forward.1} parent=31 // pred_check_branch
          %202 = sbr.rel (%p200) target = $region36
        $region35: #{conv3dnet_forward.1} parent=31 // pred_region
          %203 = dma.done %s196, 512
        $region36: #{conv3dnet_forward.1} parent=31 // pred_fallthru
          _
        // Predicated region
        $region37: #{conv3dnet_forward.1} parent=31 // pred_check
          %p204 = pneg %p75
        $region38: #{conv3dnet_forward.1} parent=31 // pred_check_branch
          %206 = sbr.rel (%p204) target = $region40
        $region39: #{conv3dnet_forward.1} parent=31 // pred_region
          %207 = dma.done [#allocation6], 8000
        $region40: #{conv3dnet_forward.1} parent=31 // pred_fallthru
          _
        // Predicated region
        $region41: #{conv3dnet_forward.1} parent=31 // pred_check
          %p208 = pneg %p96
        $region42: #{conv3dnet_forward.1} parent=31 // pred_check_branch
          %210 = sbr.rel (%p208) target = $region44
        $region43: #{conv3dnet_forward.1} parent=31 // pred_region
          %211 = dma.done [#allocation6], 128
        $region44: #{conv3dnet_forward.1} parent=31 // pred_fallthru
          _
        %s212 = sand.u32 %s41, 1
        %s213 = scalar_lea.sflag [#allocation3], %s212
        %s214 = sand.u32 %s41, 1
        %s215 = smul.addr %s214, 32
        %s216 = scalar_lea.vmem [#allocation2], %s215
        %p217 = pneg %p54
        %p218 = pneg %p51
        %p219 = pneg %p75
        %p220 = pneg %p72
        %p221 = pneg %p96
        %p222 = pneg %p93
        %p223 = pneg %p124
        %p224 = pneg %p121
        %s225 = sand.u32 %s111, 1
        %s226 = scalar_lea.sflag [#allocation4], %s225
        %s227 = sand.u32 %s111, 1
        %s228 = smul.addr %s227, 8
        %s229 = scalar_lea.vmem [#allocation8], %s228
        %s231 = smul.u32 %s26, 2
        %s232 = smul.addr %s231, 2
        %s233 = scalar_lea.vmem %s199, %s232 [#allocation2]
        %v234 = vld [vmem:[%s233] sm:$0xf]
        %v235 = vld [vmem:[#allocation5] sm:$0xf]
        %s236 = scalar_lea.vmem [#allocation5], 4
        %v237 = vld [vmem:[%s236] sm:$0xf]
        %v240 = vunpack.c.l.s4 1983009808
        %v241 = vunpack.c.0.s8 %v240
        %v242 = vlaneseq
        %v243 = vshrl.u32 %v242, 7
        %v244 = vsub.s32 %v241, %v243
        %v245 = vrot.slane %v234, %v244
        %v246 = vcombine.high %v245, %v245
        %247 = vrot.lane.b32.xlu0 %v245, 127
        %v248 = vpop.permute.xlu0 %247
        %249 = vrot.lane.b32.xlu0 %v246, 127
        %v250 = vpop.permute.xlu0 %249
        %vm251 = vcmask 1039360
        %v252 = vsel %vm251, %v248, %v250
        %vm253 = vcmask 23552
        %v255 = vsel %vm253, %v237, 0
        %vm257 = vcmask 1040384
        %vm258 = vcmask 1041408
        %v259 = vsel %vm257, 4294967295, 65535
        %v260 = vsel %vm258, %v259, 0
        %v262 = vand.u32 %v252, %v260
        %264 = vmatprep.subr.bf16.mxu0 0
        %265 = vmatpush1.bf16.msra.mxu0 %v262
        %266 = vmatprep.subr.bf16.mxu0 0
        %267 = vmatpush1.bf16.msra.mxu0 0
        %268 = vmatprep.subr.bf16.mxu0 0
        %269 = vmatpush1.bf16.msra.mxu0 0
        %270 = vmatprep.subr.bf16.mxu0 0
        %271 = vmatpush1.bf16.msra.mxu0 0
        %272 = vmatprep.subr.bf16.mxu0 0
        %273 = vmatpush1.bf16.msra.mxu0 0
        %274 = vmatprep.subr.bf16.mxu0 0
        %275 = vmatpush1.bf16.msra.mxu0 0
        %276 = vmatprep.subr.bf16.mxu0 0
        %277 = vmatpush1.bf16.msra.mxu0 0
        %278 = vmatprep.subr.bf16.mxu0 0
        %279 = vmatpush1.bf16.msra.mxu0 0
        %280 = vmatprep.subr.bf16.mxu0 0
        %281 = vmatpush1.bf16.msra.mxu0 0
        %282 = vmatprep.subr.bf16.mxu0 0
        %283 = vmatpush1.bf16.msra.mxu0 0
        %284 = vmatprep.subr.bf16.mxu0 0
        %285 = vmatpush1.bf16.msra.mxu0 0
        %286 = vmatprep.subr.bf16.mxu0 0
        %287 = vmatpush1.bf16.msra.mxu0 0
        %288 = vmatprep.subr.bf16.mxu0 0
        %289 = vmatpush1.bf16.msra.mxu0 0
        %290 = vmatprep.subr.bf16.mxu0 0
        %291 = vmatpush1.bf16.msra.mxu0 0
        %292 = vmatprep.subr.bf16.mxu0 0
        %293 = vmatpush1.bf16.msra.mxu0 0
        %294 = vmatprep.subr.bf16.mxu0 0
        %295 = vmatpush1.bf16.msra.mxu0 0
        %296 = vmatprep.mubr.bf16.mxu0 0
        %297 = vmatmul.mubr.bf16.gmra.mrb[0].mxu0 %v255
        %v298 = vpop.f32.mrb[0].mxu0
        %v299 = vadd.f32 0.0, %v298
        %v300 = vpop.f32.mrb[0].mxu0
        %v301 = vpop.f32.mrb[0].mxu0
        %v302 = vpop.f32.mrb[0].mxu0
        %303 = vdwg.mxu0
        %v305 = vsel %vm253, %v235, 0
        %v308 = vand.u32 %v234, %v260
        %310 = vmatprep.subr.bf16.mxu0 0
        %311 = vmatpush1.bf16.msra.mxu0 %v308
        %312 = vmatprep.subr.bf16.mxu0 0
        %313 = vmatpush1.bf16.msra.mxu0 0
        %314 = vmatprep.subr.bf16.mxu0 0
        %315 = vmatpush1.bf16.msra.mxu0 0
        %316 = vmatprep.subr.bf16.mxu0 0
        %317 = vmatpush1.bf16.msra.mxu0 0
        %318 = vmatprep.subr.bf16.mxu0 0
        %319 = vmatpush1.bf16.msra.mxu0 0
        %320 = vmatprep.subr.bf16.mxu0 0
        %321 = vmatpush1.bf16.msra.mxu0 0
        %322 = vmatprep.subr.bf16.mxu0 0
        %323 = vmatpush1.bf16.msra.mxu0 0
        %324 = vmatprep.subr.bf16.mxu0 0
        %325 = vmatpush1.bf16.msra.mxu0 0
        %326 = vmatprep.subr.bf16.mxu0 0
        %327 = vmatpush1.bf16.msra.mxu0 0
        %328 = vmatprep.subr.bf16.mxu0 0
        %329 = vmatpush1.bf16.msra.mxu0 0
        %330 = vmatprep.subr.bf16.mxu0 0
        %331 = vmatpush1.bf16.msra.mxu0 0
        %332 = vmatprep.subr.bf16.mxu0 0
        %333 = vmatpush1.bf16.msra.mxu0 0
        %334 = vmatprep.subr.bf16.mxu0 0
        %335 = vmatpush1.bf16.msra.mxu0 0
        %336 = vmatprep.subr.bf16.mxu0 0
        %337 = vmatpush1.bf16.msra.mxu0 0
        %338 = vmatprep.subr.bf16.mxu0 0
        %339 = vmatpush1.bf16.msra.mxu0 0
        %340 = vmatprep.subr.bf16.mxu0 0
        %341 = vmatpush1.bf16.msra.mxu0 0
        %342 = vmatprep.mubr.bf16.mxu0 0
        %343 = vmatmul.mubr.bf16.gmra.mrb[0].mxu0 %v305
        %v344 = vpop.f32.mrb[0].mxu0
        %v345 = vadd.f32 %v299, %v344
        %v346 = vpop.f32.mrb[0].mxu0
        %v347 = vpop.f32.mrb[0].mxu0
        %v348 = vpop.f32.mrb[0].mxu0
        %349 = vdwg.mxu0
        %s350 = scalar_lea.vmem [#allocation5], 8
        %v351 = vld [vmem:[%s350] sm:$0xf]
        %352 = vrot.lane.b32.xlu0 %v245, 126
        %v353 = vpop.permute.xlu0 %352
        %354 = vrot.lane.b32.xlu0 %v246, 126
        %v355 = vpop.permute.xlu0 %354
        %vm356 = vcmask 1031168
        %v357 = vsel %vm356, %v353, %v355
        %v359 = vsel %vm253, %v351, 0
        %v362 = vand.u32 %v357, %v260
        %364 = vmatprep.subr.bf16.mxu0 0
        %365 = vmatpush1.bf16.msra.mxu0 %v362
        %366 = vmatprep.subr.bf16.mxu0 0
        %367 = vmatpush1.bf16.msra.mxu0 0
        %368 = vmatprep.subr.bf16.mxu0 0
        %369 = vmatpush1.bf16.msra.mxu0 0
        %370 = vmatprep.subr.bf16.mxu0 0
        %371 = vmatpush1.bf16.msra.mxu0 0
        %372 = vmatprep.subr.bf16.mxu0 0
        %373 = vmatpush1.bf16.msra.mxu0 0
        %374 = vmatprep.subr.bf16.mxu0 0
        %375 = vmatpush1.bf16.msra.mxu0 0
        %376 = vmatprep.subr.bf16.mxu0 0
        %377 = vmatpush1.bf16.msra.mxu0 0
        %378 = vmatprep.subr.bf16.mxu0 0
        %379 = vmatpush1.bf16.msra.mxu0 0
        %380 = vmatprep.subr.bf16.mxu0 0
        %381 = vmatpush1.bf16.msra.mxu0 0
        %382 = vmatprep.subr.bf16.mxu0 0
        %383 = vmatpush1.bf16.msra.mxu0 0
        %384 = vmatprep.subr.bf16.mxu0 0
        %385 = vmatpush1.bf16.msra.mxu0 0
        %386 = vmatprep.subr.bf16.mxu0 0
        %387 = vmatpush1.bf16.msra.mxu0 0
        %388 = vmatprep.subr.bf16.mxu0 0
        %389 = vmatpush1.bf16.msra.mxu0 0
        %390 = vmatprep.subr.bf16.mxu0 0
        %391 = vmatpush1.bf16.msra.mxu0 0
        %392 = vmatprep.subr.bf16.mxu0 0
        %393 = vmatpush1.bf16.msra.mxu0 0
        %394 = vmatprep.subr.bf16.mxu0 0
        %395 = vmatpush1.bf16.msra.mxu0 0
        %396 = vmatprep.mubr.bf16.mxu0 0
        %397 = vmatmul.mubr.bf16.gmra.mrb[0].mxu0 %v359
        %v398 = vpop.f32.mrb[0].mxu0
        %v399 = vadd.f32 0.0, %v398
        %v400 = vpop.f32.mrb[0].mxu0
        %v401 = vpop.f32.mrb[0].mxu0
        %v402 = vpop.f32.mrb[0].mxu0
        %403 = vdwg.mxu0
        %v404 = vadd.f32 %v345, %v399
        %s405 = scalar_lea.vmem [#allocation5], 12
        %v406 = vld [vmem:[%s405] sm:$0xf]
        %407 = vrot.lane.b32.xlu0 %v245, 125
        %v408 = vpop.permute.xlu0 %407
        %409 = vrot.lane.b32.xlu0 %v246, 125
        %v410 = vpop.permute.xlu0 %409
        %vm411 = vcmask 1022976
        %v412 = vsel %vm411, %v408, %v410
        %v414 = vsel %vm253, %v406, 0
        %v417 = vand.u32 %v412, %v260
        %419 = vmatprep.subr.bf16.mxu0 0
        %420 = vmatpush1.bf16.msra.mxu0 %v417
        %421 = vmatprep.subr.bf16.mxu0 0
        %422 = vmatpush1.bf16.msra.mxu0 0
        %423 = vmatprep.subr.bf16.mxu0 0
        %424 = vmatpush1.bf16.msra.mxu0 0
        %425 = vmatprep.subr.bf16.mxu0 0
        %426 = vmatpush1.bf16.msra.mxu0 0
        %427 = vmatprep.subr.bf16.mxu0 0
        %428 = vmatpush1.bf16.msra.mxu0 0
        %429 = vmatprep.subr.bf16.mxu0 0
        %430 = vmatpush1.bf16.msra.mxu0 0
        %431 = vmatprep.subr.bf16.mxu0 0
        %432 = vmatpush1.bf16.msra.mxu0 0
        %433 = vmatprep.subr.bf16.mxu0 0
        %434 = vmatpush1.bf16.msra.mxu0 0
        %435 = vmatprep.subr.bf16.mxu0 0
        %436 = vmatpush1.bf16.msra.mxu0 0
        %437 = vmatprep.subr.bf16.mxu0 0
        %438 = vmatpush1.bf16.msra.mxu0 0
        %439 = vmatprep.subr.bf16.mxu0 0
        %440 = vmatpush1.bf16.msra.mxu0 0
        %441 = vmatprep.subr.bf16.mxu0 0
        %442 = vmatpush1.bf16.msra.mxu0 0
        %443 = vmatprep.subr.bf16.mxu0 0
        %444 = vmatpush1.bf16.msra.mxu0 0
        %445 = vmatprep.subr.bf16.mxu0 0
        %446 = vmatpush1.bf16.msra.mxu0 0
        %447 = vmatprep.subr.bf16.mxu0 0
        %448 = vmatpush1.bf16.msra.mxu0 0
        %449 = vmatprep.subr.bf16.mxu0 0
        %450 = vmatpush1.bf16.msra.mxu0 0
        %451 = vmatprep.mubr.bf16.mxu0 0
        %452 = vmatmul.mubr.bf16.gmra.mrb[0].mxu0 %v414
        %v453 = vpop.f32.mrb[0].mxu0
        %v454 = vadd.f32 0.0, %v453
        %v455 = vpop.f32.mrb[0].mxu0
        %v456 = vpop.f32.mrb[0].mxu0
        %v457 = vpop.f32.mrb[0].mxu0
        %458 = vdwg.mxu0
        %v459 = vadd.f32 %v404, %v454
        %s460 = scalar_lea.vmem [#allocation5], 16
        %v461 = vld [vmem:[%s460] sm:$0xf]
        %462 = vrot.lane.b32.xlu0 %v245, 124
        %v463 = vpop.permute.xlu0 %462
        %464 = vrot.lane.b32.xlu0 %v246, 124
        %v465 = vpop.permute.xlu0 %464
        %vm466 = vcmask 1014784
        %v467 = vsel %vm466, %v463, %v465
        %v469 = vsel %vm253, %v461, 0
        %v472 = vand.u32 %v467, %v260
        %474 = vmatprep.subr.bf16.mxu0 0
        %475 = vmatpush1.bf16.msra.mxu0 %v472
        %476 = vmatprep.subr.bf16.mxu0 0
        %477 = vmatpush1.bf16.msra.mxu0 0
        %478 = vmatprep.subr.bf16.mxu0 0
        %479 = vmatpush1.bf16.msra.mxu0 0
        %480 = vmatprep.subr.bf16.mxu0 0
        %481 = vmatpush1.bf16.msra.mxu0 0
        %482 = vmatprep.subr.bf16.mxu0 0
        %483 = vmatpush1.bf16.msra.mxu0 0
        %484 = vmatprep.subr.bf16.mxu0 0
        %485 = vmatpush1.bf16.msra.mxu0 0
        %486 = vmatprep.subr.bf16.mxu0 0
        %487 = vmatpush1.bf16.msra.mxu0 0
        %488 = vmatprep.subr.bf16.mxu0 0
        %489 = vmatpush1.bf16.msra.mxu0 0
        %490 = vmatprep.subr.bf16.mxu0 0
        %491 = vmatpush1.bf16.msra.mxu0 0
        %492 = vmatprep.subr.bf16.mxu0 0
        %493 = vmatpush1.bf16.msra.mxu0 0
        %494 = vmatprep.subr.bf16.mxu0 0
        %495 = vmatpush1.bf16.msra.mxu0 0
        %496 = vmatprep.subr.bf16.mxu0 0
        %497 = vmatpush1.bf16.msra.mxu0 0
        %498 = vmatprep.subr.bf16.mxu0 0
        %499 = vmatpush1.bf16.msra.mxu0 0
        %500 = vmatprep.subr.bf16.mxu0 0
        %501 = vmatpush1.bf16.msra.mxu0 0
        %502 = vmatprep.subr.bf16.mxu0 0
        %503 = vmatpush1.bf16.msra.mxu0 0
        %504 = vmatprep.subr.bf16.mxu0 0
        %505 = vmatpush1.bf16.msra.mxu0 0
        %506 = vmatprep.mubr.bf16.mxu0 0
        %507 = vmatmul.mubr.bf16.gmra.mrb[0].mxu0 %v469
        %v508 = vpop.f32.mrb[0].mxu0
        %v509 = vadd.f32 0.0, %v508
        %v510 = vpop.f32.mrb[0].mxu0
        %v511 = vpop.f32.mrb[0].mxu0
        %v512 = vpop.f32.mrb[0].mxu0
        %513 = vdwg.mxu0
        %v514 = vadd.f32 %v459, %v509
        %s515 = scalar_lea.vmem [#allocation5], 20
        %v516 = vld [vmem:[%s515] sm:$0xf]
        %517 = vrot.lane.b32.xlu0 %v245, 120
        %v518 = vpop.permute.xlu0 %517
        %519 = vrot.lane.b32.xlu0 %v246, 120
        %v520 = vpop.permute.xlu0 %519
        %vm521 = vcmask 982016
        %v522 = vsel %vm521, %v518, %v520
        %v524 = vsel %vm253, %v516, 0
        %v527 = vand.u32 %v522, %v260
        %529 = vmatprep.subr.bf16.mxu0 0
        %530 = vmatpush1.bf16.msra.mxu0 %v527
        %531 = vmatprep.subr.bf16.mxu0 0
        %532 = vmatpush1.bf16.msra.mxu0 0
        %533 = vmatprep.subr.bf16.mxu0 0
        %534 = vmatpush1.bf16.msra.mxu0 0
        %535 = vmatprep.subr.bf16.mxu0 0
        %536 = vmatpush1.bf16.msra.mxu0 0
        %537 = vmatprep.subr.bf16.mxu0 0
        %538 = vmatpush1.bf16.msra.mxu0 0
        %539 = vmatprep.subr.bf16.mxu0 0
        %540 = vmatpush1.bf16.msra.mxu0 0
        %541 = vmatprep.subr.bf16.mxu0 0
        %542 = vmatpush1.bf16.msra.mxu0 0
        %543 = vmatprep.subr.bf16.mxu0 0
        %544 = vmatpush1.bf16.msra.mxu0 0
        %545 = vmatprep.subr.bf16.mxu0 0
        %546 = vmatpush1.bf16.msra.mxu0 0
        %547 = vmatprep.subr.bf16.mxu0 0
        %548 = vmatpush1.bf16.msra.mxu0 0
        %549 = vmatprep.subr.bf16.mxu0 0
        %550 = vmatpush1.bf16.msra.mxu0 0
        %551 = vmatprep.subr.bf16.mxu0 0
        %552 = vmatpush1.bf16.msra.mxu0 0
        %553 = vmatprep.subr.bf16.mxu0 0
        %554 = vmatpush1.bf16.msra.mxu0 0
        %555 = vmatprep.subr.bf16.mxu0 0
        %556 = vmatpush1.bf16.msra.mxu0 0
        %557 = vmatprep.subr.bf16.mxu0 0
        %558 = vmatpush1.bf16.msra.mxu0 0
        %559 = vmatprep.subr.bf16.mxu0 0
        %560 = vmatpush1.bf16.msra.mxu0 0
        %561 = vmatprep.mubr.bf16.mxu0 0
        %562 = vmatmul.mubr.bf16.gmra.mrb[0].mxu0 %v524
        %v563 = vpop.f32.mrb[0].mxu0
        %v564 = vadd.f32 0.0, %v563
        %v565 = vpop.f32.mrb[0].mxu0
        %v566 = vpop.f32.mrb[0].mxu0
        %v567 = vpop.f32.mrb[0].mxu0
        %568 = vdwg.mxu0
        %v569 = vadd.f32 %v514, %v564
        %s570 = scalar_lea.vmem [#allocation5], 24
        %v571 = vld [vmem:[%s570] sm:$0xf]
        %572 = vrot.lane.b32.xlu0 %v245, 119
        %v573 = vpop.permute.xlu0 %572
        %574 = vrot.lane.b32.xlu0 %v246, 119
        %v575 = vpop.permute.xlu0 %574
        %vm576 = vcmask 973824
        %v577 = vsel %vm576, %v573, %v575
        %v579 = vsel %vm253, %v571, 0
        %v582 = vand.u32 %v577, %v260
        %584 = vmatprep.subr.bf16.mxu0 0
        %585 = vmatpush1.bf16.msra.mxu0 %v582
        %586 = vmatprep.subr.bf16.mxu0 0
        %587 = vmatpush1.bf16.msra.mxu0 0
        %588 = vmatprep.subr.bf16.mxu0 0
        %589 = vmatpush1.bf16.msra.mxu0 0
        %590 = vmatprep.subr.bf16.mxu0 0
        %591 = vmatpush1.bf16.msra.mxu0 0
        %592 = vmatprep.subr.bf16.mxu0 0
        %593 = vmatpush1.bf16.msra.mxu0 0
        %594 = vmatprep.subr.bf16.mxu0 0
        %595 = vmatpush1.bf16.msra.mxu0 0
        %596 = vmatprep.subr.bf16.mxu0 0
        %597 = vmatpush1.bf16.msra.mxu0 0
        %598 = vmatprep.subr.bf16.mxu0 0
        %599 = vmatpush1.bf16.msra.mxu0 0
        %600 = vmatprep.subr.bf16.mxu0 0
        %601 = vmatpush1.bf16.msra.mxu0 0
        %602 = vmatprep.subr.bf16.mxu0 0
        %603 = vmatpush1.bf16.msra.mxu0 0
        %604 = vmatprep.subr.bf16.mxu0 0
        %605 = vmatpush1.bf16.msra.mxu0 0
        %606 = vmatprep.subr.bf16.mxu0 0
        %607 = vmatpush1.bf16.msra.mxu0 0
        %608 = vmatprep.subr.bf16.mxu0 0
        %609 = vmatpush1.bf16.msra.mxu0 0
        %610 = vmatprep.subr.bf16.mxu0 0
        %611 = vmatpush1.bf16.msra.mxu0 0
        %612 = vmatprep.subr.bf16.mxu0 0
        %613 = vmatpush1.bf16.msra.mxu0 0
        %614 = vmatprep.subr.bf16.mxu0 0
        %615 = vmatpush1.bf16.msra.mxu0 0
        %616 = vmatprep.mubr.bf16.mxu0 0
        %617 = vmatmul.mubr.bf16.gmra.mrb[0].mxu0 %v579
        %v618 = vpop.f32.mrb[0].mxu0
        %v619 = vadd.f32 0.0, %v618
        %v620 = vpop.f32.mrb[0].mxu0
        %v621 = vpop.f32.mrb[0].mxu0
        %v622 = vpop.f32.mrb[0].mxu0
        %623 = vdwg.mxu0
        %v624 = vadd.f32 %v569, %v619
        %s625 = scalar_lea.vmem [#allocation5], 28
        %v626 = vld [vmem:[%s625] sm:$0xf]
        %627 = vrot.lane.b32.xlu0 %v245, 118
        %v628 = vpop.permute.xlu0 %627
        %629 = vrot.lane.b32.xlu0 %v246, 118
        %v630 = vpop.permute.xlu0 %629
        %vm631 = vcmask 965632
        %v632 = vsel %vm631, %v628, %v630
        %v634 = vsel %vm253, %v626, 0
        %v637 = vand.u32 %v632, %v260
        %639 = vmatprep.subr.bf16.mxu0 0
        %640 = vmatpush1.bf16.msra.mxu0 %v637
        %641 = vmatprep.subr.bf16.mxu0 0
        %642 = vmatpush1.bf16.msra.mxu0 0
        %643 = vmatprep.subr.bf16.mxu0 0
        %644 = vmatpush1.bf16.msra.mxu0 0
        %645 = vmatprep.subr.bf16.mxu0 0
        %646 = vmatpush1.bf16.msra.mxu0 0
        %647 = vmatprep.subr.bf16.mxu0 0
        %648 = vmatpush1.bf16.msra.mxu0 0
        %649 = vmatprep.subr.bf16.mxu0 0
        %650 = vmatpush1.bf16.msra.mxu0 0
        %651 = vmatprep.subr.bf16.mxu0 0
        %652 = vmatpush1.bf16.msra.mxu0 0
        %653 = vmatprep.subr.bf16.mxu0 0
        %654 = vmatpush1.bf16.msra.mxu0 0
        %655 = vmatprep.subr.bf16.mxu0 0
        %656 = vmatpush1.bf16.msra.mxu0 0
        %657 = vmatprep.subr.bf16.mxu0 0
        %658 = vmatpush1.bf16.msra.mxu0 0
        %659 = vmatprep.subr.bf16.mxu0 0
        %660 = vmatpush1.bf16.msra.mxu0 0
        %661 = vmatprep.subr.bf16.mxu0 0
        %662 = vmatpush1.bf16.msra.mxu0 0
        %663 = vmatprep.subr.bf16.mxu0 0
        %664 = vmatpush1.bf16.msra.mxu0 0
        %665 = vmatprep.subr.bf16.mxu0 0
        %666 = vmatpush1.bf16.msra.mxu0 0
        %667 = vmatprep.subr.bf16.mxu0 0
        %668 = vmatpush1.bf16.msra.mxu0 0
        %669 = vmatprep.subr.bf16.mxu0 0
        %670 = vmatpush1.bf16.msra.mxu0 0
        %671 = vmatprep.mubr.bf16.mxu0 0
        %672 = vmatmul.mubr.bf16.gmra.mrb[0].mxu0 %v634
        %v673 = vpop.f32.mrb[0].mxu0
        %v674 = vadd.f32 0.0, %v673
        %v675 = vpop.f32.mrb[0].mxu0
        %v676 = vpop.f32.mrb[0].mxu0
        %v677 = vpop.f32.mrb[0].mxu0
        %678 = vdwg.mxu0
        %v679 = vadd.f32 %v624, %v674
        %s680 = scalar_lea.vmem [#allocation5], 32
        %v681 = vld [vmem:[%s680] sm:$0xf]
        %682 = vrot.lane.b32.xlu0 %v245, 117
        %v683 = vpop.permute.xlu0 %682
        %684 = vrot.lane.b32.xlu0 %v246, 117
        %v685 = vpop.permute.xlu0 %684
        %vm686 = vcmask 957440
        %v687 = vsel %vm686, %v683, %v685
        %v689 = vsel %vm253, %v681, 0
        %v692 = vand.u32 %v687, %v260
        %694 = vmatprep.subr.bf16.mxu0 0
        %695 = vmatpush1.bf16.msra.mxu0 %v692
        %696 = vmatprep.subr.bf16.mxu0 0
        %697 = vmatpush1.bf16.msra.mxu0 0
        %698 = vmatprep.subr.bf16.mxu0 0
        %699 = vmatpush1.bf16.msra.mxu0 0
        %700 = vmatprep.subr.bf16.mxu0 0
        %701 = vmatpush1.bf16.msra.mxu0 0
        %702 = vmatprep.subr.bf16.mxu0 0
        %703 = vmatpush1.bf16.msra.mxu0 0
        %704 = vmatprep.subr.bf16.mxu0 0
        %705 = vmatpush1.bf16.msra.mxu0 0
        %706 = vmatprep.subr.bf16.mxu0 0
        %707 = vmatpush1.bf16.msra.mxu0 0
        %708 = vmatprep.subr.bf16.mxu0 0
        %709 = vmatpush1.bf16.msra.mxu0 0
        %710 = vmatprep.subr.bf16.mxu0 0
        %711 = vmatpush1.bf16.msra.mxu0 0
        %712 = vmatprep.subr.bf16.mxu0 0
        %713 = vmatpush1.bf16.msra.mxu0 0
        %714 = vmatprep.subr.bf16.mxu0 0
        %715 = vmatpush1.bf16.msra.mxu0 0
        %716 = vmatprep.subr.bf16.mxu0 0
        %717 = vmatpush1.bf16.msra.mxu0 0
        %718 = vmatprep.subr.bf16.mxu0 0
        %719 = vmatpush1.bf16.msra.mxu0 0
        %720 = vmatprep.subr.bf16.mxu0 0
        %721 = vmatpush1.bf16.msra.mxu0 0
        %722 = vmatprep.subr.bf16.mxu0 0
        %723 = vmatpush1.bf16.msra.mxu0 0
        %724 = vmatprep.subr.bf16.mxu0 0
        %725 = vmatpush1.bf16.msra.mxu0 0
        %726 = vmatprep.mubr.bf16.mxu0 0
        %727 = vmatmul.mubr.bf16.gmra.mrb[0].mxu0 %v689
        %v728 = vpop.f32.mrb[0].mxu0
        %v729 = vadd.f32 0.0, %v728
        %v730 = vpop.f32.mrb[0].mxu0
        %v731 = vpop.f32.mrb[0].mxu0
        %v732 = vpop.f32.mrb[0].mxu0
        %733 = vdwg.mxu0
        %v734 = vadd.f32 %v679, %v729
        %s735 = scalar_lea.vmem [#allocation5], 36
        %v736 = vld [vmem:[%s735] sm:$0xf]
        %737 = vrot.lane.b32.xlu0 %v245, 116
        %v738 = vpop.permute.xlu0 %737
        %739 = vrot.lane.b32.xlu0 %v246, 116
        %v740 = vpop.permute.xlu0 %739
        %vm741 = vcmask 949248
        %v742 = vsel %vm741, %v738, %v740
        %v744 = vsel %vm253, %v736, 0
        %v747 = vand.u32 %v742, %v260
        %749 = vmatprep.subr.bf16.mxu0 0
        %750 = vmatpush1.bf16.msra.mxu0 %v747
        %751 = vmatprep.subr.bf16.mxu0 0
        %752 = vmatpush1.bf16.msra.mxu0 0
        %753 = vmatprep.subr.bf16.mxu0 0
        %754 = vmatpush1.bf16.msra.mxu0 0
        %755 = vmatprep.subr.bf16.mxu0 0
        %756 = vmatpush1.bf16.msra.mxu0 0
        %757 = vmatprep.subr.bf16.mxu0 0
        %758 = vmatpush1.bf16.msra.mxu0 0
        %759 = vmatprep.subr.bf16.mxu0 0
        %760 = vmatpush1.bf16.msra.mxu0 0
        %761 = vmatprep.subr.bf16.mxu0 0
        %762 = vmatpush1.bf16.msra.mxu0 0
        %763 = vmatprep.subr.bf16.mxu0 0
        %764 = vmatpush1.bf16.msra.mxu0 0
        %765 = vmatprep.subr.bf16.mxu0 0
        %766 = vmatpush1.bf16.msra.mxu0 0
        %767 = vmatprep.subr.bf16.mxu0 0
        %768 = vmatpush1.bf16.msra.mxu0 0
        %769 = vmatprep.subr.bf16.mxu0 0
        %770 = vmatpush1.bf16.msra.mxu0 0
        %771 = vmatprep.subr.bf16.mxu0 0
        %772 = vmatpush1.bf16.msra.mxu0 0
        %773 = vmatprep.subr.bf16.mxu0 0
        %774 = vmatpush1.bf16.msra.mxu0 0
        %775 = vmatprep.subr.bf16.mxu0 0
        %776 = vmatpush1.bf16.msra.mxu0 0
        %777 = vmatprep.subr.bf16.mxu0 0
        %778 = vmatpush1.bf16.msra.mxu0 0
        %779 = vmatprep.subr.bf16.mxu0 0
        %780 = vmatpush1.bf16.msra.mxu0 0
        %781 = vmatprep.mubr.bf16.mxu0 0
        %782 = vmatmul.mubr.bf16.gmra.mrb[0].mxu0 %v744
        %v783 = vpop.f32.mrb[0].mxu0
        %v784 = vadd.f32 0.0, %v783
        %v785 = vpop.f32.mrb[0].mxu0
        %v786 = vpop.f32.mrb[0].mxu0
        %v787 = vpop.f32.mrb[0].mxu0
        %788 = vdwg.mxu0
        %v789 = vadd.f32 %v734, %v784
        %s790 = scalar_lea.vmem [#allocation5], 40
        %v791 = vld [vmem:[%s790] sm:$0xf]
        %792 = vrot.lane.b32.xlu0 %v245, 112
        %v793 = vpop.permute.xlu0 %792
        %794 = vrot.lane.b32.xlu0 %v246, 112
        %v795 = vpop.permute.xlu0 %794
        %vm796 = vcmask 916480
        %v797 = vsel %vm796, %v793, %v795
        %v799 = vsel %vm253, %v791, 0
        %v802 = vand.u32 %v797, %v260
        %804 = vmatprep.subr.bf16.mxu0 0
        %805 = vmatpush1.bf16.msra.mxu0 %v802
        %806 = vmatprep.subr.bf16.mxu0 0
        %807 = vmatpush1.bf16.msra.mxu0 0
        %808 = vmatprep.subr.bf16.mxu0 0
        %809 = vmatpush1.bf16.msra.mxu0 0
        %810 = vmatprep.subr.bf16.mxu0 0
        %811 = vmatpush1.bf16.msra.mxu0 0
        %812 = vmatprep.subr.bf16.mxu0 0
        %813 = vmatpush1.bf16.msra.mxu0 0
        %814 = vmatprep.subr.bf16.mxu0 0
        %815 = vmatpush1.bf16.msra.mxu0 0
        %816 = vmatprep.subr.bf16.mxu0 0
        %817 = vmatpush1.bf16.msra.mxu0 0
        %818 = vmatprep.subr.bf16.mxu0 0
        %819 = vmatpush1.bf16.msra.mxu0 0
        %820 = vmatprep.subr.bf16.mxu0 0
        %821 = vmatpush1.bf16.msra.mxu0 0
        %822 = vmatprep.subr.bf16.mxu0 0
        %823 = vmatpush1.bf16.msra.mxu0 0
        %824 = vmatprep.subr.bf16.mxu0 0
        %825 = vmatpush1.bf16.msra.mxu0 0
        %826 = vmatprep.subr.bf16.mxu0 0
        %827 = vmatpush1.bf16.msra.mxu0 0
        %828 = vmatprep.subr.bf16.mxu0 0
        %829 = vmatpush1.bf16.msra.mxu0 0
        %830 = vmatprep.subr.bf16.mxu0 0
        %831 = vmatpush1.bf16.msra.mxu0 0
        %832 = vmatprep.subr.bf16.mxu0 0
        %833 = vmatpush1.bf16.msra.mxu0 0
        %834 = vmatprep.subr.bf16.mxu0 0
        %835 = vmatpush1.bf16.msra.mxu0 0
        %836 = vmatprep.mubr.bf16.mxu0 0
        %837 = vmatmul.mubr.bf16.gmra.mrb[0].mxu0 %v799
        %v838 = vpop.f32.mrb[0].mxu0
        %v839 = vadd.f32 0.0, %v838
        %v840 = vpop.f32.mrb[0].mxu0
        %v841 = vpop.f32.mrb[0].mxu0
        %v842 = vpop.f32.mrb[0].mxu0
        %843 = vdwg.mxu0
        %v844 = vadd.f32 %v789, %v839
        %s845 = scalar_lea.vmem [#allocation5], 44
        %v846 = vld [vmem:[%s845] sm:$0xf]
        %847 = vrot.lane.b32.xlu0 %v245, 111
        %v848 = vpop.permute.xlu0 %847
        %849 = vrot.lane.b32.xlu0 %v246, 111
        %v850 = vpop.permute.xlu0 %849
        %vm851 = vcmask 908288
        %v852 = vsel %vm851, %v848, %v850
        %v854 = vsel %vm253, %v846, 0
        %v857 = vand.u32 %v852, %v260
        %859 = vmatprep.subr.bf16.mxu0 0
        %860 = vmatpush1.bf16.msra.mxu0 %v857
        %861 = vmatprep.subr.bf16.mxu0 0
        %862 = vmatpush1.bf16.msra.mxu0 0
        %863 = vmatprep.subr.bf16.mxu0 0
        %864 = vmatpush1.bf16.msra.mxu0 0
        %865 = vmatprep.subr.bf16.mxu0 0
        %866 = vmatpush1.bf16.msra.mxu0 0
        %867 = vmatprep.subr.bf16.mxu0 0
        %868 = vmatpush1.bf16.msra.mxu0 0
        %869 = vmatprep.subr.bf16.mxu0 0
        %870 = vmatpush1.bf16.msra.mxu0 0
        %871 = vmatprep.subr.bf16.mxu0 0
        %872 = vmatpush1.bf16.msra.mxu0 0
        %873 = vmatprep.subr.bf16.mxu0 0
        %874 = vmatpush1.bf16.msra.mxu0 0
        %875 = vmatprep.subr.bf16.mxu0 0
        %876 = vmatpush1.bf16.msra.mxu0 0
        %877 = vmatprep.subr.bf16.mxu0 0
        %878 = vmatpush1.bf16.msra.mxu0 0
        %879 = vmatprep.subr.bf16.mxu0 0
        %880 = vmatpush1.bf16.msra.mxu0 0
        %881 = vmatprep.subr.bf16.mxu0 0
        %882 = vmatpush1.bf16.msra.mxu0 0
        %883 = vmatprep.subr.bf16.mxu0 0
        %884 = vmatpush1.bf16.msra.mxu0 0
        %885 = vmatprep.subr.bf16.mxu0 0
        %886 = vmatpush1.bf16.msra.mxu0 0
        %887 = vmatprep.subr.bf16.mxu0 0
        %888 = vmatpush1.bf16.msra.mxu0 0
        %889 = vmatprep.subr.bf16.mxu0 0
        %890 = vmatpush1.bf16.msra.mxu0 0
        %891 = vmatprep.mubr.bf16.mxu0 0
        %892 = vmatmul.mubr.bf16.gmra.mrb[0].mxu0 %v854
        %v893 = vpop.f32.mrb[0].mxu0
        %v894 = vadd.f32 0.0, %v893
        %v895 = vpop.f32.mrb[0].mxu0
        %v896 = vpop.f32.mrb[0].mxu0
        %v897 = vpop.f32.mrb[0].mxu0
        %898 = vdwg.mxu0
        %v899 = vadd.f32 %v844, %v894
        %s900 = scalar_lea.vmem [#allocation5], 48
        %v901 = vld [vmem:[%s900] sm:$0xf]
        %902 = vrot.lane.b32.xlu0 %v245, 110
        %v903 = vpop.permute.xlu0 %902
        %904 = vrot.lane.b32.xlu0 %v246, 110
        %v905 = vpop.permute.xlu0 %904
        %vm906 = vcmask 900096
        %v907 = vsel %vm906, %v903, %v905
        %v909 = vsel %vm253, %v901, 0
        %v912 = vand.u32 %v907, %v260
        %914 = vmatprep.subr.bf16.mxu0 0
        %915 = vmatpush1.bf16.msra.mxu0 %v912
        %916 = vmatprep.subr.bf16.mxu0 0
        %917 = vmatpush1.bf16.msra.mxu0 0
        %918 = vmatprep.subr.bf16.mxu0 0
        %919 = vmatpush1.bf16.msra.mxu0 0
        %920 = vmatprep.subr.bf16.mxu0 0
        %921 = vmatpush1.bf16.msra.mxu0 0
        %922 = vmatprep.subr.bf16.mxu0 0
        %923 = vmatpush1.bf16.msra.mxu0 0
        %924 = vmatprep.subr.bf16.mxu0 0
        %925 = vmatpush1.bf16.msra.mxu0 0
        %926 = vmatprep.subr.bf16.mxu0 0
        %927 = vmatpush1.bf16.msra.mxu0 0
        %928 = vmatprep.subr.bf16.mxu0 0
        %929 = vmatpush1.bf16.msra.mxu0 0
        %930 = vmatprep.subr.bf16.mxu0 0
        %931 = vmatpush1.bf16.msra.mxu0 0
        %932 = vmatprep.subr.bf16.mxu0 0
        %933 = vmatpush1.bf16.msra.mxu0 0
        %934 = vmatprep.subr.bf16.mxu0 0
        %935 = vmatpush1.bf16.msra.mxu0 0
        %936 = vmatprep.subr.bf16.mxu0 0
        %937 = vmatpush1.bf16.msra.mxu0 0
        %938 = vmatprep.subr.bf16.mxu0 0
        %939 = vmatpush1.bf16.msra.mxu0 0
        %940 = vmatprep.subr.bf16.mxu0 0
        %941 = vmatpush1.bf16.msra.mxu0 0
        %942 = vmatprep.subr.bf16.mxu0 0
        %943 = vmatpush1.bf16.msra.mxu0 0
        %944 = vmatprep.subr.bf16.mxu0 0
        %945 = vmatpush1.bf16.msra.mxu0 0
        %946 = vmatprep.mubr.bf16.mxu0 0
        %947 = vmatmul.mubr.bf16.gmra.mrb[0].mxu0 %v909
        %v948 = vpop.f32.mrb[0].mxu0
        %v949 = vadd.f32 0.0, %v948
        %v950 = vpop.f32.mrb[0].mxu0
        %v951 = vpop.f32.mrb[0].mxu0
        %v952 = vpop.f32.mrb[0].mxu0
        %953 = vdwg.mxu0
        %v954 = vadd.f32 %v899, %v949
        %s955 = scalar_lea.vmem [#allocation5], 52
        %v956 = vld [vmem:[%s955] sm:$0xf]
        %957 = vrot.lane.b32.xlu0 %v245, 109
        %v958 = vpop.permute.xlu0 %957
        %959 = vrot.lane.b32.xlu0 %v246, 109
        %v960 = vpop.permute.xlu0 %959
        %vm961 = vcmask 891904
        %v962 = vsel %vm961, %v958, %v960
        %v964 = vsel %vm253, %v956, 0
        %v967 = vand.u32 %v962, %v260
        %969 = vmatprep.subr.bf16.mxu0 0
        %970 = vmatpush1.bf16.msra.mxu0 %v967
        %971 = vmatprep.subr.bf16.mxu0 0
        %972 = vmatpush1.bf16.msra.mxu0 0
        %973 = vmatprep.subr.bf16.mxu0 0
        %974 = vmatpush1.bf16.msra.mxu0 0
        %975 = vmatprep.subr.bf16.mxu0 0
        %976 = vmatpush1.bf16.msra.mxu0 0
        %977 = vmatprep.subr.bf16.mxu0 0
        %978 = vmatpush1.bf16.msra.mxu0 0
        %979 = vmatprep.subr.bf16.mxu0 0
        %980 = vmatpush1.bf16.msra.mxu0 0
        %981 = vmatprep.subr.bf16.mxu0 0
        %982 = vmatpush1.bf16.msra.mxu0 0
        %983 = vmatprep.subr.bf16.mxu0 0
        %984 = vmatpush1.bf16.msra.mxu0 0
        %985 = vmatprep.subr.bf16.mxu0 0
        %986 = vmatpush1.bf16.msra.mxu0 0
        %987 = vmatprep.subr.bf16.mxu0 0
        %988 = vmatpush1.bf16.msra.mxu0 0
        %989 = vmatprep.subr.bf16.mxu0 0
        %990 = vmatpush1.bf16.msra.mxu0 0
        %991 = vmatprep.subr.bf16.mxu0 0
        %992 = vmatpush1.bf16.msra.mxu0 0
        %993 = vmatprep.subr.bf16.mxu0 0
        %994 = vmatpush1.bf16.msra.mxu0 0
        %995 = vmatprep.subr.bf16.mxu0 0
        %996 = vmatpush1.bf16.msra.mxu0 0
        %997 = vmatprep.subr.bf16.mxu0 0
        %998 = vmatpush1.bf16.msra.mxu0 0
        %999 = vmatprep.subr.bf16.mxu0 0
        %1000 = vmatpush1.bf16.msra.mxu0 0
        %1001 = vmatprep.mubr.bf16.mxu0 0
        %1002 = vmatmul.mubr.bf16.gmra.mrb[0].mxu0 %v964
        %v1003 = vpop.f32.mrb[0].mxu0
        %v1004 = vadd.f32 0.0, %v1003
        %v1005 = vpop.f32.mrb[0].mxu0
        %v1006 = vpop.f32.mrb[0].mxu0
        %v1007 = vpop.f32.mrb[0].mxu0
        %1008 = vdwg.mxu0
        %v1009 = vadd.f32 %v954, %v1004
        %s1010 = scalar_lea.vmem [#allocation5], 56
        %v1011 = vld [vmem:[%s1010] sm:$0xf]
        %1012 = vrot.lane.b32.xlu0 %v245, 108
        %v1013 = vpop.permute.xlu0 %1012
        %1014 = vrot.lane.b32.xlu0 %v246, 108
        %v1015 = vpop.permute.xlu0 %1014
        %vm1016 = vcmask 883712
        %v1017 = vsel %vm1016, %v1013, %v1015
        %v1019 = vsel %vm253, %v1011, 0
        %v1022 = vand.u32 %v1017, %v260
        %1024 = vmatprep.subr.bf16.mxu0 0
        %1025 = vmatpush1.bf16.msra.mxu0 %v1022
        %1026 = vmatprep.subr.bf16.mxu0 0
        %1027 = vmatpush1.bf16.msra.mxu0 0
        %1028 = vmatprep.subr.bf16.mxu0 0
        %1029 = vmatpush1.bf16.msra.mxu0 0
        %1030 = vmatprep.subr.bf16.mxu0 0
        %1031 = vmatpush1.bf16.msra.mxu0 0
        %1032 = vmatprep.subr.bf16.mxu0 0
        %1033 = vmatpush1.bf16.msra.mxu0 0
        %1034 = vmatprep.subr.bf16.mxu0 0
        %1035 = vmatpush1.bf16.msra.mxu0 0
        %1036 = vmatprep.subr.bf16.mxu0 0
        %1037 = vmatpush1.bf16.msra.mxu0 0
        %1038 = vmatprep.subr.bf16.mxu0 0
        %1039 = vmatpush1.bf16.msra.mxu0 0
        %1040 = vmatprep.subr.bf16.mxu0 0
        %1041 = vmatpush1.bf16.msra.mxu0 0
        %1042 = vmatprep.subr.bf16.mxu0 0
        %1043 = vmatpush1.bf16.msra.mxu0 0
        %1044 = vmatprep.subr.bf16.mxu0 0
        %1045 = vmatpush1.bf16.msra.mxu0 0
        %1046 = vmatprep.subr.bf16.mxu0 0
        %1047 = vmatpush1.bf16.msra.mxu0 0
        %1048 = vmatprep.subr.bf16.mxu0 0
        %1049 = vmatpush1.bf16.msra.mxu0 0
        %1050 = vmatprep.subr.bf16.mxu0 0
        %1051 = vmatpush1.bf16.msra.mxu0 0
        %1052 = vmatprep.subr.bf16.mxu0 0
        %1053 = vmatpush1.bf16.msra.mxu0 0
        %1054 = vmatprep.subr.bf16.mxu0 0
        %1055 = vmatpush1.bf16.msra.mxu0 0
        %1056 = vmatprep.mubr.bf16.mxu0 0
        %1057 = vmatmul.mubr.bf16.gmra.mrb[0].mxu0 %v1019
        %v1058 = vpop.f32.mrb[0].mxu0
        %v1059 = vadd.f32 0.0, %v1058
        %v1060 = vpop.f32.mrb[0].mxu0
        %v1061 = vpop.f32.mrb[0].mxu0
        %v1062 = vpop.f32.mrb[0].mxu0
        %1063 = vdwg.mxu0
        %v1064 = vadd.f32 %v1009, %v1059
        %s1065 = scalar_lea.vmem [#allocation5], 60
        %v1066 = vld [vmem:[%s1065] sm:$0xf]
        %1067 = vrot.lane.b32.xlu0 %v245, 104
        %v1068 = vpop.permute.xlu0 %1067
        %1069 = vrot.lane.b32.xlu0 %v246, 104
        %v1070 = vpop.permute.xlu0 %1069
        %vm1071 = vcmask 850944
        %v1072 = vsel %vm1071, %v1068, %v1070
        %v1074 = vsel %vm253, %v1066, 0
        %v1077 = vand.u32 %v1072, %v260
        %1079 = vmatprep.subr.bf16.mxu0 0
        %1080 = vmatpush1.bf16.msra.mxu0 %v1077
        %1081 = vmatprep.subr.bf16.mxu0 0
        %1082 = vmatpush1.bf16.msra.mxu0 0
        %1083 = vmatprep.subr.bf16.mxu0 0
        %1084 = vmatpush1.bf16.msra.mxu0 0
        %1085 = vmatprep.subr.bf16.mxu0 0
        %1086 = vmatpush1.bf16.msra.mxu0 0
        %1087 = vmatprep.subr.bf16.mxu0 0
        %1088 = vmatpush1.bf16.msra.mxu0 0
        %1089 = vmatprep.subr.bf16.mxu0 0
        %1090 = vmatpush1.bf16.msra.mxu0 0
        %1091 = vmatprep.subr.bf16.mxu0 0
        %1092 = vmatpush1.bf16.msra.mxu0 0
        %1093 = vmatprep.subr.bf16.mxu0 0
        %1094 = vmatpush1.bf16.msra.mxu0 0
        %1095 = vmatprep.subr.bf16.mxu0 0
        %1096 = vmatpush1.bf16.msra.mxu0 0
        %1097 = vmatprep.subr.bf16.mxu0 0
        %1098 = vmatpush1.bf16.msra.mxu0 0
        %1099 = vmatprep.subr.bf16.mxu0 0
        %1100 = vmatpush1.bf16.msra.mxu0 0
        %1101 = vmatprep.subr.bf16.mxu0 0
        %1102 = vmatpush1.bf16.msra.mxu0 0
        %1103 = vmatprep.subr.bf16.mxu0 0
        %1104 = vmatpush1.bf16.msra.mxu0 0
        %1105 = vmatprep.subr.bf16.mxu0 0
        %1106 = vmatpush1.bf16.msra.mxu0 0
        %1107 = vmatprep.subr.bf16.mxu0 0
        %1108 = vmatpush1.bf16.msra.mxu0 0
        %1109 = vmatprep.subr.bf16.mxu0 0
        %1110 = vmatpush1.bf16.msra.mxu0 0
        %1111 = vmatprep.mubr.bf16.mxu0 0
        %1112 = vmatmul.mubr.bf16.gmra.mrb[0].mxu0 %v1074
        %v1113 = vpop.f32.mrb[0].mxu0
        %v1114 = vadd.f32 0.0, %v1113
        %v1115 = vpop.f32.mrb[0].mxu0
        %v1116 = vpop.f32.mrb[0].mxu0
        %v1117 = vpop.f32.mrb[0].mxu0
        %1118 = vdwg.mxu0
        %v1119 = vadd.f32 %v1064, %v1114
        %s1120 = scalar_lea.vmem [#allocation5], 64
        %v1121 = vld [vmem:[%s1120] sm:$0xf]
        %1122 = vrot.lane.b32.xlu0 %v245, 103
        %v1123 = vpop.permute.xlu0 %1122
        %1124 = vrot.lane.b32.xlu0 %v246, 103
        %v1125 = vpop.permute.xlu0 %1124
        %vm1126 = vcmask 842752
        %v1127 = vsel %vm1126, %v1123, %v1125
        %v1129 = vsel %vm253, %v1121, 0
        %v1132 = vand.u32 %v1127, %v260
        %1134 = vmatprep.subr.bf16.mxu0 0
        %1135 = vmatpush1.bf16.msra.mxu0 %v1132
        %1136 = vmatprep.subr.bf16.mxu0 0
        %1137 = vmatpush1.bf16.msra.mxu0 0
        %1138 = vmatprep.subr.bf16.mxu0 0
        %1139 = vmatpush1.bf16.msra.mxu0 0
        %1140 = vmatprep.subr.bf16.mxu0 0
        %1141 = vmatpush1.bf16.msra.mxu0 0
        %1142 = vmatprep.subr.bf16.mxu0 0
        %1143 = vmatpush1.bf16.msra.mxu0 0
        %1144 = vmatprep.subr.bf16.mxu0 0
        %1145 = vmatpush1.bf16.msra.mxu0 0
        %1146 = vmatprep.subr.bf16.mxu0 0
        %1147 = vmatpush1.bf16.msra.mxu0 0
        %1148 = vmatprep.subr.bf16.mxu0 0
        %1149 = vmatpush1.bf16.msra.mxu0 0
        %1150 = vmatprep.subr.bf16.mxu0 0
        %1151 = vmatpush1.bf16.msra.mxu0 0
        %1152 = vmatprep.subr.bf16.mxu0 0
        %1153 = vmatpush1.bf16.msra.mxu0 0
        %1154 = vmatprep.subr.bf16.mxu0 0
        %1155 = vmatpush1.bf16.msra.mxu0 0
        %1156 = vmatprep.subr.bf16.mxu0 0
        %1157 = vmatpush1.bf16.msra.mxu0 0
        %1158 = vmatprep.subr.bf16.mxu0 0
        %1159 = vmatpush1.bf16.msra.mxu0 0
        %1160 = vmatprep.subr.bf16.mxu0 0
        %1161 = vmatpush1.bf16.msra.mxu0 0
        %1162 = vmatprep.subr.bf16.mxu0 0
        %1163 = vmatpush1.bf16.msra.mxu0 0
        %1164 = vmatprep.subr.bf16.mxu0 0
        %1165 = vmatpush1.bf16.msra.mxu0 0
        %1166 = vmatprep.mubr.bf16.mxu0 0
        %1167 = vmatmul.mubr.bf16.gmra.mrb[0].mxu0 %v1129
        %v1168 = vpop.f32.mrb[0].mxu0
        %v1169 = vadd.f32 0.0, %v1168
        %v1170 = vpop.f32.mrb[0].mxu0
        %v1171 = vpop.f32.mrb[0].mxu0
        %v1172 = vpop.f32.mrb[0].mxu0
        %1173 = vdwg.mxu0
        %v1174 = vadd.f32 %v1119, %v1169
        %s1175 = scalar_lea.vmem [#allocation5], 68
        %v1176 = vld [vmem:[%s1175] sm:$0xf]
        %1177 = vrot.lane.b32.xlu0 %v245, 102
        %v1178 = vpop.permute.xlu0 %1177
        %1179 = vrot.lane.b32.xlu0 %v246, 102
        %v1180 = vpop.permute.xlu0 %1179
        %vm1181 = vcmask 834560
        %v1182 = vsel %vm1181, %v1178, %v1180
        %v1184 = vsel %vm253, %v1176, 0
        %v1187 = vand.u32 %v1182, %v260
        %1189 = vmatprep.subr.bf16.mxu0 0
        %1190 = vmatpush1.bf16.msra.mxu0 %v1187
        %1191 = vmatprep.subr.bf16.mxu0 0
        %1192 = vmatpush1.bf16.msra.mxu0 0
        %1193 = vmatprep.subr.bf16.mxu0 0
        %1194 = vmatpush1.bf16.msra.mxu0 0
        %1195 = vmatprep.subr.bf16.mxu0 0
        %1196 = vmatpush1.bf16.msra.mxu0 0
        %1197 = vmatprep.subr.bf16.mxu0 0
        %1198 = vmatpush1.bf16.msra.mxu0 0
        %1199 = vmatprep.subr.bf16.mxu0 0
        %1200 = vmatpush1.bf16.msra.mxu0 0
        %1201 = vmatprep.subr.bf16.mxu0 0
        %1202 = vmatpush1.bf16.msra.mxu0 0
        %1203 = vmatprep.subr.bf16.mxu0 0
        %1204 = vmatpush1.bf16.msra.mxu0 0
        %1205 = vmatprep.subr.bf16.mxu0 0
        %1206 = vmatpush1.bf16.msra.mxu0 0
        %1207 = vmatprep.subr.bf16.mxu0 0
        %1208 = vmatpush1.bf16.msra.mxu0 0
        %1209 = vmatprep.subr.bf16.mxu0 0
        %1210 = vmatpush1.bf16.msra.mxu0 0
        %1211 = vmatprep.subr.bf16.mxu0 0
        %1212 = vmatpush1.bf16.msra.mxu0 0
        %1213 = vmatprep.subr.bf16.mxu0 0
        %1214 = vmatpush1.bf16.msra.mxu0 0
        %1215 = vmatprep.subr.bf16.mxu0 0
        %1216 = vmatpush1.bf16.msra.mxu0 0
        %1217 = vmatprep.subr.bf16.mxu0 0
        %1218 = vmatpush1.bf16.msra.mxu0 0
        %1219 = vmatprep.subr.bf16.mxu0 0
        %1220 = vmatpush1.bf16.msra.mxu0 0
        %1221 = vmatprep.mubr.bf16.mxu0 0
        %1222 = vmatmul.mubr.bf16.gmra.mrb[0].mxu0 %v1184
        %v1223 = vpop.f32.mrb[0].mxu0
        %v1224 = vadd.f32 0.0, %v1223
        %v1225 = vpop.f32.mrb[0].mxu0
        %v1226 = vpop.f32.mrb[0].mxu0
        %v1227 = vpop.f32.mrb[0].mxu0
        %1228 = vdwg.mxu0
        %v1229 = vadd.f32 %v1174, %v1224
        %s1230 = scalar_lea.vmem [#allocation5], 72
        %v1231 = vld [vmem:[%s1230] sm:$0xf]
        %1232 = vrot.lane.b32.xlu0 %v245, 101
        %v1233 = vpop.permute.xlu0 %1232
        %1234 = vrot.lane.b32.xlu0 %v246, 101
        %v1235 = vpop.permute.xlu0 %1234
        %vm1236 = vcmask 826368
        %v1237 = vsel %vm1236, %v1233, %v1235
        %v1239 = vsel %vm253, %v1231, 0
        %v1242 = vand.u32 %v1237, %v260
        %1244 = vmatprep.subr.bf16.mxu0 0
        %1245 = vmatpush1.bf16.msra.mxu0 %v1242
        %1246 = vmatprep.subr.bf16.mxu0 0
        %1247 = vmatpush1.bf16.msra.mxu0 0
        %1248 = vmatprep.subr.bf16.mxu0 0
        %1249 = vmatpush1.bf16.msra.mxu0 0
        %1250 = vmatprep.subr.bf16.mxu0 0
        %1251 = vmatpush1.bf16.msra.mxu0 0
        %1252 = vmatprep.subr.bf16.mxu0 0
        %1253 = vmatpush1.bf16.msra.mxu0 0
        %1254 = vmatprep.subr.bf16.mxu0 0
        %1255 = vmatpush1.bf16.msra.mxu0 0
        %1256 = vmatprep.subr.bf16.mxu0 0
        %1257 = vmatpush1.bf16.msra.mxu0 0
        %1258 = vmatprep.subr.bf16.mxu0 0
        %1259 = vmatpush1.bf16.msra.mxu0 0
        %1260 = vmatprep.subr.bf16.mxu0 0
        %1261 = vmatpush1.bf16.msra.mxu0 0
        %1262 = vmatprep.subr.bf16.mxu0 0
        %1263 = vmatpush1.bf16.msra.mxu0 0
        %1264 = vmatprep.subr.bf16.mxu0 0
        %1265 = vmatpush1.bf16.msra.mxu0 0
        %1266 = vmatprep.subr.bf16.mxu0 0
        %1267 = vmatpush1.bf16.msra.mxu0 0
        %1268 = vmatprep.subr.bf16.mxu0 0
        %1269 = vmatpush1.bf16.msra.mxu0 0
        %1270 = vmatprep.subr.bf16.mxu0 0
        %1271 = vmatpush1.bf16.msra.mxu0 0
        %1272 = vmatprep.subr.bf16.mxu0 0
        %1273 = vmatpush1.bf16.msra.mxu0 0
        %1274 = vmatprep.subr.bf16.mxu0 0
        %1275 = vmatpush1.bf16.msra.mxu0 0
        %1276 = vmatprep.mubr.bf16.mxu0 0
        %1277 = vmatmul.mubr.bf16.gmra.mrb[0].mxu0 %v1239
        %v1278 = vpop.f32.mrb[0].mxu0
        %v1279 = vadd.f32 0.0, %v1278
        %v1280 = vpop.f32.mrb[0].mxu0
        %v1281 = vpop.f32.mrb[0].mxu0
        %v1282 = vpop.f32.mrb[0].mxu0
        %1283 = vdwg.mxu0
        %v1284 = vadd.f32 %v1229, %v1279
        %s1285 = scalar_lea.vmem [#allocation5], 76
        %v1286 = vld [vmem:[%s1285] sm:$0xf]
        %1287 = vrot.lane.b32.xlu0 %v245, 100
        %v1288 = vpop.permute.xlu0 %1287
        %1289 = vrot.lane.b32.xlu0 %v246, 100
        %v1290 = vpop.permute.xlu0 %1289
        %vm1291 = vcmask 818176
        %v1292 = vsel %vm1291, %v1288, %v1290
        %v1294 = vsel %vm253, %v1286, 0
        %v1297 = vand.u32 %v1292, %v260
        %1299 = vmatprep.subr.bf16.mxu0 0
        %1300 = vmatpush1.bf16.msra.mxu0 %v1297
        %1301 = vmatprep.subr.bf16.mxu0 0
        %1302 = vmatpush1.bf16.msra.mxu0 0
        %1303 = vmatprep.subr.bf16.mxu0 0
        %1304 = vmatpush1.bf16.msra.mxu0 0
        %1305 = vmatprep.subr.bf16.mxu0 0
        %1306 = vmatpush1.bf16.msra.mxu0 0
        %1307 = vmatprep.subr.bf16.mxu0 0
        %1308 = vmatpush1.bf16.msra.mxu0 0
        %1309 = vmatprep.subr.bf16.mxu0 0
        %1310 = vmatpush1.bf16.msra.mxu0 0
        %1311 = vmatprep.subr.bf16.mxu0 0
        %1312 = vmatpush1.bf16.msra.mxu0 0
        %1313 = vmatprep.subr.bf16.mxu0 0
        %1314 = vmatpush1.bf16.msra.mxu0 0
        %1315 = vmatprep.subr.bf16.mxu0 0
        %1316 = vmatpush1.bf16.msra.mxu0 0
        %1317 = vmatprep.subr.bf16.mxu0 0
        %1318 = vmatpush1.bf16.msra.mxu0 0
        %1319 = vmatprep.subr.bf16.mxu0 0
        %1320 = vmatpush1.bf16.msra.mxu0 0
        %1321 = vmatprep.subr.bf16.mxu0 0
        %1322 = vmatpush1.bf16.msra.mxu0 0
        %1323 = vmatprep.subr.bf16.mxu0 0
        %1324 = vmatpush1.bf16.msra.mxu0 0
        %1325 = vmatprep.subr.bf16.mxu0 0
        %1326 = vmatpush1.bf16.msra.mxu0 0
        %1327 = vmatprep.subr.bf16.mxu0 0
        %1328 = vmatpush1.bf16.msra.mxu0 0
        %1329 = vmatprep.subr.bf16.mxu0 0
        %1330 = vmatpush1.bf16.msra.mxu0 0
        %1331 = vmatprep.mubr.bf16.mxu0 0
        %1332 = vmatmul.mubr.bf16.gmra.mrb[0].mxu0 %v1294
        %v1333 = vpop.f32.mrb[0].mxu0
        %v1334 = vadd.f32 0.0, %v1333
        %v1335 = vpop.f32.mrb[0].mxu0
        %v1336 = vpop.f32.mrb[0].mxu0
        %v1337 = vpop.f32.mrb[0].mxu0
        %1338 = vdwg.mxu0
        %v1339 = vadd.f32 %v1284, %v1334
        %s1340 = scalar_lea.vmem [#allocation5], 80
        %v1341 = vld [vmem:[%s1340] sm:$0xf]
        %1342 = vrot.lane.b32.xlu0 %v245, 96
        %v1343 = vpop.permute.xlu0 %1342
        %1344 = vrot.lane.b32.xlu0 %v246, 96
        %v1345 = vpop.permute.xlu0 %1344
        %vm1346 = vcmask 785408
        %v1347 = vsel %vm1346, %v1343, %v1345
        %v1349 = vsel %vm253, %v1341, 0
        %v1352 = vand.u32 %v1347, %v260
        %1354 = vmatprep.subr.bf16.mxu0 0
        %1355 = vmatpush1.bf16.msra.mxu0 %v1352
        %1356 = vmatprep.subr.bf16.mxu0 0
        %1357 = vmatpush1.bf16.msra.mxu0 0
        %1358 = vmatprep.subr.bf16.mxu0 0
        %1359 = vmatpush1.bf16.msra.mxu0 0
        %1360 = vmatprep.subr.bf16.mxu0 0
        %1361 = vmatpush1.bf16.msra.mxu0 0
        %1362 = vmatprep.subr.bf16.mxu0 0
        %1363 = vmatpush1.bf16.msra.mxu0 0
        %1364 = vmatprep.subr.bf16.mxu0 0
        %1365 = vmatpush1.bf16.msra.mxu0 0
        %1366 = vmatprep.subr.bf16.mxu0 0
        %1367 = vmatpush1.bf16.msra.mxu0 0
        %1368 = vmatprep.subr.bf16.mxu0 0
        %1369 = vmatpush1.bf16.msra.mxu0 0
        %1370 = vmatprep.subr.bf16.mxu0 0
        %1371 = vmatpush1.bf16.msra.mxu0 0
        %1372 = vmatprep.subr.bf16.mxu0 0
        %1373 = vmatpush1.bf16.msra.mxu0 0
        %1374 = vmatprep.subr.bf16.mxu0 0
        %1375 = vmatpush1.bf16.msra.mxu0 0
        %1376 = vmatprep.subr.bf16.mxu0 0
        %1377 = vmatpush1.bf16.msra.mxu0 0
        %1378 = vmatprep.subr.bf16.mxu0 0
        %1379 = vmatpush1.bf16.msra.mxu0 0
        %1380 = vmatprep.subr.bf16.mxu0 0
        %1381 = vmatpush1.bf16.msra.mxu0 0
        %1382 = vmatprep.subr.bf16.mxu0 0
        %1383 = vmatpush1.bf16.msra.mxu0 0
        %1384 = vmatprep.subr.bf16.mxu0 0
        %1385 = vmatpush1.bf16.msra.mxu0 0
        %1386 = vmatprep.mubr.bf16.mxu0 0
        %1387 = vmatmul.mubr.bf16.gmra.mrb[0].mxu0 %v1349
        %v1388 = vpop.f32.mrb[0].mxu0
        %v1389 = vadd.f32 0.0, %v1388
        %v1390 = vpop.f32.mrb[0].mxu0
        %v1391 = vpop.f32.mrb[0].mxu0
        %v1392 = vpop.f32.mrb[0].mxu0
        %1393 = vdwg.mxu0
        %v1394 = vadd.f32 %v1339, %v1389
        %s1395 = scalar_lea.vmem [#allocation5], 84
        %v1396 = vld [vmem:[%s1395] sm:$0xf]
        %1397 = vrot.lane.b32.xlu0 %v245, 95
        %v1398 = vpop.permute.xlu0 %1397
        %1399 = vrot.lane.b32.xlu0 %v246, 95
        %v1400 = vpop.permute.xlu0 %1399
        %vm1401 = vcmask 777216
        %v1402 = vsel %vm1401, %v1398, %v1400
        %v1404 = vsel %vm253, %v1396, 0
        %v1407 = vand.u32 %v1402, %v260
        %1409 = vmatprep.subr.bf16.mxu0 0
        %1410 = vmatpush1.bf16.msra.mxu0 %v1407
        %1411 = vmatprep.subr.bf16.mxu0 0
        %1412 = vmatpush1.bf16.msra.mxu0 0
        %1413 = vmatprep.subr.bf16.mxu0 0
        %1414 = vmatpush1.bf16.msra.mxu0 0
        %1415 = vmatprep.subr.bf16.mxu0 0
        %1416 = vmatpush1.bf16.msra.mxu0 0
        %1417 = vmatprep.subr.bf16.mxu0 0
        %1418 = vmatpush1.bf16.msra.mxu0 0
        %1419 = vmatprep.subr.bf16.mxu0 0
        %1420 = vmatpush1.bf16.msra.mxu0 0
        %1421 = vmatprep.subr.bf16.mxu0 0
        %1422 = vmatpush1.bf16.msra.mxu0 0
        %1423 = vmatprep.subr.bf16.mxu0 0
        %1424 = vmatpush1.bf16.msra.mxu0 0
        %1425 = vmatprep.subr.bf16.mxu0 0
        %1426 = vmatpush1.bf16.msra.mxu0 0
        %1427 = vmatprep.subr.bf16.mxu0 0
        %1428 = vmatpush1.bf16.msra.mxu0 0
        %1429 = vmatprep.subr.bf16.mxu0 0
        %1430 = vmatpush1.bf16.msra.mxu0 0
        %1431 = vmatprep.subr.bf16.mxu0 0
        %1432 = vmatpush1.bf16.msra.mxu0 0
        %1433 = vmatprep.subr.bf16.mxu0 0
        %1434 = vmatpush1.bf16.msra.mxu0 0
        %1435 = vmatprep.subr.bf16.mxu0 0
        %1436 = vmatpush1.bf16.msra.mxu0 0
        %1437 = vmatprep.subr.bf16.mxu0 0
        %1438 = vmatpush1.bf16.msra.mxu0 0
        %1439 = vmatprep.subr.bf16.mxu0 0
        %1440 = vmatpush1.bf16.msra.mxu0 0
        %1441 = vmatprep.mubr.bf16.mxu0 0
        %1442 = vmatmul.mubr.bf16.gmra.mrb[0].mxu0 %v1404
        %v1443 = vpop.f32.mrb[0].mxu0
        %v1444 = vadd.f32 0.0, %v1443
        %v1445 = vpop.f32.mrb[0].mxu0
        %v1446 = vpop.f32.mrb[0].mxu0
        %v1447 = vpop.f32.mrb[0].mxu0
        %1448 = vdwg.mxu0
        %v1449 = vadd.f32 %v1394, %v1444
        %s1450 = scalar_lea.vmem [#allocation5], 88
        %v1451 = vld [vmem:[%s1450] sm:$0xf]
        %1452 = vrot.lane.b32.xlu0 %v245, 94
        %v1453 = vpop.permute.xlu0 %1452
        %1454 = vrot.lane.b32.xlu0 %v246, 94
        %v1455 = vpop.permute.xlu0 %1454
        %vm1456 = vcmask 769024
        %v1457 = vsel %vm1456, %v1453, %v1455
        %v1459 = vsel %vm253, %v1451, 0
        %v1462 = vand.u32 %v1457, %v260
        %1464 = vmatprep.subr.bf16.mxu0 0
        %1465 = vmatpush1.bf16.msra.mxu0 %v1462
        %1466 = vmatprep.subr.bf16.mxu0 0
        %1467 = vmatpush1.bf16.msra.mxu0 0
        %1468 = vmatprep.subr.bf16.mxu0 0
        %1469 = vmatpush1.bf16.msra.mxu0 0
        %1470 = vmatprep.subr.bf16.mxu0 0
        %1471 = vmatpush1.bf16.msra.mxu0 0
        %1472 = vmatprep.subr.bf16.mxu0 0
        %1473 = vmatpush1.bf16.msra.mxu0 0
        %1474 = vmatprep.subr.bf16.mxu0 0
        %1475 = vmatpush1.bf16.msra.mxu0 0
        %1476 = vmatprep.subr.bf16.mxu0 0
        %1477 = vmatpush1.bf16.msra.mxu0 0
        %1478 = vmatprep.subr.bf16.mxu0 0
        %1479 = vmatpush1.bf16.msra.mxu0 0
        %1480 = vmatprep.subr.bf16.mxu0 0
        %1481 = vmatpush1.bf16.msra.mxu0 0
        %1482 = vmatprep.subr.bf16.mxu0 0
        %1483 = vmatpush1.bf16.msra.mxu0 0
        %1484 = vmatprep.subr.bf16.mxu0 0
        %1485 = vmatpush1.bf16.msra.mxu0 0
        %1486 = vmatprep.subr.bf16.mxu0 0
        %1487 = vmatpush1.bf16.msra.mxu0 0
        %1488 = vmatprep.subr.bf16.mxu0 0
        %1489 = vmatpush1.bf16.msra.mxu0 0
        %1490 = vmatprep.subr.bf16.mxu0 0
        %1491 = vmatpush1.bf16.msra.mxu0 0
        %1492 = vmatprep.subr.bf16.mxu0 0
        %1493 = vmatpush1.bf16.msra.mxu0 0
        %1494 = vmatprep.subr.bf16.mxu0 0
        %1495 = vmatpush1.bf16.msra.mxu0 0
        %1496 = vmatprep.mubr.bf16.mxu0 0
        %1497 = vmatmul.mubr.bf16.gmra.mrb[0].mxu0 %v1459
        %v1498 = vpop.f32.mrb[0].mxu0
        %v1499 = vadd.f32 0.0, %v1498
        %v1500 = vpop.f32.mrb[0].mxu0
        %v1501 = vpop.f32.mrb[0].mxu0
        %v1502 = vpop.f32.mrb[0].mxu0
        %1503 = vdwg.mxu0
        %v1504 = vadd.f32 %v1449, %v1499
        %s1505 = scalar_lea.vmem [#allocation5], 92
        %v1506 = vld [vmem:[%s1505] sm:$0xf]
        %1507 = vrot.lane.b32.xlu0 %v245, 93
        %v1508 = vpop.permute.xlu0 %1507
        %1509 = vrot.lane.b32.xlu0 %v246, 93
        %v1510 = vpop.permute.xlu0 %1509
        %vm1511 = vcmask 760832
        %v1512 = vsel %vm1511, %v1508, %v1510
        %v1514 = vsel %vm253, %v1506, 0
        %v1517 = vand.u32 %v1512, %v260
        %1519 = vmatprep.subr.bf16.mxu0 0
        %1520 = vmatpush1.bf16.msra.mxu0 %v1517
        %1521 = vmatprep.subr.bf16.mxu0 0
        %1522 = vmatpush1.bf16.msra.mxu0 0
        %1523 = vmatprep.subr.bf16.mxu0 0
        %1524 = vmatpush1.bf16.msra.mxu0 0
        %1525 = vmatprep.subr.bf16.mxu0 0
        %1526 = vmatpush1.bf16.msra.mxu0 0
        %1527 = vmatprep.subr.bf16.mxu0 0
        %1528 = vmatpush1.bf16.msra.mxu0 0
        %1529 = vmatprep.subr.bf16.mxu0 0
        %1530 = vmatpush1.bf16.msra.mxu0 0
        %1531 = vmatprep.subr.bf16.mxu0 0
        %1532 = vmatpush1.bf16.msra.mxu0 0
        %1533 = vmatprep.subr.bf16.mxu0 0
        %1534 = vmatpush1.bf16.msra.mxu0 0
        %1535 = vmatprep.subr.bf16.mxu0 0
        %1536 = vmatpush1.bf16.msra.mxu0 0
        %1537 = vmatprep.subr.bf16.mxu0 0
        %1538 = vmatpush1.bf16.msra.mxu0 0
        %1539 = vmatprep.subr.bf16.mxu0 0
        %1540 = vmatpush1.bf16.msra.mxu0 0
        %1541 = vmatprep.subr.bf16.mxu0 0
        %1542 = vmatpush1.bf16.msra.mxu0 0
        %1543 = vmatprep.subr.bf16.mxu0 0
        %1544 = vmatpush1.bf16.msra.mxu0 0
        %1545 = vmatprep.subr.bf16.mxu0 0
        %1546 = vmatpush1.bf16.msra.mxu0 0
        %1547 = vmatprep.subr.bf16.mxu0 0
        %1548 = vmatpush1.bf16.msra.mxu0 0
        %1549 = vmatprep.subr.bf16.mxu0 0
        %1550 = vmatpush1.bf16.msra.mxu0 0
        %1551 = vmatprep.mubr.bf16.mxu0 0
        %1552 = vmatmul.mubr.bf16.gmra.mrb[0].mxu0 %v1514
        %v1553 = vpop.f32.mrb[0].mxu0
        %v1554 = vadd.f32 0.0, %v1553
        %v1555 = vpop.f32.mrb[0].mxu0
        %v1556 = vpop.f32.mrb[0].mxu0
        %v1557 = vpop.f32.mrb[0].mxu0
        %1558 = vdwg.mxu0
        %v1559 = vadd.f32 %v1504, %v1554
        %s1560 = scalar_lea.vmem [#allocation5], 96
        %v1561 = vld [vmem:[%s1560] sm:$0xf]
        %1562 = vrot.lane.b32.xlu0 %v245, 92
        %v1563 = vpop.permute.xlu0 %1562
        %1564 = vrot.lane.b32.xlu0 %v246, 92
        %v1565 = vpop.permute.xlu0 %1564
        %vm1566 = vcmask 752640
        %v1567 = vsel %vm1566, %v1563, %v1565
        %v1569 = vsel %vm253, %v1561, 0
        %v1572 = vand.u32 %v1567, %v260
        %1574 = vmatprep.subr.bf16.mxu0 0
        %1575 = vmatpush1.bf16.msra.mxu0 %v1572
        %1576 = vmatprep.subr.bf16.mxu0 0
        %1577 = vmatpush1.bf16.msra.mxu0 0
        %1578 = vmatprep.subr.bf16.mxu0 0
        %1579 = vmatpush1.bf16.msra.mxu0 0
        %1580 = vmatprep.subr.bf16.mxu0 0
        %1581 = vmatpush1.bf16.msra.mxu0 0
        %1582 = vmatprep.subr.bf16.mxu0 0
        %1583 = vmatpush1.bf16.msra.mxu0 0
        %1584 = vmatprep.subr.bf16.mxu0 0
        %1585 = vmatpush1.bf16.msra.mxu0 0
        %1586 = vmatprep.subr.bf16.mxu0 0
        %1587 = vmatpush1.bf16.msra.mxu0 0
        %1588 = vmatprep.subr.bf16.mxu0 0
        %1589 = vmatpush1.bf16.msra.mxu0 0
        %1590 = vmatprep.subr.bf16.mxu0 0
        %1591 = vmatpush1.bf16.msra.mxu0 0
        %1592 = vmatprep.subr.bf16.mxu0 0
        %1593 = vmatpush1.bf16.msra.mxu0 0
        %1594 = vmatprep.subr.bf16.mxu0 0
        %1595 = vmatpush1.bf16.msra.mxu0 0
        %1596 = vmatprep.subr.bf16.mxu0 0
        %1597 = vmatpush1.bf16.msra.mxu0 0
        %1598 = vmatprep.subr.bf16.mxu0 0
        %1599 = vmatpush1.bf16.msra.mxu0 0
        %1600 = vmatprep.subr.bf16.mxu0 0
        %1601 = vmatpush1.bf16.msra.mxu0 0
        %1602 = vmatprep.subr.bf16.mxu0 0
        %1603 = vmatpush1.bf16.msra.mxu0 0
        %1604 = vmatprep.subr.bf16.mxu0 0
        %1605 = vmatpush1.bf16.msra.mxu0 0
        %1606 = vmatprep.mubr.bf16.mxu0 0
        %1607 = vmatmul.mubr.bf16.gmra.mrb[0].mxu0 %v1569
        %v1608 = vpop.f32.mrb[0].mxu0
        %v1609 = vadd.f32 0.0, %v1608
        %v1610 = vpop.f32.mrb[0].mxu0
        %v1611 = vpop.f32.mrb[0].mxu0
        %v1612 = vpop.f32.mrb[0].mxu0
        %1613 = vdwg.mxu0
        %v1614 = vadd.f32 %v1559, %v1609
        %s1615 = sadd.s32 %s26, 1
        %s1616 = smul.u32 %s1615, 2
        %s1617 = smul.addr %s1616, 2
        %s1618 = scalar_lea.vmem %s199, %s1617 [#allocation2]
        %v1619 = vld [vmem:[%s1618] sm:$0xf]
        %s1620 = scalar_lea.vmem [#allocation5], 100
        %v1621 = vld [vmem:[%s1620] sm:$0xf]
        %v1623 = vsel %vm253, %v1621, 0
        %v1626 = vand.u32 %v1619, %v260
        %1628 = vmatprep.subr.bf16.mxu0 0
        %1629 = vmatpush1.bf16.msra.mxu0 %v1626
        %1630 = vmatprep.subr.bf16.mxu0 0
        %1631 = vmatpush1.bf16.msra.mxu0 0
        %1632 = vmatprep.subr.bf16.mxu0 0
        %1633 = vmatpush1.bf16.msra.mxu0 0
        %1634 = vmatprep.subr.bf16.mxu0 0
        %1635 = vmatpush1.bf16.msra.mxu0 0
        %1636 = vmatprep.subr.bf16.mxu0 0
        %1637 = vmatpush1.bf16.msra.mxu0 0
        %1638 = vmatprep.subr.bf16.mxu0 0
        %1639 = vmatpush1.bf16.msra.mxu0 0
        %1640 = vmatprep.subr.bf16.mxu0 0
        %1641 = vmatpush1.bf16.msra.mxu0 0
        %1642 = vmatprep.subr.bf16.mxu0 0
        %1643 = vmatpush1.bf16.msra.mxu0 0
        %1644 = vmatprep.subr.bf16.mxu0 0
        %1645 = vmatpush1.bf16.msra.mxu0 0
        %1646 = vmatprep.subr.bf16.mxu0 0
        %1647 = vmatpush1.bf16.msra.mxu0 0
        %1648 = vmatprep.subr.bf16.mxu0 0
        %1649 = vmatpush1.bf16.msra.mxu0 0
        %1650 = vmatprep.subr.bf16.mxu0 0
        %1651 = vmatpush1.bf16.msra.mxu0 0
        %1652 = vmatprep.subr.bf16.mxu0 0
        %1653 = vmatpush1.bf16.msra.mxu0 0
        %1654 = vmatprep.subr.bf16.mxu0 0
        %1655 = vmatpush1.bf16.msra.mxu0 0
        %1656 = vmatprep.subr.bf16.mxu0 0
        %1657 = vmatpush1.bf16.msra.mxu0 0
        %1658 = vmatprep.subr.bf16.mxu0 0
        %1659 = vmatpush1.bf16.msra.mxu0 0
        %1660 = vmatprep.mubr.bf16.mxu0 0
        %1661 = vmatmul.mubr.bf16.gmra.mrb[0].mxu0 %v1623
        %v1662 = vpop.f32.mrb[0].mxu0
        %v1663 = vadd.f32 0.0, %v1662
        %v1664 = vpop.f32.mrb[0].mxu0
        %v1665 = vpop.f32.mrb[0].mxu0
        %v1666 = vpop.f32.mrb[0].mxu0
        %1667 = vdwg.mxu0
        %v1668 = vadd.f32 %v1614, %v1663
        %s1669 = scalar_lea.vmem [#allocation5], 104
        %v1670 = vld [vmem:[%s1669] sm:$0xf]
        %v1673 = vunpack.c.l.s4 1983009808
        %v1674 = vunpack.c.0.s8 %v1673
        %v1675 = vlaneseq
        %v1676 = vshrl.u32 %v1675, 7
        %v1677 = vsub.s32 %v1674, %v1676
        %v1678 = vrot.slane %v1619, %v1677
        %v1679 = vcombine.high %v1678, %v1678
        %1680 = vrot.lane.b32.xlu0 %v1678, 127
        %v1681 = vpop.permute.xlu0 %1680
        %1682 = vrot.lane.b32.xlu0 %v1679, 127
        %v1683 = vpop.permute.xlu0 %1682
        %v1684 = vsel %vm251, %v1681, %v1683
        %v1686 = vsel %vm253, %v1670, 0
        %v1689 = vand.u32 %v1684, %v260
        %1691 = vmatprep.subr.bf16.mxu0 0
        %1692 = vmatpush1.bf16.msra.mxu0 %v1689
        %1693 = vmatprep.subr.bf16.mxu0 0
        %1694 = vmatpush1.bf16.msra.mxu0 0
        %1695 = vmatprep.subr.bf16.mxu0 0
        %1696 = vmatpush1.bf16.msra.mxu0 0
        %1697 = vmatprep.subr.bf16.mxu0 0
        %1698 = vmatpush1.bf16.msra.mxu0 0
        %1699 = vmatprep.subr.bf16.mxu0 0
        %1700 = vmatpush1.bf16.msra.mxu0 0
        %1701 = vmatprep.subr.bf16.mxu0 0
        %1702 = vmatpush1.bf16.msra.mxu0 0
        %1703 = vmatprep.subr.bf16.mxu0 0
        %1704 = vmatpush1.bf16.msra.mxu0 0
        %1705 = vmatprep.subr.bf16.mxu0 0
        %1706 = vmatpush1.bf16.msra.mxu0 0
        %1707 = vmatprep.subr.bf16.mxu0 0
        %1708 = vmatpush1.bf16.msra.mxu0 0
        %1709 = vmatprep.subr.bf16.mxu0 0
        %1710 = vmatpush1.bf16.msra.mxu0 0
        %1711 = vmatprep.subr.bf16.mxu0 0
        %1712 = vmatpush1.bf16.msra.mxu0 0
        %1713 = vmatprep.subr.bf16.mxu0 0
        %1714 = vmatpush1.bf16.msra.mxu0 0
        %1715 = vmatprep.subr.bf16.mxu0 0
        %1716 = vmatpush1.bf16.msra.mxu0 0
        %1717 = vmatprep.subr.bf16.mxu0 0
        %1718 = vmatpush1.bf16.msra.mxu0 0
        %1719 = vmatprep.subr.bf16.mxu0 0
        %1720 = vmatpush1.bf16.msra.mxu0 0
        %1721 = vmatprep.subr.bf16.mxu0 0
        %1722 = vmatpush1.bf16.msra.mxu0 0
        %1723 = vmatprep.mubr.bf16.mxu0 0
        %1724 = vmatmul.mubr.bf16.gmra.mrb[0].mxu0 %v1686
        %v1725 = vpop.f32.mrb[0].mxu0
        %v1726 = vadd.f32 0.0, %v1725
        %v1727 = vpop.f32.mrb[0].mxu0
        %v1728 = vpop.f32.mrb[0].mxu0
        %v1729 = vpop.f32.mrb[0].mxu0
        %1730 = vdwg.mxu0
        %v1731 = vadd.f32 %v1668, %v1726
        %s1732 = scalar_lea.vmem [#allocation5], 108
        %v1733 = vld [vmem:[%s1732] sm:$0xf]
        %1734 = vrot.lane.b32.xlu0 %v1678, 126
        %v1735 = vpop.permute.xlu0 %1734
        %1736 = vrot.lane.b32.xlu0 %v1679, 126
        %v1737 = vpop.permute.xlu0 %1736
        %v1738 = vsel %vm356, %v1735, %v1737
        %v1740 = vsel %vm253, %v1733, 0
        %v1743 = vand.u32 %v1738, %v260
        %1745 = vmatprep.subr.bf16.mxu0 0
        %1746 = vmatpush1.bf16.msra.mxu0 %v1743
        %1747 = vmatprep.subr.bf16.mxu0 0
        %1748 = vmatpush1.bf16.msra.mxu0 0
        %1749 = vmatprep.subr.bf16.mxu0 0
        %1750 = vmatpush1.bf16.msra.mxu0 0
        %1751 = vmatprep.subr.bf16.mxu0 0
        %1752 = vmatpush1.bf16.msra.mxu0 0
        %1753 = vmatprep.subr.bf16.mxu0 0
        %1754 = vmatpush1.bf16.msra.mxu0 0
        %1755 = vmatprep.subr.bf16.mxu0 0
        %1756 = vmatpush1.bf16.msra.mxu0 0
        %1757 = vmatprep.subr.bf16.mxu0 0
        %1758 = vmatpush1.bf16.msra.mxu0 0
        %1759 = vmatprep.subr.bf16.mxu0 0
        %1760 = vmatpush1.bf16.msra.mxu0 0
        %1761 = vmatprep.subr.bf16.mxu0 0
        %1762 = vmatpush1.bf16.msra.mxu0 0
        %1763 = vmatprep.subr.bf16.mxu0 0
        %1764 = vmatpush1.bf16.msra.mxu0 0
        %1765 = vmatprep.subr.bf16.mxu0 0
        %1766 = vmatpush1.bf16.msra.mxu0 0
        %1767 = vmatprep.subr.bf16.mxu0 0
        %1768 = vmatpush1.bf16.msra.mxu0 0
        %1769 = vmatprep.subr.bf16.mxu0 0
        %1770 = vmatpush1.bf16.msra.mxu0 0
        %1771 = vmatprep.subr.bf16.mxu0 0
        %1772 = vmatpush1.bf16.msra.mxu0 0
        %1773 = vmatprep.subr.bf16.mxu0 0
        %1774 = vmatpush1.bf16.msra.mxu0 0
        %1775 = vmatprep.subr.bf16.mxu0 0
        %1776 = vmatpush1.bf16.msra.mxu0 0
        %1777 = vmatprep.mubr.bf16.mxu0 0
        %1778 = vmatmul.mubr.bf16.gmra.mrb[0].mxu0 %v1740
        %v1779 = vpop.f32.mrb[0].mxu0
        %v1780 = vadd.f32 0.0, %v1779
        %v1781 = vpop.f32.mrb[0].mxu0
        %v1782 = vpop.f32.mrb[0].mxu0
        %v1783 = vpop.f32.mrb[0].mxu0
        %1784 = vdwg.mxu0
        %v1785 = vadd.f32 %v1731, %v1780
        %s1786 = scalar_lea.vmem [#allocation5], 112
        %v1787 = vld [vmem:[%s1786] sm:$0xf]
        %1788 = vrot.lane.b32.xlu0 %v1678, 125
        %v1789 = vpop.permute.xlu0 %1788
        %1790 = vrot.lane.b32.xlu0 %v1679, 125
        %v1791 = vpop.permute.xlu0 %1790
        %v1792 = vsel %vm411, %v1789, %v1791
        %v1794 = vsel %vm253, %v1787, 0
        %v1797 = vand.u32 %v1792, %v260
        %1799 = vmatprep.subr.bf16.mxu0 0
        %1800 = vmatpush1.bf16.msra.mxu0 %v1797
        %1801 = vmatprep.subr.bf16.mxu0 0
        %1802 = vmatpush1.bf16.msra.mxu0 0
        %1803 = vmatprep.subr.bf16.mxu0 0
        %1804 = vmatpush1.bf16.msra.mxu0 0
        %1805 = vmatprep.subr.bf16.mxu0 0
        %1806 = vmatpush1.bf16.msra.mxu0 0
        %1807 = vmatprep.subr.bf16.mxu0 0
        %1808 = vmatpush1.bf16.msra.mxu0 0
        %1809 = vmatprep.subr.bf16.mxu0 0
        %1810 = vmatpush1.bf16.msra.mxu0 0
        %1811 = vmatprep.subr.bf16.mxu0 0
        %1812 = vmatpush1.bf16.msra.mxu0 0
        %1813 = vmatprep.subr.bf16.mxu0 0
        %1814 = vmatpush1.bf16.msra.mxu0 0
        %1815 = vmatprep.subr.bf16.mxu0 0
        %1816 = vmatpush1.bf16.msra.mxu0 0
        %1817 = vmatprep.subr.bf16.mxu0 0
        %1818 = vmatpush1.bf16.msra.mxu0 0
        %1819 = vmatprep.subr.bf16.mxu0 0
        %1820 = vmatpush1.bf16.msra.mxu0 0
        %1821 = vmatprep.subr.bf16.mxu0 0
        %1822 = vmatpush1.bf16.msra.mxu0 0
        %1823 = vmatprep.subr.bf16.mxu0 0
        %1824 = vmatpush1.bf16.msra.mxu0 0
        %1825 = vmatprep.subr.bf16.mxu0 0
        %1826 = vmatpush1.bf16.msra.mxu0 0
        %1827 = vmatprep.subr.bf16.mxu0 0
        %1828 = vmatpush1.bf16.msra.mxu0 0
        %1829 = vmatprep.subr.bf16.mxu0 0
        %1830 = vmatpush1.bf16.msra.mxu0 0
        %1831 = vmatprep.mubr.bf16.mxu0 0
        %1832 = vmatmul.mubr.bf16.gmra.mrb[0].mxu0 %v1794
        %v1833 = vpop.f32.mrb[0].mxu0
        %v1834 = vadd.f32 0.0, %v1833
        %v1835 = vpop.f32.mrb[0].mxu0
        %v1836 = vpop.f32.mrb[0].mxu0
        %v1837 = vpop.f32.mrb[0].mxu0
        %1838 = vdwg.mxu0
        %v1839 = vadd.f32 %v1785, %v1834
        %s1840 = scalar_lea.vmem [#allocation5], 116
        %v1841 = vld [vmem:[%s1840] sm:$0xf]
        %1842 = vrot.lane.b32.xlu0 %v1678, 124
        %v1843 = vpop.permute.xlu0 %1842
        %1844 = vrot.lane.b32.xlu0 %v1679, 124
        %v1845 = vpop.permute.xlu0 %1844
        %v1846 = vsel %vm466, %v1843, %v1845
        %v1848 = vsel %vm253, %v1841, 0
        %v1851 = vand.u32 %v1846, %v260
        %1853 = vmatprep.subr.bf16.mxu0 0
        %1854 = vmatpush1.bf16.msra.mxu0 %v1851
        %1855 = vmatprep.subr.bf16.mxu0 0
        %1856 = vmatpush1.bf16.msra.mxu0 0
        %1857 = vmatprep.subr.bf16.mxu0 0
        %1858 = vmatpush1.bf16.msra.mxu0 0
        %1859 = vmatprep.subr.bf16.mxu0 0
        %1860 = vmatpush1.bf16.msra.mxu0 0
        %1861 = vmatprep.subr.bf16.mxu0 0
        %1862 = vmatpush1.bf16.msra.mxu0 0
        %1863 = vmatprep.subr.bf16.mxu0 0
        %1864 = vmatpush1.bf16.msra.mxu0 0
        %1865 = vmatprep.subr.bf16.mxu0 0
        %1866 = vmatpush1.bf16.msra.mxu0 0
        %1867 = vmatprep.subr.bf16.mxu0 0
        %1868 = vmatpush1.bf16.msra.mxu0 0
        %1869 = vmatprep.subr.bf16.mxu0 0
        %1870 = vmatpush1.bf16.msra.mxu0 0
        %1871 = vmatprep.subr.bf16.mxu0 0
        %1872 = vmatpush1.bf16.msra.mxu0 0
        %1873 = vmatprep.subr.bf16.mxu0 0
        %1874 = vmatpush1.bf16.msra.mxu0 0
        %1875 = vmatprep.subr.bf16.mxu0 0
        %1876 = vmatpush1.bf16.msra.mxu0 0
        %1877 = vmatprep.subr.bf16.mxu0 0
        %1878 = vmatpush1.bf16.msra.mxu0 0
        %1879 = vmatprep.subr.bf16.mxu0 0
        %1880 = vmatpush1.bf16.msra.mxu0 0
        %1881 = vmatprep.subr.bf16.mxu0 0
        %1882 = vmatpush1.bf16.msra.mxu0 0
        %1883 = vmatprep.subr.bf16.mxu0 0
        %1884 = vmatpush1.bf16.msra.mxu0 0
        %1885 = vmatprep.mubr.bf16.mxu0 0
        %1886 = vmatmul.mubr.bf16.gmra.mrb[0].mxu0 %v1848
        %v1887 = vpop.f32.mrb[0].mxu0
        %v1888 = vadd.f32 0.0, %v1887
        %v1889 = vpop.f32.mrb[0].mxu0
        %v1890 = vpop.f32.mrb[0].mxu0
        %v1891 = vpop.f32.mrb[0].mxu0
        %1892 = vdwg.mxu0
        %v1893 = vadd.f32 %v1839, %v1888
        %s1894 = scalar_lea.vmem [#allocation5], 120
        %v1895 = vld [vmem:[%s1894] sm:$0xf]
        %1896 = vrot.lane.b32.xlu0 %v1678, 120
        %v1897 = vpop.permute.xlu0 %1896
        %1898 = vrot.lane.b32.xlu0 %v1679, 120
        %v1899 = vpop.permute.xlu0 %1898
        %v1900 = vsel %vm521, %v1897, %v1899
        %v1902 = vsel %vm253, %v1895, 0
        %v1905 = vand.u32 %v1900, %v260
        %1907 = vmatprep.subr.bf16.mxu0 0
        %1908 = vmatpush1.bf16.msra.mxu0 %v1905
        %1909 = vmatprep.subr.bf16.mxu0 0
        %1910 = vmatpush1.bf16.msra.mxu0 0
        %1911 = vmatprep.subr.bf16.mxu0 0
        %1912 = vmatpush1.bf16.msra.mxu0 0
        %1913 = vmatprep.subr.bf16.mxu0 0
        %1914 = vmatpush1.bf16.msra.mxu0 0
        %1915 = vmatprep.subr.bf16.mxu0 0
        %1916 = vmatpush1.bf16.msra.mxu0 0
        %1917 = vmatprep.subr.bf16.mxu0 0
        %1918 = vmatpush1.bf16.msra.mxu0 0
        %1919 = vmatprep.subr.bf16.mxu0 0
        %1920 = vmatpush1.bf16.msra.mxu0 0
        %1921 = vmatprep.subr.bf16.mxu0 0
        %1922 = vmatpush1.bf16.msra.mxu0 0
        %1923 = vmatprep.subr.bf16.mxu0 0
        %1924 = vmatpush1.bf16.msra.mxu0 0
        %1925 = vmatprep.subr.bf16.mxu0 0
        %1926 = vmatpush1.bf16.msra.mxu0 0
        %1927 = vmatprep.subr.bf16.mxu0 0
        %1928 = vmatpush1.bf16.msra.mxu0 0
        %1929 = vmatprep.subr.bf16.mxu0 0
        %1930 = vmatpush1.bf16.msra.mxu0 0
        %1931 = vmatprep.subr.bf16.mxu0 0
        %1932 = vmatpush1.bf16.msra.mxu0 0
        %1933 = vmatprep.subr.bf16.mxu0 0
        %1934 = vmatpush1.bf16.msra.mxu0 0
        %1935 = vmatprep.subr.bf16.mxu0 0
        %1936 = vmatpush1.bf16.msra.mxu0 0
        %1937 = vmatprep.subr.bf16.mxu0 0
        %1938 = vmatpush1.bf16.msra.mxu0 0
        %1939 = vmatprep.mubr.bf16.mxu0 0
        %1940 = vmatmul.mubr.bf16.gmra.mrb[0].mxu0 %v1902
        %v1941 = vpop.f32.mrb[0].mxu0
        %v1942 = vadd.f32 0.0, %v1941
        %v1943 = vpop.f32.mrb[0].mxu0
        %v1944 = vpop.f32.mrb[0].mxu0
        %v1945 = vpop.f32.mrb[0].mxu0
        %1946 = vdwg.mxu0
        %v1947 = vadd.f32 %v1893, %v1942
        %s1948 = scalar_lea.vmem [#allocation5], 124
        %v1949 = vld [vmem:[%s1948] sm:$0xf]
        %1950 = vrot.lane.b32.xlu0 %v1678, 119
        %v1951 = vpop.permute.xlu0 %1950
        %1952 = vrot.lane.b32.xlu0 %v1679, 119
        %v1953 = vpop.permute.xlu0 %1952
        %v1954 = vsel %vm576, %v1951, %v1953
        %v1956 = vsel %vm253, %v1949, 0
        %v1959 = vand.u32 %v1954, %v260
        %1961 = vmatprep.subr.bf16.mxu0 0
        %1962 = vmatpush1.bf16.msra.mxu0 %v1959
        %1963 = vmatprep.subr.bf16.mxu0 0
        %1964 = vmatpush1.bf16.msra.mxu0 0
        %1965 = vmatprep.subr.bf16.mxu0 0
        %1966 = vmatpush1.bf16.msra.mxu0 0
        %1967 = vmatprep.subr.bf16.mxu0 0
        %1968 = vmatpush1.bf16.msra.mxu0 0
        %1969 = vmatprep.subr.bf16.mxu0 0
        %1970 = vmatpush1.bf16.msra.mxu0 0
        %1971 = vmatprep.subr.bf16.mxu0 0
        %1972 = vmatpush1.bf16.msra.mxu0 0
        %1973 = vmatprep.subr.bf16.mxu0 0
        %1974 = vmatpush1.bf16.msra.mxu0 0
        %1975 = vmatprep.subr.bf16.mxu0 0
        %1976 = vmatpush1.bf16.msra.mxu0 0
        %1977 = vmatprep.subr.bf16.mxu0 0
        %1978 = vmatpush1.bf16.msra.mxu0 0
        %1979 = vmatprep.subr.bf16.mxu0 0
        %1980 = vmatpush1.bf16.msra.mxu0 0
        %1981 = vmatprep.subr.bf16.mxu0 0
        %1982 = vmatpush1.bf16.msra.mxu0 0
        %1983 = vmatprep.subr.bf16.mxu0 0
        %1984 = vmatpush1.bf16.msra.mxu0 0
        %1985 = vmatprep.subr.bf16.mxu0 0
        %1986 = vmatpush1.bf16.msra.mxu0 0
        %1987 = vmatprep.subr.bf16.mxu0 0
        %1988 = vmatpush1.bf16.msra.mxu0 0
        %1989 = vmatprep.subr.bf16.mxu0 0
        %1990 = vmatpush1.bf16.msra.mxu0 0
        %1991 = vmatprep.subr.bf16.mxu0 0
        %1992 = vmatpush1.bf16.msra.mxu0 0
        %1993 = vmatprep.mubr.bf16.mxu0 0
        %1994 = vmatmul.mubr.bf16.gmra.mrb[0].mxu0 %v1956
        %v1995 = vpop.f32.mrb[0].mxu0
        %v1996 = vadd.f32 0.0, %v1995
        %v1997 = vpop.f32.mrb[0].mxu0
        %v1998 = vpop.f32.mrb[0].mxu0
        %v1999 = vpop.f32.mrb[0].mxu0
        %2000 = vdwg.mxu0
        %v2001 = vadd.f32 %v1947, %v1996
        %s2002 = scalar_lea.vmem [#allocation5], 128
        %v2003 = vld [vmem:[%s2002] sm:$0xf]
        %2004 = vrot.lane.b32.xlu0 %v1678, 118
        %v2005 = vpop.permute.xlu0 %2004
        %2006 = vrot.lane.b32.xlu0 %v1679, 118
        %v2007 = vpop.permute.xlu0 %2006
        %v2008 = vsel %vm631, %v2005, %v2007
        %v2010 = vsel %vm253, %v2003, 0
        %v2013 = vand.u32 %v2008, %v260
        %2015 = vmatprep.subr.bf16.mxu0 0
        %2016 = vmatpush1.bf16.msra.mxu0 %v2013
        %2017 = vmatprep.subr.bf16.mxu0 0
        %2018 = vmatpush1.bf16.msra.mxu0 0
        %2019 = vmatprep.subr.bf16.mxu0 0
        %2020 = vmatpush1.bf16.msra.mxu0 0
        %2021 = vmatprep.subr.bf16.mxu0 0
        %2022 = vmatpush1.bf16.msra.mxu0 0
        %2023 = vmatprep.subr.bf16.mxu0 0
        %2024 = vmatpush1.bf16.msra.mxu0 0
        %2025 = vmatprep.subr.bf16.mxu0 0
        %2026 = vmatpush1.bf16.msra.mxu0 0
        %2027 = vmatprep.subr.bf16.mxu0 0
        %2028 = vmatpush1.bf16.msra.mxu0 0
        %2029 = vmatprep.subr.bf16.mxu0 0
        %2030 = vmatpush1.bf16.msra.mxu0 0
        %2031 = vmatprep.subr.bf16.mxu0 0
        %2032 = vmatpush1.bf16.msra.mxu0 0
        %2033 = vmatprep.subr.bf16.mxu0 0
        %2034 = vmatpush1.bf16.msra.mxu0 0
        %2035 = vmatprep.subr.bf16.mxu0 0
        %2036 = vmatpush1.bf16.msra.mxu0 0
        %2037 = vmatprep.subr.bf16.mxu0 0
        %2038 = vmatpush1.bf16.msra.mxu0 0
        %2039 = vmatprep.subr.bf16.mxu0 0
        %2040 = vmatpush1.bf16.msra.mxu0 0
        %2041 = vmatprep.subr.bf16.mxu0 0
        %2042 = vmatpush1.bf16.msra.mxu0 0
        %2043 = vmatprep.subr.bf16.mxu0 0
        %2044 = vmatpush1.bf16.msra.mxu0 0
        %2045 = vmatprep.subr.bf16.mxu0 0
        %2046 = vmatpush1.bf16.msra.mxu0 0
        %2047 = vmatprep.mubr.bf16.mxu0 0
        %2048 = vmatmul.mubr.bf16.gmra.mrb[0].mxu0 %v2010
        %v2049 = vpop.f32.mrb[0].mxu0
        %v2050 = vadd.f32 0.0, %v2049
        %v2051 = vpop.f32.mrb[0].mxu0
        %v2052 = vpop.f32.mrb[0].mxu0
        %v2053 = vpop.f32.mrb[0].mxu0
        %2054 = vdwg.mxu0
        %v2055 = vadd.f32 %v2001, %v2050
        %s2056 = scalar_lea.vmem [#allocation5], 132
        %v2057 = vld [vmem:[%s2056] sm:$0xf]
        %2058 = vrot.lane.b32.xlu0 %v1678, 117
        %v2059 = vpop.permute.xlu0 %2058
        %2060 = vrot.lane.b32.xlu0 %v1679, 117
        %v2061 = vpop.permute.xlu0 %2060
        %v2062 = vsel %vm686, %v2059, %v2061
        %v2064 = vsel %vm253, %v2057, 0
        %v2067 = vand.u32 %v2062, %v260
        %2069 = vmatprep.subr.bf16.mxu0 0
        %2070 = vmatpush1.bf16.msra.mxu0 %v2067
        %2071 = vmatprep.subr.bf16.mxu0 0
        %2072 = vmatpush1.bf16.msra.mxu0 0
        %2073 = vmatprep.subr.bf16.mxu0 0
        %2074 = vmatpush1.bf16.msra.mxu0 0
        %2075 = vmatprep.subr.bf16.mxu0 0
        %2076 = vmatpush1.bf16.msra.mxu0 0
        %2077 = vmatprep.subr.bf16.mxu0 0
        %2078 = vmatpush1.bf16.msra.mxu0 0
        %2079 = vmatprep.subr.bf16.mxu0 0
        %2080 = vmatpush1.bf16.msra.mxu0 0
        %2081 = vmatprep.subr.bf16.mxu0 0
        %2082 = vmatpush1.bf16.msra.mxu0 0
        %2083 = vmatprep.subr.bf16.mxu0 0
        %2084 = vmatpush1.bf16.msra.mxu0 0
        %2085 = vmatprep.subr.bf16.mxu0 0
        %2086 = vmatpush1.bf16.msra.mxu0 0
        %2087 = vmatprep.subr.bf16.mxu0 0
        %2088 = vmatpush1.bf16.msra.mxu0 0
        %2089 = vmatprep.subr.bf16.mxu0 0
        %2090 = vmatpush1.bf16.msra.mxu0 0
        %2091 = vmatprep.subr.bf16.mxu0 0
        %2092 = vmatpush1.bf16.msra.mxu0 0
        %2093 = vmatprep.subr.bf16.mxu0 0
        %2094 = vmatpush1.bf16.msra.mxu0 0
        %2095 = vmatprep.subr.bf16.mxu0 0
        %2096 = vmatpush1.bf16.msra.mxu0 0
        %2097 = vmatprep.subr.bf16.mxu0 0
        %2098 = vmatpush1.bf16.msra.mxu0 0
        %2099 = vmatprep.subr.bf16.mxu0 0
        %2100 = vmatpush1.bf16.msra.mxu0 0
        %2101 = vmatprep.mubr.bf16.mxu0 0
        %2102 = vmatmul.mubr.bf16.gmra.mrb[0].mxu0 %v2064
        %v2103 = vpop.f32.mrb[0].mxu0
        %v2104 = vadd.f32 0.0, %v2103
        %v2105 = vpop.f32.mrb[0].mxu0
        %v2106 = vpop.f32.mrb[0].mxu0
        %v2107 = vpop.f32.mrb[0].mxu0
        %2108 = vdwg.mxu0
        %v2109 = vadd.f32 %v2055, %v2104
        %s2110 = scalar_lea.vmem [#allocation5], 136
        %v2111 = vld [vmem:[%s2110] sm:$0xf]
        %2112 = vrot.lane.b32.xlu0 %v1678, 116
        %v2113 = vpop.permute.xlu0 %2112
        %2114 = vrot.lane.b32.xlu0 %v1679, 116
        %v2115 = vpop.permute.xlu0 %2114
        %v2116 = vsel %vm741, %v2113, %v2115
        %v2118 = vsel %vm253, %v2111, 0
        %v2121 = vand.u32 %v2116, %v260
        %2123 = vmatprep.subr.bf16.mxu0 0
        %2124 = vmatpush1.bf16.msra.mxu0 %v2121
        %2125 = vmatprep.subr.bf16.mxu0 0
        %2126 = vmatpush1.bf16.msra.mxu0 0
        %2127 = vmatprep.subr.bf16.mxu0 0
        %2128 = vmatpush1.bf16.msra.mxu0 0
        %2129 = vmatprep.subr.bf16.mxu0 0
        %2130 = vmatpush1.bf16.msra.mxu0 0
        %2131 = vmatprep.subr.bf16.mxu0 0
        %2132 = vmatpush1.bf16.msra.mxu0 0
        %2133 = vmatprep.subr.bf16.mxu0 0
        %2134 = vmatpush1.bf16.msra.mxu0 0
        %2135 = vmatprep.subr.bf16.mxu0 0
        %2136 = vmatpush1.bf16.msra.mxu0 0
        %2137 = vmatprep.subr.bf16.mxu0 0
        %2138 = vmatpush1.bf16.msra.mxu0 0
        %2139 = vmatprep.subr.bf16.mxu0 0
        %2140 = vmatpush1.bf16.msra.mxu0 0
        %2141 = vmatprep.subr.bf16.mxu0 0
        %2142 = vmatpush1.bf16.msra.mxu0 0
        %2143 = vmatprep.subr.bf16.mxu0 0
        %2144 = vmatpush1.bf16.msra.mxu0 0
        %2145 = vmatprep.subr.bf16.mxu0 0
        %2146 = vmatpush1.bf16.msra.mxu0 0
        %2147 = vmatprep.subr.bf16.mxu0 0
        %2148 = vmatpush1.bf16.msra.mxu0 0
        %2149 = vmatprep.subr.bf16.mxu0 0
        %2150 = vmatpush1.bf16.msra.mxu0 0
        %2151 = vmatprep.subr.bf16.mxu0 0
        %2152 = vmatpush1.bf16.msra.mxu0 0
        %2153 = vmatprep.subr.bf16.mxu0 0
        %2154 = vmatpush1.bf16.msra.mxu0 0
        %2155 = vmatprep.mubr.bf16.mxu0 0
        %2156 = vmatmul.mubr.bf16.gmra.mrb[0].mxu0 %v2118
        %v2157 = vpop.f32.mrb[0].mxu0
        %v2158 = vadd.f32 0.0, %v2157
        %v2159 = vpop.f32.mrb[0].mxu0
        %v2160 = vpop.f32.mrb[0].mxu0
        %v2161 = vpop.f32.mrb[0].mxu0
        %2162 = vdwg.mxu0
        %v2163 = vadd.f32 %v2109, %v2158
        %s2164 = scalar_lea.vmem [#allocation5], 140
        %v2165 = vld [vmem:[%s2164] sm:$0xf]
        %2166 = vrot.lane.b32.xlu0 %v1678, 112
        %v2167 = vpop.permute.xlu0 %2166
        %2168 = vrot.lane.b32.xlu0 %v1679, 112
        %v2169 = vpop.permute.xlu0 %2168
        %v2170 = vsel %vm796, %v2167, %v2169
        %v2172 = vsel %vm253, %v2165, 0
        %v2175 = vand.u32 %v2170, %v260
        %2177 = vmatprep.subr.bf16.mxu0 0
        %2178 = vmatpush1.bf16.msra.mxu0 %v2175
        %2179 = vmatprep.subr.bf16.mxu0 0
        %2180 = vmatpush1.bf16.msra.mxu0 0
        %2181 = vmatprep.subr.bf16.mxu0 0
        %2182 = vmatpush1.bf16.msra.mxu0 0
        %2183 = vmatprep.subr.bf16.mxu0 0
        %2184 = vmatpush1.bf16.msra.mxu0 0
        %2185 = vmatprep.subr.bf16.mxu0 0
        %2186 = vmatpush1.bf16.msra.mxu0 0
        %2187 = vmatprep.subr.bf16.mxu0 0
        %2188 = vmatpush1.bf16.msra.mxu0 0
        %2189 = vmatprep.subr.bf16.mxu0 0
        %2190 = vmatpush1.bf16.msra.mxu0 0
        %2191 = vmatprep.subr.bf16.mxu0 0
        %2192 = vmatpush1.bf16.msra.mxu0 0
        %2193 = vmatprep.subr.bf16.mxu0 0
        %2194 = vmatpush1.bf16.msra.mxu0 0
        %2195 = vmatprep.subr.bf16.mxu0 0
        %2196 = vmatpush1.bf16.msra.mxu0 0
        %2197 = vmatprep.subr.bf16.mxu0 0
        %2198 = vmatpush1.bf16.msra.mxu0 0
        %2199 = vmatprep.subr.bf16.mxu0 0
        %2200 = vmatpush1.bf16.msra.mxu0 0
        %2201 = vmatprep.subr.bf16.mxu0 0
        %2202 = vmatpush1.bf16.msra.mxu0 0
        %2203 = vmatprep.subr.bf16.mxu0 0
        %2204 = vmatpush1.bf16.msra.mxu0 0
        %2205 = vmatprep.subr.bf16.mxu0 0
        %2206 = vmatpush1.bf16.msra.mxu0 0
        %2207 = vmatprep.subr.bf16.mxu0 0
        %2208 = vmatpush1.bf16.msra.mxu0 0
        %2209 = vmatprep.mubr.bf16.mxu0 0
        %2210 = vmatmul.mubr.bf16.gmra.mrb[0].mxu0 %v2172
        %v2211 = vpop.f32.mrb[0].mxu0
        %v2212 = vadd.f32 0.0, %v2211
        %v2213 = vpop.f32.mrb[0].mxu0
        %v2214 = vpop.f32.mrb[0].mxu0
        %v2215 = vpop.f32.mrb[0].mxu0
        %2216 = vdwg.mxu0
        %v2217 = vadd.f32 %v2163, %v2212
        %s2218 = scalar_lea.vmem [#allocation5], 144
        %v2219 = vld [vmem:[%s2218] sm:$0xf]
        %2220 = vrot.lane.b32.xlu0 %v1678, 111
        %v2221 = vpop.permute.xlu0 %2220
        %2222 = vrot.lane.b32.xlu0 %v1679, 111
        %v2223 = vpop.permute.xlu0 %2222
        %v2224 = vsel %vm851, %v2221, %v2223
        %v2226 = vsel %vm253, %v2219, 0
        %v2229 = vand.u32 %v2224, %v260
        %2231 = vmatprep.subr.bf16.mxu0 0
        %2232 = vmatpush1.bf16.msra.mxu0 %v2229
        %2233 = vmatprep.subr.bf16.mxu0 0
        %2234 = vmatpush1.bf16.msra.mxu0 0
        %2235 = vmatprep.subr.bf16.mxu0 0
        %2236 = vmatpush1.bf16.msra.mxu0 0
        %2237 = vmatprep.subr.bf16.mxu0 0
        %2238 = vmatpush1.bf16.msra.mxu0 0
        %2239 = vmatprep.subr.bf16.mxu0 0
        %2240 = vmatpush1.bf16.msra.mxu0 0
        %2241 = vmatprep.subr.bf16.mxu0 0
        %2242 = vmatpush1.bf16.msra.mxu0 0
        %2243 = vmatprep.subr.bf16.mxu0 0
        %2244 = vmatpush1.bf16.msra.mxu0 0
        %2245 = vmatprep.subr.bf16.mxu0 0
        %2246 = vmatpush1.bf16.msra.mxu0 0
        %2247 = vmatprep.subr.bf16.mxu0 0
        %2248 = vmatpush1.bf16.msra.mxu0 0
        %2249 = vmatprep.subr.bf16.mxu0 0
        %2250 = vmatpush1.bf16.msra.mxu0 0
        %2251 = vmatprep.subr.bf16.mxu0 0
        %2252 = vmatpush1.bf16.msra.mxu0 0
        %2253 = vmatprep.subr.bf16.mxu0 0
        %2254 = vmatpush1.bf16.msra.mxu0 0
        %2255 = vmatprep.subr.bf16.mxu0 0
        %2256 = vmatpush1.bf16.msra.mxu0 0
        %2257 = vmatprep.subr.bf16.mxu0 0
        %2258 = vmatpush1.bf16.msra.mxu0 0
        %2259 = vmatprep.subr.bf16.mxu0 0
        %2260 = vmatpush1.bf16.msra.mxu0 0
        %2261 = vmatprep.subr.bf16.mxu0 0
        %2262 = vmatpush1.bf16.msra.mxu0 0
        %2263 = vmatprep.mubr.bf16.mxu0 0
        %2264 = vmatmul.mubr.bf16.gmra.mrb[0].mxu0 %v2226
        %v2265 = vpop.f32.mrb[0].mxu0
        %v2266 = vadd.f32 0.0, %v2265
        %v2267 = vpop.f32.mrb[0].mxu0
        %v2268 = vpop.f32.mrb[0].mxu0
        %v2269 = vpop.f32.mrb[0].mxu0
        %2270 = vdwg.mxu0
        %v2271 = vadd.f32 %v2217, %v2266
        %s2272 = scalar_lea.vmem [#allocation5], 148
        %v2273 = vld [vmem:[%s2272] sm:$0xf]
        %2274 = vrot.lane.b32.xlu0 %v1678, 110
        %v2275 = vpop.permute.xlu0 %2274
        %2276 = vrot.lane.b32.xlu0 %v1679, 110
        %v2277 = vpop.permute.xlu0 %2276
        %v2278 = vsel %vm906, %v2275, %v2277
        %v2280 = vsel %vm253, %v2273, 0
        %v2283 = vand.u32 %v2278, %v260
        %2285 = vmatprep.subr.bf16.mxu0 0
        %2286 = vmatpush1.bf16.msra.mxu0 %v2283
        %2287 = vmatprep.subr.bf16.mxu0 0
        %2288 = vmatpush1.bf16.msra.mxu0 0
        %2289 = vmatprep.subr.bf16.mxu0 0
        %2290 = vmatpush1.bf16.msra.mxu0 0
        %2291 = vmatprep.subr.bf16.mxu0 0
        %2292 = vmatpush1.bf16.msra.mxu0 0
        %2293 = vmatprep.subr.bf16.mxu0 0
        %2294 = vmatpush1.bf16.msra.mxu0 0
        %2295 = vmatprep.subr.bf16.mxu0 0
        %2296 = vmatpush1.bf16.msra.mxu0 0
        %2297 = vmatprep.subr.bf16.mxu0 0
        %2298 = vmatpush1.bf16.msra.mxu0 0
        %2299 = vmatprep.subr.bf16.mxu0 0
        %2300 = vmatpush1.bf16.msra.mxu0 0
        %2301 = vmatprep.subr.bf16.mxu0 0
        %2302 = vmatpush1.bf16.msra.mxu0 0
        %2303 = vmatprep.subr.bf16.mxu0 0
        %2304 = vmatpush1.bf16.msra.mxu0 0
        %2305 = vmatprep.subr.bf16.mxu0 0
        %2306 = vmatpush1.bf16.msra.mxu0 0
        %2307 = vmatprep.subr.bf16.mxu0 0
        %2308 = vmatpush1.bf16.msra.mxu0 0
        %2309 = vmatprep.subr.bf16.mxu0 0
        %2310 = vmatpush1.bf16.msra.mxu0 0
        %2311 = vmatprep.subr.bf16.mxu0 0
        %2312 = vmatpush1.bf16.msra.mxu0 0
        %2313 = vmatprep.subr.bf16.mxu0 0
        %2314 = vmatpush1.bf16.msra.mxu0 0
        %2315 = vmatprep.subr.bf16.mxu0 0
        %2316 = vmatpush1.bf16.msra.mxu0 0
        %2317 = vmatprep.mubr.bf16.mxu0 0
        %2318 = vmatmul.mubr.bf16.gmra.mrb[0].mxu0 %v2280
        %v2319 = vpop.f32.mrb[0].mxu0
        %v2320 = vadd.f32 0.0, %v2319
        %v2321 = vpop.f32.mrb[0].mxu0
        %v2322 = vpop.f32.mrb[0].mxu0
        %v2323 = vpop.f32.mrb[0].mxu0
        %2324 = vdwg.mxu0
        %v2325 = vadd.f32 %v2271, %v2320
        %s2326 = scalar_lea.vmem [#allocation5], 152
        %v2327 = vld [vmem:[%s2326] sm:$0xf]
        %2328 = vrot.lane.b32.xlu0 %v1678, 109
        %v2329 = vpop.permute.xlu0 %2328
        %2330 = vrot.lane.b32.xlu0 %v1679, 109
        %v2331 = vpop.permute.xlu0 %2330
        %v2332 = vsel %vm961, %v2329, %v2331
        %v2334 = vsel %vm253, %v2327, 0
        %v2337 = vand.u32 %v2332, %v260
        %2339 = vmatprep.subr.bf16.mxu0 0
        %2340 = vmatpush1.bf16.msra.mxu0 %v2337
        %2341 = vmatprep.subr.bf16.mxu0 0
        %2342 = vmatpush1.bf16.msra.mxu0 0
        %2343 = vmatprep.subr.bf16.mxu0 0
        %2344 = vmatpush1.bf16.msra.mxu0 0
        %2345 = vmatprep.subr.bf16.mxu0 0
        %2346 = vmatpush1.bf16.msra.mxu0 0
        %2347 = vmatprep.subr.bf16.mxu0 0
        %2348 = vmatpush1.bf16.msra.mxu0 0
        %2349 = vmatprep.subr.bf16.mxu0 0
        %2350 = vmatpush1.bf16.msra.mxu0 0
        %2351 = vmatprep.subr.bf16.mxu0 0
        %2352 = vmatpush1.bf16.msra.mxu0 0
        %2353 = vmatprep.subr.bf16.mxu0 0
        %2354 = vmatpush1.bf16.msra.mxu0 0
        %2355 = vmatprep.subr.bf16.mxu0 0
        %2356 = vmatpush1.bf16.msra.mxu0 0
        %2357 = vmatprep.subr.bf16.mxu0 0
        %2358 = vmatpush1.bf16.msra.mxu0 0
        %2359 = vmatprep.subr.bf16.mxu0 0
        %2360 = vmatpush1.bf16.msra.mxu0 0
        %2361 = vmatprep.subr.bf16.mxu0 0
        %2362 = vmatpush1.bf16.msra.mxu0 0
        %2363 = vmatprep.subr.bf16.mxu0 0
        %2364 = vmatpush1.bf16.msra.mxu0 0
        %2365 = vmatprep.subr.bf16.mxu0 0
        %2366 = vmatpush1.bf16.msra.mxu0 0
        %2367 = vmatprep.subr.bf16.mxu0 0
        %2368 = vmatpush1.bf16.msra.mxu0 0
        %2369 = vmatprep.subr.bf16.mxu0 0
        %2370 = vmatpush1.bf16.msra.mxu0 0
        %2371 = vmatprep.mubr.bf16.mxu0 0
        %2372 = vmatmul.mubr.bf16.gmra.mrb[0].mxu0 %v2334
        %v2373 = vpop.f32.mrb[0].mxu0
        %v2374 = vadd.f32 0.0, %v2373
        %v2375 = vpop.f32.mrb[0].mxu0
        %v2376 = vpop.f32.mrb[0].mxu0
        %v2377 = vpop.f32.mrb[0].mxu0
        %2378 = vdwg.mxu0
        %v2379 = vadd.f32 %v2325, %v2374
        %s2380 = scalar_lea.vmem [#allocation5], 156
        %v2381 = vld [vmem:[%s2380] sm:$0xf]
        %2382 = vrot.lane.b32.xlu0 %v1678, 108
        %v2383 = vpop.permute.xlu0 %2382
        %2384 = vrot.lane.b32.xlu0 %v1679, 108
        %v2385 = vpop.permute.xlu0 %2384
        %v2386 = vsel %vm1016, %v2383, %v2385
        %v2388 = vsel %vm253, %v2381, 0
        %v2391 = vand.u32 %v2386, %v260
        %2393 = vmatprep.subr.bf16.mxu0 0
        %2394 = vmatpush1.bf16.msra.mxu0 %v2391
        %2395 = vmatprep.subr.bf16.mxu0 0
        %2396 = vmatpush1.bf16.msra.mxu0 0
        %2397 = vmatprep.subr.bf16.mxu0 0
        %2398 = vmatpush1.bf16.msra.mxu0 0
        %2399 = vmatprep.subr.bf16.mxu0 0
        %2400 = vmatpush1.bf16.msra.mxu0 0
        %2401 = vmatprep.subr.bf16.mxu0 0
        %2402 = vmatpush1.bf16.msra.mxu0 0
        %2403 = vmatprep.subr.bf16.mxu0 0
        %2404 = vmatpush1.bf16.msra.mxu0 0
        %2405 = vmatprep.subr.bf16.mxu0 0
        %2406 = vmatpush1.bf16.msra.mxu0 0
        %2407 = vmatprep.subr.bf16.mxu0 0
        %2408 = vmatpush1.bf16.msra.mxu0 0
        %2409 = vmatprep.subr.bf16.mxu0 0
        %2410 = vmatpush1.bf16.msra.mxu0 0
        %2411 = vmatprep.subr.bf16.mxu0 0
        %2412 = vmatpush1.bf16.msra.mxu0 0
        %2413 = vmatprep.subr.bf16.mxu0 0
        %2414 = vmatpush1.bf16.msra.mxu0 0
        %2415 = vmatprep.subr.bf16.mxu0 0
        %2416 = vmatpush1.bf16.msra.mxu0 0
        %2417 = vmatprep.subr.bf16.mxu0 0
        %2418 = vmatpush1.bf16.msra.mxu0 0
        %2419 = vmatprep.subr.bf16.mxu0 0
        %2420 = vmatpush1.bf16.msra.mxu0 0
        %2421 = vmatprep.subr.bf16.mxu0 0
        %2422 = vmatpush1.bf16.msra.mxu0 0
        %2423 = vmatprep.subr.bf16.mxu0 0
        %2424 = vmatpush1.bf16.msra.mxu0 0
        %2425 = vmatprep.mubr.bf16.mxu0 0
        %2426 = vmatmul.mubr.bf16.gmra.mrb[0].mxu0 %v2388
        %v2427 = vpop.f32.mrb[0].mxu0
        %v2428 = vadd.f32 0.0, %v2427
        %v2429 = vpop.f32.mrb[0].mxu0
        %v2430 = vpop.f32.mrb[0].mxu0
        %v2431 = vpop.f32.mrb[0].mxu0
        %2432 = vdwg.mxu0
        %v2433 = vadd.f32 %v2379, %v2428
        %s2434 = scalar_lea.vmem [#allocation5], 160
        %v2435 = vld [vmem:[%s2434] sm:$0xf]
        %2436 = vrot.lane.b32.xlu0 %v1678, 104
        %v2437 = vpop.permute.xlu0 %2436
        %2438 = vrot.lane.b32.xlu0 %v1679, 104
        %v2439 = vpop.permute.xlu0 %2438
        %v2440 = vsel %vm1071, %v2437, %v2439
        %v2442 = vsel %vm253, %v2435, 0
        %v2445 = vand.u32 %v2440, %v260
        %2447 = vmatprep.subr.bf16.mxu0 0
        %2448 = vmatpush1.bf16.msra.mxu0 %v2445
        %2449 = vmatprep.subr.bf16.mxu0 0
        %2450 = vmatpush1.bf16.msra.mxu0 0
        %2451 = vmatprep.subr.bf16.mxu0 0
        %2452 = vmatpush1.bf16.msra.mxu0 0
        %2453 = vmatprep.subr.bf16.mxu0 0
        %2454 = vmatpush1.bf16.msra.mxu0 0
        %2455 = vmatprep.subr.bf16.mxu0 0
        %2456 = vmatpush1.bf16.msra.mxu0 0
        %2457 = vmatprep.subr.bf16.mxu0 0
        %2458 = vmatpush1.bf16.msra.mxu0 0
        %2459 = vmatprep.subr.bf16.mxu0 0
        %2460 = vmatpush1.bf16.msra.mxu0 0
        %2461 = vmatprep.subr.bf16.mxu0 0
        %2462 = vmatpush1.bf16.msra.mxu0 0
        %2463 = vmatprep.subr.bf16.mxu0 0
        %2464 = vmatpush1.bf16.msra.mxu0 0
        %2465 = vmatprep.subr.bf16.mxu0 0
        %2466 = vmatpush1.bf16.msra.mxu0 0
        %2467 = vmatprep.subr.bf16.mxu0 0
        %2468 = vmatpush1.bf16.msra.mxu0 0
        %2469 = vmatprep.subr.bf16.mxu0 0
        %2470 = vmatpush1.bf16.msra.mxu0 0
        %2471 = vmatprep.subr.bf16.mxu0 0
        %2472 = vmatpush1.bf16.msra.mxu0 0
        %2473 = vmatprep.subr.bf16.mxu0 0
        %2474 = vmatpush1.bf16.msra.mxu0 0
        %2475 = vmatprep.subr.bf16.mxu0 0
        %2476 = vmatpush1.bf16.msra.mxu0 0
        %2477 = vmatprep.subr.bf16.mxu0 0
        %2478 = vmatpush1.bf16.msra.mxu0 0
        %2479 = vmatprep.mubr.bf16.mxu0 0
        %2480 = vmatmul.mubr.bf16.gmra.mrb[0].mxu0 %v2442
        %v2481 = vpop.f32.mrb[0].mxu0
        %v2482 = vadd.f32 0.0, %v2481
        %v2483 = vpop.f32.mrb[0].mxu0
        %v2484 = vpop.f32.mrb[0].mxu0
        %v2485 = vpop.f32.mrb[0].mxu0
        %2486 = vdwg.mxu0
        %v2487 = vadd.f32 %v2433, %v2482
        %s2488 = scalar_lea.vmem [#allocation5], 164
        %v2489 = vld [vmem:[%s2488] sm:$0xf]
        %2490 = vrot.lane.b32.xlu0 %v1678, 103
        %v2491 = vpop.permute.xlu0 %2490
        %2492 = vrot.lane.b32.xlu0 %v1679, 103
        %v2493 = vpop.permute.xlu0 %2492
        %v2494 = vsel %vm1126, %v2491, %v2493
        %v2496 = vsel %vm253, %v2489, 0
        %v2499 = vand.u32 %v2494, %v260
        %2501 = vmatprep.subr.bf16.mxu0 0
        %2502 = vmatpush1.bf16.msra.mxu0 %v2499
        %2503 = vmatprep.subr.bf16.mxu0 0
        %2504 = vmatpush1.bf16.msra.mxu0 0
        %2505 = vmatprep.subr.bf16.mxu0 0
        %2506 = vmatpush1.bf16.msra.mxu0 0
        %2507 = vmatprep.subr.bf16.mxu0 0
        %2508 = vmatpush1.bf16.msra.mxu0 0
        %2509 = vmatprep.subr.bf16.mxu0 0
        %2510 = vmatpush1.bf16.msra.mxu0 0
        %2511 = vmatprep.subr.bf16.mxu0 0
        %2512 = vmatpush1.bf16.msra.mxu0 0
        %2513 = vmatprep.subr.bf16.mxu0 0
        %2514 = vmatpush1.bf16.msra.mxu0 0
        %2515 = vmatprep.subr.bf16.mxu0 0
        %2516 = vmatpush1.bf16.msra.mxu0 0
        %2517 = vmatprep.subr.bf16.mxu0 0
        %2518 = vmatpush1.bf16.msra.mxu0 0
        %2519 = vmatprep.subr.bf16.mxu0 0
        %2520 = vmatpush1.bf16.msra.mxu0 0
        %2521 = vmatprep.subr.bf16.mxu0 0
        %2522 = vmatpush1.bf16.msra.mxu0 0
        %2523 = vmatprep.subr.bf16.mxu0 0
        %2524 = vmatpush1.bf16.msra.mxu0 0
        %2525 = vmatprep.subr.bf16.mxu0 0
        %2526 = vmatpush1.bf16.msra.mxu0 0
        %2527 = vmatprep.subr.bf16.mxu0 0
        %2528 = vmatpush1.bf16.msra.mxu0 0
        %2529 = vmatprep.subr.bf16.mxu0 0
        %2530 = vmatpush1.bf16.msra.mxu0 0
        %2531 = vmatprep.subr.bf16.mxu0 0
        %2532 = vmatpush1.bf16.msra.mxu0 0
        %2533 = vmatprep.mubr.bf16.mxu0 0
        %2534 = vmatmul.mubr.bf16.gmra.mrb[0].mxu0 %v2496
        %v2535 = vpop.f32.mrb[0].mxu0
        %v2536 = vadd.f32 0.0, %v2535
        %v2537 = vpop.f32.mrb[0].mxu0
        %v2538 = vpop.f32.mrb[0].mxu0
        %v2539 = vpop.f32.mrb[0].mxu0
        %2540 = vdwg.mxu0
        %v2541 = vadd.f32 %v2487, %v2536
        %s2542 = scalar_lea.vmem [#allocation5], 168
        %v2543 = vld [vmem:[%s2542] sm:$0xf]
        %2544 = vrot.lane.b32.xlu0 %v1678, 102
        %v2545 = vpop.permute.xlu0 %2544
        %2546 = vrot.lane.b32.xlu0 %v1679, 102
        %v2547 = vpop.permute.xlu0 %2546
        %v2548 = vsel %vm1181, %v2545, %v2547
        %v2550 = vsel %vm253, %v2543, 0
        %v2553 = vand.u32 %v2548, %v260
        %2555 = vmatprep.subr.bf16.mxu0 0
        %2556 = vmatpush1.bf16.msra.mxu0 %v2553
        %2557 = vmatprep.subr.bf16.mxu0 0
        %2558 = vmatpush1.bf16.msra.mxu0 0
        %2559 = vmatprep.subr.bf16.mxu0 0
        %2560 = vmatpush1.bf16.msra.mxu0 0
        %2561 = vmatprep.subr.bf16.mxu0 0
        %2562 = vmatpush1.bf16.msra.mxu0 0
        %2563 = vmatprep.subr.bf16.mxu0 0
        %2564 = vmatpush1.bf16.msra.mxu0 0
        %2565 = vmatprep.subr.bf16.mxu0 0
        %2566 = vmatpush1.bf16.msra.mxu0 0
        %2567 = vmatprep.subr.bf16.mxu0 0
        %2568 = vmatpush1.bf16.msra.mxu0 0
        %2569 = vmatprep.subr.bf16.mxu0 0
        %2570 = vmatpush1.bf16.msra.mxu0 0
        %2571 = vmatprep.subr.bf16.mxu0 0
        %2572 = vmatpush1.bf16.msra.mxu0 0
        %2573 = vmatprep.subr.bf16.mxu0 0
        %2574 = vmatpush1.bf16.msra.mxu0 0
        %2575 = vmatprep.subr.bf16.mxu0 0
        %2576 = vmatpush1.bf16.msra.mxu0 0
        %2577 = vmatprep.subr.bf16.mxu0 0
        %2578 = vmatpush1.bf16.msra.mxu0 0
        %2579 = vmatprep.subr.bf16.mxu0 0
        %2580 = vmatpush1.bf16.msra.mxu0 0
        %2581 = vmatprep.subr.bf16.mxu0 0
        %2582 = vmatpush1.bf16.msra.mxu0 0
        %2583 = vmatprep.subr.bf16.mxu0 0
        %2584 = vmatpush1.bf16.msra.mxu0 0
        %2585 = vmatprep.subr.bf16.mxu0 0
        %2586 = vmatpush1.bf16.msra.mxu0 0
        %2587 = vmatprep.mubr.bf16.mxu0 0
        %2588 = vmatmul.mubr.bf16.gmra.mrb[0].mxu0 %v2550
        %v2589 = vpop.f32.mrb[0].mxu0
        %v2590 = vadd.f32 0.0, %v2589
        %v2591 = vpop.f32.mrb[0].mxu0
        %v2592 = vpop.f32.mrb[0].mxu0
        %v2593 = vpop.f32.mrb[0].mxu0
        %2594 = vdwg.mxu0
        %v2595 = vadd.f32 %v2541, %v2590
        %s2596 = scalar_lea.vmem [#allocation5], 172
        %v2597 = vld [vmem:[%s2596] sm:$0xf]
        %2598 = vrot.lane.b32.xlu0 %v1678, 101
        %v2599 = vpop.permute.xlu0 %2598
        %2600 = vrot.lane.b32.xlu0 %v1679, 101
        %v2601 = vpop.permute.xlu0 %2600
        %v2602 = vsel %vm1236, %v2599, %v2601
        %v2604 = vsel %vm253, %v2597, 0
        %v2607 = vand.u32 %v2602, %v260
        %2609 = vmatprep.subr.bf16.mxu0 0
        %2610 = vmatpush1.bf16.msra.mxu0 %v2607
        %2611 = vmatprep.subr.bf16.mxu0 0
        %2612 = vmatpush1.bf16.msra.mxu0 0
        %2613 = vmatprep.subr.bf16.mxu0 0
        %2614 = vmatpush1.bf16.msra.mxu0 0
        %2615 = vmatprep.subr.bf16.mxu0 0
        %2616 = vmatpush1.bf16.msra.mxu0 0
        %2617 = vmatprep.subr.bf16.mxu0 0
        %2618 = vmatpush1.bf16.msra.mxu0 0
        %2619 = vmatprep.subr.bf16.mxu0 0
        %2620 = vmatpush1.bf16.msra.mxu0 0
        %2621 = vmatprep.subr.bf16.mxu0 0
        %2622 = vmatpush1.bf16.msra.mxu0 0
        %2623 = vmatprep.subr.bf16.mxu0 0
        %2624 = vmatpush1.bf16.msra.mxu0 0
        %2625 = vmatprep.subr.bf16.mxu0 0
        %2626 = vmatpush1.bf16.msra.mxu0 0
        %2627 = vmatprep.subr.bf16.mxu0 0
        %2628 = vmatpush1.bf16.msra.mxu0 0
        %2629 = vmatprep.subr.bf16.mxu0 0
        %2630 = vmatpush1.bf16.msra.mxu0 0
        %2631 = vmatprep.subr.bf16.mxu0 0
        %2632 = vmatpush1.bf16.msra.mxu0 0
        %2633 = vmatprep.subr.bf16.mxu0 0
        %2634 = vmatpush1.bf16.msra.mxu0 0
        %2635 = vmatprep.subr.bf16.mxu0 0
        %2636 = vmatpush1.bf16.msra.mxu0 0
        %2637 = vmatprep.subr.bf16.mxu0 0
        %2638 = vmatpush1.bf16.msra.mxu0 0
        %2639 = vmatprep.subr.bf16.mxu0 0
        %2640 = vmatpush1.bf16.msra.mxu0 0
        %2641 = vmatprep.mubr.bf16.mxu0 0
        %2642 = vmatmul.mubr.bf16.gmra.mrb[0].mxu0 %v2604
        %v2643 = vpop.f32.mrb[0].mxu0
        %v2644 = vadd.f32 0.0, %v2643
        %v2645 = vpop.f32.mrb[0].mxu0
        %v2646 = vpop.f32.mrb[0].mxu0
        %v2647 = vpop.f32.mrb[0].mxu0
        %2648 = vdwg.mxu0
        %v2649 = vadd.f32 %v2595, %v2644
        %s2650 = scalar_lea.vmem [#allocation5], 176
        %v2651 = vld [vmem:[%s2650] sm:$0xf]
        %2652 = vrot.lane.b32.xlu0 %v1678, 100
        %v2653 = vpop.permute.xlu0 %2652
        %2654 = vrot.lane.b32.xlu0 %v1679, 100
        %v2655 = vpop.permute.xlu0 %2654
        %v2656 = vsel %vm1291, %v2653, %v2655
        %v2658 = vsel %vm253, %v2651, 0
        %v2661 = vand.u32 %v2656, %v260
        %2663 = vmatprep.subr.bf16.mxu0 0
        %2664 = vmatpush1.bf16.msra.mxu0 %v2661
        %2665 = vmatprep.subr.bf16.mxu0 0
        %2666 = vmatpush1.bf16.msra.mxu0 0
        %2667 = vmatprep.subr.bf16.mxu0 0
        %2668 = vmatpush1.bf16.msra.mxu0 0
        %2669 = vmatprep.subr.bf16.mxu0 0
        %2670 = vmatpush1.bf16.msra.mxu0 0
        %2671 = vmatprep.subr.bf16.mxu0 0
        %2672 = vmatpush1.bf16.msra.mxu0 0
        %2673 = vmatprep.subr.bf16.mxu0 0
        %2674 = vmatpush1.bf16.msra.mxu0 0
        %2675 = vmatprep.subr.bf16.mxu0 0
        %2676 = vmatpush1.bf16.msra.mxu0 0
        %2677 = vmatprep.subr.bf16.mxu0 0
        %2678 = vmatpush1.bf16.msra.mxu0 0
        %2679 = vmatprep.subr.bf16.mxu0 0
        %2680 = vmatpush1.bf16.msra.mxu0 0
        %2681 = vmatprep.subr.bf16.mxu0 0
        %2682 = vmatpush1.bf16.msra.mxu0 0
        %2683 = vmatprep.subr.bf16.mxu0 0
        %2684 = vmatpush1.bf16.msra.mxu0 0
        %2685 = vmatprep.subr.bf16.mxu0 0
        %2686 = vmatpush1.bf16.msra.mxu0 0
        %2687 = vmatprep.subr.bf16.mxu0 0
        %2688 = vmatpush1.bf16.msra.mxu0 0
        %2689 = vmatprep.subr.bf16.mxu0 0
        %2690 = vmatpush1.bf16.msra.mxu0 0
        %2691 = vmatprep.subr.bf16.mxu0 0
        %2692 = vmatpush1.bf16.msra.mxu0 0
        %2693 = vmatprep.subr.bf16.mxu0 0
        %2694 = vmatpush1.bf16.msra.mxu0 0
        %2695 = vmatprep.mubr.bf16.mxu0 0
        %2696 = vmatmul.mubr.bf16.gmra.mrb[0].mxu0 %v2658
        %v2697 = vpop.f32.mrb[0].mxu0
        %v2698 = vadd.f32 0.0, %v2697
        %v2699 = vpop.f32.mrb[0].mxu0
        %v2700 = vpop.f32.mrb[0].mxu0
        %v2701 = vpop.f32.mrb[0].mxu0
        %2702 = vdwg.mxu0
        %v2703 = vadd.f32 %v2649, %v2698
        %s2704 = scalar_lea.vmem [#allocation5], 180
        %v2705 = vld [vmem:[%s2704] sm:$0xf]
        %2706 = vrot.lane.b32.xlu0 %v1678, 96
        %v2707 = vpop.permute.xlu0 %2706
        %2708 = vrot.lane.b32.xlu0 %v1679, 96
        %v2709 = vpop.permute.xlu0 %2708
        %v2710 = vsel %vm1346, %v2707, %v2709
        %v2712 = vsel %vm253, %v2705, 0
        %v2715 = vand.u32 %v2710, %v260
        %2717 = vmatprep.subr.bf16.mxu0 0
        %2718 = vmatpush1.bf16.msra.mxu0 %v2715
        %2719 = vmatprep.subr.bf16.mxu0 0
        %2720 = vmatpush1.bf16.msra.mxu0 0
        %2721 = vmatprep.subr.bf16.mxu0 0
        %2722 = vmatpush1.bf16.msra.mxu0 0
        %2723 = vmatprep.subr.bf16.mxu0 0
        %2724 = vmatpush1.bf16.msra.mxu0 0
        %2725 = vmatprep.subr.bf16.mxu0 0
        %2726 = vmatpush1.bf16.msra.mxu0 0
        %2727 = vmatprep.subr.bf16.mxu0 0
        %2728 = vmatpush1.bf16.msra.mxu0 0
        %2729 = vmatprep.subr.bf16.mxu0 0
        %2730 = vmatpush1.bf16.msra.mxu0 0
        %2731 = vmatprep.subr.bf16.mxu0 0
        %2732 = vmatpush1.bf16.msra.mxu0 0
        %2733 = vmatprep.subr.bf16.mxu0 0
        %2734 = vmatpush1.bf16.msra.mxu0 0
        %2735 = vmatprep.subr.bf16.mxu0 0
        %2736 = vmatpush1.bf16.msra.mxu0 0
        %2737 = vmatprep.subr.bf16.mxu0 0
        %2738 = vmatpush1.bf16.msra.mxu0 0
        %2739 = vmatprep.subr.bf16.mxu0 0
        %2740 = vmatpush1.bf16.msra.mxu0 0
        %2741 = vmatprep.subr.bf16.mxu0 0
        %2742 = vmatpush1.bf16.msra.mxu0 0
        %2743 = vmatprep.subr.bf16.mxu0 0
        %2744 = vmatpush1.bf16.msra.mxu0 0
        %2745 = vmatprep.subr.bf16.mxu0 0
        %2746 = vmatpush1.bf16.msra.mxu0 0
        %2747 = vmatprep.subr.bf16.mxu0 0
        %2748 = vmatpush1.bf16.msra.mxu0 0
        %2749 = vmatprep.mubr.bf16.mxu0 0
        %2750 = vmatmul.mubr.bf16.gmra.mrb[0].mxu0 %v2712
        %v2751 = vpop.f32.mrb[0].mxu0
        %v2752 = vadd.f32 0.0, %v2751
        %v2753 = vpop.f32.mrb[0].mxu0
        %v2754 = vpop.f32.mrb[0].mxu0
        %v2755 = vpop.f32.mrb[0].mxu0
        %2756 = vdwg.mxu0
        %v2757 = vadd.f32 %v2703, %v2752
        %s2758 = scalar_lea.vmem [#allocation5], 184
        %v2759 = vld [vmem:[%s2758] sm:$0xf]
        %2760 = vrot.lane.b32.xlu0 %v1678, 95
        %v2761 = vpop.permute.xlu0 %2760
        %2762 = vrot.lane.b32.xlu0 %v1679, 95
        %v2763 = vpop.permute.xlu0 %2762
        %v2764 = vsel %vm1401, %v2761, %v2763
        %v2766 = vsel %vm253, %v2759, 0
        %v2769 = vand.u32 %v2764, %v260
        %2771 = vmatprep.subr.bf16.mxu0 0
        %2772 = vmatpush1.bf16.msra.mxu0 %v2769
        %2773 = vmatprep.subr.bf16.mxu0 0
        %2774 = vmatpush1.bf16.msra.mxu0 0
        %2775 = vmatprep.subr.bf16.mxu0 0
        %2776 = vmatpush1.bf16.msra.mxu0 0
        %2777 = vmatprep.subr.bf16.mxu0 0
        %2778 = vmatpush1.bf16.msra.mxu0 0
        %2779 = vmatprep.subr.bf16.mxu0 0
        %2780 = vmatpush1.bf16.msra.mxu0 0
        %2781 = vmatprep.subr.bf16.mxu0 0
        %2782 = vmatpush1.bf16.msra.mxu0 0
        %2783 = vmatprep.subr.bf16.mxu0 0
        %2784 = vmatpush1.bf16.msra.mxu0 0
        %2785 = vmatprep.subr.bf16.mxu0 0
        %2786 = vmatpush1.bf16.msra.mxu0 0
        %2787 = vmatprep.subr.bf16.mxu0 0
        %2788 = vmatpush1.bf16.msra.mxu0 0
        %2789 = vmatprep.subr.bf16.mxu0 0
        %2790 = vmatpush1.bf16.msra.mxu0 0
        %2791 = vmatprep.subr.bf16.mxu0 0
        %2792 = vmatpush1.bf16.msra.mxu0 0
        %2793 = vmatprep.subr.bf16.mxu0 0
        %2794 = vmatpush1.bf16.msra.mxu0 0
        %2795 = vmatprep.subr.bf16.mxu0 0
        %2796 = vmatpush1.bf16.msra.mxu0 0
        %2797 = vmatprep.subr.bf16.mxu0 0
        %2798 = vmatpush1.bf16.msra.mxu0 0
        %2799 = vmatprep.subr.bf16.mxu0 0
        %2800 = vmatpush1.bf16.msra.mxu0 0
        %2801 = vmatprep.subr.bf16.mxu0 0
        %2802 = vmatpush1.bf16.msra.mxu0 0
        %2803 = vmatprep.mubr.bf16.mxu0 0
        %2804 = vmatmul.mubr.bf16.gmra.mrb[0].mxu0 %v2766
        %v2805 = vpop.f32.mrb[0].mxu0
        %v2806 = vadd.f32 0.0, %v2805
        %v2807 = vpop.f32.mrb[0].mxu0
        %v2808 = vpop.f32.mrb[0].mxu0
        %v2809 = vpop.f32.mrb[0].mxu0
        %2810 = vdwg.mxu0
        %v2811 = vadd.f32 %v2757, %v2806
        %s2812 = scalar_lea.vmem [#allocation5], 188
        %v2813 = vld [vmem:[%s2812] sm:$0xf]
        %2814 = vrot.lane.b32.xlu0 %v1678, 94
        %v2815 = vpop.permute.xlu0 %2814
        %2816 = vrot.lane.b32.xlu0 %v1679, 94
        %v2817 = vpop.permute.xlu0 %2816
        %v2818 = vsel %vm1456, %v2815, %v2817
        %v2820 = vsel %vm253, %v2813, 0
        %v2823 = vand.u32 %v2818, %v260
        %2825 = vmatprep.subr.bf16.mxu0 0
        %2826 = vmatpush1.bf16.msra.mxu0 %v2823
        %2827 = vmatprep.subr.bf16.mxu0 0
        %2828 = vmatpush1.bf16.msra.mxu0 0
        %2829 = vmatprep.subr.bf16.mxu0 0
        %2830 = vmatpush1.bf16.msra.mxu0 0
        %2831 = vmatprep.subr.bf16.mxu0 0
        %2832 = vmatpush1.bf16.msra.mxu0 0
        %2833 = vmatprep.subr.bf16.mxu0 0
        %2834 = vmatpush1.bf16.msra.mxu0 0
        %2835 = vmatprep.subr.bf16.mxu0 0
        %2836 = vmatpush1.bf16.msra.mxu0 0
        %2837 = vmatprep.subr.bf16.mxu0 0
        %2838 = vmatpush1.bf16.msra.mxu0 0
        %2839 = vmatprep.subr.bf16.mxu0 0
        %2840 = vmatpush1.bf16.msra.mxu0 0
        %2841 = vmatprep.subr.bf16.mxu0 0
        %2842 = vmatpush1.bf16.msra.mxu0 0
        %2843 = vmatprep.subr.bf16.mxu0 0
        %2844 = vmatpush1.bf16.msra.mxu0 0
        %2845 = vmatprep.subr.bf16.mxu0 0
        %2846 = vmatpush1.bf16.msra.mxu0 0
        %2847 = vmatprep.subr.bf16.mxu0 0
        %2848 = vmatpush1.bf16.msra.mxu0 0
        %2849 = vmatprep.subr.bf16.mxu0 0
        %2850 = vmatpush1.bf16.msra.mxu0 0
        %2851 = vmatprep.subr.bf16.mxu0 0
        %2852 = vmatpush1.bf16.msra.mxu0 0
        %2853 = vmatprep.subr.bf16.mxu0 0
        %2854 = vmatpush1.bf16.msra.mxu0 0
        %2855 = vmatprep.subr.bf16.mxu0 0
        %2856 = vmatpush1.bf16.msra.mxu0 0
        %2857 = vmatprep.mubr.bf16.mxu0 0
        %2858 = vmatmul.mubr.bf16.gmra.mrb[0].mxu0 %v2820
        %v2859 = vpop.f32.mrb[0].mxu0
        %v2860 = vadd.f32 0.0, %v2859
        %v2861 = vpop.f32.mrb[0].mxu0
        %v2862 = vpop.f32.mrb[0].mxu0
        %v2863 = vpop.f32.mrb[0].mxu0
        %2864 = vdwg.mxu0
        %v2865 = vadd.f32 %v2811, %v2860
        %s2866 = scalar_lea.vmem [#allocation5], 192
        %v2867 = vld [vmem:[%s2866] sm:$0xf]
        %2868 = vrot.lane.b32.xlu0 %v1678, 93
        %v2869 = vpop.permute.xlu0 %2868
        %2870 = vrot.lane.b32.xlu0 %v1679, 93
        %v2871 = vpop.permute.xlu0 %2870
        %v2872 = vsel %vm1511, %v2869, %v2871
        %v2874 = vsel %vm253, %v2867, 0
        %v2877 = vand.u32 %v2872, %v260
        %2879 = vmatprep.subr.bf16.mxu0 0
        %2880 = vmatpush1.bf16.msra.mxu0 %v2877
        %2881 = vmatprep.subr.bf16.mxu0 0
        %2882 = vmatpush1.bf16.msra.mxu0 0
        %2883 = vmatprep.subr.bf16.mxu0 0
        %2884 = vmatpush1.bf16.msra.mxu0 0
        %2885 = vmatprep.subr.bf16.mxu0 0
        %2886 = vmatpush1.bf16.msra.mxu0 0
        %2887 = vmatprep.subr.bf16.mxu0 0
        %2888 = vmatpush1.bf16.msra.mxu0 0
        %2889 = vmatprep.subr.bf16.mxu0 0
        %2890 = vmatpush1.bf16.msra.mxu0 0
        %2891 = vmatprep.subr.bf16.mxu0 0
        %2892 = vmatpush1.bf16.msra.mxu0 0
        %2893 = vmatprep.subr.bf16.mxu0 0
        %2894 = vmatpush1.bf16.msra.mxu0 0
        %2895 = vmatprep.subr.bf16.mxu0 0
        %2896 = vmatpush1.bf16.msra.mxu0 0
        %2897 = vmatprep.subr.bf16.mxu0 0
        %2898 = vmatpush1.bf16.msra.mxu0 0
        %2899 = vmatprep.subr.bf16.mxu0 0
        %2900 = vmatpush1.bf16.msra.mxu0 0
        %2901 = vmatprep.subr.bf16.mxu0 0
        %2902 = vmatpush1.bf16.msra.mxu0 0
        %2903 = vmatprep.subr.bf16.mxu0 0
        %2904 = vmatpush1.bf16.msra.mxu0 0
        %2905 = vmatprep.subr.bf16.mxu0 0
        %2906 = vmatpush1.bf16.msra.mxu0 0
        %2907 = vmatprep.subr.bf16.mxu0 0
        %2908 = vmatpush1.bf16.msra.mxu0 0
        %2909 = vmatprep.subr.bf16.mxu0 0
        %2910 = vmatpush1.bf16.msra.mxu0 0
        %2911 = vmatprep.mubr.bf16.mxu0 0
        %2912 = vmatmul.mubr.bf16.gmra.mrb[0].mxu0 %v2874
        %v2913 = vpop.f32.mrb[0].mxu0
        %v2914 = vadd.f32 0.0, %v2913
        %v2915 = vpop.f32.mrb[0].mxu0
        %v2916 = vpop.f32.mrb[0].mxu0
        %v2917 = vpop.f32.mrb[0].mxu0
        %2918 = vdwg.mxu0
        %v2919 = vadd.f32 %v2865, %v2914
        %s2920 = scalar_lea.vmem [#allocation5], 196
        %v2921 = vld [vmem:[%s2920] sm:$0xf]
        %2922 = vrot.lane.b32.xlu0 %v1678, 92
        %v2923 = vpop.permute.xlu0 %2922
        %2924 = vrot.lane.b32.xlu0 %v1679, 92
        %v2925 = vpop.permute.xlu0 %2924
        %v2926 = vsel %vm1566, %v2923, %v2925
        %v2928 = vsel %vm253, %v2921, 0
        %v2931 = vand.u32 %v2926, %v260
        %2933 = vmatprep.subr.bf16.mxu0 0
        %2934 = vmatpush1.bf16.msra.mxu0 %v2931
        %2935 = vmatprep.subr.bf16.mxu0 0
        %2936 = vmatpush1.bf16.msra.mxu0 0
        %2937 = vmatprep.subr.bf16.mxu0 0
        %2938 = vmatpush1.bf16.msra.mxu0 0
        %2939 = vmatprep.subr.bf16.mxu0 0
        %2940 = vmatpush1.bf16.msra.mxu0 0
        %2941 = vmatprep.subr.bf16.mxu0 0
        %2942 = vmatpush1.bf16.msra.mxu0 0
        %2943 = vmatprep.subr.bf16.mxu0 0
        %2944 = vmatpush1.bf16.msra.mxu0 0
        %2945 = vmatprep.subr.bf16.mxu0 0
        %2946 = vmatpush1.bf16.msra.mxu0 0
        %2947 = vmatprep.subr.bf16.mxu0 0
        %2948 = vmatpush1.bf16.msra.mxu0 0
        %2949 = vmatprep.subr.bf16.mxu0 0
        %2950 = vmatpush1.bf16.msra.mxu0 0
        %2951 = vmatprep.subr.bf16.mxu0 0
        %2952 = vmatpush1.bf16.msra.mxu0 0
        %2953 = vmatprep.subr.bf16.mxu0 0
        %2954 = vmatpush1.bf16.msra.mxu0 0
        %2955 = vmatprep.subr.bf16.mxu0 0
        %2956 = vmatpush1.bf16.msra.mxu0 0
        %2957 = vmatprep.subr.bf16.mxu0 0
        %2958 = vmatpush1.bf16.msra.mxu0 0
        %2959 = vmatprep.subr.bf16.mxu0 0
        %2960 = vmatpush1.bf16.msra.mxu0 0
        %2961 = vmatprep.subr.bf16.mxu0 0
        %2962 = vmatpush1.bf16.msra.mxu0 0
        %2963 = vmatprep.subr.bf16.mxu0 0
        %2964 = vmatpush1.bf16.msra.mxu0 0
        %2965 = vmatprep.mubr.bf16.mxu0 0
        %2966 = vmatmul.mubr.bf16.gmra.mrb[0].mxu0 %v2928
        %v2967 = vpop.f32.mrb[0].mxu0
        %v2968 = vadd.f32 0.0, %v2967
        %v2969 = vpop.f32.mrb[0].mxu0
        %v2970 = vpop.f32.mrb[0].mxu0
        %v2971 = vpop.f32.mrb[0].mxu0
        %2972 = vdwg.mxu0
        %v2973 = vadd.f32 %v2919, %v2968
        %s2974 = sadd.s32 %s26, 2
        %s2975 = smul.u32 %s2974, 2
        %s2976 = smul.addr %s2975, 2
        %s2977 = scalar_lea.vmem %s199, %s2976 [#allocation2]
        %v2978 = vld [vmem:[%s2977] sm:$0xf]
        %s2979 = scalar_lea.vmem [#allocation5], 200
        %v2980 = vld [vmem:[%s2979] sm:$0xf]
        %v2982 = vsel %vm253, %v2980, 0
        %v2985 = vand.u32 %v2978, %v260
        %2987 = vmatprep.subr.bf16.mxu0 0
        %2988 = vmatpush1.bf16.msra.mxu0 %v2985
        %2989 = vmatprep.subr.bf16.mxu0 0
        %2990 = vmatpush1.bf16.msra.mxu0 0
        %2991 = vmatprep.subr.bf16.mxu0 0
        %2992 = vmatpush1.bf16.msra.mxu0 0
        %2993 = vmatprep.subr.bf16.mxu0 0
        %2994 = vmatpush1.bf16.msra.mxu0 0
        %2995 = vmatprep.subr.bf16.mxu0 0
        %2996 = vmatpush1.bf16.msra.mxu0 0
        %2997 = vmatprep.subr.bf16.mxu0 0
        %2998 = vmatpush1.bf16.msra.mxu0 0
        %2999 = vmatprep.subr.bf16.mxu0 0
        %3000 = vmatpush1.bf16.msra.mxu0 0
        %3001 = vmatprep.subr.bf16.mxu0 0
        %3002 = vmatpush1.bf16.msra.mxu0 0
        %3003 = vmatprep.subr.bf16.mxu0 0
        %3004 = vmatpush1.bf16.msra.mxu0 0
        %3005 = vmatprep.subr.bf16.mxu0 0
        %3006 = vmatpush1.bf16.msra.mxu0 0
        %3007 = vmatprep.subr.bf16.mxu0 0
        %3008 = vmatpush1.bf16.msra.mxu0 0
        %3009 = vmatprep.subr.bf16.mxu0 0
        %3010 = vmatpush1.bf16.msra.mxu0 0
        %3011 = vmatprep.subr.bf16.mxu0 0
        %3012 = vmatpush1.bf16.msra.mxu0 0
        %3013 = vmatprep.subr.bf16.mxu0 0
        %3014 = vmatpush1.bf16.msra.mxu0 0
        %3015 = vmatprep.subr.bf16.mxu0 0
        %3016 = vmatpush1.bf16.msra.mxu0 0
        %3017 = vmatprep.subr.bf16.mxu0 0
        %3018 = vmatpush1.bf16.msra.mxu0 0
        %3019 = vmatprep.mubr.bf16.mxu0 0
        %3020 = vmatmul.mubr.bf16.gmra.mrb[0].mxu0 %v2982
        %v3021 = vpop.f32.mrb[0].mxu0
        %v3022 = vadd.f32 0.0, %v3021
        %v3023 = vpop.f32.mrb[0].mxu0
        %v3024 = vpop.f32.mrb[0].mxu0
        %v3025 = vpop.f32.mrb[0].mxu0
        %3026 = vdwg.mxu0
        %v3027 = vadd.f32 %v2973, %v3022
        %s3028 = scalar_lea.vmem [#allocation5], 204
        %v3029 = vld [vmem:[%s3028] sm:$0xf]
        %v3032 = vunpack.c.l.s4 1983009808
        %v3033 = vunpack.c.0.s8 %v3032
        %v3034 = vlaneseq
        %v3035 = vshrl.u32 %v3034, 7
        %v3036 = vsub.s32 %v3033, %v3035
        %v3037 = vrot.slane %v2978, %v3036
        %v3038 = vcombine.high %v3037, %v3037
        %3039 = vrot.lane.b32.xlu0 %v3037, 127
        %v3040 = vpop.permute.xlu0 %3039
        %3041 = vrot.lane.b32.xlu0 %v3038, 127
        %v3042 = vpop.permute.xlu0 %3041
        %v3043 = vsel %vm251, %v3040, %v3042
        %v3045 = vsel %vm253, %v3029, 0
        %v3048 = vand.u32 %v3043, %v260
        %3050 = vmatprep.subr.bf16.mxu0 0
        %3051 = vmatpush1.bf16.msra.mxu0 %v3048
        %3052 = vmatprep.subr.bf16.mxu0 0
        %3053 = vmatpush1.bf16.msra.mxu0 0
        %3054 = vmatprep.subr.bf16.mxu0 0
        %3055 = vmatpush1.bf16.msra.mxu0 0
        %3056 = vmatprep.subr.bf16.mxu0 0
        %3057 = vmatpush1.bf16.msra.mxu0 0
        %3058 = vmatprep.subr.bf16.mxu0 0
        %3059 = vmatpush1.bf16.msra.mxu0 0
        %3060 = vmatprep.subr.bf16.mxu0 0
        %3061 = vmatpush1.bf16.msra.mxu0 0
        %3062 = vmatprep.subr.bf16.mxu0 0
        %3063 = vmatpush1.bf16.msra.mxu0 0
        %3064 = vmatprep.subr.bf16.mxu0 0
        %3065 = vmatpush1.bf16.msra.mxu0 0
        %3066 = vmatprep.subr.bf16.mxu0 0
        %3067 = vmatpush1.bf16.msra.mxu0 0
        %3068 = vmatprep.subr.bf16.mxu0 0
        %3069 = vmatpush1.bf16.msra.mxu0 0
        %3070 = vmatprep.subr.bf16.mxu0 0
        %3071 = vmatpush1.bf16.msra.mxu0 0
        %3072 = vmatprep.subr.bf16.mxu0 0
        %3073 = vmatpush1.bf16.msra.mxu0 0
        %3074 = vmatprep.subr.bf16.mxu0 0
        %3075 = vmatpush1.bf16.msra.mxu0 0
        %3076 = vmatprep.subr.bf16.mxu0 0
        %3077 = vmatpush1.bf16.msra.mxu0 0
        %3078 = vmatprep.subr.bf16.mxu0 0
        %3079 = vmatpush1.bf16.msra.mxu0 0
        %3080 = vmatprep.subr.bf16.mxu0 0
        %3081 = vmatpush1.bf16.msra.mxu0 0
        %3082 = vmatprep.mubr.bf16.mxu0 0
        %3083 = vmatmul.mubr.bf16.gmra.mrb[0].mxu0 %v3045
        %v3084 = vpop.f32.mrb[0].mxu0
        %v3085 = vadd.f32 0.0, %v3084
        %v3086 = vpop.f32.mrb[0].mxu0
        %v3087 = vpop.f32.mrb[0].mxu0
        %v3088 = vpop.f32.mrb[0].mxu0
        %3089 = vdwg.mxu0
        %v3090 = vadd.f32 %v3027, %v3085
        %s3091 = scalar_lea.vmem [#allocation5], 208
        %v3092 = vld [vmem:[%s3091] sm:$0xf]
        %3093 = vrot.lane.b32.xlu0 %v3037, 126
        %v3094 = vpop.permute.xlu0 %3093
        %3095 = vrot.lane.b32.xlu0 %v3038, 126
        %v3096 = vpop.permute.xlu0 %3095
        %v3097 = vsel %vm356, %v3094, %v3096
        %v3099 = vsel %vm253, %v3092, 0
        %v3102 = vand.u32 %v3097, %v260
        %3104 = vmatprep.subr.bf16.mxu0 0
        %3105 = vmatpush1.bf16.msra.mxu0 %v3102
        %3106 = vmatprep.subr.bf16.mxu0 0
        %3107 = vmatpush1.bf16.msra.mxu0 0
        %3108 = vmatprep.subr.bf16.mxu0 0
        %3109 = vmatpush1.bf16.msra.mxu0 0
        %3110 = vmatprep.subr.bf16.mxu0 0
        %3111 = vmatpush1.bf16.msra.mxu0 0
        %3112 = vmatprep.subr.bf16.mxu0 0
        %3113 = vmatpush1.bf16.msra.mxu0 0
        %3114 = vmatprep.subr.bf16.mxu0 0
        %3115 = vmatpush1.bf16.msra.mxu0 0
        %3116 = vmatprep.subr.bf16.mxu0 0
        %3117 = vmatpush1.bf16.msra.mxu0 0
        %3118 = vmatprep.subr.bf16.mxu0 0
        %3119 = vmatpush1.bf16.msra.mxu0 0
        %3120 = vmatprep.subr.bf16.mxu0 0
        %3121 = vmatpush1.bf16.msra.mxu0 0
        %3122 = vmatprep.subr.bf16.mxu0 0
        %3123 = vmatpush1.bf16.msra.mxu0 0
        %3124 = vmatprep.subr.bf16.mxu0 0
        %3125 = vmatpush1.bf16.msra.mxu0 0
        %3126 = vmatprep.subr.bf16.mxu0 0
        %3127 = vmatpush1.bf16.msra.mxu0 0
        %3128 = vmatprep.subr.bf16.mxu0 0
        %3129 = vmatpush1.bf16.msra.mxu0 0
        %3130 = vmatprep.subr.bf16.mxu0 0
        %3131 = vmatpush1.bf16.msra.mxu0 0
        %3132 = vmatprep.subr.bf16.mxu0 0
        %3133 = vmatpush1.bf16.msra.mxu0 0
        %3134 = vmatprep.subr.bf16.mxu0 0
        %3135 = vmatpush1.bf16.msra.mxu0 0
        %3136 = vmatprep.mubr.bf16.mxu0 0
        %3137 = vmatmul.mubr.bf16.gmra.mrb[0].mxu0 %v3099
        %v3138 = vpop.f32.mrb[0].mxu0
        %v3139 = vadd.f32 0.0, %v3138
        %v3140 = vpop.f32.mrb[0].mxu0
        %v3141 = vpop.f32.mrb[0].mxu0
        %v3142 = vpop.f32.mrb[0].mxu0
        %3143 = vdwg.mxu0
        %v3144 = vadd.f32 %v3090, %v3139
        %s3145 = scalar_lea.vmem [#allocation5], 212
        %v3146 = vld [vmem:[%s3145] sm:$0xf]
        %3147 = vrot.lane.b32.xlu0 %v3037, 125
        %v3148 = vpop.permute.xlu0 %3147
        %3149 = vrot.lane.b32.xlu0 %v3038, 125
        %v3150 = vpop.permute.xlu0 %3149
        %v3151 = vsel %vm411, %v3148, %v3150
        %v3153 = vsel %vm253, %v3146, 0
        %v3156 = vand.u32 %v3151, %v260
        %3158 = vmatprep.subr.bf16.mxu0 0
        %3159 = vmatpush1.bf16.msra.mxu0 %v3156
        %3160 = vmatprep.subr.bf16.mxu0 0
        %3161 = vmatpush1.bf16.msra.mxu0 0
        %3162 = vmatprep.subr.bf16.mxu0 0
        %3163 = vmatpush1.bf16.msra.mxu0 0
        %3164 = vmatprep.subr.bf16.mxu0 0
        %3165 = vmatpush1.bf16.msra.mxu0 0
        %3166 = vmatprep.subr.bf16.mxu0 0
        %3167 = vmatpush1.bf16.msra.mxu0 0
        %3168 = vmatprep.subr.bf16.mxu0 0
        %3169 = vmatpush1.bf16.msra.mxu0 0
        %3170 = vmatprep.subr.bf16.mxu0 0
        %3171 = vmatpush1.bf16.msra.mxu0 0
        %3172 = vmatprep.subr.bf16.mxu0 0
        %3173 = vmatpush1.bf16.msra.mxu0 0
        %3174 = vmatprep.subr.bf16.mxu0 0
        %3175 = vmatpush1.bf16.msra.mxu0 0
        %3176 = vmatprep.subr.bf16.mxu0 0
        %3177 = vmatpush1.bf16.msra.mxu0 0
        %3178 = vmatprep.subr.bf16.mxu0 0
        %3179 = vmatpush1.bf16.msra.mxu0 0
        %3180 = vmatprep.subr.bf16.mxu0 0
        %3181 = vmatpush1.bf16.msra.mxu0 0
        %3182 = vmatprep.subr.bf16.mxu0 0
        %3183 = vmatpush1.bf16.msra.mxu0 0
        %3184 = vmatprep.subr.bf16.mxu0 0
        %3185 = vmatpush1.bf16.msra.mxu0 0
        %3186 = vmatprep.subr.bf16.mxu0 0
        %3187 = vmatpush1.bf16.msra.mxu0 0
        %3188 = vmatprep.subr.bf16.mxu0 0
        %3189 = vmatpush1.bf16.msra.mxu0 0
        %3190 = vmatprep.mubr.bf16.mxu0 0
        %3191 = vmatmul.mubr.bf16.gmra.mrb[0].mxu0 %v3153
        %v3192 = vpop.f32.mrb[0].mxu0
        %v3193 = vadd.f32 0.0, %v3192
        %v3194 = vpop.f32.mrb[0].mxu0
        %v3195 = vpop.f32.mrb[0].mxu0
        %v3196 = vpop.f32.mrb[0].mxu0
        %3197 = vdwg.mxu0
        %v3198 = vadd.f32 %v3144, %v3193
        %s3199 = scalar_lea.vmem [#allocation5], 216
        %v3200 = vld [vmem:[%s3199] sm:$0xf]
        %3201 = vrot.lane.b32.xlu0 %v3037, 124
        %v3202 = vpop.permute.xlu0 %3201
        %3203 = vrot.lane.b32.xlu0 %v3038, 124
        %v3204 = vpop.permute.xlu0 %3203
        %v3205 = vsel %vm466, %v3202, %v3204
        %v3207 = vsel %vm253, %v3200, 0
        %v3210 = vand.u32 %v3205, %v260
        %3212 = vmatprep.subr.bf16.mxu0 0
        %3213 = vmatpush1.bf16.msra.mxu0 %v3210
        %3214 = vmatprep.subr.bf16.mxu0 0
        %3215 = vmatpush1.bf16.msra.mxu0 0
        %3216 = vmatprep.subr.bf16.mxu0 0
        %3217 = vmatpush1.bf16.msra.mxu0 0
        %3218 = vmatprep.subr.bf16.mxu0 0
        %3219 = vmatpush1.bf16.msra.mxu0 0
        %3220 = vmatprep.subr.bf16.mxu0 0
        %3221 = vmatpush1.bf16.msra.mxu0 0
        %3222 = vmatprep.subr.bf16.mxu0 0
        %3223 = vmatpush1.bf16.msra.mxu0 0
        %3224 = vmatprep.subr.bf16.mxu0 0
        %3225 = vmatpush1.bf16.msra.mxu0 0
        %3226 = vmatprep.subr.bf16.mxu0 0
        %3227 = vmatpush1.bf16.msra.mxu0 0
        %3228 = vmatprep.subr.bf16.mxu0 0
        %3229 = vmatpush1.bf16.msra.mxu0 0
        %3230 = vmatprep.subr.bf16.mxu0 0
        %3231 = vmatpush1.bf16.msra.mxu0 0
        %3232 = vmatprep.subr.bf16.mxu0 0
        %3233 = vmatpush1.bf16.msra.mxu0 0
        %3234 = vmatprep.subr.bf16.mxu0 0
        %3235 = vmatpush1.bf16.msra.mxu0 0
        %3236 = vmatprep.subr.bf16.mxu0 0
        %3237 = vmatpush1.bf16.msra.mxu0 0
        %3238 = vmatprep.subr.bf16.mxu0 0
        %3239 = vmatpush1.bf16.msra.mxu0 0
        %3240 = vmatprep.subr.bf16.mxu0 0
        %3241 = vmatpush1.bf16.msra.mxu0 0
        %3242 = vmatprep.subr.bf16.mxu0 0
        %3243 = vmatpush1.bf16.msra.mxu0 0
        %3244 = vmatprep.mubr.bf16.mxu0 0
        %3245 = vmatmul.mubr.bf16.gmra.mrb[0].mxu0 %v3207
        %v3246 = vpop.f32.mrb[0].mxu0
        %v3247 = vadd.f32 0.0, %v3246
        %v3248 = vpop.f32.mrb[0].mxu0
        %v3249 = vpop.f32.mrb[0].mxu0
        %v3250 = vpop.f32.mrb[0].mxu0
        %3251 = vdwg.mxu0
        %v3252 = vadd.f32 %v3198, %v3247
        %s3253 = scalar_lea.vmem [#allocation5], 220
        %v3254 = vld [vmem:[%s3253] sm:$0xf]
        %3255 = vrot.lane.b32.xlu0 %v3037, 120
        %v3256 = vpop.permute.xlu0 %3255
        %3257 = vrot.lane.b32.xlu0 %v3038, 120
        %v3258 = vpop.permute.xlu0 %3257
        %v3259 = vsel %vm521, %v3256, %v3258
        %v3261 = vsel %vm253, %v3254, 0
        %v3264 = vand.u32 %v3259, %v260
        %3266 = vmatprep.subr.bf16.mxu0 0
        %3267 = vmatpush1.bf16.msra.mxu0 %v3264
        %3268 = vmatprep.subr.bf16.mxu0 0
        %3269 = vmatpush1.bf16.msra.mxu0 0
        %3270 = vmatprep.subr.bf16.mxu0 0
        %3271 = vmatpush1.bf16.msra.mxu0 0
        %3272 = vmatprep.subr.bf16.mxu0 0
        %3273 = vmatpush1.bf16.msra.mxu0 0
        %3274 = vmatprep.subr.bf16.mxu0 0
        %3275 = vmatpush1.bf16.msra.mxu0 0
        %3276 = vmatprep.subr.bf16.mxu0 0
        %3277 = vmatpush1.bf16.msra.mxu0 0
        %3278 = vmatprep.subr.bf16.mxu0 0
        %3279 = vmatpush1.bf16.msra.mxu0 0
        %3280 = vmatprep.subr.bf16.mxu0 0
        %3281 = vmatpush1.bf16.msra.mxu0 0
        %3282 = vmatprep.subr.bf16.mxu0 0
        %3283 = vmatpush1.bf16.msra.mxu0 0
        %3284 = vmatprep.subr.bf16.mxu0 0
        %3285 = vmatpush1.bf16.msra.mxu0 0
        %3286 = vmatprep.subr.bf16.mxu0 0
        %3287 = vmatpush1.bf16.msra.mxu0 0
        %3288 = vmatprep.subr.bf16.mxu0 0
        %3289 = vmatpush1.bf16.msra.mxu0 0
        %3290 = vmatprep.subr.bf16.mxu0 0
        %3291 = vmatpush1.bf16.msra.mxu0 0
        %3292 = vmatprep.subr.bf16.mxu0 0
        %3293 = vmatpush1.bf16.msra.mxu0 0
        %3294 = vmatprep.subr.bf16.mxu0 0
        %3295 = vmatpush1.bf16.msra.mxu0 0
        %3296 = vmatprep.subr.bf16.mxu0 0
        %3297 = vmatpush1.bf16.msra.mxu0 0
        %3298 = vmatprep.mubr.bf16.mxu0 0
        %3299 = vmatmul.mubr.bf16.gmra.mrb[0].mxu0 %v3261
        %v3300 = vpop.f32.mrb[0].mxu0
        %v3301 = vadd.f32 0.0, %v3300
        %v3302 = vpop.f32.mrb[0].mxu0
        %v3303 = vpop.f32.mrb[0].mxu0
        %v3304 = vpop.f32.mrb[0].mxu0
        %3305 = vdwg.mxu0
        %v3306 = vadd.f32 %v3252, %v3301
        %s3307 = scalar_lea.vmem [#allocation5], 224
        %v3308 = vld [vmem:[%s3307] sm:$0xf]
        %3309 = vrot.lane.b32.xlu0 %v3037, 119
        %v3310 = vpop.permute.xlu0 %3309
        %3311 = vrot.lane.b32.xlu0 %v3038, 119
        %v3312 = vpop.permute.xlu0 %3311
        %v3313 = vsel %vm576, %v3310, %v3312
        %v3315 = vsel %vm253, %v3308, 0
        %v3318 = vand.u32 %v3313, %v260
        %3320 = vmatprep.subr.bf16.mxu0 0
        %3321 = vmatpush1.bf16.msra.mxu0 %v3318
        %3322 = vmatprep.subr.bf16.mxu0 0
        %3323 = vmatpush1.bf16.msra.mxu0 0
        %3324 = vmatprep.subr.bf16.mxu0 0
        %3325 = vmatpush1.bf16.msra.mxu0 0
        %3326 = vmatprep.subr.bf16.mxu0 0
        %3327 = vmatpush1.bf16.msra.mxu0 0
        %3328 = vmatprep.subr.bf16.mxu0 0
        %3329 = vmatpush1.bf16.msra.mxu0 0
        %3330 = vmatprep.subr.bf16.mxu0 0
        %3331 = vmatpush1.bf16.msra.mxu0 0
        %3332 = vmatprep.subr.bf16.mxu0 0
        %3333 = vmatpush1.bf16.msra.mxu0 0
        %3334 = vmatprep.subr.bf16.mxu0 0
        %3335 = vmatpush1.bf16.msra.mxu0 0
        %3336 = vmatprep.subr.bf16.mxu0 0
        %3337 = vmatpush1.bf16.msra.mxu0 0
        %3338 = vmatprep.subr.bf16.mxu0 0
        %3339 = vmatpush1.bf16.msra.mxu0 0
        %3340 = vmatprep.subr.bf16.mxu0 0
        %3341 = vmatpush1.bf16.msra.mxu0 0
        %3342 = vmatprep.subr.bf16.mxu0 0
        %3343 = vmatpush1.bf16.msra.mxu0 0
        %3344 = vmatprep.subr.bf16.mxu0 0
        %3345 = vmatpush1.bf16.msra.mxu0 0
        %3346 = vmatprep.subr.bf16.mxu0 0
        %3347 = vmatpush1.bf16.msra.mxu0 0
        %3348 = vmatprep.subr.bf16.mxu0 0
        %3349 = vmatpush1.bf16.msra.mxu0 0
        %3350 = vmatprep.subr.bf16.mxu0 0
        %3351 = vmatpush1.bf16.msra.mxu0 0
        %3352 = vmatprep.mubr.bf16.mxu0 0
        %3353 = vmatmul.mubr.bf16.gmra.mrb[0].mxu0 %v3315
        %v3354 = vpop.f32.mrb[0].mxu0
        %v3355 = vadd.f32 0.0, %v3354
        %v3356 = vpop.f32.mrb[0].mxu0
        %v3357 = vpop.f32.mrb[0].mxu0
        %v3358 = vpop.f32.mrb[0].mxu0
        %3359 = vdwg.mxu0
        %v3360 = vadd.f32 %v3306, %v3355
        %s3361 = scalar_lea.vmem [#allocation5], 228
        %v3362 = vld [vmem:[%s3361] sm:$0xf]
        %3363 = vrot.lane.b32.xlu0 %v3037, 118
        %v3364 = vpop.permute.xlu0 %3363
        %3365 = vrot.lane.b32.xlu0 %v3038, 118
        %v3366 = vpop.permute.xlu0 %3365
        %v3367 = vsel %vm631, %v3364, %v3366
        %v3369 = vsel %vm253, %v3362, 0
        %v3372 = vand.u32 %v3367, %v260
        %3374 = vmatprep.subr.bf16.mxu0 0
        %3375 = vmatpush1.bf16.msra.mxu0 %v3372
        %3376 = vmatprep.subr.bf16.mxu0 0
        %3377 = vmatpush1.bf16.msra.mxu0 0
        %3378 = vmatprep.subr.bf16.mxu0 0
        %3379 = vmatpush1.bf16.msra.mxu0 0
        %3380 = vmatprep.subr.bf16.mxu0 0
        %3381 = vmatpush1.bf16.msra.mxu0 0
        %3382 = vmatprep.subr.bf16.mxu0 0
        %3383 = vmatpush1.bf16.msra.mxu0 0
        %3384 = vmatprep.subr.bf16.mxu0 0
        %3385 = vmatpush1.bf16.msra.mxu0 0
        %3386 = vmatprep.subr.bf16.mxu0 0
        %3387 = vmatpush1.bf16.msra.mxu0 0
        %3388 = vmatprep.subr.bf16.mxu0 0
        %3389 = vmatpush1.bf16.msra.mxu0 0
        %3390 = vmatprep.subr.bf16.mxu0 0
        %3391 = vmatpush1.bf16.msra.mxu0 0
        %3392 = vmatprep.subr.bf16.mxu0 0
        %3393 = vmatpush1.bf16.msra.mxu0 0
        %3394 = vmatprep.subr.bf16.mxu0 0
        %3395 = vmatpush1.bf16.msra.mxu0 0
        %3396 = vmatprep.subr.bf16.mxu0 0
        %3397 = vmatpush1.bf16.msra.mxu0 0
        %3398 = vmatprep.subr.bf16.mxu0 0
        %3399 = vmatpush1.bf16.msra.mxu0 0
        %3400 = vmatprep.subr.bf16.mxu0 0
        %3401 = vmatpush1.bf16.msra.mxu0 0
        %3402 = vmatprep.subr.bf16.mxu0 0
        %3403 = vmatpush1.bf16.msra.mxu0 0
        %3404 = vmatprep.subr.bf16.mxu0 0
        %3405 = vmatpush1.bf16.msra.mxu0 0
        %3406 = vmatprep.mubr.bf16.mxu0 0
        %3407 = vmatmul.mubr.bf16.gmra.mrb[0].mxu0 %v3369
        %v3408 = vpop.f32.mrb[0].mxu0
        %v3409 = vadd.f32 0.0, %v3408
        %v3410 = vpop.f32.mrb[0].mxu0
        %v3411 = vpop.f32.mrb[0].mxu0
        %v3412 = vpop.f32.mrb[0].mxu0
        %3413 = vdwg.mxu0
        %v3414 = vadd.f32 %v3360, %v3409
        %s3415 = scalar_lea.vmem [#allocation5], 232
        %v3416 = vld [vmem:[%s3415] sm:$0xf]
        %3417 = vrot.lane.b32.xlu0 %v3037, 117
        %v3418 = vpop.permute.xlu0 %3417
        %3419 = vrot.lane.b32.xlu0 %v3038, 117
        %v3420 = vpop.permute.xlu0 %3419
        %v3421 = vsel %vm686, %v3418, %v3420
        %v3423 = vsel %vm253, %v3416, 0
        %v3426 = vand.u32 %v3421, %v260
        %3428 = vmatprep.subr.bf16.mxu0 0
        %3429 = vmatpush1.bf16.msra.mxu0 %v3426
        %3430 = vmatprep.subr.bf16.mxu0 0
        %3431 = vmatpush1.bf16.msra.mxu0 0
        %3432 = vmatprep.subr.bf16.mxu0 0
        %3433 = vmatpush1.bf16.msra.mxu0 0
        %3434 = vmatprep.subr.bf16.mxu0 0
        %3435 = vmatpush1.bf16.msra.mxu0 0
        %3436 = vmatprep.subr.bf16.mxu0 0
        %3437 = vmatpush1.bf16.msra.mxu0 0
        %3438 = vmatprep.subr.bf16.mxu0 0
        %3439 = vmatpush1.bf16.msra.mxu0 0
        %3440 = vmatprep.subr.bf16.mxu0 0
        %3441 = vmatpush1.bf16.msra.mxu0 0
        %3442 = vmatprep.subr.bf16.mxu0 0
        %3443 = vmatpush1.bf16.msra.mxu0 0
        %3444 = vmatprep.subr.bf16.mxu0 0
        %3445 = vmatpush1.bf16.msra.mxu0 0
        %3446 = vmatprep.subr.bf16.mxu0 0
        %3447 = vmatpush1.bf16.msra.mxu0 0
        %3448 = vmatprep.subr.bf16.mxu0 0
        %3449 = vmatpush1.bf16.msra.mxu0 0
        %3450 = vmatprep.subr.bf16.mxu0 0
        %3451 = vmatpush1.bf16.msra.mxu0 0
        %3452 = vmatprep.subr.bf16.mxu0 0
        %3453 = vmatpush1.bf16.msra.mxu0 0
        %3454 = vmatprep.subr.bf16.mxu0 0
        %3455 = vmatpush1.bf16.msra.mxu0 0
        %3456 = vmatprep.subr.bf16.mxu0 0
        %3457 = vmatpush1.bf16.msra.mxu0 0
        %3458 = vmatprep.subr.bf16.mxu0 0
        %3459 = vmatpush1.bf16.msra.mxu0 0
        %3460 = vmatprep.mubr.bf16.mxu0 0
        %3461 = vmatmul.mubr.bf16.gmra.mrb[0].mxu0 %v3423
        %v3462 = vpop.f32.mrb[0].mxu0
        %v3463 = vadd.f32 0.0, %v3462
        %v3464 = vpop.f32.mrb[0].mxu0
        %v3465 = vpop.f32.mrb[0].mxu0
        %v3466 = vpop.f32.mrb[0].mxu0
        %3467 = vdwg.mxu0
        %v3468 = vadd.f32 %v3414, %v3463
        %s3469 = scalar_lea.vmem [#allocation5], 236
        %v3470 = vld [vmem:[%s3469] sm:$0xf]
        %3471 = vrot.lane.b32.xlu0 %v3037, 116
        %v3472 = vpop.permute.xlu0 %3471
        %3473 = vrot.lane.b32.xlu0 %v3038, 116
        %v3474 = vpop.permute.xlu0 %3473
        %v3475 = vsel %vm741, %v3472, %v3474
        %v3477 = vsel %vm253, %v3470, 0
        %v3480 = vand.u32 %v3475, %v260
        %3482 = vmatprep.subr.bf16.mxu0 0
        %3483 = vmatpush1.bf16.msra.mxu0 %v3480
        %3484 = vmatprep.subr.bf16.mxu0 0
        %3485 = vmatpush1.bf16.msra.mxu0 0
        %3486 = vmatprep.subr.bf16.mxu0 0
        %3487 = vmatpush1.bf16.msra.mxu0 0
        %3488 = vmatprep.subr.bf16.mxu0 0
        %3489 = vmatpush1.bf16.msra.mxu0 0
        %3490 = vmatprep.subr.bf16.mxu0 0
        %3491 = vmatpush1.bf16.msra.mxu0 0
        %3492 = vmatprep.subr.bf16.mxu0 0
        %3493 = vmatpush1.bf16.msra.mxu0 0
        %3494 = vmatprep.subr.bf16.mxu0 0
        %3495 = vmatpush1.bf16.msra.mxu0 0
        %3496 = vmatprep.subr.bf16.mxu0 0
        %3497 = vmatpush1.bf16.msra.mxu0 0
        %3498 = vmatprep.subr.bf16.mxu0 0
        %3499 = vmatpush1.bf16.msra.mxu0 0
        %3500 = vmatprep.subr.bf16.mxu0 0
        %3501 = vmatpush1.bf16.msra.mxu0 0
        %3502 = vmatprep.subr.bf16.mxu0 0
        %3503 = vmatpush1.bf16.msra.mxu0 0
        %3504 = vmatprep.subr.bf16.mxu0 0
        %3505 = vmatpush1.bf16.msra.mxu0 0
        %3506 = vmatprep.subr.bf16.mxu0 0
        %3507 = vmatpush1.bf16.msra.mxu0 0
        %3508 = vmatprep.subr.bf16.mxu0 0
        %3509 = vmatpush1.bf16.msra.mxu0 0
        %3510 = vmatprep.subr.bf16.mxu0 0
        %3511 = vmatpush1.bf16.msra.mxu0 0
        %3512 = vmatprep.subr.bf16.mxu0 0
        %3513 = vmatpush1.bf16.msra.mxu0 0
        %3514 = vmatprep.mubr.bf16.mxu0 0
        %3515 = vmatmul.mubr.bf16.gmra.mrb[0].mxu0 %v3477
        %v3516 = vpop.f32.mrb[0].mxu0
        %v3517 = vadd.f32 0.0, %v3516
        %v3518 = vpop.f32.mrb[0].mxu0
        %v3519 = vpop.f32.mrb[0].mxu0
        %v3520 = vpop.f32.mrb[0].mxu0
        %3521 = vdwg.mxu0
        %v3522 = vadd.f32 %v3468, %v3517
        %s3523 = scalar_lea.vmem [#allocation5], 240
        %v3524 = vld [vmem:[%s3523] sm:$0xf]
        %3525 = vrot.lane.b32.xlu0 %v3037, 112
        %v3526 = vpop.permute.xlu0 %3525
        %3527 = vrot.lane.b32.xlu0 %v3038, 112
        %v3528 = vpop.permute.xlu0 %3527
        %v3529 = vsel %vm796, %v3526, %v3528
        %v3531 = vsel %vm253, %v3524, 0
        %v3534 = vand.u32 %v3529, %v260
        %3536 = vmatprep.subr.bf16.mxu0 0
        %3537 = vmatpush1.bf16.msra.mxu0 %v3534
        %3538 = vmatprep.subr.bf16.mxu0 0
        %3539 = vmatpush1.bf16.msra.mxu0 0
        %3540 = vmatprep.subr.bf16.mxu0 0
        %3541 = vmatpush1.bf16.msra.mxu0 0
        %3542 = vmatprep.subr.bf16.mxu0 0
        %3543 = vmatpush1.bf16.msra.mxu0 0
        %3544 = vmatprep.subr.bf16.mxu0 0
        %3545 = vmatpush1.bf16.msra.mxu0 0
        %3546 = vmatprep.subr.bf16.mxu0 0
        %3547 = vmatpush1.bf16.msra.mxu0 0
        %3548 = vmatprep.subr.bf16.mxu0 0
        %3549 = vmatpush1.bf16.msra.mxu0 0
        %3550 = vmatprep.subr.bf16.mxu0 0
        %3551 = vmatpush1.bf16.msra.mxu0 0
        %3552 = vmatprep.subr.bf16.mxu0 0
        %3553 = vmatpush1.bf16.msra.mxu0 0
        %3554 = vmatprep.subr.bf16.mxu0 0
        %3555 = vmatpush1.bf16.msra.mxu0 0
        %3556 = vmatprep.subr.bf16.mxu0 0
        %3557 = vmatpush1.bf16.msra.mxu0 0
        %3558 = vmatprep.subr.bf16.mxu0 0
        %3559 = vmatpush1.bf16.msra.mxu0 0
        %3560 = vmatprep.subr.bf16.mxu0 0
        %3561 = vmatpush1.bf16.msra.mxu0 0
        %3562 = vmatprep.subr.bf16.mxu0 0
        %3563 = vmatpush1.bf16.msra.mxu0 0
        %3564 = vmatprep.subr.bf16.mxu0 0
        %3565 = vmatpush1.bf16.msra.mxu0 0
        %3566 = vmatprep.subr.bf16.mxu0 0
        %3567 = vmatpush1.bf16.msra.mxu0 0
        %3568 = vmatprep.mubr.bf16.mxu0 0
        %3569 = vmatmul.mubr.bf16.gmra.mrb[0].mxu0 %v3531
        %v3570 = vpop.f32.mrb[0].mxu0
        %v3571 = vadd.f32 0.0, %v3570
        %v3572 = vpop.f32.mrb[0].mxu0
        %v3573 = vpop.f32.mrb[0].mxu0
        %v3574 = vpop.f32.mrb[0].mxu0
        %3575 = vdwg.mxu0
        %v3576 = vadd.f32 %v3522, %v3571
        %s3577 = scalar_lea.vmem [#allocation5], 244
        %v3578 = vld [vmem:[%s3577] sm:$0xf]
        %3579 = vrot.lane.b32.xlu0 %v3037, 111
        %v3580 = vpop.permute.xlu0 %3579
        %3581 = vrot.lane.b32.xlu0 %v3038, 111
        %v3582 = vpop.permute.xlu0 %3581
        %v3583 = vsel %vm851, %v3580, %v3582
        %v3585 = vsel %vm253, %v3578, 0
        %v3588 = vand.u32 %v3583, %v260
        %3590 = vmatprep.subr.bf16.mxu0 0
        %3591 = vmatpush1.bf16.msra.mxu0 %v3588
        %3592 = vmatprep.subr.bf16.mxu0 0
        %3593 = vmatpush1.bf16.msra.mxu0 0
        %3594 = vmatprep.subr.bf16.mxu0 0
        %3595 = vmatpush1.bf16.msra.mxu0 0
        %3596 = vmatprep.subr.bf16.mxu0 0
        %3597 = vmatpush1.bf16.msra.mxu0 0
        %3598 = vmatprep.subr.bf16.mxu0 0
        %3599 = vmatpush1.bf16.msra.mxu0 0
        %3600 = vmatprep.subr.bf16.mxu0 0
        %3601 = vmatpush1.bf16.msra.mxu0 0
        %3602 = vmatprep.subr.bf16.mxu0 0
        %3603 = vmatpush1.bf16.msra.mxu0 0
        %3604 = vmatprep.subr.bf16.mxu0 0
        %3605 = vmatpush1.bf16.msra.mxu0 0
        %3606 = vmatprep.subr.bf16.mxu0 0
        %3607 = vmatpush1.bf16.msra.mxu0 0
        %3608 = vmatprep.subr.bf16.mxu0 0
        %3609 = vmatpush1.bf16.msra.mxu0 0
        %3610 = vmatprep.subr.bf16.mxu0 0
        %3611 = vmatpush1.bf16.msra.mxu0 0
        %3612 = vmatprep.subr.bf16.mxu0 0
        %3613 = vmatpush1.bf16.msra.mxu0 0
        %3614 = vmatprep.subr.bf16.mxu0 0
        %3615 = vmatpush1.bf16.msra.mxu0 0
        %3616 = vmatprep.subr.bf16.mxu0 0
        %3617 = vmatpush1.bf16.msra.mxu0 0
        %3618 = vmatprep.subr.bf16.mxu0 0
        %3619 = vmatpush1.bf16.msra.mxu0 0
        %3620 = vmatprep.subr.bf16.mxu0 0
        %3621 = vmatpush1.bf16.msra.mxu0 0
        %3622 = vmatprep.mubr.bf16.mxu0 0
        %3623 = vmatmul.mubr.bf16.gmra.mrb[0].mxu0 %v3585
        %v3624 = vpop.f32.mrb[0].mxu0
        %v3625 = vadd.f32 0.0, %v3624
        %v3626 = vpop.f32.mrb[0].mxu0
        %v3627 = vpop.f32.mrb[0].mxu0
        %v3628 = vpop.f32.mrb[0].mxu0
        %3629 = vdwg.mxu0
        %v3630 = vadd.f32 %v3576, %v3625
        %s3631 = scalar_lea.vmem [#allocation5], 248
        %v3632 = vld [vmem:[%s3631] sm:$0xf]
        %3633 = vrot.lane.b32.xlu0 %v3037, 110
        %v3634 = vpop.permute.xlu0 %3633
        %3635 = vrot.lane.b32.xlu0 %v3038, 110
        %v3636 = vpop.permute.xlu0 %3635
        %v3637 = vsel %vm906, %v3634, %v3636
        %v3639 = vsel %vm253, %v3632, 0
        %v3642 = vand.u32 %v3637, %v260
        %3644 = vmatprep.subr.bf16.mxu0 0
        %3645 = vmatpush1.bf16.msra.mxu0 %v3642
        %3646 = vmatprep.subr.bf16.mxu0 0
        %3647 = vmatpush1.bf16.msra.mxu0 0
        %3648 = vmatprep.subr.bf16.mxu0 0
        %3649 = vmatpush1.bf16.msra.mxu0 0
        %3650 = vmatprep.subr.bf16.mxu0 0
        %3651 = vmatpush1.bf16.msra.mxu0 0
        %3652 = vmatprep.subr.bf16.mxu0 0
        %3653 = vmatpush1.bf16.msra.mxu0 0
        %3654 = vmatprep.subr.bf16.mxu0 0
        %3655 = vmatpush1.bf16.msra.mxu0 0
        %3656 = vmatprep.subr.bf16.mxu0 0
        %3657 = vmatpush1.bf16.msra.mxu0 0
        %3658 = vmatprep.subr.bf16.mxu0 0
        %3659 = vmatpush1.bf16.msra.mxu0 0
        %3660 = vmatprep.subr.bf16.mxu0 0
        %3661 = vmatpush1.bf16.msra.mxu0 0
        %3662 = vmatprep.subr.bf16.mxu0 0
        %3663 = vmatpush1.bf16.msra.mxu0 0
        %3664 = vmatprep.subr.bf16.mxu0 0
        %3665 = vmatpush1.bf16.msra.mxu0 0
        %3666 = vmatprep.subr.bf16.mxu0 0
        %3667 = vmatpush1.bf16.msra.mxu0 0
        %3668 = vmatprep.subr.bf16.mxu0 0
        %3669 = vmatpush1.bf16.msra.mxu0 0
        %3670 = vmatprep.subr.bf16.mxu0 0
        %3671 = vmatpush1.bf16.msra.mxu0 0
        %3672 = vmatprep.subr.bf16.mxu0 0
        %3673 = vmatpush1.bf16.msra.mxu0 0
        %3674 = vmatprep.subr.bf16.mxu0 0
        %3675 = vmatpush1.bf16.msra.mxu0 0
        %3676 = vmatprep.mubr.bf16.mxu0 0
        %3677 = vmatmul.mubr.bf16.gmra.mrb[0].mxu0 %v3639
        %v3678 = vpop.f32.mrb[0].mxu0
        %v3679 = vadd.f32 0.0, %v3678
        %v3680 = vpop.f32.mrb[0].mxu0
        %v3681 = vpop.f32.mrb[0].mxu0
        %v3682 = vpop.f32.mrb[0].mxu0
        %3683 = vdwg.mxu0
        %v3684 = vadd.f32 %v3630, %v3679
        %s3685 = scalar_lea.vmem [#allocation5], 252
        %v3686 = vld [vmem:[%s3685] sm:$0xf]
        %3687 = vrot.lane.b32.xlu0 %v3037, 109
        %v3688 = vpop.permute.xlu0 %3687
        %3689 = vrot.lane.b32.xlu0 %v3038, 109
        %v3690 = vpop.permute.xlu0 %3689
        %v3691 = vsel %vm961, %v3688, %v3690
        %v3693 = vsel %vm253, %v3686, 0
        %v3696 = vand.u32 %v3691, %v260
        %3698 = vmatprep.subr.bf16.mxu0 0
        %3699 = vmatpush1.bf16.msra.mxu0 %v3696
        %3700 = vmatprep.subr.bf16.mxu0 0
        %3701 = vmatpush1.bf16.msra.mxu0 0
        %3702 = vmatprep.subr.bf16.mxu0 0
        %3703 = vmatpush1.bf16.msra.mxu0 0
        %3704 = vmatprep.subr.bf16.mxu0 0
        %3705 = vmatpush1.bf16.msra.mxu0 0
        %3706 = vmatprep.subr.bf16.mxu0 0
        %3707 = vmatpush1.bf16.msra.mxu0 0
        %3708 = vmatprep.subr.bf16.mxu0 0
        %3709 = vmatpush1.bf16.msra.mxu0 0
        %3710 = vmatprep.subr.bf16.mxu0 0
        %3711 = vmatpush1.bf16.msra.mxu0 0
        %3712 = vmatprep.subr.bf16.mxu0 0
        %3713 = vmatpush1.bf16.msra.mxu0 0
        %3714 = vmatprep.subr.bf16.mxu0 0
        %3715 = vmatpush1.bf16.msra.mxu0 0
        %3716 = vmatprep.subr.bf16.mxu0 0
        %3717 = vmatpush1.bf16.msra.mxu0 0
        %3718 = vmatprep.subr.bf16.mxu0 0
        %3719 = vmatpush1.bf16.msra.mxu0 0
        %3720 = vmatprep.subr.bf16.mxu0 0
        %3721 = vmatpush1.bf16.msra.mxu0 0
        %3722 = vmatprep.subr.bf16.mxu0 0
        %3723 = vmatpush1.bf16.msra.mxu0 0
        %3724 = vmatprep.subr.bf16.mxu0 0
        %3725 = vmatpush1.bf16.msra.mxu0 0
        %3726 = vmatprep.subr.bf16.mxu0 0
        %3727 = vmatpush1.bf16.msra.mxu0 0
        %3728 = vmatprep.subr.bf16.mxu0 0
        %3729 = vmatpush1.bf16.msra.mxu0 0
        %3730 = vmatprep.mubr.bf16.mxu0 0
        %3731 = vmatmul.mubr.bf16.gmra.mrb[0].mxu0 %v3693
        %v3732 = vpop.f32.mrb[0].mxu0
        %v3733 = vadd.f32 0.0, %v3732
        %v3734 = vpop.f32.mrb[0].mxu0
        %v3735 = vpop.f32.mrb[0].mxu0
        %v3736 = vpop.f32.mrb[0].mxu0
        %3737 = vdwg.mxu0
        %v3738 = vadd.f32 %v3684, %v3733
        %s3739 = scalar_lea.vmem [#allocation5], 256
        %v3740 = vld [vmem:[%s3739] sm:$0xf]
        %3741 = vrot.lane.b32.xlu0 %v3037, 108
        %v3742 = vpop.permute.xlu0 %3741
        %3743 = vrot.lane.b32.xlu0 %v3038, 108
        %v3744 = vpop.permute.xlu0 %3743
        %v3745 = vsel %vm1016, %v3742, %v3744
        %v3747 = vsel %vm253, %v3740, 0
        %v3750 = vand.u32 %v3745, %v260
        %3752 = vmatprep.subr.bf16.mxu0 0
        %3753 = vmatpush1.bf16.msra.mxu0 %v3750
        %3754 = vmatprep.subr.bf16.mxu0 0
        %3755 = vmatpush1.bf16.msra.mxu0 0
        %3756 = vmatprep.subr.bf16.mxu0 0
        %3757 = vmatpush1.bf16.msra.mxu0 0
        %3758 = vmatprep.subr.bf16.mxu0 0
        %3759 = vmatpush1.bf16.msra.mxu0 0
        %3760 = vmatprep.subr.bf16.mxu0 0
        %3761 = vmatpush1.bf16.msra.mxu0 0
        %3762 = vmatprep.subr.bf16.mxu0 0
        %3763 = vmatpush1.bf16.msra.mxu0 0
        %3764 = vmatprep.subr.bf16.mxu0 0
        %3765 = vmatpush1.bf16.msra.mxu0 0
        %3766 = vmatprep.subr.bf16.mxu0 0
        %3767 = vmatpush1.bf16.msra.mxu0 0
        %3768 = vmatprep.subr.bf16.mxu0 0
        %3769 = vmatpush1.bf16.msra.mxu0 0
        %3770 = vmatprep.subr.bf16.mxu0 0
        %3771 = vmatpush1.bf16.msra.mxu0 0
        %3772 = vmatprep.subr.bf16.mxu0 0
        %3773 = vmatpush1.bf16.msra.mxu0 0
        %3774 = vmatprep.subr.bf16.mxu0 0
        %3775 = vmatpush1.bf16.msra.mxu0 0
        %3776 = vmatprep.subr.bf16.mxu0 0
        %3777 = vmatpush1.bf16.msra.mxu0 0
        %3778 = vmatprep.subr.bf16.mxu0 0
        %3779 = vmatpush1.bf16.msra.mxu0 0
        %3780 = vmatprep.subr.bf16.mxu0 0
        %3781 = vmatpush1.bf16.msra.mxu0 0
        %3782 = vmatprep.subr.bf16.mxu0 0
        %3783 = vmatpush1.bf16.msra.mxu0 0
        %3784 = vmatprep.mubr.bf16.mxu0 0
        %3785 = vmatmul.mubr.bf16.gmra.mrb[0].mxu0 %v3747
        %v3786 = vpop.f32.mrb[0].mxu0
        %v3787 = vadd.f32 0.0, %v3786
        %v3788 = vpop.f32.mrb[0].mxu0
        %v3789 = vpop.f32.mrb[0].mxu0
        %v3790 = vpop.f32.mrb[0].mxu0
        %3791 = vdwg.mxu0
        %v3792 = vadd.f32 %v3738, %v3787
        %s3793 = scalar_lea.vmem [#allocation5], 260
        %v3794 = vld [vmem:[%s3793] sm:$0xf]
        %3795 = vrot.lane.b32.xlu0 %v3037, 104
        %v3796 = vpop.permute.xlu0 %3795
        %3797 = vrot.lane.b32.xlu0 %v3038, 104
        %v3798 = vpop.permute.xlu0 %3797
        %v3799 = vsel %vm1071, %v3796, %v3798
        %v3801 = vsel %vm253, %v3794, 0
        %v3804 = vand.u32 %v3799, %v260
        %3806 = vmatprep.subr.bf16.mxu0 0
        %3807 = vmatpush1.bf16.msra.mxu0 %v3804
        %3808 = vmatprep.subr.bf16.mxu0 0
        %3809 = vmatpush1.bf16.msra.mxu0 0
        %3810 = vmatprep.subr.bf16.mxu0 0
        %3811 = vmatpush1.bf16.msra.mxu0 0
        %3812 = vmatprep.subr.bf16.mxu0 0
        %3813 = vmatpush1.bf16.msra.mxu0 0
        %3814 = vmatprep.subr.bf16.mxu0 0
        %3815 = vmatpush1.bf16.msra.mxu0 0
        %3816 = vmatprep.subr.bf16.mxu0 0
        %3817 = vmatpush1.bf16.msra.mxu0 0
        %3818 = vmatprep.subr.bf16.mxu0 0
        %3819 = vmatpush1.bf16.msra.mxu0 0
        %3820 = vmatprep.subr.bf16.mxu0 0
        %3821 = vmatpush1.bf16.msra.mxu0 0
        %3822 = vmatprep.subr.bf16.mxu0 0
        %3823 = vmatpush1.bf16.msra.mxu0 0
        %3824 = vmatprep.subr.bf16.mxu0 0
        %3825 = vmatpush1.bf16.msra.mxu0 0
        %3826 = vmatprep.subr.bf16.mxu0 0
        %3827 = vmatpush1.bf16.msra.mxu0 0
        %3828 = vmatprep.subr.bf16.mxu0 0
        %3829 = vmatpush1.bf16.msra.mxu0 0
        %3830 = vmatprep.subr.bf16.mxu0 0
        %3831 = vmatpush1.bf16.msra.mxu0 0
        %3832 = vmatprep.subr.bf16.mxu0 0
        %3833 = vmatpush1.bf16.msra.mxu0 0
        %3834 = vmatprep.subr.bf16.mxu0 0
        %3835 = vmatpush1.bf16.msra.mxu0 0
        %3836 = vmatprep.subr.bf16.mxu0 0
        %3837 = vmatpush1.bf16.msra.mxu0 0
        %3838 = vmatprep.mubr.bf16.mxu0 0
        %3839 = vmatmul.mubr.bf16.gmra.mrb[0].mxu0 %v3801
        %v3840 = vpop.f32.mrb[0].mxu0
        %v3841 = vadd.f32 0.0, %v3840
        %v3842 = vpop.f32.mrb[0].mxu0
        %v3843 = vpop.f32.mrb[0].mxu0
        %v3844 = vpop.f32.mrb[0].mxu0
        %3845 = vdwg.mxu0
        %v3846 = vadd.f32 %v3792, %v3841
        %s3847 = scalar_lea.vmem [#allocation5], 264
        %v3848 = vld [vmem:[%s3847] sm:$0xf]
        %3849 = vrot.lane.b32.xlu0 %v3037, 103
        %v3850 = vpop.permute.xlu0 %3849
        %3851 = vrot.lane.b32.xlu0 %v3038, 103
        %v3852 = vpop.permute.xlu0 %3851
        %v3853 = vsel %vm1126, %v3850, %v3852
        %v3855 = vsel %vm253, %v3848, 0
        %v3858 = vand.u32 %v3853, %v260
        %3860 = vmatprep.subr.bf16.mxu0 0
        %3861 = vmatpush1.bf16.msra.mxu0 %v3858
        %3862 = vmatprep.subr.bf16.mxu0 0
        %3863 = vmatpush1.bf16.msra.mxu0 0
        %3864 = vmatprep.subr.bf16.mxu0 0
        %3865 = vmatpush1.bf16.msra.mxu0 0
        %3866 = vmatprep.subr.bf16.mxu0 0
        %3867 = vmatpush1.bf16.msra.mxu0 0
        %3868 = vmatprep.subr.bf16.mxu0 0
        %3869 = vmatpush1.bf16.msra.mxu0 0
        %3870 = vmatprep.subr.bf16.mxu0 0
        %3871 = vmatpush1.bf16.msra.mxu0 0
        %3872 = vmatprep.subr.bf16.mxu0 0
        %3873 = vmatpush1.bf16.msra.mxu0 0
        %3874 = vmatprep.subr.bf16.mxu0 0
        %3875 = vmatpush1.bf16.msra.mxu0 0
        %3876 = vmatprep.subr.bf16.mxu0 0
        %3877 = vmatpush1.bf16.msra.mxu0 0
        %3878 = vmatprep.subr.bf16.mxu0 0
        %3879 = vmatpush1.bf16.msra.mxu0 0
        %3880 = vmatprep.subr.bf16.mxu0 0
        %3881 = vmatpush1.bf16.msra.mxu0 0
        %3882 = vmatprep.subr.bf16.mxu0 0
        %3883 = vmatpush1.bf16.msra.mxu0 0
        %3884 = vmatprep.subr.bf16.mxu0 0
        %3885 = vmatpush1.bf16.msra.mxu0 0
        %3886 = vmatprep.subr.bf16.mxu0 0
        %3887 = vmatpush1.bf16.msra.mxu0 0
        %3888 = vmatprep.subr.bf16.mxu0 0
        %3889 = vmatpush1.bf16.msra.mxu0 0
        %3890 = vmatprep.subr.bf16.mxu0 0
        %3891 = vmatpush1.bf16.msra.mxu0 0
        %3892 = vmatprep.mubr.bf16.mxu0 0
        %3893 = vmatmul.mubr.bf16.gmra.mrb[0].mxu0 %v3855
        %v3894 = vpop.f32.mrb[0].mxu0
        %v3895 = vadd.f32 0.0, %v3894
        %v3896 = vpop.f32.mrb[0].mxu0
        %v3897 = vpop.f32.mrb[0].mxu0
        %v3898 = vpop.f32.mrb[0].mxu0
        %3899 = vdwg.mxu0
        %v3900 = vadd.f32 %v3846, %v3895
        %s3901 = scalar_lea.vmem [#allocation5], 268
        %v3902 = vld [vmem:[%s3901] sm:$0xf]
        %3903 = vrot.lane.b32.xlu0 %v3037, 102
        %v3904 = vpop.permute.xlu0 %3903
        %3905 = vrot.lane.b32.xlu0 %v3038, 102
        %v3906 = vpop.permute.xlu0 %3905
        %v3907 = vsel %vm1181, %v3904, %v3906
        %v3909 = vsel %vm253, %v3902, 0
        %v3912 = vand.u32 %v3907, %v260
        %3914 = vmatprep.subr.bf16.mxu0 0
        %3915 = vmatpush1.bf16.msra.mxu0 %v3912
        %3916 = vmatprep.subr.bf16.mxu0 0
        %3917 = vmatpush1.bf16.msra.mxu0 0
        %3918 = vmatprep.subr.bf16.mxu0 0
        %3919 = vmatpush1.bf16.msra.mxu0 0
        %3920 = vmatprep.subr.bf16.mxu0 0
        %3921 = vmatpush1.bf16.msra.mxu0 0
        %3922 = vmatprep.subr.bf16.mxu0 0
        %3923 = vmatpush1.bf16.msra.mxu0 0
        %3924 = vmatprep.subr.bf16.mxu0 0
        %3925 = vmatpush1.bf16.msra.mxu0 0
        %3926 = vmatprep.subr.bf16.mxu0 0
        %3927 = vmatpush1.bf16.msra.mxu0 0
        %3928 = vmatprep.subr.bf16.mxu0 0
        %3929 = vmatpush1.bf16.msra.mxu0 0
        %3930 = vmatprep.subr.bf16.mxu0 0
        %3931 = vmatpush1.bf16.msra.mxu0 0
        %3932 = vmatprep.subr.bf16.mxu0 0
        %3933 = vmatpush1.bf16.msra.mxu0 0
        %3934 = vmatprep.subr.bf16.mxu0 0
        %3935 = vmatpush1.bf16.msra.mxu0 0
        %3936 = vmatprep.subr.bf16.mxu0 0
        %3937 = vmatpush1.bf16.msra.mxu0 0
        %3938 = vmatprep.subr.bf16.mxu0 0
        %3939 = vmatpush1.bf16.msra.mxu0 0
        %3940 = vmatprep.subr.bf16.mxu0 0
        %3941 = vmatpush1.bf16.msra.mxu0 0
        %3942 = vmatprep.subr.bf16.mxu0 0
        %3943 = vmatpush1.bf16.msra.mxu0 0
        %3944 = vmatprep.subr.bf16.mxu0 0
        %3945 = vmatpush1.bf16.msra.mxu0 0
        %3946 = vmatprep.mubr.bf16.mxu0 0
        %3947 = vmatmul.mubr.bf16.gmra.mrb[0].mxu0 %v3909
        %v3948 = vpop.f32.mrb[0].mxu0
        %v3949 = vadd.f32 0.0, %v3948
        %v3950 = vpop.f32.mrb[0].mxu0
        %v3951 = vpop.f32.mrb[0].mxu0
        %v3952 = vpop.f32.mrb[0].mxu0
        %3953 = vdwg.mxu0
        %v3954 = vadd.f32 %v3900, %v3949
        %s3955 = scalar_lea.vmem [#allocation5], 272
        %v3956 = vld [vmem:[%s3955] sm:$0xf]
        %3957 = vrot.lane.b32.xlu0 %v3037, 101
        %v3958 = vpop.permute.xlu0 %3957
        %3959 = vrot.lane.b32.xlu0 %v3038, 101
        %v3960 = vpop.permute.xlu0 %3959
        %v3961 = vsel %vm1236, %v3958, %v3960
        %v3963 = vsel %vm253, %v3956, 0
        %v3966 = vand.u32 %v3961, %v260
        %3968 = vmatprep.subr.bf16.mxu0 0
        %3969 = vmatpush1.bf16.msra.mxu0 %v3966
        %3970 = vmatprep.subr.bf16.mxu0 0
        %3971 = vmatpush1.bf16.msra.mxu0 0
        %3972 = vmatprep.subr.bf16.mxu0 0
        %3973 = vmatpush1.bf16.msra.mxu0 0
        %3974 = vmatprep.subr.bf16.mxu0 0
        %3975 = vmatpush1.bf16.msra.mxu0 0
        %3976 = vmatprep.subr.bf16.mxu0 0
        %3977 = vmatpush1.bf16.msra.mxu0 0
        %3978 = vmatprep.subr.bf16.mxu0 0
        %3979 = vmatpush1.bf16.msra.mxu0 0
        %3980 = vmatprep.subr.bf16.mxu0 0
        %3981 = vmatpush1.bf16.msra.mxu0 0
        %3982 = vmatprep.subr.bf16.mxu0 0
        %3983 = vmatpush1.bf16.msra.mxu0 0
        %3984 = vmatprep.subr.bf16.mxu0 0
        %3985 = vmatpush1.bf16.msra.mxu0 0
        %3986 = vmatprep.subr.bf16.mxu0 0
        %3987 = vmatpush1.bf16.msra.mxu0 0
        %3988 = vmatprep.subr.bf16.mxu0 0
        %3989 = vmatpush1.bf16.msra.mxu0 0
        %3990 = vmatprep.subr.bf16.mxu0 0
        %3991 = vmatpush1.bf16.msra.mxu0 0
        %3992 = vmatprep.subr.bf16.mxu0 0
        %3993 = vmatpush1.bf16.msra.mxu0 0
        %3994 = vmatprep.subr.bf16.mxu0 0
        %3995 = vmatpush1.bf16.msra.mxu0 0
        %3996 = vmatprep.subr.bf16.mxu0 0
        %3997 = vmatpush1.bf16.msra.mxu0 0
        %3998 = vmatprep.subr.bf16.mxu0 0
        %3999 = vmatpush1.bf16.msra.mxu0 0
        %4000 = vmatprep.mubr.bf16.mxu0 0
        %4001 = vmatmul.mubr.bf16.gmra.mrb[0].mxu0 %v3963
        %v4002 = vpop.f32.mrb[0].mxu0
        %v4003 = vadd.f32 0.0, %v4002
        %v4004 = vpop.f32.mrb[0].mxu0
        %v4005 = vpop.f32.mrb[0].mxu0
        %v4006 = vpop.f32.mrb[0].mxu0
        %4007 = vdwg.mxu0
        %v4008 = vadd.f32 %v3954, %v4003
        %s4009 = scalar_lea.vmem [#allocation5], 276
        %v4010 = vld [vmem:[%s4009] sm:$0xf]
        %4011 = vrot.lane.b32.xlu0 %v3037, 100
        %v4012 = vpop.permute.xlu0 %4011
        %4013 = vrot.lane.b32.xlu0 %v3038, 100
        %v4014 = vpop.permute.xlu0 %4013
        %v4015 = vsel %vm1291, %v4012, %v4014
        %v4017 = vsel %vm253, %v4010, 0
        %v4020 = vand.u32 %v4015, %v260
        %4022 = vmatprep.subr.bf16.mxu0 0
        %4023 = vmatpush1.bf16.msra.mxu0 %v4020
        %4024 = vmatprep.subr.bf16.mxu0 0
        %4025 = vmatpush1.bf16.msra.mxu0 0
        %4026 = vmatprep.subr.bf16.mxu0 0
        %4027 = vmatpush1.bf16.msra.mxu0 0
        %4028 = vmatprep.subr.bf16.mxu0 0
        %4029 = vmatpush1.bf16.msra.mxu0 0
        %4030 = vmatprep.subr.bf16.mxu0 0
        %4031 = vmatpush1.bf16.msra.mxu0 0
        %4032 = vmatprep.subr.bf16.mxu0 0
        %4033 = vmatpush1.bf16.msra.mxu0 0
        %4034 = vmatprep.subr.bf16.mxu0 0
        %4035 = vmatpush1.bf16.msra.mxu0 0
        %4036 = vmatprep.subr.bf16.mxu0 0
        %4037 = vmatpush1.bf16.msra.mxu0 0
        %4038 = vmatprep.subr.bf16.mxu0 0
        %4039 = vmatpush1.bf16.msra.mxu0 0
        %4040 = vmatprep.subr.bf16.mxu0 0
        %4041 = vmatpush1.bf16.msra.mxu0 0
        %4042 = vmatprep.subr.bf16.mxu0 0
        %4043 = vmatpush1.bf16.msra.mxu0 0
        %4044 = vmatprep.subr.bf16.mxu0 0
        %4045 = vmatpush1.bf16.msra.mxu0 0
        %4046 = vmatprep.subr.bf16.mxu0 0
        %4047 = vmatpush1.bf16.msra.mxu0 0
        %4048 = vmatprep.subr.bf16.mxu0 0
        %4049 = vmatpush1.bf16.msra.mxu0 0
        %4050 = vmatprep.subr.bf16.mxu0 0
        %4051 = vmatpush1.bf16.msra.mxu0 0
        %4052 = vmatprep.subr.bf16.mxu0 0
        %4053 = vmatpush1.bf16.msra.mxu0 0
        %4054 = vmatprep.mubr.bf16.mxu0 0
        %4055 = vmatmul.mubr.bf16.gmra.mrb[0].mxu0 %v4017
        %v4056 = vpop.f32.mrb[0].mxu0
        %v4057 = vadd.f32 0.0, %v4056
        %v4058 = vpop.f32.mrb[0].mxu0
        %v4059 = vpop.f32.mrb[0].mxu0
        %v4060 = vpop.f32.mrb[0].mxu0
        %4061 = vdwg.mxu0
        %v4062 = vadd.f32 %v4008, %v4057
        %s4063 = scalar_lea.vmem [#allocation5], 280
        %v4064 = vld [vmem:[%s4063] sm:$0xf]
        %4065 = vrot.lane.b32.xlu0 %v3037, 96
        %v4066 = vpop.permute.xlu0 %4065
        %4067 = vrot.lane.b32.xlu0 %v3038, 96
        %v4068 = vpop.permute.xlu0 %4067
        %v4069 = vsel %vm1346, %v4066, %v4068
        %v4071 = vsel %vm253, %v4064, 0
        %v4074 = vand.u32 %v4069, %v260
        %4076 = vmatprep.subr.bf16.mxu0 0
        %4077 = vmatpush1.bf16.msra.mxu0 %v4074
        %4078 = vmatprep.subr.bf16.mxu0 0
        %4079 = vmatpush1.bf16.msra.mxu0 0
        %4080 = vmatprep.subr.bf16.mxu0 0
        %4081 = vmatpush1.bf16.msra.mxu0 0
        %4082 = vmatprep.subr.bf16.mxu0 0
        %4083 = vmatpush1.bf16.msra.mxu0 0
        %4084 = vmatprep.subr.bf16.mxu0 0
        %4085 = vmatpush1.bf16.msra.mxu0 0
        %4086 = vmatprep.subr.bf16.mxu0 0
        %4087 = vmatpush1.bf16.msra.mxu0 0
        %4088 = vmatprep.subr.bf16.mxu0 0
        %4089 = vmatpush1.bf16.msra.mxu0 0
        %4090 = vmatprep.subr.bf16.mxu0 0
        %4091 = vmatpush1.bf16.msra.mxu0 0
        %4092 = vmatprep.subr.bf16.mxu0 0
        %4093 = vmatpush1.bf16.msra.mxu0 0
        %4094 = vmatprep.subr.bf16.mxu0 0
        %4095 = vmatpush1.bf16.msra.mxu0 0
        %4096 = vmatprep.subr.bf16.mxu0 0
        %4097 = vmatpush1.bf16.msra.mxu0 0
        %4098 = vmatprep.subr.bf16.mxu0 0
        %4099 = vmatpush1.bf16.msra.mxu0 0
        %4100 = vmatprep.subr.bf16.mxu0 0
        %4101 = vmatpush1.bf16.msra.mxu0 0
        %4102 = vmatprep.subr.bf16.mxu0 0
        %4103 = vmatpush1.bf16.msra.mxu0 0
        %4104 = vmatprep.subr.bf16.mxu0 0
        %4105 = vmatpush1.bf16.msra.mxu0 0
        %4106 = vmatprep.subr.bf16.mxu0 0
        %4107 = vmatpush1.bf16.msra.mxu0 0
        %4108 = vmatprep.mubr.bf16.mxu0 0
        %4109 = vmatmul.mubr.bf16.gmra.mrb[0].mxu0 %v4071
        %v4110 = vpop.f32.mrb[0].mxu0
        %v4111 = vadd.f32 0.0, %v4110
        %v4112 = vpop.f32.mrb[0].mxu0
        %v4113 = vpop.f32.mrb[0].mxu0
        %v4114 = vpop.f32.mrb[0].mxu0
        %4115 = vdwg.mxu0
        %v4116 = vadd.f32 %v4062, %v4111
        %s4117 = scalar_lea.vmem [#allocation5], 284
        %v4118 = vld [vmem:[%s4117] sm:$0xf]
        %4119 = vrot.lane.b32.xlu0 %v3037, 95
        %v4120 = vpop.permute.xlu0 %4119
        %4121 = vrot.lane.b32.xlu0 %v3038, 95
        %v4122 = vpop.permute.xlu0 %4121
        %v4123 = vsel %vm1401, %v4120, %v4122
        %v4125 = vsel %vm253, %v4118, 0
        %v4128 = vand.u32 %v4123, %v260
        %4130 = vmatprep.subr.bf16.mxu0 0
        %4131 = vmatpush1.bf16.msra.mxu0 %v4128
        %4132 = vmatprep.subr.bf16.mxu0 0
        %4133 = vmatpush1.bf16.msra.mxu0 0
        %4134 = vmatprep.subr.bf16.mxu0 0
        %4135 = vmatpush1.bf16.msra.mxu0 0
        %4136 = vmatprep.subr.bf16.mxu0 0
        %4137 = vmatpush1.bf16.msra.mxu0 0
        %4138 = vmatprep.subr.bf16.mxu0 0
        %4139 = vmatpush1.bf16.msra.mxu0 0
        %4140 = vmatprep.subr.bf16.mxu0 0
        %4141 = vmatpush1.bf16.msra.mxu0 0
        %4142 = vmatprep.subr.bf16.mxu0 0
        %4143 = vmatpush1.bf16.msra.mxu0 0
        %4144 = vmatprep.subr.bf16.mxu0 0
        %4145 = vmatpush1.bf16.msra.mxu0 0
        %4146 = vmatprep.subr.bf16.mxu0 0
        %4147 = vmatpush1.bf16.msra.mxu0 0
        %4148 = vmatprep.subr.bf16.mxu0 0
        %4149 = vmatpush1.bf16.msra.mxu0 0
        %4150 = vmatprep.subr.bf16.mxu0 0
        %4151 = vmatpush1.bf16.msra.mxu0 0
        %4152 = vmatprep.subr.bf16.mxu0 0
        %4153 = vmatpush1.bf16.msra.mxu0 0
        %4154 = vmatprep.subr.bf16.mxu0 0
        %4155 = vmatpush1.bf16.msra.mxu0 0
        %4156 = vmatprep.subr.bf16.mxu0 0
        %4157 = vmatpush1.bf16.msra.mxu0 0
        %4158 = vmatprep.subr.bf16.mxu0 0
        %4159 = vmatpush1.bf16.msra.mxu0 0
        %4160 = vmatprep.subr.bf16.mxu0 0
        %4161 = vmatpush1.bf16.msra.mxu0 0
        %4162 = vmatprep.mubr.bf16.mxu0 0
        %4163 = vmatmul.mubr.bf16.gmra.mrb[0].mxu0 %v4125
        %v4164 = vpop.f32.mrb[0].mxu0
        %v4165 = vadd.f32 0.0, %v4164
        %v4166 = vpop.f32.mrb[0].mxu0
        %v4167 = vpop.f32.mrb[0].mxu0
        %v4168 = vpop.f32.mrb[0].mxu0
        %4169 = vdwg.mxu0
        %v4170 = vadd.f32 %v4116, %v4165
        %s4171 = scalar_lea.vmem [#allocation5], 288
        %v4172 = vld [vmem:[%s4171] sm:$0xf]
        %4173 = vrot.lane.b32.xlu0 %v3037, 94
        %v4174 = vpop.permute.xlu0 %4173
        %4175 = vrot.lane.b32.xlu0 %v3038, 94
        %v4176 = vpop.permute.xlu0 %4175
        %v4177 = vsel %vm1456, %v4174, %v4176
        %v4179 = vsel %vm253, %v4172, 0
        %v4182 = vand.u32 %v4177, %v260
        %4184 = vmatprep.subr.bf16.mxu0 0
        %4185 = vmatpush1.bf16.msra.mxu0 %v4182
        %4186 = vmatprep.subr.bf16.mxu0 0
        %4187 = vmatpush1.bf16.msra.mxu0 0
        %4188 = vmatprep.subr.bf16.mxu0 0
        %4189 = vmatpush1.bf16.msra.mxu0 0
        %4190 = vmatprep.subr.bf16.mxu0 0
        %4191 = vmatpush1.bf16.msra.mxu0 0
        %4192 = vmatprep.subr.bf16.mxu0 0
        %4193 = vmatpush1.bf16.msra.mxu0 0
        %4194 = vmatprep.subr.bf16.mxu0 0
        %4195 = vmatpush1.bf16.msra.mxu0 0
        %4196 = vmatprep.subr.bf16.mxu0 0
        %4197 = vmatpush1.bf16.msra.mxu0 0
        %4198 = vmatprep.subr.bf16.mxu0 0
        %4199 = vmatpush1.bf16.msra.mxu0 0
        %4200 = vmatprep.subr.bf16.mxu0 0
        %4201 = vmatpush1.bf16.msra.mxu0 0
        %4202 = vmatprep.subr.bf16.mxu0 0
        %4203 = vmatpush1.bf16.msra.mxu0 0
        %4204 = vmatprep.subr.bf16.mxu0 0
        %4205 = vmatpush1.bf16.msra.mxu0 0
        %4206 = vmatprep.subr.bf16.mxu0 0
        %4207 = vmatpush1.bf16.msra.mxu0 0
        %4208 = vmatprep.subr.bf16.mxu0 0
        %4209 = vmatpush1.bf16.msra.mxu0 0
        %4210 = vmatprep.subr.bf16.mxu0 0
        %4211 = vmatpush1.bf16.msra.mxu0 0
        %4212 = vmatprep.subr.bf16.mxu0 0
        %4213 = vmatpush1.bf16.msra.mxu0 0
        %4214 = vmatprep.subr.bf16.mxu0 0
        %4215 = vmatpush1.bf16.msra.mxu0 0
        %4216 = vmatprep.mubr.bf16.mxu0 0
        %4217 = vmatmul.mubr.bf16.gmra.mrb[0].mxu0 %v4179
        %v4218 = vpop.f32.mrb[0].mxu0
        %v4219 = vadd.f32 0.0, %v4218
        %v4220 = vpop.f32.mrb[0].mxu0
        %v4221 = vpop.f32.mrb[0].mxu0
        %v4222 = vpop.f32.mrb[0].mxu0
        %4223 = vdwg.mxu0
        %v4224 = vadd.f32 %v4170, %v4219
        %s4225 = scalar_lea.vmem [#allocation5], 292
        %v4226 = vld [vmem:[%s4225] sm:$0xf]
        %4227 = vrot.lane.b32.xlu0 %v3037, 93
        %v4228 = vpop.permute.xlu0 %4227
        %4229 = vrot.lane.b32.xlu0 %v3038, 93
        %v4230 = vpop.permute.xlu0 %4229
        %v4231 = vsel %vm1511, %v4228, %v4230
        %v4233 = vsel %vm253, %v4226, 0
        %v4236 = vand.u32 %v4231, %v260
        %4238 = vmatprep.subr.bf16.mxu0 0
        %4239 = vmatpush1.bf16.msra.mxu0 %v4236
        %4240 = vmatprep.subr.bf16.mxu0 0
        %4241 = vmatpush1.bf16.msra.mxu0 0
        %4242 = vmatprep.subr.bf16.mxu0 0
        %4243 = vmatpush1.bf16.msra.mxu0 0
        %4244 = vmatprep.subr.bf16.mxu0 0
        %4245 = vmatpush1.bf16.msra.mxu0 0
        %4246 = vmatprep.subr.bf16.mxu0 0
        %4247 = vmatpush1.bf16.msra.mxu0 0
        %4248 = vmatprep.subr.bf16.mxu0 0
        %4249 = vmatpush1.bf16.msra.mxu0 0
        %4250 = vmatprep.subr.bf16.mxu0 0
        %4251 = vmatpush1.bf16.msra.mxu0 0
        %4252 = vmatprep.subr.bf16.mxu0 0
        %4253 = vmatpush1.bf16.msra.mxu0 0
        %4254 = vmatprep.subr.bf16.mxu0 0
        %4255 = vmatpush1.bf16.msra.mxu0 0
        %4256 = vmatprep.subr.bf16.mxu0 0
        %4257 = vmatpush1.bf16.msra.mxu0 0
        %4258 = vmatprep.subr.bf16.mxu0 0
        %4259 = vmatpush1.bf16.msra.mxu0 0
        %4260 = vmatprep.subr.bf16.mxu0 0
        %4261 = vmatpush1.bf16.msra.mxu0 0
        %4262 = vmatprep.subr.bf16.mxu0 0
        %4263 = vmatpush1.bf16.msra.mxu0 0
        %4264 = vmatprep.subr.bf16.mxu0 0
        %4265 = vmatpush1.bf16.msra.mxu0 0
        %4266 = vmatprep.subr.bf16.mxu0 0
        %4267 = vmatpush1.bf16.msra.mxu0 0
        %4268 = vmatprep.subr.bf16.mxu0 0
        %4269 = vmatpush1.bf16.msra.mxu0 0
        %4270 = vmatprep.mubr.bf16.mxu0 0
        %4271 = vmatmul.mubr.bf16.gmra.mrb[0].mxu0 %v4233
        %v4272 = vpop.f32.mrb[0].mxu0
        %v4273 = vadd.f32 0.0, %v4272
        %v4274 = vpop.f32.mrb[0].mxu0
        %v4275 = vpop.f32.mrb[0].mxu0
        %v4276 = vpop.f32.mrb[0].mxu0
        %4277 = vdwg.mxu0
        %v4278 = vadd.f32 %v4224, %v4273
        %s4279 = scalar_lea.vmem [#allocation5], 296
        %v4280 = vld [vmem:[%s4279] sm:$0xf]
        %4281 = vrot.lane.b32.xlu0 %v3037, 92
        %v4282 = vpop.permute.xlu0 %4281
        %4283 = vrot.lane.b32.xlu0 %v3038, 92
        %v4284 = vpop.permute.xlu0 %4283
        %v4285 = vsel %vm1566, %v4282, %v4284
        %v4287 = vsel %vm253, %v4280, 0
        %v4290 = vand.u32 %v4285, %v260
        %4292 = vmatprep.subr.bf16.mxu0 0
        %4293 = vmatpush1.bf16.msra.mxu0 %v4290
        %4294 = vmatprep.subr.bf16.mxu0 0
        %4295 = vmatpush1.bf16.msra.mxu0 0
        %4296 = vmatprep.subr.bf16.mxu0 0
        %4297 = vmatpush1.bf16.msra.mxu0 0
        %4298 = vmatprep.subr.bf16.mxu0 0
        %4299 = vmatpush1.bf16.msra.mxu0 0
        %4300 = vmatprep.subr.bf16.mxu0 0
        %4301 = vmatpush1.bf16.msra.mxu0 0
        %4302 = vmatprep.subr.bf16.mxu0 0
        %4303 = vmatpush1.bf16.msra.mxu0 0
        %4304 = vmatprep.subr.bf16.mxu0 0
        %4305 = vmatpush1.bf16.msra.mxu0 0
        %4306 = vmatprep.subr.bf16.mxu0 0
        %4307 = vmatpush1.bf16.msra.mxu0 0
        %4308 = vmatprep.subr.bf16.mxu0 0
        %4309 = vmatpush1.bf16.msra.mxu0 0
        %4310 = vmatprep.subr.bf16.mxu0 0
        %4311 = vmatpush1.bf16.msra.mxu0 0
        %4312 = vmatprep.subr.bf16.mxu0 0
        %4313 = vmatpush1.bf16.msra.mxu0 0
        %4314 = vmatprep.subr.bf16.mxu0 0
        %4315 = vmatpush1.bf16.msra.mxu0 0
        %4316 = vmatprep.subr.bf16.mxu0 0
        %4317 = vmatpush1.bf16.msra.mxu0 0
        %4318 = vmatprep.subr.bf16.mxu0 0
        %4319 = vmatpush1.bf16.msra.mxu0 0
        %4320 = vmatprep.subr.bf16.mxu0 0
        %4321 = vmatpush1.bf16.msra.mxu0 0
        %4322 = vmatprep.subr.bf16.mxu0 0
        %4323 = vmatpush1.bf16.msra.mxu0 0
        %4324 = vmatprep.mubr.bf16.mxu0 0
        %4325 = vmatmul.mubr.bf16.gmra.mrb[0].mxu0 %v4287
        %v4326 = vpop.f32.mrb[0].mxu0
        %v4327 = vadd.f32 0.0, %v4326
        %v4328 = vpop.f32.mrb[0].mxu0
        %v4329 = vpop.f32.mrb[0].mxu0
        %v4330 = vpop.f32.mrb[0].mxu0
        %4331 = vdwg.mxu0
        %v4332 = vadd.f32 %v4278, %v4327
        %s4333 = sadd.s32 %s26, 3
        %s4334 = smul.u32 %s4333, 2
        %s4335 = smul.addr %s4334, 2
        %s4336 = scalar_lea.vmem %s199, %s4335 [#allocation2]
        %v4337 = vld [vmem:[%s4336] sm:$0xf]
        %s4338 = scalar_lea.vmem [#allocation5], 300
        %v4339 = vld [vmem:[%s4338] sm:$0xf]
        %v4341 = vsel %vm253, %v4339, 0
        %v4344 = vand.u32 %v4337, %v260
        %4346 = vmatprep.subr.bf16.mxu0 0
        %4347 = vmatpush1.bf16.msra.mxu0 %v4344
        %4348 = vmatprep.subr.bf16.mxu0 0
        %4349 = vmatpush1.bf16.msra.mxu0 0
        %4350 = vmatprep.subr.bf16.mxu0 0
        %4351 = vmatpush1.bf16.msra.mxu0 0
        %4352 = vmatprep.subr.bf16.mxu0 0
        %4353 = vmatpush1.bf16.msra.mxu0 0
        %4354 = vmatprep.subr.bf16.mxu0 0
        %4355 = vmatpush1.bf16.msra.mxu0 0
        %4356 = vmatprep.subr.bf16.mxu0 0
        %4357 = vmatpush1.bf16.msra.mxu0 0
        %4358 = vmatprep.subr.bf16.mxu0 0
        %4359 = vmatpush1.bf16.msra.mxu0 0
        %4360 = vmatprep.subr.bf16.mxu0 0
        %4361 = vmatpush1.bf16.msra.mxu0 0
        %4362 = vmatprep.subr.bf16.mxu0 0
        %4363 = vmatpush1.bf16.msra.mxu0 0
        %4364 = vmatprep.subr.bf16.mxu0 0
        %4365 = vmatpush1.bf16.msra.mxu0 0
        %4366 = vmatprep.subr.bf16.mxu0 0
        %4367 = vmatpush1.bf16.msra.mxu0 0
        %4368 = vmatprep.subr.bf16.mxu0 0
        %4369 = vmatpush1.bf16.msra.mxu0 0
        %4370 = vmatprep.subr.bf16.mxu0 0
        %4371 = vmatpush1.bf16.msra.mxu0 0
        %4372 = vmatprep.subr.bf16.mxu0 0
        %4373 = vmatpush1.bf16.msra.mxu0 0
        %4374 = vmatprep.subr.bf16.mxu0 0
        %4375 = vmatpush1.bf16.msra.mxu0 0
        %4376 = vmatprep.subr.bf16.mxu0 0
        %4377 = vmatpush1.bf16.msra.mxu0 0
        %4378 = vmatprep.mubr.bf16.mxu0 0
        %4379 = vmatmul.mubr.bf16.gmra.mrb[0].mxu0 %v4341
        %v4380 = vpop.f32.mrb[0].mxu0
        %v4381 = vadd.f32 0.0, %v4380
        %v4382 = vpop.f32.mrb[0].mxu0
        %v4383 = vpop.f32.mrb[0].mxu0
        %v4384 = vpop.f32.mrb[0].mxu0
        %4385 = vdwg.mxu0
        %v4386 = vadd.f32 %v4332, %v4381
        %s4387 = scalar_lea.vmem [#allocation5], 304
        %v4388 = vld [vmem:[%s4387] sm:$0xf]
        %v4391 = vunpack.c.l.s4 1983009808
        %v4392 = vunpack.c.0.s8 %v4391
        %v4393 = vlaneseq
        %v4394 = vshrl.u32 %v4393, 7
        %v4395 = vsub.s32 %v4392, %v4394
        %v4396 = vrot.slane %v4337, %v4395
        %v4397 = vcombine.high %v4396, %v4396
        %4398 = vrot.lane.b32.xlu0 %v4396, 127
        %v4399 = vpop.permute.xlu0 %4398
        %4400 = vrot.lane.b32.xlu0 %v4397, 127
        %v4401 = vpop.permute.xlu0 %4400
        %v4402 = vsel %vm251, %v4399, %v4401
        %v4404 = vsel %vm253, %v4388, 0
        %v4407 = vand.u32 %v4402, %v260
        %4409 = vmatprep.subr.bf16.mxu0 0
        %4410 = vmatpush1.bf16.msra.mxu0 %v4407
        %4411 = vmatprep.subr.bf16.mxu0 0
        %4412 = vmatpush1.bf16.msra.mxu0 0
        %4413 = vmatprep.subr.bf16.mxu0 0
        %4414 = vmatpush1.bf16.msra.mxu0 0
        %4415 = vmatprep.subr.bf16.mxu0 0
        %4416 = vmatpush1.bf16.msra.mxu0 0
        %4417 = vmatprep.subr.bf16.mxu0 0
        %4418 = vmatpush1.bf16.msra.mxu0 0
        %4419 = vmatprep.subr.bf16.mxu0 0
        %4420 = vmatpush1.bf16.msra.mxu0 0
        %4421 = vmatprep.subr.bf16.mxu0 0
        %4422 = vmatpush1.bf16.msra.mxu0 0
        %4423 = vmatprep.subr.bf16.mxu0 0
        %4424 = vmatpush1.bf16.msra.mxu0 0
        %4425 = vmatprep.subr.bf16.mxu0 0
        %4426 = vmatpush1.bf16.msra.mxu0 0
        %4427 = vmatprep.subr.bf16.mxu0 0
        %4428 = vmatpush1.bf16.msra.mxu0 0
        %4429 = vmatprep.subr.bf16.mxu0 0
        %4430 = vmatpush1.bf16.msra.mxu0 0
        %4431 = vmatprep.subr.bf16.mxu0 0
        %4432 = vmatpush1.bf16.msra.mxu0 0
        %4433 = vmatprep.subr.bf16.mxu0 0
        %4434 = vmatpush1.bf16.msra.mxu0 0
        %4435 = vmatprep.subr.bf16.mxu0 0
        %4436 = vmatpush1.bf16.msra.mxu0 0
        %4437 = vmatprep.subr.bf16.mxu0 0
        %4438 = vmatpush1.bf16.msra.mxu0 0
        %4439 = vmatprep.subr.bf16.mxu0 0
        %4440 = vmatpush1.bf16.msra.mxu0 0
        %4441 = vmatprep.mubr.bf16.mxu0 0
        %4442 = vmatmul.mubr.bf16.gmra.mrb[0].mxu0 %v4404
        %v4443 = vpop.f32.mrb[0].mxu0
        %v4444 = vadd.f32 0.0, %v4443
        %v4445 = vpop.f32.mrb[0].mxu0
        %v4446 = vpop.f32.mrb[0].mxu0
        %v4447 = vpop.f32.mrb[0].mxu0
        %4448 = vdwg.mxu0
        %v4449 = vadd.f32 %v4386, %v4444
        %s4450 = scalar_lea.vmem [#allocation5], 308
        %v4451 = vld [vmem:[%s4450] sm:$0xf]
        %4452 = vrot.lane.b32.xlu0 %v4396, 126
        %v4453 = vpop.permute.xlu0 %4452
        %4454 = vrot.lane.b32.xlu0 %v4397, 126
        %v4455 = vpop.permute.xlu0 %4454
        %v4456 = vsel %vm356, %v4453, %v4455
        %v4458 = vsel %vm253, %v4451, 0
        %v4461 = vand.u32 %v4456, %v260
        %4463 = vmatprep.subr.bf16.mxu0 0
        %4464 = vmatpush1.bf16.msra.mxu0 %v4461
        %4465 = vmatprep.subr.bf16.mxu0 0
        %4466 = vmatpush1.bf16.msra.mxu0 0
        %4467 = vmatprep.subr.bf16.mxu0 0
        %4468 = vmatpush1.bf16.msra.mxu0 0
        %4469 = vmatprep.subr.bf16.mxu0 0
        %4470 = vmatpush1.bf16.msra.mxu0 0
        %4471 = vmatprep.subr.bf16.mxu0 0
        %4472 = vmatpush1.bf16.msra.mxu0 0
        %4473 = vmatprep.subr.bf16.mxu0 0
        %4474 = vmatpush1.bf16.msra.mxu0 0
        %4475 = vmatprep.subr.bf16.mxu0 0
        %4476 = vmatpush1.bf16.msra.mxu0 0
        %4477 = vmatprep.subr.bf16.mxu0 0
        %4478 = vmatpush1.bf16.msra.mxu0 0
        %4479 = vmatprep.subr.bf16.mxu0 0
        %4480 = vmatpush1.bf16.msra.mxu0 0
        %4481 = vmatprep.subr.bf16.mxu0 0
        %4482 = vmatpush1.bf16.msra.mxu0 0
        %4483 = vmatprep.subr.bf16.mxu0 0
        %4484 = vmatpush1.bf16.msra.mxu0 0
        %4485 = vmatprep.subr.bf16.mxu0 0
        %4486 = vmatpush1.bf16.msra.mxu0 0
        %4487 = vmatprep.subr.bf16.mxu0 0
        %4488 = vmatpush1.bf16.msra.mxu0 0
        %4489 = vmatprep.subr.bf16.mxu0 0
        %4490 = vmatpush1.bf16.msra.mxu0 0
        %4491 = vmatprep.subr.bf16.mxu0 0
        %4492 = vmatpush1.bf16.msra.mxu0 0
        %4493 = vmatprep.subr.bf16.mxu0 0
        %4494 = vmatpush1.bf16.msra.mxu0 0
        %4495 = vmatprep.mubr.bf16.mxu0 0
        %4496 = vmatmul.mubr.bf16.gmra.mrb[0].mxu0 %v4458
        %v4497 = vpop.f32.mrb[0].mxu0
        %v4498 = vadd.f32 0.0, %v4497
        %v4499 = vpop.f32.mrb[0].mxu0
        %v4500 = vpop.f32.mrb[0].mxu0
        %v4501 = vpop.f32.mrb[0].mxu0
        %4502 = vdwg.mxu0
        %v4503 = vadd.f32 %v4449, %v4498
        %s4504 = scalar_lea.vmem [#allocation5], 312
        %v4505 = vld [vmem:[%s4504] sm:$0xf]
        %4506 = vrot.lane.b32.xlu0 %v4396, 125
        %v4507 = vpop.permute.xlu0 %4506
        %4508 = vrot.lane.b32.xlu0 %v4397, 125
        %v4509 = vpop.permute.xlu0 %4508
        %v4510 = vsel %vm411, %v4507, %v4509
        %v4512 = vsel %vm253, %v4505, 0
        %v4515 = vand.u32 %v4510, %v260
        %4517 = vmatprep.subr.bf16.mxu0 0
        %4518 = vmatpush1.bf16.msra.mxu0 %v4515
        %4519 = vmatprep.subr.bf16.mxu0 0
        %4520 = vmatpush1.bf16.msra.mxu0 0
        %4521 = vmatprep.subr.bf16.mxu0 0
        %4522 = vmatpush1.bf16.msra.mxu0 0
        %4523 = vmatprep.subr.bf16.mxu0 0
        %4524 = vmatpush1.bf16.msra.mxu0 0
        %4525 = vmatprep.subr.bf16.mxu0 0
        %4526 = vmatpush1.bf16.msra.mxu0 0
        %4527 = vmatprep.subr.bf16.mxu0 0
        %4528 = vmatpush1.bf16.msra.mxu0 0
        %4529 = vmatprep.subr.bf16.mxu0 0
        %4530 = vmatpush1.bf16.msra.mxu0 0
        %4531 = vmatprep.subr.bf16.mxu0 0
        %4532 = vmatpush1.bf16.msra.mxu0 0
        %4533 = vmatprep.subr.bf16.mxu0 0
        %4534 = vmatpush1.bf16.msra.mxu0 0
        %4535 = vmatprep.subr.bf16.mxu0 0
        %4536 = vmatpush1.bf16.msra.mxu0 0
        %4537 = vmatprep.subr.bf16.mxu0 0
        %4538 = vmatpush1.bf16.msra.mxu0 0
        %4539 = vmatprep.subr.bf16.mxu0 0
        %4540 = vmatpush1.bf16.msra.mxu0 0
        %4541 = vmatprep.subr.bf16.mxu0 0
        %4542 = vmatpush1.bf16.msra.mxu0 0
        %4543 = vmatprep.subr.bf16.mxu0 0
        %4544 = vmatpush1.bf16.msra.mxu0 0
        %4545 = vmatprep.subr.bf16.mxu0 0
        %4546 = vmatpush1.bf16.msra.mxu0 0
        %4547 = vmatprep.subr.bf16.mxu0 0
        %4548 = vmatpush1.bf16.msra.mxu0 0
        %4549 = vmatprep.mubr.bf16.mxu0 0
        %4550 = vmatmul.mubr.bf16.gmra.mrb[0].mxu0 %v4512
        %v4551 = vpop.f32.mrb[0].mxu0
        %v4552 = vadd.f32 0.0, %v4551
        %v4553 = vpop.f32.mrb[0].mxu0
        %v4554 = vpop.f32.mrb[0].mxu0
        %v4555 = vpop.f32.mrb[0].mxu0
        %4556 = vdwg.mxu0
        %v4557 = vadd.f32 %v4503, %v4552
        %s4558 = scalar_lea.vmem [#allocation5], 316
        %v4559 = vld [vmem:[%s4558] sm:$0xf]
        %4560 = vrot.lane.b32.xlu0 %v4396, 124
        %v4561 = vpop.permute.xlu0 %4560
        %4562 = vrot.lane.b32.xlu0 %v4397, 124
        %v4563 = vpop.permute.xlu0 %4562
        %v4564 = vsel %vm466, %v4561, %v4563
        %v4566 = vsel %vm253, %v4559, 0
        %v4569 = vand.u32 %v4564, %v260
        %4571 = vmatprep.subr.bf16.mxu0 0
        %4572 = vmatpush1.bf16.msra.mxu0 %v4569
        %4573 = vmatprep.subr.bf16.mxu0 0
        %4574 = vmatpush1.bf16.msra.mxu0 0
        %4575 = vmatprep.subr.bf16.mxu0 0
        %4576 = vmatpush1.bf16.msra.mxu0 0
        %4577 = vmatprep.subr.bf16.mxu0 0
        %4578 = vmatpush1.bf16.msra.mxu0 0
        %4579 = vmatprep.subr.bf16.mxu0 0
        %4580 = vmatpush1.bf16.msra.mxu0 0
        %4581 = vmatprep.subr.bf16.mxu0 0
        %4582 = vmatpush1.bf16.msra.mxu0 0
        %4583 = vmatprep.subr.bf16.mxu0 0
        %4584 = vmatpush1.bf16.msra.mxu0 0
        %4585 = vmatprep.subr.bf16.mxu0 0
        %4586 = vmatpush1.bf16.msra.mxu0 0
        %4587 = vmatprep.subr.bf16.mxu0 0
        %4588 = vmatpush1.bf16.msra.mxu0 0
        %4589 = vmatprep.subr.bf16.mxu0 0
        %4590 = vmatpush1.bf16.msra.mxu0 0
        %4591 = vmatprep.subr.bf16.mxu0 0
        %4592 = vmatpush1.bf16.msra.mxu0 0
        %4593 = vmatprep.subr.bf16.mxu0 0
        %4594 = vmatpush1.bf16.msra.mxu0 0
        %4595 = vmatprep.subr.bf16.mxu0 0
        %4596 = vmatpush1.bf16.msra.mxu0 0
        %4597 = vmatprep.subr.bf16.mxu0 0
        %4598 = vmatpush1.bf16.msra.mxu0 0
        %4599 = vmatprep.subr.bf16.mxu0 0
        %4600 = vmatpush1.bf16.msra.mxu0 0
        %4601 = vmatprep.subr.bf16.mxu0 0
        %4602 = vmatpush1.bf16.msra.mxu0 0
        %4603 = vmatprep.mubr.bf16.mxu0 0
        %4604 = vmatmul.mubr.bf16.gmra.mrb[0].mxu0 %v4566
        %v4605 = vpop.f32.mrb[0].mxu0
        %v4606 = vadd.f32 0.0, %v4605
        %v4607 = vpop.f32.mrb[0].mxu0
        %v4608 = vpop.f32.mrb[0].mxu0
        %v4609 = vpop.f32.mrb[0].mxu0
        %4610 = vdwg.mxu0
        %v4611 = vadd.f32 %v4557, %v4606
        %s4612 = scalar_lea.vmem [#allocation5], 320
        %v4613 = vld [vmem:[%s4612] sm:$0xf]
        %4614 = vrot.lane.b32.xlu0 %v4396, 120
        %v4615 = vpop.permute.xlu0 %4614
        %4616 = vrot.lane.b32.xlu0 %v4397, 120
        %v4617 = vpop.permute.xlu0 %4616
        %v4618 = vsel %vm521, %v4615, %v4617
        %v4620 = vsel %vm253, %v4613, 0
        %v4623 = vand.u32 %v4618, %v260
        %4625 = vmatprep.subr.bf16.mxu0 0
        %4626 = vmatpush1.bf16.msra.mxu0 %v4623
        %4627 = vmatprep.subr.bf16.mxu0 0
        %4628 = vmatpush1.bf16.msra.mxu0 0
        %4629 = vmatprep.subr.bf16.mxu0 0
        %4630 = vmatpush1.bf16.msra.mxu0 0
        %4631 = vmatprep.subr.bf16.mxu0 0
        %4632 = vmatpush1.bf16.msra.mxu0 0
        %4633 = vmatprep.subr.bf16.mxu0 0
        %4634 = vmatpush1.bf16.msra.mxu0 0
        %4635 = vmatprep.subr.bf16.mxu0 0
        %4636 = vmatpush1.bf16.msra.mxu0 0
        %4637 = vmatprep.subr.bf16.mxu0 0
        %4638 = vmatpush1.bf16.msra.mxu0 0
        %4639 = vmatprep.subr.bf16.mxu0 0
        %4640 = vmatpush1.bf16.msra.mxu0 0
        %4641 = vmatprep.subr.bf16.mxu0 0
        %4642 = vmatpush1.bf16.msra.mxu0 0
        %4643 = vmatprep.subr.bf16.mxu0 0
        %4644 = vmatpush1.bf16.msra.mxu0 0
        %4645 = vmatprep.subr.bf16.mxu0 0
        %4646 = vmatpush1.bf16.msra.mxu0 0
        %4647 = vmatprep.subr.bf16.mxu0 0
        %4648 = vmatpush1.bf16.msra.mxu0 0
        %4649 = vmatprep.subr.bf16.mxu0 0
        %4650 = vmatpush1.bf16.msra.mxu0 0
        %4651 = vmatprep.subr.bf16.mxu0 0
        %4652 = vmatpush1.bf16.msra.mxu0 0
        %4653 = vmatprep.subr.bf16.mxu0 0
        %4654 = vmatpush1.bf16.msra.mxu0 0
        %4655 = vmatprep.subr.bf16.mxu0 0
        %4656 = vmatpush1.bf16.msra.mxu0 0
        %4657 = vmatprep.mubr.bf16.mxu0 0
        %4658 = vmatmul.mubr.bf16.gmra.mrb[0].mxu0 %v4620
        %v4659 = vpop.f32.mrb[0].mxu0
        %v4660 = vadd.f32 0.0, %v4659
        %v4661 = vpop.f32.mrb[0].mxu0
        %v4662 = vpop.f32.mrb[0].mxu0
        %v4663 = vpop.f32.mrb[0].mxu0
        %4664 = vdwg.mxu0
        %v4665 = vadd.f32 %v4611, %v4660
        %s4666 = scalar_lea.vmem [#allocation5], 324
        %v4667 = vld [vmem:[%s4666] sm:$0xf]
        %4668 = vrot.lane.b32.xlu0 %v4396, 119
        %v4669 = vpop.permute.xlu0 %4668
        %4670 = vrot.lane.b32.xlu0 %v4397, 119
        %v4671 = vpop.permute.xlu0 %4670
        %v4672 = vsel %vm576, %v4669, %v4671
        %v4674 = vsel %vm253, %v4667, 0
        %v4677 = vand.u32 %v4672, %v260
        %4679 = vmatprep.subr.bf16.mxu0 0
        %4680 = vmatpush1.bf16.msra.mxu0 %v4677
        %4681 = vmatprep.subr.bf16.mxu0 0
        %4682 = vmatpush1.bf16.msra.mxu0 0
        %4683 = vmatprep.subr.bf16.mxu0 0
        %4684 = vmatpush1.bf16.msra.mxu0 0
        %4685 = vmatprep.subr.bf16.mxu0 0
        %4686 = vmatpush1.bf16.msra.mxu0 0
        %4687 = vmatprep.subr.bf16.mxu0 0
        %4688 = vmatpush1.bf16.msra.mxu0 0
        %4689 = vmatprep.subr.bf16.mxu0 0
        %4690 = vmatpush1.bf16.msra.mxu0 0
        %4691 = vmatprep.subr.bf16.mxu0 0
        %4692 = vmatpush1.bf16.msra.mxu0 0
        %4693 = vmatprep.subr.bf16.mxu0 0
        %4694 = vmatpush1.bf16.msra.mxu0 0
        %4695 = vmatprep.subr.bf16.mxu0 0
        %4696 = vmatpush1.bf16.msra.mxu0 0
        %4697 = vmatprep.subr.bf16.mxu0 0
        %4698 = vmatpush1.bf16.msra.mxu0 0
        %4699 = vmatprep.subr.bf16.mxu0 0
        %4700 = vmatpush1.bf16.msra.mxu0 0
        %4701 = vmatprep.subr.bf16.mxu0 0
        %4702 = vmatpush1.bf16.msra.mxu0 0
        %4703 = vmatprep.subr.bf16.mxu0 0
        %4704 = vmatpush1.bf16.msra.mxu0 0
        %4705 = vmatprep.subr.bf16.mxu0 0
        %4706 = vmatpush1.bf16.msra.mxu0 0
        %4707 = vmatprep.subr.bf16.mxu0 0
        %4708 = vmatpush1.bf16.msra.mxu0 0
        %4709 = vmatprep.subr.bf16.mxu0 0
        %4710 = vmatpush1.bf16.msra.mxu0 0
        %4711 = vmatprep.mubr.bf16.mxu0 0
        %4712 = vmatmul.mubr.bf16.gmra.mrb[0].mxu0 %v4674
        %v4713 = vpop.f32.mrb[0].mxu0
        %v4714 = vadd.f32 0.0, %v4713
        %v4715 = vpop.f32.mrb[0].mxu0
        %v4716 = vpop.f32.mrb[0].mxu0
        %v4717 = vpop.f32.mrb[0].mxu0
        %4718 = vdwg.mxu0
        %v4719 = vadd.f32 %v4665, %v4714
        %s4720 = scalar_lea.vmem [#allocation5], 328
        %v4721 = vld [vmem:[%s4720] sm:$0xf]
        %4722 = vrot.lane.b32.xlu0 %v4396, 118
        %v4723 = vpop.permute.xlu0 %4722
        %4724 = vrot.lane.b32.xlu0 %v4397, 118
        %v4725 = vpop.permute.xlu0 %4724
        %v4726 = vsel %vm631, %v4723, %v4725
        %v4728 = vsel %vm253, %v4721, 0
        %v4731 = vand.u32 %v4726, %v260
        %4733 = vmatprep.subr.bf16.mxu0 0
        %4734 = vmatpush1.bf16.msra.mxu0 %v4731
        %4735 = vmatprep.subr.bf16.mxu0 0
        %4736 = vmatpush1.bf16.msra.mxu0 0
        %4737 = vmatprep.subr.bf16.mxu0 0
        %4738 = vmatpush1.bf16.msra.mxu0 0
        %4739 = vmatprep.subr.bf16.mxu0 0
        %4740 = vmatpush1.bf16.msra.mxu0 0
        %4741 = vmatprep.subr.bf16.mxu0 0
        %4742 = vmatpush1.bf16.msra.mxu0 0
        %4743 = vmatprep.subr.bf16.mxu0 0
        %4744 = vmatpush1.bf16.msra.mxu0 0
        %4745 = vmatprep.subr.bf16.mxu0 0
        %4746 = vmatpush1.bf16.msra.mxu0 0
        %4747 = vmatprep.subr.bf16.mxu0 0
        %4748 = vmatpush1.bf16.msra.mxu0 0
        %4749 = vmatprep.subr.bf16.mxu0 0
        %4750 = vmatpush1.bf16.msra.mxu0 0
        %4751 = vmatprep.subr.bf16.mxu0 0
        %4752 = vmatpush1.bf16.msra.mxu0 0
        %4753 = vmatprep.subr.bf16.mxu0 0
        %4754 = vmatpush1.bf16.msra.mxu0 0
        %4755 = vmatprep.subr.bf16.mxu0 0
        %4756 = vmatpush1.bf16.msra.mxu0 0
        %4757 = vmatprep.subr.bf16.mxu0 0
        %4758 = vmatpush1.bf16.msra.mxu0 0
        %4759 = vmatprep.subr.bf16.mxu0 0
        %4760 = vmatpush1.bf16.msra.mxu0 0
        %4761 = vmatprep.subr.bf16.mxu0 0
        %4762 = vmatpush1.bf16.msra.mxu0 0
        %4763 = vmatprep.subr.bf16.mxu0 0
        %4764 = vmatpush1.bf16.msra.mxu0 0
        %4765 = vmatprep.mubr.bf16.mxu0 0
        %4766 = vmatmul.mubr.bf16.gmra.mrb[0].mxu0 %v4728
        %v4767 = vpop.f32.mrb[0].mxu0
        %v4768 = vadd.f32 0.0, %v4767
        %v4769 = vpop.f32.mrb[0].mxu0
        %v4770 = vpop.f32.mrb[0].mxu0
        %v4771 = vpop.f32.mrb[0].mxu0
        %4772 = vdwg.mxu0
        %v4773 = vadd.f32 %v4719, %v4768
        %s4774 = scalar_lea.vmem [#allocation5], 332
        %v4775 = vld [vmem:[%s4774] sm:$0xf]
        %4776 = vrot.lane.b32.xlu0 %v4396, 117
        %v4777 = vpop.permute.xlu0 %4776
        %4778 = vrot.lane.b32.xlu0 %v4397, 117
        %v4779 = vpop.permute.xlu0 %4778
        %v4780 = vsel %vm686, %v4777, %v4779
        %v4782 = vsel %vm253, %v4775, 0
        %v4785 = vand.u32 %v4780, %v260
        %4787 = vmatprep.subr.bf16.mxu0 0
        %4788 = vmatpush1.bf16.msra.mxu0 %v4785
        %4789 = vmatprep.subr.bf16.mxu0 0
        %4790 = vmatpush1.bf16.msra.mxu0 0
        %4791 = vmatprep.subr.bf16.mxu0 0
        %4792 = vmatpush1.bf16.msra.mxu0 0
        %4793 = vmatprep.subr.bf16.mxu0 0
        %4794 = vmatpush1.bf16.msra.mxu0 0
        %4795 = vmatprep.subr.bf16.mxu0 0
        %4796 = vmatpush1.bf16.msra.mxu0 0
        %4797 = vmatprep.subr.bf16.mxu0 0
        %4798 = vmatpush1.bf16.msra.mxu0 0
        %4799 = vmatprep.subr.bf16.mxu0 0
        %4800 = vmatpush1.bf16.msra.mxu0 0
        %4801 = vmatprep.subr.bf16.mxu0 0
        %4802 = vmatpush1.bf16.msra.mxu0 0
        %4803 = vmatprep.subr.bf16.mxu0 0
        %4804 = vmatpush1.bf16.msra.mxu0 0
        %4805 = vmatprep.subr.bf16.mxu0 0
        %4806 = vmatpush1.bf16.msra.mxu0 0
        %4807 = vmatprep.subr.bf16.mxu0 0
        %4808 = vmatpush1.bf16.msra.mxu0 0
        %4809 = vmatprep.subr.bf16.mxu0 0
        %4810 = vmatpush1.bf16.msra.mxu0 0
        %4811 = vmatprep.subr.bf16.mxu0 0
        %4812 = vmatpush1.bf16.msra.mxu0 0
        %4813 = vmatprep.subr.bf16.mxu0 0
        %4814 = vmatpush1.bf16.msra.mxu0 0
        %4815 = vmatprep.subr.bf16.mxu0 0
        %4816 = vmatpush1.bf16.msra.mxu0 0
        %4817 = vmatprep.subr.bf16.mxu0 0
        %4818 = vmatpush1.bf16.msra.mxu0 0
        %4819 = vmatprep.mubr.bf16.mxu0 0
        %4820 = vmatmul.mubr.bf16.gmra.mrb[0].mxu0 %v4782
        %v4821 = vpop.f32.mrb[0].mxu0
        %v4822 = vadd.f32 0.0, %v4821
        %v4823 = vpop.f32.mrb[0].mxu0
        %v4824 = vpop.f32.mrb[0].mxu0
        %v4825 = vpop.f32.mrb[0].mxu0
        %4826 = vdwg.mxu0
        %v4827 = vadd.f32 %v4773, %v4822
        %s4828 = scalar_lea.vmem [#allocation5], 336
        %v4829 = vld [vmem:[%s4828] sm:$0xf]
        %4830 = vrot.lane.b32.xlu0 %v4396, 116
        %v4831 = vpop.permute.xlu0 %4830
        %4832 = vrot.lane.b32.xlu0 %v4397, 116
        %v4833 = vpop.permute.xlu0 %4832
        %v4834 = vsel %vm741, %v4831, %v4833
        %v4836 = vsel %vm253, %v4829, 0
        %v4839 = vand.u32 %v4834, %v260
        %4841 = vmatprep.subr.bf16.mxu0 0
        %4842 = vmatpush1.bf16.msra.mxu0 %v4839
        %4843 = vmatprep.subr.bf16.mxu0 0
        %4844 = vmatpush1.bf16.msra.mxu0 0
        %4845 = vmatprep.subr.bf16.mxu0 0
        %4846 = vmatpush1.bf16.msra.mxu0 0
        %4847 = vmatprep.subr.bf16.mxu0 0
        %4848 = vmatpush1.bf16.msra.mxu0 0
        %4849 = vmatprep.subr.bf16.mxu0 0
        %4850 = vmatpush1.bf16.msra.mxu0 0
        %4851 = vmatprep.subr.bf16.mxu0 0
        %4852 = vmatpush1.bf16.msra.mxu0 0
        %4853 = vmatprep.subr.bf16.mxu0 0
        %4854 = vmatpush1.bf16.msra.mxu0 0
        %4855 = vmatprep.subr.bf16.mxu0 0
        %4856 = vmatpush1.bf16.msra.mxu0 0
        %4857 = vmatprep.subr.bf16.mxu0 0
        %4858 = vmatpush1.bf16.msra.mxu0 0
        %4859 = vmatprep.subr.bf16.mxu0 0
        %4860 = vmatpush1.bf16.msra.mxu0 0
        %4861 = vmatprep.subr.bf16.mxu0 0
        %4862 = vmatpush1.bf16.msra.mxu0 0
        %4863 = vmatprep.subr.bf16.mxu0 0
        %4864 = vmatpush1.bf16.msra.mxu0 0
        %4865 = vmatprep.subr.bf16.mxu0 0
        %4866 = vmatpush1.bf16.msra.mxu0 0
        %4867 = vmatprep.subr.bf16.mxu0 0
        %4868 = vmatpush1.bf16.msra.mxu0 0
        %4869 = vmatprep.subr.bf16.mxu0 0
        %4870 = vmatpush1.bf16.msra.mxu0 0
        %4871 = vmatprep.subr.bf16.mxu0 0
        %4872 = vmatpush1.bf16.msra.mxu0 0
        %4873 = vmatprep.mubr.bf16.mxu0 0
        %4874 = vmatmul.mubr.bf16.gmra.mrb[0].mxu0 %v4836
        %v4875 = vpop.f32.mrb[0].mxu0
        %v4876 = vadd.f32 0.0, %v4875
        %v4877 = vpop.f32.mrb[0].mxu0
        %v4878 = vpop.f32.mrb[0].mxu0
        %v4879 = vpop.f32.mrb[0].mxu0
        %4880 = vdwg.mxu0
        %v4881 = vadd.f32 %v4827, %v4876
        %s4882 = scalar_lea.vmem [#allocation5], 340
        %v4883 = vld [vmem:[%s4882] sm:$0xf]
        %4884 = vrot.lane.b32.xlu0 %v4396, 112
        %v4885 = vpop.permute.xlu0 %4884
        %4886 = vrot.lane.b32.xlu0 %v4397, 112
        %v4887 = vpop.permute.xlu0 %4886
        %v4888 = vsel %vm796, %v4885, %v4887
        %v4890 = vsel %vm253, %v4883, 0
        %v4893 = vand.u32 %v4888, %v260
        %4895 = vmatprep.subr.bf16.mxu0 0
        %4896 = vmatpush1.bf16.msra.mxu0 %v4893
        %4897 = vmatprep.subr.bf16.mxu0 0
        %4898 = vmatpush1.bf16.msra.mxu0 0
        %4899 = vmatprep.subr.bf16.mxu0 0
        %4900 = vmatpush1.bf16.msra.mxu0 0
        %4901 = vmatprep.subr.bf16.mxu0 0
        %4902 = vmatpush1.bf16.msra.mxu0 0
        %4903 = vmatprep.subr.bf16.mxu0 0
        %4904 = vmatpush1.bf16.msra.mxu0 0
        %4905 = vmatprep.subr.bf16.mxu0 0
        %4906 = vmatpush1.bf16.msra.mxu0 0
        %4907 = vmatprep.subr.bf16.mxu0 0
        %4908 = vmatpush1.bf16.msra.mxu0 0
        %4909 = vmatprep.subr.bf16.mxu0 0
        %4910 = vmatpush1.bf16.msra.mxu0 0
        %4911 = vmatprep.subr.bf16.mxu0 0
        %4912 = vmatpush1.bf16.msra.mxu0 0
        %4913 = vmatprep.subr.bf16.mxu0 0
        %4914 = vmatpush1.bf16.msra.mxu0 0
        %4915 = vmatprep.subr.bf16.mxu0 0
        %4916 = vmatpush1.bf16.msra.mxu0 0
        %4917 = vmatprep.subr.bf16.mxu0 0
        %4918 = vmatpush1.bf16.msra.mxu0 0
        %4919 = vmatprep.subr.bf16.mxu0 0
        %4920 = vmatpush1.bf16.msra.mxu0 0
        %4921 = vmatprep.subr.bf16.mxu0 0
        %4922 = vmatpush1.bf16.msra.mxu0 0
        %4923 = vmatprep.subr.bf16.mxu0 0
        %4924 = vmatpush1.bf16.msra.mxu0 0
        %4925 = vmatprep.subr.bf16.mxu0 0
        %4926 = vmatpush1.bf16.msra.mxu0 0
        %4927 = vmatprep.mubr.bf16.mxu0 0
        %4928 = vmatmul.mubr.bf16.gmra.mrb[0].mxu0 %v4890
        %v4929 = vpop.f32.mrb[0].mxu0
        %v4930 = vadd.f32 0.0, %v4929
        %v4931 = vpop.f32.mrb[0].mxu0
        %v4932 = vpop.f32.mrb[0].mxu0
        %v4933 = vpop.f32.mrb[0].mxu0
        %4934 = vdwg.mxu0
        %v4935 = vadd.f32 %v4881, %v4930
        %s4936 = scalar_lea.vmem [#allocation5], 344
        %v4937 = vld [vmem:[%s4936] sm:$0xf]
        %4938 = vrot.lane.b32.xlu0 %v4396, 111
        %v4939 = vpop.permute.xlu0 %4938
        %4940 = vrot.lane.b32.xlu0 %v4397, 111
        %v4941 = vpop.permute.xlu0 %4940
        %v4942 = vsel %vm851, %v4939, %v4941
        %v4944 = vsel %vm253, %v4937, 0
        %v4947 = vand.u32 %v4942, %v260
        %4949 = vmatprep.subr.bf16.mxu0 0
        %4950 = vmatpush1.bf16.msra.mxu0 %v4947
        %4951 = vmatprep.subr.bf16.mxu0 0
        %4952 = vmatpush1.bf16.msra.mxu0 0
        %4953 = vmatprep.subr.bf16.mxu0 0
        %4954 = vmatpush1.bf16.msra.mxu0 0
        %4955 = vmatprep.subr.bf16.mxu0 0
        %4956 = vmatpush1.bf16.msra.mxu0 0
        %4957 = vmatprep.subr.bf16.mxu0 0
        %4958 = vmatpush1.bf16.msra.mxu0 0
        %4959 = vmatprep.subr.bf16.mxu0 0
        %4960 = vmatpush1.bf16.msra.mxu0 0
        %4961 = vmatprep.subr.bf16.mxu0 0
        %4962 = vmatpush1.bf16.msra.mxu0 0
        %4963 = vmatprep.subr.bf16.mxu0 0
        %4964 = vmatpush1.bf16.msra.mxu0 0
        %4965 = vmatprep.subr.bf16.mxu0 0
        %4966 = vmatpush1.bf16.msra.mxu0 0
        %4967 = vmatprep.subr.bf16.mxu0 0
        %4968 = vmatpush1.bf16.msra.mxu0 0
        %4969 = vmatprep.subr.bf16.mxu0 0
        %4970 = vmatpush1.bf16.msra.mxu0 0
        %4971 = vmatprep.subr.bf16.mxu0 0
        %4972 = vmatpush1.bf16.msra.mxu0 0
        %4973 = vmatprep.subr.bf16.mxu0 0
        %4974 = vmatpush1.bf16.msra.mxu0 0
        %4975 = vmatprep.subr.bf16.mxu0 0
        %4976 = vmatpush1.bf16.msra.mxu0 0
        %4977 = vmatprep.subr.bf16.mxu0 0
        %4978 = vmatpush1.bf16.msra.mxu0 0
        %4979 = vmatprep.subr.bf16.mxu0 0
        %4980 = vmatpush1.bf16.msra.mxu0 0
        %4981 = vmatprep.mubr.bf16.mxu0 0
        %4982 = vmatmul.mubr.bf16.gmra.mrb[0].mxu0 %v4944
        %v4983 = vpop.f32.mrb[0].mxu0
        %v4984 = vadd.f32 0.0, %v4983
        %v4985 = vpop.f32.mrb[0].mxu0
        %v4986 = vpop.f32.mrb[0].mxu0
        %v4987 = vpop.f32.mrb[0].mxu0
        %4988 = vdwg.mxu0
        %v4989 = vadd.f32 %v4935, %v4984
        %s4990 = scalar_lea.vmem [#allocation5], 348
        %v4991 = vld [vmem:[%s4990] sm:$0xf]
        %4992 = vrot.lane.b32.xlu0 %v4396, 110
        %v4993 = vpop.permute.xlu0 %4992
        %4994 = vrot.lane.b32.xlu0 %v4397, 110
        %v4995 = vpop.permute.xlu0 %4994
        %v4996 = vsel %vm906, %v4993, %v4995
        %v4998 = vsel %vm253, %v4991, 0
        %v5001 = vand.u32 %v4996, %v260
        %5003 = vmatprep.subr.bf16.mxu0 0
        %5004 = vmatpush1.bf16.msra.mxu0 %v5001
        %5005 = vmatprep.subr.bf16.mxu0 0
        %5006 = vmatpush1.bf16.msra.mxu0 0
        %5007 = vmatprep.subr.bf16.mxu0 0
        %5008 = vmatpush1.bf16.msra.mxu0 0
        %5009 = vmatprep.subr.bf16.mxu0 0
        %5010 = vmatpush1.bf16.msra.mxu0 0
        %5011 = vmatprep.subr.bf16.mxu0 0
        %5012 = vmatpush1.bf16.msra.mxu0 0
        %5013 = vmatprep.subr.bf16.mxu0 0
        %5014 = vmatpush1.bf16.msra.mxu0 0
        %5015 = vmatprep.subr.bf16.mxu0 0
        %5016 = vmatpush1.bf16.msra.mxu0 0
        %5017 = vmatprep.subr.bf16.mxu0 0
        %5018 = vmatpush1.bf16.msra.mxu0 0
        %5019 = vmatprep.subr.bf16.mxu0 0
        %5020 = vmatpush1.bf16.msra.mxu0 0
        %5021 = vmatprep.subr.bf16.mxu0 0
        %5022 = vmatpush1.bf16.msra.mxu0 0
        %5023 = vmatprep.subr.bf16.mxu0 0
        %5024 = vmatpush1.bf16.msra.mxu0 0
        %5025 = vmatprep.subr.bf16.mxu0 0
        %5026 = vmatpush1.bf16.msra.mxu0 0
        %5027 = vmatprep.subr.bf16.mxu0 0
        %5028 = vmatpush1.bf16.msra.mxu0 0
        %5029 = vmatprep.subr.bf16.mxu0 0
        %5030 = vmatpush1.bf16.msra.mxu0 0
        %5031 = vmatprep.subr.bf16.mxu0 0
        %5032 = vmatpush1.bf16.msra.mxu0 0
        %5033 = vmatprep.subr.bf16.mxu0 0
        %5034 = vmatpush1.bf16.msra.mxu0 0
        %5035 = vmatprep.mubr.bf16.mxu0 0
        %5036 = vmatmul.mubr.bf16.gmra.mrb[0].mxu0 %v4998
        %v5037 = vpop.f32.mrb[0].mxu0
        %v5038 = vadd.f32 0.0, %v5037
        %v5039 = vpop.f32.mrb[0].mxu0
        %v5040 = vpop.f32.mrb[0].mxu0
        %v5041 = vpop.f32.mrb[0].mxu0
        %5042 = vdwg.mxu0
        %v5043 = vadd.f32 %v4989, %v5038
        %s5044 = scalar_lea.vmem [#allocation5], 352
        %v5045 = vld [vmem:[%s5044] sm:$0xf]
        %5046 = vrot.lane.b32.xlu0 %v4396, 109
        %v5047 = vpop.permute.xlu0 %5046
        %5048 = vrot.lane.b32.xlu0 %v4397, 109
        %v5049 = vpop.permute.xlu0 %5048
        %v5050 = vsel %vm961, %v5047, %v5049
        %v5052 = vsel %vm253, %v5045, 0
        %v5055 = vand.u32 %v5050, %v260
        %5057 = vmatprep.subr.bf16.mxu0 0
        %5058 = vmatpush1.bf16.msra.mxu0 %v5055
        %5059 = vmatprep.subr.bf16.mxu0 0
        %5060 = vmatpush1.bf16.msra.mxu0 0
        %5061 = vmatprep.subr.bf16.mxu0 0
        %5062 = vmatpush1.bf16.msra.mxu0 0
        %5063 = vmatprep.subr.bf16.mxu0 0
        %5064 = vmatpush1.bf16.msra.mxu0 0
        %5065 = vmatprep.subr.bf16.mxu0 0
        %5066 = vmatpush1.bf16.msra.mxu0 0
        %5067 = vmatprep.subr.bf16.mxu0 0
        %5068 = vmatpush1.bf16.msra.mxu0 0
        %5069 = vmatprep.subr.bf16.mxu0 0
        %5070 = vmatpush1.bf16.msra.mxu0 0
        %5071 = vmatprep.subr.bf16.mxu0 0
        %5072 = vmatpush1.bf16.msra.mxu0 0
        %5073 = vmatprep.subr.bf16.mxu0 0
        %5074 = vmatpush1.bf16.msra.mxu0 0
        %5075 = vmatprep.subr.bf16.mxu0 0
        %5076 = vmatpush1.bf16.msra.mxu0 0
        %5077 = vmatprep.subr.bf16.mxu0 0
        %5078 = vmatpush1.bf16.msra.mxu0 0
        %5079 = vmatprep.subr.bf16.mxu0 0
        %5080 = vmatpush1.bf16.msra.mxu0 0
        %5081 = vmatprep.subr.bf16.mxu0 0
        %5082 = vmatpush1.bf16.msra.mxu0 0
        %5083 = vmatprep.subr.bf16.mxu0 0
        %5084 = vmatpush1.bf16.msra.mxu0 0
        %5085 = vmatprep.subr.bf16.mxu0 0
        %5086 = vmatpush1.bf16.msra.mxu0 0
        %5087 = vmatprep.subr.bf16.mxu0 0
        %5088 = vmatpush1.bf16.msra.mxu0 0
        %5089 = vmatprep.mubr.bf16.mxu0 0
        %5090 = vmatmul.mubr.bf16.gmra.mrb[0].mxu0 %v5052
        %v5091 = vpop.f32.mrb[0].mxu0
        %v5092 = vadd.f32 0.0, %v5091
        %v5093 = vpop.f32.mrb[0].mxu0
        %v5094 = vpop.f32.mrb[0].mxu0
        %v5095 = vpop.f32.mrb[0].mxu0
        %5096 = vdwg.mxu0
        %v5097 = vadd.f32 %v5043, %v5092
        %s5098 = scalar_lea.vmem [#allocation5], 356
        %v5099 = vld [vmem:[%s5098] sm:$0xf]
        %5100 = vrot.lane.b32.xlu0 %v4396, 108
        %v5101 = vpop.permute.xlu0 %5100
        %5102 = vrot.lane.b32.xlu0 %v4397, 108
        %v5103 = vpop.permute.xlu0 %5102
        %v5104 = vsel %vm1016, %v5101, %v5103
        %v5106 = vsel %vm253, %v5099, 0
        %v5109 = vand.u32 %v5104, %v260
        %5111 = vmatprep.subr.bf16.mxu0 0
        %5112 = vmatpush1.bf16.msra.mxu0 %v5109
        %5113 = vmatprep.subr.bf16.mxu0 0
        %5114 = vmatpush1.bf16.msra.mxu0 0
        %5115 = vmatprep.subr.bf16.mxu0 0
        %5116 = vmatpush1.bf16.msra.mxu0 0
        %5117 = vmatprep.subr.bf16.mxu0 0
        %5118 = vmatpush1.bf16.msra.mxu0 0
        %5119 = vmatprep.subr.bf16.mxu0 0
        %5120 = vmatpush1.bf16.msra.mxu0 0
        %5121 = vmatprep.subr.bf16.mxu0 0
        %5122 = vmatpush1.bf16.msra.mxu0 0
        %5123 = vmatprep.subr.bf16.mxu0 0
        %5124 = vmatpush1.bf16.msra.mxu0 0
        %5125 = vmatprep.subr.bf16.mxu0 0
        %5126 = vmatpush1.bf16.msra.mxu0 0
        %5127 = vmatprep.subr.bf16.mxu0 0
        %5128 = vmatpush1.bf16.msra.mxu0 0
        %5129 = vmatprep.subr.bf16.mxu0 0
        %5130 = vmatpush1.bf16.msra.mxu0 0
        %5131 = vmatprep.subr.bf16.mxu0 0
        %5132 = vmatpush1.bf16.msra.mxu0 0
        %5133 = vmatprep.subr.bf16.mxu0 0
        %5134 = vmatpush1.bf16.msra.mxu0 0
        %5135 = vmatprep.subr.bf16.mxu0 0
        %5136 = vmatpush1.bf16.msra.mxu0 0
        %5137 = vmatprep.subr.bf16.mxu0 0
        %5138 = vmatpush1.bf16.msra.mxu0 0
        %5139 = vmatprep.subr.bf16.mxu0 0
        %5140 = vmatpush1.bf16.msra.mxu0 0
        %5141 = vmatprep.subr.bf16.mxu0 0
        %5142 = vmatpush1.bf16.msra.mxu0 0
        %5143 = vmatprep.mubr.bf16.mxu0 0
        %5144 = vmatmul.mubr.bf16.gmra.mrb[0].mxu0 %v5106
        %v5145 = vpop.f32.mrb[0].mxu0
        %v5146 = vadd.f32 0.0, %v5145
        %v5147 = vpop.f32.mrb[0].mxu0
        %v5148 = vpop.f32.mrb[0].mxu0
        %v5149 = vpop.f32.mrb[0].mxu0
        %5150 = vdwg.mxu0
        %v5151 = vadd.f32 %v5097, %v5146
        %s5152 = scalar_lea.vmem [#allocation5], 360
        %v5153 = vld [vmem:[%s5152] sm:$0xf]
        %5154 = vrot.lane.b32.xlu0 %v4396, 104
        %v5155 = vpop.permute.xlu0 %5154
        %5156 = vrot.lane.b32.xlu0 %v4397, 104
        %v5157 = vpop.permute.xlu0 %5156
        %v5158 = vsel %vm1071, %v5155, %v5157
        %v5160 = vsel %vm253, %v5153, 0
        %v5163 = vand.u32 %v5158, %v260
        %5165 = vmatprep.subr.bf16.mxu0 0
        %5166 = vmatpush1.bf16.msra.mxu0 %v5163
        %5167 = vmatprep.subr.bf16.mxu0 0
        %5168 = vmatpush1.bf16.msra.mxu0 0
        %5169 = vmatprep.subr.bf16.mxu0 0
        %5170 = vmatpush1.bf16.msra.mxu0 0
        %5171 = vmatprep.subr.bf16.mxu0 0
        %5172 = vmatpush1.bf16.msra.mxu0 0
        %5173 = vmatprep.subr.bf16.mxu0 0
        %5174 = vmatpush1.bf16.msra.mxu0 0
        %5175 = vmatprep.subr.bf16.mxu0 0
        %5176 = vmatpush1.bf16.msra.mxu0 0
        %5177 = vmatprep.subr.bf16.mxu0 0
        %5178 = vmatpush1.bf16.msra.mxu0 0
        %5179 = vmatprep.subr.bf16.mxu0 0
        %5180 = vmatpush1.bf16.msra.mxu0 0
        %5181 = vmatprep.subr.bf16.mxu0 0
        %5182 = vmatpush1.bf16.msra.mxu0 0
        %5183 = vmatprep.subr.bf16.mxu0 0
        %5184 = vmatpush1.bf16.msra.mxu0 0
        %5185 = vmatprep.subr.bf16.mxu0 0
        %5186 = vmatpush1.bf16.msra.mxu0 0
        %5187 = vmatprep.subr.bf16.mxu0 0
        %5188 = vmatpush1.bf16.msra.mxu0 0
        %5189 = vmatprep.subr.bf16.mxu0 0
        %5190 = vmatpush1.bf16.msra.mxu0 0
        %5191 = vmatprep.subr.bf16.mxu0 0
        %5192 = vmatpush1.bf16.msra.mxu0 0
        %5193 = vmatprep.subr.bf16.mxu0 0
        %5194 = vmatpush1.bf16.msra.mxu0 0
        %5195 = vmatprep.subr.bf16.mxu0 0
        %5196 = vmatpush1.bf16.msra.mxu0 0
        %5197 = vmatprep.mubr.bf16.mxu0 0
        %5198 = vmatmul.mubr.bf16.gmra.mrb[0].mxu0 %v5160
        %v5199 = vpop.f32.mrb[0].mxu0
        %v5200 = vadd.f32 0.0, %v5199
        %v5201 = vpop.f32.mrb[0].mxu0
        %v5202 = vpop.f32.mrb[0].mxu0
        %v5203 = vpop.f32.mrb[0].mxu0
        %5204 = vdwg.mxu0
        %v5205 = vadd.f32 %v5151, %v5200
        %s5206 = scalar_lea.vmem [#allocation5], 364
        %v5207 = vld [vmem:[%s5206] sm:$0xf]
        %5208 = vrot.lane.b32.xlu0 %v4396, 103
        %v5209 = vpop.permute.xlu0 %5208
        %5210 = vrot.lane.b32.xlu0 %v4397, 103
        %v5211 = vpop.permute.xlu0 %5210
        %v5212 = vsel %vm1126, %v5209, %v5211
        %v5214 = vsel %vm253, %v5207, 0
        %v5217 = vand.u32 %v5212, %v260
        %5219 = vmatprep.subr.bf16.mxu0 0
        %5220 = vmatpush1.bf16.msra.mxu0 %v5217
        %5221 = vmatprep.subr.bf16.mxu0 0
        %5222 = vmatpush1.bf16.msra.mxu0 0
        %5223 = vmatprep.subr.bf16.mxu0 0
        %5224 = vmatpush1.bf16.msra.mxu0 0
        %5225 = vmatprep.subr.bf16.mxu0 0
        %5226 = vmatpush1.bf16.msra.mxu0 0
        %5227 = vmatprep.subr.bf16.mxu0 0
        %5228 = vmatpush1.bf16.msra.mxu0 0
        %5229 = vmatprep.subr.bf16.mxu0 0
        %5230 = vmatpush1.bf16.msra.mxu0 0
        %5231 = vmatprep.subr.bf16.mxu0 0
        %5232 = vmatpush1.bf16.msra.mxu0 0
        %5233 = vmatprep.subr.bf16.mxu0 0
        %5234 = vmatpush1.bf16.msra.mxu0 0
        %5235 = vmatprep.subr.bf16.mxu0 0
        %5236 = vmatpush1.bf16.msra.mxu0 0
        %5237 = vmatprep.subr.bf16.mxu0 0
        %5238 = vmatpush1.bf16.msra.mxu0 0
        %5239 = vmatprep.subr.bf16.mxu0 0
        %5240 = vmatpush1.bf16.msra.mxu0 0
        %5241 = vmatprep.subr.bf16.mxu0 0
        %5242 = vmatpush1.bf16.msra.mxu0 0
        %5243 = vmatprep.subr.bf16.mxu0 0
        %5244 = vmatpush1.bf16.msra.mxu0 0
        %5245 = vmatprep.subr.bf16.mxu0 0
        %5246 = vmatpush1.bf16.msra.mxu0 0
        %5247 = vmatprep.subr.bf16.mxu0 0
        %5248 = vmatpush1.bf16.msra.mxu0 0
        %5249 = vmatprep.subr.bf16.mxu0 0
        %5250 = vmatpush1.bf16.msra.mxu0 0
        %5251 = vmatprep.mubr.bf16.mxu0 0
        %5252 = vmatmul.mubr.bf16.gmra.mrb[0].mxu0 %v5214
        %v5253 = vpop.f32.mrb[0].mxu0
        %v5254 = vadd.f32 0.0, %v5253
        %v5255 = vpop.f32.mrb[0].mxu0
        %v5256 = vpop.f32.mrb[0].mxu0
        %v5257 = vpop.f32.mrb[0].mxu0
        %5258 = vdwg.mxu0
        %v5259 = vadd.f32 %v5205, %v5254
        %s5260 = scalar_lea.vmem [#allocation5], 368
        %v5261 = vld [vmem:[%s5260] sm:$0xf]
        %5262 = vrot.lane.b32.xlu0 %v4396, 102
        %v5263 = vpop.permute.xlu0 %5262
        %5264 = vrot.lane.b32.xlu0 %v4397, 102
        %v5265 = vpop.permute.xlu0 %5264
        %v5266 = vsel %vm1181, %v5263, %v5265
        %v5268 = vsel %vm253, %v5261, 0
        %v5271 = vand.u32 %v5266, %v260
        %5273 = vmatprep.subr.bf16.mxu0 0
        %5274 = vmatpush1.bf16.msra.mxu0 %v5271
        %5275 = vmatprep.subr.bf16.mxu0 0
        %5276 = vmatpush1.bf16.msra.mxu0 0
        %5277 = vmatprep.subr.bf16.mxu0 0
        %5278 = vmatpush1.bf16.msra.mxu0 0
        %5279 = vmatprep.subr.bf16.mxu0 0
        %5280 = vmatpush1.bf16.msra.mxu0 0
        %5281 = vmatprep.subr.bf16.mxu0 0
        %5282 = vmatpush1.bf16.msra.mxu0 0
        %5283 = vmatprep.subr.bf16.mxu0 0
        %5284 = vmatpush1.bf16.msra.mxu0 0
        %5285 = vmatprep.subr.bf16.mxu0 0
        %5286 = vmatpush1.bf16.msra.mxu0 0
        %5287 = vmatprep.subr.bf16.mxu0 0
        %5288 = vmatpush1.bf16.msra.mxu0 0
        %5289 = vmatprep.subr.bf16.mxu0 0
        %5290 = vmatpush1.bf16.msra.mxu0 0
        %5291 = vmatprep.subr.bf16.mxu0 0
        %5292 = vmatpush1.bf16.msra.mxu0 0
        %5293 = vmatprep.subr.bf16.mxu0 0
        %5294 = vmatpush1.bf16.msra.mxu0 0
        %5295 = vmatprep.subr.bf16.mxu0 0
        %5296 = vmatpush1.bf16.msra.mxu0 0
        %5297 = vmatprep.subr.bf16.mxu0 0
        %5298 = vmatpush1.bf16.msra.mxu0 0
        %5299 = vmatprep.subr.bf16.mxu0 0
        %5300 = vmatpush1.bf16.msra.mxu0 0
        %5301 = vmatprep.subr.bf16.mxu0 0
        %5302 = vmatpush1.bf16.msra.mxu0 0
        %5303 = vmatprep.subr.bf16.mxu0 0
        %5304 = vmatpush1.bf16.msra.mxu0 0
        %5305 = vmatprep.mubr.bf16.mxu0 0
        %5306 = vmatmul.mubr.bf16.gmra.mrb[0].mxu0 %v5268
        %v5307 = vpop.f32.mrb[0].mxu0
        %v5308 = vadd.f32 0.0, %v5307
        %v5309 = vpop.f32.mrb[0].mxu0
        %v5310 = vpop.f32.mrb[0].mxu0
        %v5311 = vpop.f32.mrb[0].mxu0
        %5312 = vdwg.mxu0
        %v5313 = vadd.f32 %v5259, %v5308
        %s5314 = scalar_lea.vmem [#allocation5], 372
        %v5315 = vld [vmem:[%s5314] sm:$0xf]
        %5316 = vrot.lane.b32.xlu0 %v4396, 101
        %v5317 = vpop.permute.xlu0 %5316
        %5318 = vrot.lane.b32.xlu0 %v4397, 101
        %v5319 = vpop.permute.xlu0 %5318
        %v5320 = vsel %vm1236, %v5317, %v5319
        %v5322 = vsel %vm253, %v5315, 0
        %v5325 = vand.u32 %v5320, %v260
        %5327 = vmatprep.subr.bf16.mxu0 0
        %5328 = vmatpush1.bf16.msra.mxu0 %v5325
        %5329 = vmatprep.subr.bf16.mxu0 0
        %5330 = vmatpush1.bf16.msra.mxu0 0
        %5331 = vmatprep.subr.bf16.mxu0 0
        %5332 = vmatpush1.bf16.msra.mxu0 0
        %5333 = vmatprep.subr.bf16.mxu0 0
        %5334 = vmatpush1.bf16.msra.mxu0 0
        %5335 = vmatprep.subr.bf16.mxu0 0
        %5336 = vmatpush1.bf16.msra.mxu0 0
        %5337 = vmatprep.subr.bf16.mxu0 0
        %5338 = vmatpush1.bf16.msra.mxu0 0
        %5339 = vmatprep.subr.bf16.mxu0 0
        %5340 = vmatpush1.bf16.msra.mxu0 0
        %5341 = vmatprep.subr.bf16.mxu0 0
        %5342 = vmatpush1.bf16.msra.mxu0 0
        %5343 = vmatprep.subr.bf16.mxu0 0
        %5344 = vmatpush1.bf16.msra.mxu0 0
        %5345 = vmatprep.subr.bf16.mxu0 0
        %5346 = vmatpush1.bf16.msra.mxu0 0
        %5347 = vmatprep.subr.bf16.mxu0 0
        %5348 = vmatpush1.bf16.msra.mxu0 0
        %5349 = vmatprep.subr.bf16.mxu0 0
        %5350 = vmatpush1.bf16.msra.mxu0 0
        %5351 = vmatprep.subr.bf16.mxu0 0
        %5352 = vmatpush1.bf16.msra.mxu0 0
        %5353 = vmatprep.subr.bf16.mxu0 0
        %5354 = vmatpush1.bf16.msra.mxu0 0
        %5355 = vmatprep.subr.bf16.mxu0 0
        %5356 = vmatpush1.bf16.msra.mxu0 0
        %5357 = vmatprep.subr.bf16.mxu0 0
        %5358 = vmatpush1.bf16.msra.mxu0 0
        %5359 = vmatprep.mubr.bf16.mxu0 0
        %5360 = vmatmul.mubr.bf16.gmra.mrb[0].mxu0 %v5322
        %v5361 = vpop.f32.mrb[0].mxu0
        %v5362 = vadd.f32 0.0, %v5361
        %v5363 = vpop.f32.mrb[0].mxu0
        %v5364 = vpop.f32.mrb[0].mxu0
        %v5365 = vpop.f32.mrb[0].mxu0
        %5366 = vdwg.mxu0
        %v5367 = vadd.f32 %v5313, %v5362
        %s5368 = scalar_lea.vmem [#allocation5], 376
        %v5369 = vld [vmem:[%s5368] sm:$0xf]
        %5370 = vrot.lane.b32.xlu0 %v4396, 100
        %v5371 = vpop.permute.xlu0 %5370
        %5372 = vrot.lane.b32.xlu0 %v4397, 100
        %v5373 = vpop.permute.xlu0 %5372
        %v5374 = vsel %vm1291, %v5371, %v5373
        %v5376 = vsel %vm253, %v5369, 0
        %v5379 = vand.u32 %v5374, %v260
        %5381 = vmatprep.subr.bf16.mxu0 0
        %5382 = vmatpush1.bf16.msra.mxu0 %v5379
        %5383 = vmatprep.subr.bf16.mxu0 0
        %5384 = vmatpush1.bf16.msra.mxu0 0
        %5385 = vmatprep.subr.bf16.mxu0 0
        %5386 = vmatpush1.bf16.msra.mxu0 0
        %5387 = vmatprep.subr.bf16.mxu0 0
        %5388 = vmatpush1.bf16.msra.mxu0 0
        %5389 = vmatprep.subr.bf16.mxu0 0
        %5390 = vmatpush1.bf16.msra.mxu0 0
        %5391 = vmatprep.subr.bf16.mxu0 0
        %5392 = vmatpush1.bf16.msra.mxu0 0
        %5393 = vmatprep.subr.bf16.mxu0 0
        %5394 = vmatpush1.bf16.msra.mxu0 0
        %5395 = vmatprep.subr.bf16.mxu0 0
        %5396 = vmatpush1.bf16.msra.mxu0 0
        %5397 = vmatprep.subr.bf16.mxu0 0
        %5398 = vmatpush1.bf16.msra.mxu0 0
        %5399 = vmatprep.subr.bf16.mxu0 0
        %5400 = vmatpush1.bf16.msra.mxu0 0
        %5401 = vmatprep.subr.bf16.mxu0 0
        %5402 = vmatpush1.bf16.msra.mxu0 0
        %5403 = vmatprep.subr.bf16.mxu0 0
        %5404 = vmatpush1.bf16.msra.mxu0 0
        %5405 = vmatprep.subr.bf16.mxu0 0
        %5406 = vmatpush1.bf16.msra.mxu0 0
        %5407 = vmatprep.subr.bf16.mxu0 0
        %5408 = vmatpush1.bf16.msra.mxu0 0
        %5409 = vmatprep.subr.bf16.mxu0 0
        %5410 = vmatpush1.bf16.msra.mxu0 0
        %5411 = vmatprep.subr.bf16.mxu0 0
        %5412 = vmatpush1.bf16.msra.mxu0 0
        %5413 = vmatprep.mubr.bf16.mxu0 0
        %5414 = vmatmul.mubr.bf16.gmra.mrb[0].mxu0 %v5376
        %v5415 = vpop.f32.mrb[0].mxu0
        %v5416 = vadd.f32 0.0, %v5415
        %v5417 = vpop.f32.mrb[0].mxu0
        %v5418 = vpop.f32.mrb[0].mxu0
        %v5419 = vpop.f32.mrb[0].mxu0
        %5420 = vdwg.mxu0
        %v5421 = vadd.f32 %v5367, %v5416
        %s5422 = scalar_lea.vmem [#allocation5], 380
        %v5423 = vld [vmem:[%s5422] sm:$0xf]
        %5424 = vrot.lane.b32.xlu0 %v4396, 96
        %v5425 = vpop.permute.xlu0 %5424
        %5426 = vrot.lane.b32.xlu0 %v4397, 96
        %v5427 = vpop.permute.xlu0 %5426
        %v5428 = vsel %vm1346, %v5425, %v5427
        %v5430 = vsel %vm253, %v5423, 0
        %v5433 = vand.u32 %v5428, %v260
        %5435 = vmatprep.subr.bf16.mxu0 0
        %5436 = vmatpush1.bf16.msra.mxu0 %v5433
        %5437 = vmatprep.subr.bf16.mxu0 0
        %5438 = vmatpush1.bf16.msra.mxu0 0
        %5439 = vmatprep.subr.bf16.mxu0 0
        %5440 = vmatpush1.bf16.msra.mxu0 0
        %5441 = vmatprep.subr.bf16.mxu0 0
        %5442 = vmatpush1.bf16.msra.mxu0 0
        %5443 = vmatprep.subr.bf16.mxu0 0
        %5444 = vmatpush1.bf16.msra.mxu0 0
        %5445 = vmatprep.subr.bf16.mxu0 0
        %5446 = vmatpush1.bf16.msra.mxu0 0
        %5447 = vmatprep.subr.bf16.mxu0 0
        %5448 = vmatpush1.bf16.msra.mxu0 0
        %5449 = vmatprep.subr.bf16.mxu0 0
        %5450 = vmatpush1.bf16.msra.mxu0 0
        %5451 = vmatprep.subr.bf16.mxu0 0
        %5452 = vmatpush1.bf16.msra.mxu0 0
        %5453 = vmatprep.subr.bf16.mxu0 0
        %5454 = vmatpush1.bf16.msra.mxu0 0
        %5455 = vmatprep.subr.bf16.mxu0 0
        %5456 = vmatpush1.bf16.msra.mxu0 0
        %5457 = vmatprep.subr.bf16.mxu0 0
        %5458 = vmatpush1.bf16.msra.mxu0 0
        %5459 = vmatprep.subr.bf16.mxu0 0
        %5460 = vmatpush1.bf16.msra.mxu0 0
        %5461 = vmatprep.subr.bf16.mxu0 0
        %5462 = vmatpush1.bf16.msra.mxu0 0
        %5463 = vmatprep.subr.bf16.mxu0 0
        %5464 = vmatpush1.bf16.msra.mxu0 0
        %5465 = vmatprep.subr.bf16.mxu0 0
        %5466 = vmatpush1.bf16.msra.mxu0 0
        %5467 = vmatprep.mubr.bf16.mxu0 0
        %5468 = vmatmul.mubr.bf16.gmra.mrb[0].mxu0 %v5430
        %v5469 = vpop.f32.mrb[0].mxu0
        %v5470 = vadd.f32 0.0, %v5469
        %v5471 = vpop.f32.mrb[0].mxu0
        %v5472 = vpop.f32.mrb[0].mxu0
        %v5473 = vpop.f32.mrb[0].mxu0
        %5474 = vdwg.mxu0
        %v5475 = vadd.f32 %v5421, %v5470
        %s5476 = scalar_lea.vmem [#allocation5], 384
        %v5477 = vld [vmem:[%s5476] sm:$0xf]
        %5478 = vrot.lane.b32.xlu0 %v4396, 95
        %v5479 = vpop.permute.xlu0 %5478
        %5480 = vrot.lane.b32.xlu0 %v4397, 95
        %v5481 = vpop.permute.xlu0 %5480
        %v5482 = vsel %vm1401, %v5479, %v5481
        %v5484 = vsel %vm253, %v5477, 0
        %v5487 = vand.u32 %v5482, %v260
        %5489 = vmatprep.subr.bf16.mxu0 0
        %5490 = vmatpush1.bf16.msra.mxu0 %v5487
        %5491 = vmatprep.subr.bf16.mxu0 0
        %5492 = vmatpush1.bf16.msra.mxu0 0
        %5493 = vmatprep.subr.bf16.mxu0 0
        %5494 = vmatpush1.bf16.msra.mxu0 0
        %5495 = vmatprep.subr.bf16.mxu0 0
        %5496 = vmatpush1.bf16.msra.mxu0 0
        %5497 = vmatprep.subr.bf16.mxu0 0
        %5498 = vmatpush1.bf16.msra.mxu0 0
        %5499 = vmatprep.subr.bf16.mxu0 0
        %5500 = vmatpush1.bf16.msra.mxu0 0
        %5501 = vmatprep.subr.bf16.mxu0 0
        %5502 = vmatpush1.bf16.msra.mxu0 0
        %5503 = vmatprep.subr.bf16.mxu0 0
        %5504 = vmatpush1.bf16.msra.mxu0 0
        %5505 = vmatprep.subr.bf16.mxu0 0
        %5506 = vmatpush1.bf16.msra.mxu0 0
        %5507 = vmatprep.subr.bf16.mxu0 0
        %5508 = vmatpush1.bf16.msra.mxu0 0
        %5509 = vmatprep.subr.bf16.mxu0 0
        %5510 = vmatpush1.bf16.msra.mxu0 0
        %5511 = vmatprep.subr.bf16.mxu0 0
        %5512 = vmatpush1.bf16.msra.mxu0 0
        %5513 = vmatprep.subr.bf16.mxu0 0
        %5514 = vmatpush1.bf16.msra.mxu0 0
        %5515 = vmatprep.subr.bf16.mxu0 0
        %5516 = vmatpush1.bf16.msra.mxu0 0
        %5517 = vmatprep.subr.bf16.mxu0 0
        %5518 = vmatpush1.bf16.msra.mxu0 0
        %5519 = vmatprep.subr.bf16.mxu0 0
        %5520 = vmatpush1.bf16.msra.mxu0 0
        %5521 = vmatprep.mubr.bf16.mxu0 0
        %5522 = vmatmul.mubr.bf16.gmra.mrb[0].mxu0 %v5484
        %v5523 = vpop.f32.mrb[0].mxu0
        %v5524 = vadd.f32 0.0, %v5523
        %v5525 = vpop.f32.mrb[0].mxu0
        %v5526 = vpop.f32.mrb[0].mxu0
        %v5527 = vpop.f32.mrb[0].mxu0
        %5528 = vdwg.mxu0
        %v5529 = vadd.f32 %v5475, %v5524
        %s5530 = scalar_lea.vmem [#allocation5], 388
        %v5531 = vld [vmem:[%s5530] sm:$0xf]
        %5532 = vrot.lane.b32.xlu0 %v4396, 94
        %v5533 = vpop.permute.xlu0 %5532
        %5534 = vrot.lane.b32.xlu0 %v4397, 94
        %v5535 = vpop.permute.xlu0 %5534
        %v5536 = vsel %vm1456, %v5533, %v5535
        %v5538 = vsel %vm253, %v5531, 0
        %v5541 = vand.u32 %v5536, %v260
        %5543 = vmatprep.subr.bf16.mxu0 0
        %5544 = vmatpush1.bf16.msra.mxu0 %v5541
        %5545 = vmatprep.subr.bf16.mxu0 0
        %5546 = vmatpush1.bf16.msra.mxu0 0
        %5547 = vmatprep.subr.bf16.mxu0 0
        %5548 = vmatpush1.bf16.msra.mxu0 0
        %5549 = vmatprep.subr.bf16.mxu0 0
        %5550 = vmatpush1.bf16.msra.mxu0 0
        %5551 = vmatprep.subr.bf16.mxu0 0
        %5552 = vmatpush1.bf16.msra.mxu0 0
        %5553 = vmatprep.subr.bf16.mxu0 0
        %5554 = vmatpush1.bf16.msra.mxu0 0
        %5555 = vmatprep.subr.bf16.mxu0 0
        %5556 = vmatpush1.bf16.msra.mxu0 0
        %5557 = vmatprep.subr.bf16.mxu0 0
        %5558 = vmatpush1.bf16.msra.mxu0 0
        %5559 = vmatprep.subr.bf16.mxu0 0
        %5560 = vmatpush1.bf16.msra.mxu0 0
        %5561 = vmatprep.subr.bf16.mxu0 0
        %5562 = vmatpush1.bf16.msra.mxu0 0
        %5563 = vmatprep.subr.bf16.mxu0 0
        %5564 = vmatpush1.bf16.msra.mxu0 0
        %5565 = vmatprep.subr.bf16.mxu0 0
        %5566 = vmatpush1.bf16.msra.mxu0 0
        %5567 = vmatprep.subr.bf16.mxu0 0
        %5568 = vmatpush1.bf16.msra.mxu0 0
        %5569 = vmatprep.subr.bf16.mxu0 0
        %5570 = vmatpush1.bf16.msra.mxu0 0
        %5571 = vmatprep.subr.bf16.mxu0 0
        %5572 = vmatpush1.bf16.msra.mxu0 0
        %5573 = vmatprep.subr.bf16.mxu0 0
        %5574 = vmatpush1.bf16.msra.mxu0 0
        %5575 = vmatprep.mubr.bf16.mxu0 0
        %5576 = vmatmul.mubr.bf16.gmra.mrb[0].mxu0 %v5538
        %v5577 = vpop.f32.mrb[0].mxu0
        %v5578 = vadd.f32 0.0, %v5577
        %v5579 = vpop.f32.mrb[0].mxu0
        %v5580 = vpop.f32.mrb[0].mxu0
        %v5581 = vpop.f32.mrb[0].mxu0
        %5582 = vdwg.mxu0
        %v5583 = vadd.f32 %v5529, %v5578
        %s5584 = scalar_lea.vmem [#allocation5], 392
        %v5585 = vld [vmem:[%s5584] sm:$0xf]
        %5586 = vrot.lane.b32.xlu0 %v4396, 93
        %v5587 = vpop.permute.xlu0 %5586
        %5588 = vrot.lane.b32.xlu0 %v4397, 93
        %v5589 = vpop.permute.xlu0 %5588
        %v5590 = vsel %vm1511, %v5587, %v5589
        %v5592 = vsel %vm253, %v5585, 0
        %v5595 = vand.u32 %v5590, %v260
        %5597 = vmatprep.subr.bf16.mxu0 0
        %5598 = vmatpush1.bf16.msra.mxu0 %v5595
        %5599 = vmatprep.subr.bf16.mxu0 0
        %5600 = vmatpush1.bf16.msra.mxu0 0
        %5601 = vmatprep.subr.bf16.mxu0 0
        %5602 = vmatpush1.bf16.msra.mxu0 0
        %5603 = vmatprep.subr.bf16.mxu0 0
        %5604 = vmatpush1.bf16.msra.mxu0 0
        %5605 = vmatprep.subr.bf16.mxu0 0
        %5606 = vmatpush1.bf16.msra.mxu0 0
        %5607 = vmatprep.subr.bf16.mxu0 0
        %5608 = vmatpush1.bf16.msra.mxu0 0
        %5609 = vmatprep.subr.bf16.mxu0 0
        %5610 = vmatpush1.bf16.msra.mxu0 0
        %5611 = vmatprep.subr.bf16.mxu0 0
        %5612 = vmatpush1.bf16.msra.mxu0 0
        %5613 = vmatprep.subr.bf16.mxu0 0
        %5614 = vmatpush1.bf16.msra.mxu0 0
        %5615 = vmatprep.subr.bf16.mxu0 0
        %5616 = vmatpush1.bf16.msra.mxu0 0
        %5617 = vmatprep.subr.bf16.mxu0 0
        %5618 = vmatpush1.bf16.msra.mxu0 0
        %5619 = vmatprep.subr.bf16.mxu0 0
        %5620 = vmatpush1.bf16.msra.mxu0 0
        %5621 = vmatprep.subr.bf16.mxu0 0
        %5622 = vmatpush1.bf16.msra.mxu0 0
        %5623 = vmatprep.subr.bf16.mxu0 0
        %5624 = vmatpush1.bf16.msra.mxu0 0
        %5625 = vmatprep.subr.bf16.mxu0 0
        %5626 = vmatpush1.bf16.msra.mxu0 0
        %5627 = vmatprep.subr.bf16.mxu0 0
        %5628 = vmatpush1.bf16.msra.mxu0 0
        %5629 = vmatprep.mubr.bf16.mxu0 0
        %5630 = vmatmul.mubr.bf16.gmra.mrb[0].mxu0 %v5592
        %v5631 = vpop.f32.mrb[0].mxu0
        %v5632 = vadd.f32 0.0, %v5631
        %v5633 = vpop.f32.mrb[0].mxu0
        %v5634 = vpop.f32.mrb[0].mxu0
        %v5635 = vpop.f32.mrb[0].mxu0
        %5636 = vdwg.mxu0
        %v5637 = vadd.f32 %v5583, %v5632
        %s5638 = scalar_lea.vmem [#allocation5], 396
        %v5639 = vld [vmem:[%s5638] sm:$0xf]
        %5640 = vrot.lane.b32.xlu0 %v4396, 92
        %v5641 = vpop.permute.xlu0 %5640
        %5642 = vrot.lane.b32.xlu0 %v4397, 92
        %v5643 = vpop.permute.xlu0 %5642
        %v5644 = vsel %vm1566, %v5641, %v5643
        %v5646 = vsel %vm253, %v5639, 0
        %v5649 = vand.u32 %v5644, %v260
        %5651 = vmatprep.subr.bf16.mxu0 0
        %5652 = vmatpush1.bf16.msra.mxu0 %v5649
        %5653 = vmatprep.subr.bf16.mxu0 0
        %5654 = vmatpush1.bf16.msra.mxu0 0
        %5655 = vmatprep.subr.bf16.mxu0 0
        %5656 = vmatpush1.bf16.msra.mxu0 0
        %5657 = vmatprep.subr.bf16.mxu0 0
        %5658 = vmatpush1.bf16.msra.mxu0 0
        %5659 = vmatprep.subr.bf16.mxu0 0
        %5660 = vmatpush1.bf16.msra.mxu0 0
        %5661 = vmatprep.subr.bf16.mxu0 0
        %5662 = vmatpush1.bf16.msra.mxu0 0
        %5663 = vmatprep.subr.bf16.mxu0 0
        %5664 = vmatpush1.bf16.msra.mxu0 0
        %5665 = vmatprep.subr.bf16.mxu0 0
        %5666 = vmatpush1.bf16.msra.mxu0 0
        %5667 = vmatprep.subr.bf16.mxu0 0
        %5668 = vmatpush1.bf16.msra.mxu0 0
        %5669 = vmatprep.subr.bf16.mxu0 0
        %5670 = vmatpush1.bf16.msra.mxu0 0
        %5671 = vmatprep.subr.bf16.mxu0 0
        %5672 = vmatpush1.bf16.msra.mxu0 0
        %5673 = vmatprep.subr.bf16.mxu0 0
        %5674 = vmatpush1.bf16.msra.mxu0 0
        %5675 = vmatprep.subr.bf16.mxu0 0
        %5676 = vmatpush1.bf16.msra.mxu0 0
        %5677 = vmatprep.subr.bf16.mxu0 0
        %5678 = vmatpush1.bf16.msra.mxu0 0
        %5679 = vmatprep.subr.bf16.mxu0 0
        %5680 = vmatpush1.bf16.msra.mxu0 0
        %5681 = vmatprep.subr.bf16.mxu0 0
        %5682 = vmatpush1.bf16.msra.mxu0 0
        %5683 = vmatprep.mubr.bf16.mxu0 0
        %5684 = vmatmul.mubr.bf16.gmra.mrb[0].mxu0 %v5646
        %v5685 = vpop.f32.mrb[0].mxu0
        %v5686 = vadd.f32 0.0, %v5685
        %v5687 = vpop.f32.mrb[0].mxu0
        %v5688 = vpop.f32.mrb[0].mxu0
        %v5689 = vpop.f32.mrb[0].mxu0
        %5690 = vdwg.mxu0
        %v5691 = vadd.f32 %v5637, %v5686
        %s5692 = sadd.s32 %s26, 4
        %s5693 = smul.u32 %s5692, 2
        %s5694 = smul.addr %s5693, 2
        %s5695 = scalar_lea.vmem %s199, %s5694 [#allocation2]
        %v5696 = vld [vmem:[%s5695] sm:$0xf]
        %s5697 = scalar_lea.vmem [#allocation5], 400
        %v5698 = vld [vmem:[%s5697] sm:$0xf]
        %v5700 = vsel %vm253, %v5698, 0
        %v5703 = vand.u32 %v5696, %v260
        %5705 = vmatprep.subr.bf16.mxu0 0
        %5706 = vmatpush1.bf16.msra.mxu0 %v5703
        %5707 = vmatprep.subr.bf16.mxu0 0
        %5708 = vmatpush1.bf16.msra.mxu0 0
        %5709 = vmatprep.subr.bf16.mxu0 0
        %5710 = vmatpush1.bf16.msra.mxu0 0
        %5711 = vmatprep.subr.bf16.mxu0 0
        %5712 = vmatpush1.bf16.msra.mxu0 0
        %5713 = vmatprep.subr.bf16.mxu0 0
        %5714 = vmatpush1.bf16.msra.mxu0 0
        %5715 = vmatprep.subr.bf16.mxu0 0
        %5716 = vmatpush1.bf16.msra.mxu0 0
        %5717 = vmatprep.subr.bf16.mxu0 0
        %5718 = vmatpush1.bf16.msra.mxu0 0
        %5719 = vmatprep.subr.bf16.mxu0 0
        %5720 = vmatpush1.bf16.msra.mxu0 0
        %5721 = vmatprep.subr.bf16.mxu0 0
        %5722 = vmatpush1.bf16.msra.mxu0 0
        %5723 = vmatprep.subr.bf16.mxu0 0
        %5724 = vmatpush1.bf16.msra.mxu0 0
        %5725 = vmatprep.subr.bf16.mxu0 0
        %5726 = vmatpush1.bf16.msra.mxu0 0
        %5727 = vmatprep.subr.bf16.mxu0 0
        %5728 = vmatpush1.bf16.msra.mxu0 0
        %5729 = vmatprep.subr.bf16.mxu0 0
        %5730 = vmatpush1.bf16.msra.mxu0 0
        %5731 = vmatprep.subr.bf16.mxu0 0
        %5732 = vmatpush1.bf16.msra.mxu0 0
        %5733 = vmatprep.subr.bf16.mxu0 0
        %5734 = vmatpush1.bf16.msra.mxu0 0
        %5735 = vmatprep.subr.bf16.mxu0 0
        %5736 = vmatpush1.bf16.msra.mxu0 0
        %5737 = vmatprep.mubr.bf16.mxu0 0
        %5738 = vmatmul.mubr.bf16.gmra.mrb[0].mxu0 %v5700
        %v5739 = vpop.f32.mrb[0].mxu0
        %v5740 = vadd.f32 0.0, %v5739
        %v5741 = vpop.f32.mrb[0].mxu0
        %v5742 = vpop.f32.mrb[0].mxu0
        %v5743 = vpop.f32.mrb[0].mxu0
        %5744 = vdwg.mxu0
        %v5745 = vadd.f32 %v5691, %v5740
        %s5746 = scalar_lea.vmem [#allocation5], 404
        %v5747 = vld [vmem:[%s5746] sm:$0xf]
        %v5750 = vunpack.c.l.s4 1983009808
        %v5751 = vunpack.c.0.s8 %v5750
        %v5752 = vlaneseq
        %v5753 = vshrl.u32 %v5752, 7
        %v5754 = vsub.s32 %v5751, %v5753
        %v5755 = vrot.slane %v5696, %v5754
        %v5756 = vcombine.high %v5755, %v5755
        %5757 = vrot.lane.b32.xlu0 %v5755, 127
        %v5758 = vpop.permute.xlu0 %5757
        %5759 = vrot.lane.b32.xlu0 %v5756, 127
        %v5760 = vpop.permute.xlu0 %5759
        %v5761 = vsel %vm251, %v5758, %v5760
        %v5763 = vsel %vm253, %v5747, 0
        %v5766 = vand.u32 %v5761, %v260
        %5768 = vmatprep.subr.bf16.mxu0 0
        %5769 = vmatpush1.bf16.msra.mxu0 %v5766
        %5770 = vmatprep.subr.bf16.mxu0 0
        %5771 = vmatpush1.bf16.msra.mxu0 0
        %5772 = vmatprep.subr.bf16.mxu0 0
        %5773 = vmatpush1.bf16.msra.mxu0 0
        %5774 = vmatprep.subr.bf16.mxu0 0
        %5775 = vmatpush1.bf16.msra.mxu0 0
        %5776 = vmatprep.subr.bf16.mxu0 0
        %5777 = vmatpush1.bf16.msra.mxu0 0
        %5778 = vmatprep.subr.bf16.mxu0 0
        %5779 = vmatpush1.bf16.msra.mxu0 0
        %5780 = vmatprep.subr.bf16.mxu0 0
        %5781 = vmatpush1.bf16.msra.mxu0 0
        %5782 = vmatprep.subr.bf16.mxu0 0
        %5783 = vmatpush1.bf16.msra.mxu0 0
        %5784 = vmatprep.subr.bf16.mxu0 0
        %5785 = vmatpush1.bf16.msra.mxu0 0
        %5786 = vmatprep.subr.bf16.mxu0 0
        %5787 = vmatpush1.bf16.msra.mxu0 0
        %5788 = vmatprep.subr.bf16.mxu0 0
        %5789 = vmatpush1.bf16.msra.mxu0 0
        %5790 = vmatprep.subr.bf16.mxu0 0
        %5791 = vmatpush1.bf16.msra.mxu0 0
        %5792 = vmatprep.subr.bf16.mxu0 0
        %5793 = vmatpush1.bf16.msra.mxu0 0
        %5794 = vmatprep.subr.bf16.mxu0 0
        %5795 = vmatpush1.bf16.msra.mxu0 0
        %5796 = vmatprep.subr.bf16.mxu0 0
        %5797 = vmatpush1.bf16.msra.mxu0 0
        %5798 = vmatprep.subr.bf16.mxu0 0
        %5799 = vmatpush1.bf16.msra.mxu0 0
        %5800 = vmatprep.mubr.bf16.mxu0 0
        %5801 = vmatmul.mubr.bf16.gmra.mrb[0].mxu0 %v5763
        %v5802 = vpop.f32.mrb[0].mxu0
        %v5803 = vadd.f32 0.0, %v5802
        %v5804 = vpop.f32.mrb[0].mxu0
        %v5805 = vpop.f32.mrb[0].mxu0
        %v5806 = vpop.f32.mrb[0].mxu0
        %5807 = vdwg.mxu0
        %v5808 = vadd.f32 %v5745, %v5803
        %s5809 = scalar_lea.vmem [#allocation5], 408
        %v5810 = vld [vmem:[%s5809] sm:$0xf]
        %5811 = vrot.lane.b32.xlu0 %v5755, 126
        %v5812 = vpop.permute.xlu0 %5811
        %5813 = vrot.lane.b32.xlu0 %v5756, 126
        %v5814 = vpop.permute.xlu0 %5813
        %v5815 = vsel %vm356, %v5812, %v5814
        %v5817 = vsel %vm253, %v5810, 0
        %v5820 = vand.u32 %v5815, %v260
        %5822 = vmatprep.subr.bf16.mxu0 0
        %5823 = vmatpush1.bf16.msra.mxu0 %v5820
        %5824 = vmatprep.subr.bf16.mxu0 0
        %5825 = vmatpush1.bf16.msra.mxu0 0
        %5826 = vmatprep.subr.bf16.mxu0 0
        %5827 = vmatpush1.bf16.msra.mxu0 0
        %5828 = vmatprep.subr.bf16.mxu0 0
        %5829 = vmatpush1.bf16.msra.mxu0 0
        %5830 = vmatprep.subr.bf16.mxu0 0
        %5831 = vmatpush1.bf16.msra.mxu0 0
        %5832 = vmatprep.subr.bf16.mxu0 0
        %5833 = vmatpush1.bf16.msra.mxu0 0
        %5834 = vmatprep.subr.bf16.mxu0 0
        %5835 = vmatpush1.bf16.msra.mxu0 0
        %5836 = vmatprep.subr.bf16.mxu0 0
        %5837 = vmatpush1.bf16.msra.mxu0 0
        %5838 = vmatprep.subr.bf16.mxu0 0
        %5839 = vmatpush1.bf16.msra.mxu0 0
        %5840 = vmatprep.subr.bf16.mxu0 0
        %5841 = vmatpush1.bf16.msra.mxu0 0
        %5842 = vmatprep.subr.bf16.mxu0 0
        %5843 = vmatpush1.bf16.msra.mxu0 0
        %5844 = vmatprep.subr.bf16.mxu0 0
        %5845 = vmatpush1.bf16.msra.mxu0 0
        %5846 = vmatprep.subr.bf16.mxu0 0
        %5847 = vmatpush1.bf16.msra.mxu0 0
        %5848 = vmatprep.subr.bf16.mxu0 0
        %5849 = vmatpush1.bf16.msra.mxu0 0
        %5850 = vmatprep.subr.bf16.mxu0 0
        %5851 = vmatpush1.bf16.msra.mxu0 0
        %5852 = vmatprep.subr.bf16.mxu0 0
        %5853 = vmatpush1.bf16.msra.mxu0 0
        %5854 = vmatprep.mubr.bf16.mxu0 0
        %5855 = vmatmul.mubr.bf16.gmra.mrb[0].mxu0 %v5817
        %v5856 = vpop.f32.mrb[0].mxu0
        %v5857 = vadd.f32 0.0, %v5856
        %v5858 = vpop.f32.mrb[0].mxu0
        %v5859 = vpop.f32.mrb[0].mxu0
        %v5860 = vpop.f32.mrb[0].mxu0
        %5861 = vdwg.mxu0
        %v5862 = vadd.f32 %v5808, %v5857
        %s5863 = scalar_lea.vmem [#allocation5], 412
        %v5864 = vld [vmem:[%s5863] sm:$0xf]
        %5865 = vrot.lane.b32.xlu0 %v5755, 125
        %v5866 = vpop.permute.xlu0 %5865
        %5867 = vrot.lane.b32.xlu0 %v5756, 125
        %v5868 = vpop.permute.xlu0 %5867
        %v5869 = vsel %vm411, %v5866, %v5868
        %v5871 = vsel %vm253, %v5864, 0
        %v5874 = vand.u32 %v5869, %v260
        %5876 = vmatprep.subr.bf16.mxu0 0
        %5877 = vmatpush1.bf16.msra.mxu0 %v5874
        %5878 = vmatprep.subr.bf16.mxu0 0
        %5879 = vmatpush1.bf16.msra.mxu0 0
        %5880 = vmatprep.subr.bf16.mxu0 0
        %5881 = vmatpush1.bf16.msra.mxu0 0
        %5882 = vmatprep.subr.bf16.mxu0 0
        %5883 = vmatpush1.bf16.msra.mxu0 0
        %5884 = vmatprep.subr.bf16.mxu0 0
        %5885 = vmatpush1.bf16.msra.mxu0 0
        %5886 = vmatprep.subr.bf16.mxu0 0
        %5887 = vmatpush1.bf16.msra.mxu0 0
        %5888 = vmatprep.subr.bf16.mxu0 0
        %5889 = vmatpush1.bf16.msra.mxu0 0
        %5890 = vmatprep.subr.bf16.mxu0 0
        %5891 = vmatpush1.bf16.msra.mxu0 0
        %5892 = vmatprep.subr.bf16.mxu0 0
        %5893 = vmatpush1.bf16.msra.mxu0 0
        %5894 = vmatprep.subr.bf16.mxu0 0
        %5895 = vmatpush1.bf16.msra.mxu0 0
        %5896 = vmatprep.subr.bf16.mxu0 0
        %5897 = vmatpush1.bf16.msra.mxu0 0
        %5898 = vmatprep.subr.bf16.mxu0 0
        %5899 = vmatpush1.bf16.msra.mxu0 0
        %5900 = vmatprep.subr.bf16.mxu0 0
        %5901 = vmatpush1.bf16.msra.mxu0 0
        %5902 = vmatprep.subr.bf16.mxu0 0
        %5903 = vmatpush1.bf16.msra.mxu0 0
        %5904 = vmatprep.subr.bf16.mxu0 0
        %5905 = vmatpush1.bf16.msra.mxu0 0
        %5906 = vmatprep.subr.bf16.mxu0 0
        %5907 = vmatpush1.bf16.msra.mxu0 0
        %5908 = vmatprep.mubr.bf16.mxu0 0
        %5909 = vmatmul.mubr.bf16.gmra.mrb[0].mxu0 %v5871
        %v5910 = vpop.f32.mrb[0].mxu0
        %v5911 = vadd.f32 0.0, %v5910
        %v5912 = vpop.f32.mrb[0].mxu0
        %v5913 = vpop.f32.mrb[0].mxu0
        %v5914 = vpop.f32.mrb[0].mxu0
        %5915 = vdwg.mxu0
        %v5916 = vadd.f32 %v5862, %v5911
        %s5917 = scalar_lea.vmem [#allocation5], 416
        %v5918 = vld [vmem:[%s5917] sm:$0xf]
        %5919 = vrot.lane.b32.xlu0 %v5755, 124
        %v5920 = vpop.permute.xlu0 %5919
        %5921 = vrot.lane.b32.xlu0 %v5756, 124
        %v5922 = vpop.permute.xlu0 %5921
        %v5923 = vsel %vm466, %v5920, %v5922
        %v5925 = vsel %vm253, %v5918, 0
        %v5928 = vand.u32 %v5923, %v260
        %5930 = vmatprep.subr.bf16.mxu0 0
        %5931 = vmatpush1.bf16.msra.mxu0 %v5928
        %5932 = vmatprep.subr.bf16.mxu0 0
        %5933 = vmatpush1.bf16.msra.mxu0 0
        %5934 = vmatprep.subr.bf16.mxu0 0
        %5935 = vmatpush1.bf16.msra.mxu0 0
        %5936 = vmatprep.subr.bf16.mxu0 0
        %5937 = vmatpush1.bf16.msra.mxu0 0
        %5938 = vmatprep.subr.bf16.mxu0 0
        %5939 = vmatpush1.bf16.msra.mxu0 0
        %5940 = vmatprep.subr.bf16.mxu0 0
        %5941 = vmatpush1.bf16.msra.mxu0 0
        %5942 = vmatprep.subr.bf16.mxu0 0
        %5943 = vmatpush1.bf16.msra.mxu0 0
        %5944 = vmatprep.subr.bf16.mxu0 0
        %5945 = vmatpush1.bf16.msra.mxu0 0
        %5946 = vmatprep.subr.bf16.mxu0 0
        %5947 = vmatpush1.bf16.msra.mxu0 0
        %5948 = vmatprep.subr.bf16.mxu0 0
        %5949 = vmatpush1.bf16.msra.mxu0 0
        %5950 = vmatprep.subr.bf16.mxu0 0
        %5951 = vmatpush1.bf16.msra.mxu0 0
        %5952 = vmatprep.subr.bf16.mxu0 0
        %5953 = vmatpush1.bf16.msra.mxu0 0
        %5954 = vmatprep.subr.bf16.mxu0 0
        %5955 = vmatpush1.bf16.msra.mxu0 0
        %5956 = vmatprep.subr.bf16.mxu0 0
        %5957 = vmatpush1.bf16.msra.mxu0 0
        %5958 = vmatprep.subr.bf16.mxu0 0
        %5959 = vmatpush1.bf16.msra.mxu0 0
        %5960 = vmatprep.subr.bf16.mxu0 0
        %5961 = vmatpush1.bf16.msra.mxu0 0
        %5962 = vmatprep.mubr.bf16.mxu0 0
        %5963 = vmatmul.mubr.bf16.gmra.mrb[0].mxu0 %v5925
        %v5964 = vpop.f32.mrb[0].mxu0
        %v5965 = vadd.f32 0.0, %v5964
        %v5966 = vpop.f32.mrb[0].mxu0
        %v5967 = vpop.f32.mrb[0].mxu0
        %v5968 = vpop.f32.mrb[0].mxu0
        %5969 = vdwg.mxu0
        %v5970 = vadd.f32 %v5916, %v5965
        %s5971 = scalar_lea.vmem [#allocation5], 420
        %v5972 = vld [vmem:[%s5971] sm:$0xf]
        %5973 = vrot.lane.b32.xlu0 %v5755, 120
        %v5974 = vpop.permute.xlu0 %5973
        %5975 = vrot.lane.b32.xlu0 %v5756, 120
        %v5976 = vpop.permute.xlu0 %5975
        %v5977 = vsel %vm521, %v5974, %v5976
        %v5979 = vsel %vm253, %v5972, 0
        %v5982 = vand.u32 %v5977, %v260
        %5984 = vmatprep.subr.bf16.mxu0 0
        %5985 = vmatpush1.bf16.msra.mxu0 %v5982
        %5986 = vmatprep.subr.bf16.mxu0 0
        %5987 = vmatpush1.bf16.msra.mxu0 0
        %5988 = vmatprep.subr.bf16.mxu0 0
        %5989 = vmatpush1.bf16.msra.mxu0 0
        %5990 = vmatprep.subr.bf16.mxu0 0
        %5991 = vmatpush1.bf16.msra.mxu0 0
        %5992 = vmatprep.subr.bf16.mxu0 0
        %5993 = vmatpush1.bf16.msra.mxu0 0
        %5994 = vmatprep.subr.bf16.mxu0 0
        %5995 = vmatpush1.bf16.msra.mxu0 0
        %5996 = vmatprep.subr.bf16.mxu0 0
        %5997 = vmatpush1.bf16.msra.mxu0 0
        %5998 = vmatprep.subr.bf16.mxu0 0
        %5999 = vmatpush1.bf16.msra.mxu0 0
        %6000 = vmatprep.subr.bf16.mxu0 0
        %6001 = vmatpush1.bf16.msra.mxu0 0
        %6002 = vmatprep.subr.bf16.mxu0 0
        %6003 = vmatpush1.bf16.msra.mxu0 0
        %6004 = vmatprep.subr.bf16.mxu0 0
        %6005 = vmatpush1.bf16.msra.mxu0 0
        %6006 = vmatprep.subr.bf16.mxu0 0
        %6007 = vmatpush1.bf16.msra.mxu0 0
        %6008 = vmatprep.subr.bf16.mxu0 0
        %6009 = vmatpush1.bf16.msra.mxu0 0
        %6010 = vmatprep.subr.bf16.mxu0 0
        %6011 = vmatpush1.bf16.msra.mxu0 0
        %6012 = vmatprep.subr.bf16.mxu0 0
        %6013 = vmatpush1.bf16.msra.mxu0 0
        %6014 = vmatprep.subr.bf16.mxu0 0
        %6015 = vmatpush1.bf16.msra.mxu0 0
        %6016 = vmatprep.mubr.bf16.mxu0 0
        %6017 = vmatmul.mubr.bf16.gmra.mrb[0].mxu0 %v5979
        %v6018 = vpop.f32.mrb[0].mxu0
        %v6019 = vadd.f32 0.0, %v6018
        %v6020 = vpop.f32.mrb[0].mxu0
        %v6021 = vpop.f32.mrb[0].mxu0
        %v6022 = vpop.f32.mrb[0].mxu0
        %6023 = vdwg.mxu0
        %v6024 = vadd.f32 %v5970, %v6019
        %s6025 = scalar_lea.vmem [#allocation5], 424
        %v6026 = vld [vmem:[%s6025] sm:$0xf]
        %6027 = vrot.lane.b32.xlu0 %v5755, 119
        %v6028 = vpop.permute.xlu0 %6027
        %6029 = vrot.lane.b32.xlu0 %v5756, 119
        %v6030 = vpop.permute.xlu0 %6029
        %v6031 = vsel %vm576, %v6028, %v6030
        %v6033 = vsel %vm253, %v6026, 0
        %v6036 = vand.u32 %v6031, %v260
        %6038 = vmatprep.subr.bf16.mxu0 0
        %6039 = vmatpush1.bf16.msra.mxu0 %v6036
        %6040 = vmatprep.subr.bf16.mxu0 0
        %6041 = vmatpush1.bf16.msra.mxu0 0
        %6042 = vmatprep.subr.bf16.mxu0 0
        %6043 = vmatpush1.bf16.msra.mxu0 0
        %6044 = vmatprep.subr.bf16.mxu0 0
        %6045 = vmatpush1.bf16.msra.mxu0 0
        %6046 = vmatprep.subr.bf16.mxu0 0
        %6047 = vmatpush1.bf16.msra.mxu0 0
        %6048 = vmatprep.subr.bf16.mxu0 0
        %6049 = vmatpush1.bf16.msra.mxu0 0
        %6050 = vmatprep.subr.bf16.mxu0 0
        %6051 = vmatpush1.bf16.msra.mxu0 0
        %6052 = vmatprep.subr.bf16.mxu0 0
        %6053 = vmatpush1.bf16.msra.mxu0 0
        %6054 = vmatprep.subr.bf16.mxu0 0
        %6055 = vmatpush1.bf16.msra.mxu0 0
        %6056 = vmatprep.subr.bf16.mxu0 0
        %6057 = vmatpush1.bf16.msra.mxu0 0
        %6058 = vmatprep.subr.bf16.mxu0 0
        %6059 = vmatpush1.bf16.msra.mxu0 0
        %6060 = vmatprep.subr.bf16.mxu0 0
        %6061 = vmatpush1.bf16.msra.mxu0 0
        %6062 = vmatprep.subr.bf16.mxu0 0
        %6063 = vmatpush1.bf16.msra.mxu0 0
        %6064 = vmatprep.subr.bf16.mxu0 0
        %6065 = vmatpush1.bf16.msra.mxu0 0
        %6066 = vmatprep.subr.bf16.mxu0 0
        %6067 = vmatpush1.bf16.msra.mxu0 0
        %6068 = vmatprep.subr.bf16.mxu0 0
        %6069 = vmatpush1.bf16.msra.mxu0 0
        %6070 = vmatprep.mubr.bf16.mxu0 0
        %6071 = vmatmul.mubr.bf16.gmra.mrb[0].mxu0 %v6033
        %v6072 = vpop.f32.mrb[0].mxu0
        %v6073 = vadd.f32 0.0, %v6072
        %v6074 = vpop.f32.mrb[0].mxu0
        %v6075 = vpop.f32.mrb[0].mxu0
        %v6076 = vpop.f32.mrb[0].mxu0
        %6077 = vdwg.mxu0
        %v6078 = vadd.f32 %v6024, %v6073
        %s6079 = scalar_lea.vmem [#allocation5], 428
        %v6080 = vld [vmem:[%s6079] sm:$0xf]
        %6081 = vrot.lane.b32.xlu0 %v5755, 118
        %v6082 = vpop.permute.xlu0 %6081
        %6083 = vrot.lane.b32.xlu0 %v5756, 118
        %v6084 = vpop.permute.xlu0 %6083
        %v6085 = vsel %vm631, %v6082, %v6084
        %v6087 = vsel %vm253, %v6080, 0
        %v6090 = vand.u32 %v6085, %v260
        %6092 = vmatprep.subr.bf16.mxu0 0
        %6093 = vmatpush1.bf16.msra.mxu0 %v6090
        %6094 = vmatprep.subr.bf16.mxu0 0
        %6095 = vmatpush1.bf16.msra.mxu0 0
        %6096 = vmatprep.subr.bf16.mxu0 0
        %6097 = vmatpush1.bf16.msra.mxu0 0
        %6098 = vmatprep.subr.bf16.mxu0 0
        %6099 = vmatpush1.bf16.msra.mxu0 0
        %6100 = vmatprep.subr.bf16.mxu0 0
        %6101 = vmatpush1.bf16.msra.mxu0 0
        %6102 = vmatprep.subr.bf16.mxu0 0
        %6103 = vmatpush1.bf16.msra.mxu0 0
        %6104 = vmatprep.subr.bf16.mxu0 0
        %6105 = vmatpush1.bf16.msra.mxu0 0
        %6106 = vmatprep.subr.bf16.mxu0 0
        %6107 = vmatpush1.bf16.msra.mxu0 0
        %6108 = vmatprep.subr.bf16.mxu0 0
        %6109 = vmatpush1.bf16.msra.mxu0 0
        %6110 = vmatprep.subr.bf16.mxu0 0
        %6111 = vmatpush1.bf16.msra.mxu0 0
        %6112 = vmatprep.subr.bf16.mxu0 0
        %6113 = vmatpush1.bf16.msra.mxu0 0
        %6114 = vmatprep.subr.bf16.mxu0 0
        %6115 = vmatpush1.bf16.msra.mxu0 0
        %6116 = vmatprep.subr.bf16.mxu0 0
        %6117 = vmatpush1.bf16.msra.mxu0 0
        %6118 = vmatprep.subr.bf16.mxu0 0
        %6119 = vmatpush1.bf16.msra.mxu0 0
        %6120 = vmatprep.subr.bf16.mxu0 0
        %6121 = vmatpush1.bf16.msra.mxu0 0
        %6122 = vmatprep.subr.bf16.mxu0 0
        %6123 = vmatpush1.bf16.msra.mxu0 0
        %6124 = vmatprep.mubr.bf16.mxu0 0
        %6125 = vmatmul.mubr.bf16.gmra.mrb[0].mxu0 %v6087
        %v6126 = vpop.f32.mrb[0].mxu0
        %v6127 = vadd.f32 0.0, %v6126
        %v6128 = vpop.f32.mrb[0].mxu0
        %v6129 = vpop.f32.mrb[0].mxu0
        %v6130 = vpop.f32.mrb[0].mxu0
        %6131 = vdwg.mxu0
        %v6132 = vadd.f32 %v6078, %v6127
        %s6133 = scalar_lea.vmem [#allocation5], 432
        %v6134 = vld [vmem:[%s6133] sm:$0xf]
        %6135 = vrot.lane.b32.xlu0 %v5755, 117
        %v6136 = vpop.permute.xlu0 %6135
        %6137 = vrot.lane.b32.xlu0 %v5756, 117
        %v6138 = vpop.permute.xlu0 %6137
        %v6139 = vsel %vm686, %v6136, %v6138
        %v6141 = vsel %vm253, %v6134, 0
        %v6144 = vand.u32 %v6139, %v260
        %6146 = vmatprep.subr.bf16.mxu0 0
        %6147 = vmatpush1.bf16.msra.mxu0 %v6144
        %6148 = vmatprep.subr.bf16.mxu0 0
        %6149 = vmatpush1.bf16.msra.mxu0 0
        %6150 = vmatprep.subr.bf16.mxu0 0
        %6151 = vmatpush1.bf16.msra.mxu0 0
        %6152 = vmatprep.subr.bf16.mxu0 0
        %6153 = vmatpush1.bf16.msra.mxu0 0
        %6154 = vmatprep.subr.bf16.mxu0 0
        %6155 = vmatpush1.bf16.msra.mxu0 0
        %6156 = vmatprep.subr.bf16.mxu0 0
        %6157 = vmatpush1.bf16.msra.mxu0 0
        %6158 = vmatprep.subr.bf16.mxu0 0
        %6159 = vmatpush1.bf16.msra.mxu0 0
        %6160 = vmatprep.subr.bf16.mxu0 0
        %6161 = vmatpush1.bf16.msra.mxu0 0
        %6162 = vmatprep.subr.bf16.mxu0 0
        %6163 = vmatpush1.bf16.msra.mxu0 0
        %6164 = vmatprep.subr.bf16.mxu0 0
        %6165 = vmatpush1.bf16.msra.mxu0 0
        %6166 = vmatprep.subr.bf16.mxu0 0
        %6167 = vmatpush1.bf16.msra.mxu0 0
        %6168 = vmatprep.subr.bf16.mxu0 0
        %6169 = vmatpush1.bf16.msra.mxu0 0
        %6170 = vmatprep.subr.bf16.mxu0 0
        %6171 = vmatpush1.bf16.msra.mxu0 0
        %6172 = vmatprep.subr.bf16.mxu0 0
        %6173 = vmatpush1.bf16.msra.mxu0 0
        %6174 = vmatprep.subr.bf16.mxu0 0
        %6175 = vmatpush1.bf16.msra.mxu0 0
        %6176 = vmatprep.subr.bf16.mxu0 0
        %6177 = vmatpush1.bf16.msra.mxu0 0
        %6178 = vmatprep.mubr.bf16.mxu0 0
        %6179 = vmatmul.mubr.bf16.gmra.mrb[0].mxu0 %v6141
        %v6180 = vpop.f32.mrb[0].mxu0
        %v6181 = vadd.f32 0.0, %v6180
        %v6182 = vpop.f32.mrb[0].mxu0
        %v6183 = vpop.f32.mrb[0].mxu0
        %v6184 = vpop.f32.mrb[0].mxu0
        %6185 = vdwg.mxu0
        %v6186 = vadd.f32 %v6132, %v6181
        %s6187 = scalar_lea.vmem [#allocation5], 436
        %v6188 = vld [vmem:[%s6187] sm:$0xf]
        %6189 = vrot.lane.b32.xlu0 %v5755, 116
        %v6190 = vpop.permute.xlu0 %6189
        %6191 = vrot.lane.b32.xlu0 %v5756, 116
        %v6192 = vpop.permute.xlu0 %6191
        %v6193 = vsel %vm741, %v6190, %v6192
        %v6195 = vsel %vm253, %v6188, 0
        %v6198 = vand.u32 %v6193, %v260
        %6200 = vmatprep.subr.bf16.mxu0 0
        %6201 = vmatpush1.bf16.msra.mxu0 %v6198
        %6202 = vmatprep.subr.bf16.mxu0 0
        %6203 = vmatpush1.bf16.msra.mxu0 0
        %6204 = vmatprep.subr.bf16.mxu0 0
        %6205 = vmatpush1.bf16.msra.mxu0 0
        %6206 = vmatprep.subr.bf16.mxu0 0
        %6207 = vmatpush1.bf16.msra.mxu0 0
        %6208 = vmatprep.subr.bf16.mxu0 0
        %6209 = vmatpush1.bf16.msra.mxu0 0
        %6210 = vmatprep.subr.bf16.mxu0 0
        %6211 = vmatpush1.bf16.msra.mxu0 0
        %6212 = vmatprep.subr.bf16.mxu0 0
        %6213 = vmatpush1.bf16.msra.mxu0 0
        %6214 = vmatprep.subr.bf16.mxu0 0
        %6215 = vmatpush1.bf16.msra.mxu0 0
        %6216 = vmatprep.subr.bf16.mxu0 0
        %6217 = vmatpush1.bf16.msra.mxu0 0
        %6218 = vmatprep.subr.bf16.mxu0 0
        %6219 = vmatpush1.bf16.msra.mxu0 0
        %6220 = vmatprep.subr.bf16.mxu0 0
        %6221 = vmatpush1.bf16.msra.mxu0 0
        %6222 = vmatprep.subr.bf16.mxu0 0
        %6223 = vmatpush1.bf16.msra.mxu0 0
        %6224 = vmatprep.subr.bf16.mxu0 0
        %6225 = vmatpush1.bf16.msra.mxu0 0
        %6226 = vmatprep.subr.bf16.mxu0 0
        %6227 = vmatpush1.bf16.msra.mxu0 0
        %6228 = vmatprep.subr.bf16.mxu0 0
        %6229 = vmatpush1.bf16.msra.mxu0 0
        %6230 = vmatprep.subr.bf16.mxu0 0
        %6231 = vmatpush1.bf16.msra.mxu0 0
        %6232 = vmatprep.mubr.bf16.mxu0 0
        %6233 = vmatmul.mubr.bf16.gmra.mrb[0].mxu0 %v6195
        %v6234 = vpop.f32.mrb[0].mxu0
        %v6235 = vadd.f32 0.0, %v6234
        %v6236 = vpop.f32.mrb[0].mxu0
        %v6237 = vpop.f32.mrb[0].mxu0
        %v6238 = vpop.f32.mrb[0].mxu0
        %6239 = vdwg.mxu0
        %v6240 = vadd.f32 %v6186, %v6235
        %s6241 = scalar_lea.vmem [#allocation5], 440
        %v6242 = vld [vmem:[%s6241] sm:$0xf]
        %6243 = vrot.lane.b32.xlu0 %v5755, 112
        %v6244 = vpop.permute.xlu0 %6243
        %6245 = vrot.lane.b32.xlu0 %v5756, 112
        %v6246 = vpop.permute.xlu0 %6245
        %v6247 = vsel %vm796, %v6244, %v6246
        %v6249 = vsel %vm253, %v6242, 0
        %v6252 = vand.u32 %v6247, %v260
        %6254 = vmatprep.subr.bf16.mxu0 0
        %6255 = vmatpush1.bf16.msra.mxu0 %v6252
        %6256 = vmatprep.subr.bf16.mxu0 0
        %6257 = vmatpush1.bf16.msra.mxu0 0
        %6258 = vmatprep.subr.bf16.mxu0 0
        %6259 = vmatpush1.bf16.msra.mxu0 0
        %6260 = vmatprep.subr.bf16.mxu0 0
        %6261 = vmatpush1.bf16.msra.mxu0 0
        %6262 = vmatprep.subr.bf16.mxu0 0
        %6263 = vmatpush1.bf16.msra.mxu0 0
        %6264 = vmatprep.subr.bf16.mxu0 0
        %6265 = vmatpush1.bf16.msra.mxu0 0
        %6266 = vmatprep.subr.bf16.mxu0 0
        %6267 = vmatpush1.bf16.msra.mxu0 0
        %6268 = vmatprep.subr.bf16.mxu0 0
        %6269 = vmatpush1.bf16.msra.mxu0 0
        %6270 = vmatprep.subr.bf16.mxu0 0
        %6271 = vmatpush1.bf16.msra.mxu0 0
        %6272 = vmatprep.subr.bf16.mxu0 0
        %6273 = vmatpush1.bf16.msra.mxu0 0
        %6274 = vmatprep.subr.bf16.mxu0 0
        %6275 = vmatpush1.bf16.msra.mxu0 0
        %6276 = vmatprep.subr.bf16.mxu0 0
        %6277 = vmatpush1.bf16.msra.mxu0 0
        %6278 = vmatprep.subr.bf16.mxu0 0
        %6279 = vmatpush1.bf16.msra.mxu0 0
        %6280 = vmatprep.subr.bf16.mxu0 0
        %6281 = vmatpush1.bf16.msra.mxu0 0
        %6282 = vmatprep.subr.bf16.mxu0 0
        %6283 = vmatpush1.bf16.msra.mxu0 0
        %6284 = vmatprep.subr.bf16.mxu0 0
        %6285 = vmatpush1.bf16.msra.mxu0 0
        %6286 = vmatprep.mubr.bf16.mxu0 0
        %6287 = vmatmul.mubr.bf16.gmra.mrb[0].mxu0 %v6249
        %v6288 = vpop.f32.mrb[0].mxu0
        %v6289 = vadd.f32 0.0, %v6288
        %v6290 = vpop.f32.mrb[0].mxu0
        %v6291 = vpop.f32.mrb[0].mxu0
        %v6292 = vpop.f32.mrb[0].mxu0
        %6293 = vdwg.mxu0
        %v6294 = vadd.f32 %v6240, %v6289
        %s6295 = scalar_lea.vmem [#allocation5], 444
        %v6296 = vld [vmem:[%s6295] sm:$0xf]
        %6297 = vrot.lane.b32.xlu0 %v5755, 111
        %v6298 = vpop.permute.xlu0 %6297
        %6299 = vrot.lane.b32.xlu0 %v5756, 111
        %v6300 = vpop.permute.xlu0 %6299
        %v6301 = vsel %vm851, %v6298, %v6300
        %v6303 = vsel %vm253, %v6296, 0
        %v6306 = vand.u32 %v6301, %v260
        %6308 = vmatprep.subr.bf16.mxu0 0
        %6309 = vmatpush1.bf16.msra.mxu0 %v6306
        %6310 = vmatprep.subr.bf16.mxu0 0
        %6311 = vmatpush1.bf16.msra.mxu0 0
        %6312 = vmatprep.subr.bf16.mxu0 0
        %6313 = vmatpush1.bf16.msra.mxu0 0
        %6314 = vmatprep.subr.bf16.mxu0 0
        %6315 = vmatpush1.bf16.msra.mxu0 0
        %6316 = vmatprep.subr.bf16.mxu0 0
        %6317 = vmatpush1.bf16.msra.mxu0 0
        %6318 = vmatprep.subr.bf16.mxu0 0
        %6319 = vmatpush1.bf16.msra.mxu0 0
        %6320 = vmatprep.subr.bf16.mxu0 0
        %6321 = vmatpush1.bf16.msra.mxu0 0
        %6322 = vmatprep.subr.bf16.mxu0 0
        %6323 = vmatpush1.bf16.msra.mxu0 0
        %6324 = vmatprep.subr.bf16.mxu0 0
        %6325 = vmatpush1.bf16.msra.mxu0 0
        %6326 = vmatprep.subr.bf16.mxu0 0
        %6327 = vmatpush1.bf16.msra.mxu0 0
        %6328 = vmatprep.subr.bf16.mxu0 0
        %6329 = vmatpush1.bf16.msra.mxu0 0
        %6330 = vmatprep.subr.bf16.mxu0 0
        %6331 = vmatpush1.bf16.msra.mxu0 0
        %6332 = vmatprep.subr.bf16.mxu0 0
        %6333 = vmatpush1.bf16.msra.mxu0 0
        %6334 = vmatprep.subr.bf16.mxu0 0
        %6335 = vmatpush1.bf16.msra.mxu0 0
        %6336 = vmatprep.subr.bf16.mxu0 0
        %6337 = vmatpush1.bf16.msra.mxu0 0
        %6338 = vmatprep.subr.bf16.mxu0 0
        %6339 = vmatpush1.bf16.msra.mxu0 0
        %6340 = vmatprep.mubr.bf16.mxu0 0
        %6341 = vmatmul.mubr.bf16.gmra.mrb[0].mxu0 %v6303
        %v6342 = vpop.f32.mrb[0].mxu0
        %v6343 = vadd.f32 0.0, %v6342
        %v6344 = vpop.f32.mrb[0].mxu0
        %v6345 = vpop.f32.mrb[0].mxu0
        %v6346 = vpop.f32.mrb[0].mxu0
        %6347 = vdwg.mxu0
        %v6348 = vadd.f32 %v6294, %v6343
        %s6349 = scalar_lea.vmem [#allocation5], 448
        %v6350 = vld [vmem:[%s6349] sm:$0xf]
        %6351 = vrot.lane.b32.xlu0 %v5755, 110
        %v6352 = vpop.permute.xlu0 %6351
        %6353 = vrot.lane.b32.xlu0 %v5756, 110
        %v6354 = vpop.permute.xlu0 %6353
        %v6355 = vsel %vm906, %v6352, %v6354
        %v6357 = vsel %vm253, %v6350, 0
        %v6360 = vand.u32 %v6355, %v260
        %6362 = vmatprep.subr.bf16.mxu0 0
        %6363 = vmatpush1.bf16.msra.mxu0 %v6360
        %6364 = vmatprep.subr.bf16.mxu0 0
        %6365 = vmatpush1.bf16.msra.mxu0 0
        %6366 = vmatprep.subr.bf16.mxu0 0
        %6367 = vmatpush1.bf16.msra.mxu0 0
        %6368 = vmatprep.subr.bf16.mxu0 0
        %6369 = vmatpush1.bf16.msra.mxu0 0
        %6370 = vmatprep.subr.bf16.mxu0 0
        %6371 = vmatpush1.bf16.msra.mxu0 0
        %6372 = vmatprep.subr.bf16.mxu0 0
        %6373 = vmatpush1.bf16.msra.mxu0 0
        %6374 = vmatprep.subr.bf16.mxu0 0
        %6375 = vmatpush1.bf16.msra.mxu0 0
        %6376 = vmatprep.subr.bf16.mxu0 0
        %6377 = vmatpush1.bf16.msra.mxu0 0
        %6378 = vmatprep.subr.bf16.mxu0 0
        %6379 = vmatpush1.bf16.msra.mxu0 0
        %6380 = vmatprep.subr.bf16.mxu0 0
        %6381 = vmatpush1.bf16.msra.mxu0 0
        %6382 = vmatprep.subr.bf16.mxu0 0
        %6383 = vmatpush1.bf16.msra.mxu0 0
        %6384 = vmatprep.subr.bf16.mxu0 0
        %6385 = vmatpush1.bf16.msra.mxu0 0
        %6386 = vmatprep.subr.bf16.mxu0 0
        %6387 = vmatpush1.bf16.msra.mxu0 0
        %6388 = vmatprep.subr.bf16.mxu0 0
        %6389 = vmatpush1.bf16.msra.mxu0 0
        %6390 = vmatprep.subr.bf16.mxu0 0
        %6391 = vmatpush1.bf16.msra.mxu0 0
        %6392 = vmatprep.subr.bf16.mxu0 0
        %6393 = vmatpush1.bf16.msra.mxu0 0
        %6394 = vmatprep.mubr.bf16.mxu0 0
        %6395 = vmatmul.mubr.bf16.gmra.mrb[0].mxu0 %v6357
        %v6396 = vpop.f32.mrb[0].mxu0
        %v6397 = vadd.f32 0.0, %v6396
        %v6398 = vpop.f32.mrb[0].mxu0
        %v6399 = vpop.f32.mrb[0].mxu0
        %v6400 = vpop.f32.mrb[0].mxu0
        %6401 = vdwg.mxu0
        %v6402 = vadd.f32 %v6348, %v6397
        %s6403 = scalar_lea.vmem [#allocation5], 452
        %v6404 = vld [vmem:[%s6403] sm:$0xf]
        %6405 = vrot.lane.b32.xlu0 %v5755, 109
        %v6406 = vpop.permute.xlu0 %6405
        %6407 = vrot.lane.b32.xlu0 %v5756, 109
        %v6408 = vpop.permute.xlu0 %6407
        %v6409 = vsel %vm961, %v6406, %v6408
        %v6411 = vsel %vm253, %v6404, 0
        %v6414 = vand.u32 %v6409, %v260
        %6416 = vmatprep.subr.bf16.mxu0 0
        %6417 = vmatpush1.bf16.msra.mxu0 %v6414
        %6418 = vmatprep.subr.bf16.mxu0 0
        %6419 = vmatpush1.bf16.msra.mxu0 0
        %6420 = vmatprep.subr.bf16.mxu0 0
        %6421 = vmatpush1.bf16.msra.mxu0 0
        %6422 = vmatprep.subr.bf16.mxu0 0
        %6423 = vmatpush1.bf16.msra.mxu0 0
        %6424 = vmatprep.subr.bf16.mxu0 0
        %6425 = vmatpush1.bf16.msra.mxu0 0
        %6426 = vmatprep.subr.bf16.mxu0 0
        %6427 = vmatpush1.bf16.msra.mxu0 0
        %6428 = vmatprep.subr.bf16.mxu0 0
        %6429 = vmatpush1.bf16.msra.mxu0 0
        %6430 = vmatprep.subr.bf16.mxu0 0
        %6431 = vmatpush1.bf16.msra.mxu0 0
        %6432 = vmatprep.subr.bf16.mxu0 0
        %6433 = vmatpush1.bf16.msra.mxu0 0
        %6434 = vmatprep.subr.bf16.mxu0 0
        %6435 = vmatpush1.bf16.msra.mxu0 0
        %6436 = vmatprep.subr.bf16.mxu0 0
        %6437 = vmatpush1.bf16.msra.mxu0 0
        %6438 = vmatprep.subr.bf16.mxu0 0
        %6439 = vmatpush1.bf16.msra.mxu0 0
        %6440 = vmatprep.subr.bf16.mxu0 0
        %6441 = vmatpush1.bf16.msra.mxu0 0
        %6442 = vmatprep.subr.bf16.mxu0 0
        %6443 = vmatpush1.bf16.msra.mxu0 0
        %6444 = vmatprep.subr.bf16.mxu0 0
        %6445 = vmatpush1.bf16.msra.mxu0 0
        %6446 = vmatprep.subr.bf16.mxu0 0
        %6447 = vmatpush1.bf16.msra.mxu0 0
        %6448 = vmatprep.mubr.bf16.mxu0 0
        %6449 = vmatmul.mubr.bf16.gmra.mrb[0].mxu0 %v6411
        %v6450 = vpop.f32.mrb[0].mxu0
        %v6451 = vadd.f32 0.0, %v6450
        %v6452 = vpop.f32.mrb[0].mxu0
        %v6453 = vpop.f32.mrb[0].mxu0
        %v6454 = vpop.f32.mrb[0].mxu0
        %6455 = vdwg.mxu0
        %v6456 = vadd.f32 %v6402, %v6451
        %s6457 = scalar_lea.vmem [#allocation5], 456
        %v6458 = vld [vmem:[%s6457] sm:$0xf]
        %6459 = vrot.lane.b32.xlu0 %v5755, 108
        %v6460 = vpop.permute.xlu0 %6459
        %6461 = vrot.lane.b32.xlu0 %v5756, 108
        %v6462 = vpop.permute.xlu0 %6461
        %v6463 = vsel %vm1016, %v6460, %v6462
        %v6465 = vsel %vm253, %v6458, 0
        %v6468 = vand.u32 %v6463, %v260
        %6470 = vmatprep.subr.bf16.mxu0 0
        %6471 = vmatpush1.bf16.msra.mxu0 %v6468
        %6472 = vmatprep.subr.bf16.mxu0 0
        %6473 = vmatpush1.bf16.msra.mxu0 0
        %6474 = vmatprep.subr.bf16.mxu0 0
        %6475 = vmatpush1.bf16.msra.mxu0 0
        %6476 = vmatprep.subr.bf16.mxu0 0
        %6477 = vmatpush1.bf16.msra.mxu0 0
        %6478 = vmatprep.subr.bf16.mxu0 0
        %6479 = vmatpush1.bf16.msra.mxu0 0
        %6480 = vmatprep.subr.bf16.mxu0 0
        %6481 = vmatpush1.bf16.msra.mxu0 0
        %6482 = vmatprep.subr.bf16.mxu0 0
        %6483 = vmatpush1.bf16.msra.mxu0 0
        %6484 = vmatprep.subr.bf16.mxu0 0
        %6485 = vmatpush1.bf16.msra.mxu0 0
        %6486 = vmatprep.subr.bf16.mxu0 0
        %6487 = vmatpush1.bf16.msra.mxu0 0
        %6488 = vmatprep.subr.bf16.mxu0 0
        %6489 = vmatpush1.bf16.msra.mxu0 0
        %6490 = vmatprep.subr.bf16.mxu0 0
        %6491 = vmatpush1.bf16.msra.mxu0 0
        %6492 = vmatprep.subr.bf16.mxu0 0
        %6493 = vmatpush1.bf16.msra.mxu0 0
        %6494 = vmatprep.subr.bf16.mxu0 0
        %6495 = vmatpush1.bf16.msra.mxu0 0
        %6496 = vmatprep.subr.bf16.mxu0 0
        %6497 = vmatpush1.bf16.msra.mxu0 0
        %6498 = vmatprep.subr.bf16.mxu0 0
        %6499 = vmatpush1.bf16.msra.mxu0 0
        %6500 = vmatprep.subr.bf16.mxu0 0
        %6501 = vmatpush1.bf16.msra.mxu0 0
        %6502 = vmatprep.mubr.bf16.mxu0 0
        %6503 = vmatmul.mubr.bf16.gmra.mrb[0].mxu0 %v6465
        %v6504 = vpop.f32.mrb[0].mxu0
        %v6505 = vadd.f32 0.0, %v6504
        %v6506 = vpop.f32.mrb[0].mxu0
        %v6507 = vpop.f32.mrb[0].mxu0
        %v6508 = vpop.f32.mrb[0].mxu0
        %6509 = vdwg.mxu0
        %v6510 = vadd.f32 %v6456, %v6505
        %s6511 = scalar_lea.vmem [#allocation5], 460
        %v6512 = vld [vmem:[%s6511] sm:$0xf]
        %6513 = vrot.lane.b32.xlu0 %v5755, 104
        %v6514 = vpop.permute.xlu0 %6513
        %6515 = vrot.lane.b32.xlu0 %v5756, 104
        %v6516 = vpop.permute.xlu0 %6515
        %v6517 = vsel %vm1071, %v6514, %v6516
        %v6519 = vsel %vm253, %v6512, 0
        %v6522 = vand.u32 %v6517, %v260
        %6524 = vmatprep.subr.bf16.mxu0 0
        %6525 = vmatpush1.bf16.msra.mxu0 %v6522
        %6526 = vmatprep.subr.bf16.mxu0 0
        %6527 = vmatpush1.bf16.msra.mxu0 0
        %6528 = vmatprep.subr.bf16.mxu0 0
        %6529 = vmatpush1.bf16.msra.mxu0 0
        %6530 = vmatprep.subr.bf16.mxu0 0
        %6531 = vmatpush1.bf16.msra.mxu0 0
        %6532 = vmatprep.subr.bf16.mxu0 0
        %6533 = vmatpush1.bf16.msra.mxu0 0
        %6534 = vmatprep.subr.bf16.mxu0 0
        %6535 = vmatpush1.bf16.msra.mxu0 0
        %6536 = vmatprep.subr.bf16.mxu0 0
        %6537 = vmatpush1.bf16.msra.mxu0 0
        %6538 = vmatprep.subr.bf16.mxu0 0
        %6539 = vmatpush1.bf16.msra.mxu0 0
        %6540 = vmatprep.subr.bf16.mxu0 0
        %6541 = vmatpush1.bf16.msra.mxu0 0
        %6542 = vmatprep.subr.bf16.mxu0 0
        %6543 = vmatpush1.bf16.msra.mxu0 0
        %6544 = vmatprep.subr.bf16.mxu0 0
        %6545 = vmatpush1.bf16.msra.mxu0 0
        %6546 = vmatprep.subr.bf16.mxu0 0
        %6547 = vmatpush1.bf16.msra.mxu0 0
        %6548 = vmatprep.subr.bf16.mxu0 0
        %6549 = vmatpush1.bf16.msra.mxu0 0
        %6550 = vmatprep.subr.bf16.mxu0 0
        %6551 = vmatpush1.bf16.msra.mxu0 0
        %6552 = vmatprep.subr.bf16.mxu0 0
        %6553 = vmatpush1.bf16.msra.mxu0 0
        %6554 = vmatprep.subr.bf16.mxu0 0
        %6555 = vmatpush1.bf16.msra.mxu0 0
        %6556 = vmatprep.mubr.bf16.mxu0 0
        %6557 = vmatmul.mubr.bf16.gmra.mrb[0].mxu0 %v6519
        %v6558 = vpop.f32.mrb[0].mxu0
        %v6559 = vadd.f32 0.0, %v6558
        %v6560 = vpop.f32.mrb[0].mxu0
        %v6561 = vpop.f32.mrb[0].mxu0
        %v6562 = vpop.f32.mrb[0].mxu0
        %6563 = vdwg.mxu0
        %v6564 = vadd.f32 %v6510, %v6559
        %s6565 = scalar_lea.vmem [#allocation5], 464
        %v6566 = vld [vmem:[%s6565] sm:$0xf]
        %6567 = vrot.lane.b32.xlu0 %v5755, 103
        %v6568 = vpop.permute.xlu0 %6567
        %6569 = vrot.lane.b32.xlu0 %v5756, 103
        %v6570 = vpop.permute.xlu0 %6569
        %v6571 = vsel %vm1126, %v6568, %v6570
        %v6573 = vsel %vm253, %v6566, 0
        %v6576 = vand.u32 %v6571, %v260
        %6578 = vmatprep.subr.bf16.mxu0 0
        %6579 = vmatpush1.bf16.msra.mxu0 %v6576
        %6580 = vmatprep.subr.bf16.mxu0 0
        %6581 = vmatpush1.bf16.msra.mxu0 0
        %6582 = vmatprep.subr.bf16.mxu0 0
        %6583 = vmatpush1.bf16.msra.mxu0 0
        %6584 = vmatprep.subr.bf16.mxu0 0
        %6585 = vmatpush1.bf16.msra.mxu0 0
        %6586 = vmatprep.subr.bf16.mxu0 0
        %6587 = vmatpush1.bf16.msra.mxu0 0
        %6588 = vmatprep.subr.bf16.mxu0 0
        %6589 = vmatpush1.bf16.msra.mxu0 0
        %6590 = vmatprep.subr.bf16.mxu0 0
        %6591 = vmatpush1.bf16.msra.mxu0 0
        %6592 = vmatprep.subr.bf16.mxu0 0
        %6593 = vmatpush1.bf16.msra.mxu0 0
        %6594 = vmatprep.subr.bf16.mxu0 0
        %6595 = vmatpush1.bf16.msra.mxu0 0
        %6596 = vmatprep.subr.bf16.mxu0 0
        %6597 = vmatpush1.bf16.msra.mxu0 0
        %6598 = vmatprep.subr.bf16.mxu0 0
        %6599 = vmatpush1.bf16.msra.mxu0 0
        %6600 = vmatprep.subr.bf16.mxu0 0
        %6601 = vmatpush1.bf16.msra.mxu0 0
        %6602 = vmatprep.subr.bf16.mxu0 0
        %6603 = vmatpush1.bf16.msra.mxu0 0
        %6604 = vmatprep.subr.bf16.mxu0 0
        %6605 = vmatpush1.bf16.msra.mxu0 0
        %6606 = vmatprep.subr.bf16.mxu0 0
        %6607 = vmatpush1.bf16.msra.mxu0 0
        %6608 = vmatprep.subr.bf16.mxu0 0
        %6609 = vmatpush1.bf16.msra.mxu0 0
        %6610 = vmatprep.mubr.bf16.mxu0 0
        %6611 = vmatmul.mubr.bf16.gmra.mrb[0].mxu0 %v6573
        %v6612 = vpop.f32.mrb[0].mxu0
        %v6613 = vadd.f32 0.0, %v6612
        %v6614 = vpop.f32.mrb[0].mxu0
        %v6615 = vpop.f32.mrb[0].mxu0
        %v6616 = vpop.f32.mrb[0].mxu0
        %6617 = vdwg.mxu0
        %v6618 = vadd.f32 %v6564, %v6613
        %s6619 = scalar_lea.vmem [#allocation5], 468
        %v6620 = vld [vmem:[%s6619] sm:$0xf]
        %6621 = vrot.lane.b32.xlu0 %v5755, 102
        %v6622 = vpop.permute.xlu0 %6621
        %6623 = vrot.lane.b32.xlu0 %v5756, 102
        %v6624 = vpop.permute.xlu0 %6623
        %v6625 = vsel %vm1181, %v6622, %v6624
        %v6627 = vsel %vm253, %v6620, 0
        %v6630 = vand.u32 %v6625, %v260
        %6632 = vmatprep.subr.bf16.mxu0 0
        %6633 = vmatpush1.bf16.msra.mxu0 %v6630
        %6634 = vmatprep.subr.bf16.mxu0 0
        %6635 = vmatpush1.bf16.msra.mxu0 0
        %6636 = vmatprep.subr.bf16.mxu0 0
        %6637 = vmatpush1.bf16.msra.mxu0 0
        %6638 = vmatprep.subr.bf16.mxu0 0
        %6639 = vmatpush1.bf16.msra.mxu0 0
        %6640 = vmatprep.subr.bf16.mxu0 0
        %6641 = vmatpush1.bf16.msra.mxu0 0
        %6642 = vmatprep.subr.bf16.mxu0 0
        %6643 = vmatpush1.bf16.msra.mxu0 0
        %6644 = vmatprep.subr.bf16.mxu0 0
        %6645 = vmatpush1.bf16.msra.mxu0 0
        %6646 = vmatprep.subr.bf16.mxu0 0
        %6647 = vmatpush1.bf16.msra.mxu0 0
        %6648 = vmatprep.subr.bf16.mxu0 0
        %6649 = vmatpush1.bf16.msra.mxu0 0
        %6650 = vmatprep.subr.bf16.mxu0 0
        %6651 = vmatpush1.bf16.msra.mxu0 0
        %6652 = vmatprep.subr.bf16.mxu0 0
        %6653 = vmatpush1.bf16.msra.mxu0 0
        %6654 = vmatprep.subr.bf16.mxu0 0
        %6655 = vmatpush1.bf16.msra.mxu0 0
        %6656 = vmatprep.subr.bf16.mxu0 0
        %6657 = vmatpush1.bf16.msra.mxu0 0
        %6658 = vmatprep.subr.bf16.mxu0 0
        %6659 = vmatpush1.bf16.msra.mxu0 0
        %6660 = vmatprep.subr.bf16.mxu0 0
        %6661 = vmatpush1.bf16.msra.mxu0 0
        %6662 = vmatprep.subr.bf16.mxu0 0
        %6663 = vmatpush1.bf16.msra.mxu0 0
        %6664 = vmatprep.mubr.bf16.mxu0 0
        %6665 = vmatmul.mubr.bf16.gmra.mrb[0].mxu0 %v6627
        %v6666 = vpop.f32.mrb[0].mxu0
        %v6667 = vadd.f32 0.0, %v6666
        %v6668 = vpop.f32.mrb[0].mxu0
        %v6669 = vpop.f32.mrb[0].mxu0
        %v6670 = vpop.f32.mrb[0].mxu0
        %6671 = vdwg.mxu0
        %v6672 = vadd.f32 %v6618, %v6667
        %s6673 = scalar_lea.vmem [#allocation5], 472
        %v6674 = vld [vmem:[%s6673] sm:$0xf]
        %6675 = vrot.lane.b32.xlu0 %v5755, 101
        %v6676 = vpop.permute.xlu0 %6675
        %6677 = vrot.lane.b32.xlu0 %v5756, 101
        %v6678 = vpop.permute.xlu0 %6677
        %v6679 = vsel %vm1236, %v6676, %v6678
        %v6681 = vsel %vm253, %v6674, 0
        %v6684 = vand.u32 %v6679, %v260
        %6686 = vmatprep.subr.bf16.mxu0 0
        %6687 = vmatpush1.bf16.msra.mxu0 %v6684
        %6688 = vmatprep.subr.bf16.mxu0 0
        %6689 = vmatpush1.bf16.msra.mxu0 0
        %6690 = vmatprep.subr.bf16.mxu0 0
        %6691 = vmatpush1.bf16.msra.mxu0 0
        %6692 = vmatprep.subr.bf16.mxu0 0
        %6693 = vmatpush1.bf16.msra.mxu0 0
        %6694 = vmatprep.subr.bf16.mxu0 0
        %6695 = vmatpush1.bf16.msra.mxu0 0
        %6696 = vmatprep.subr.bf16.mxu0 0
        %6697 = vmatpush1.bf16.msra.mxu0 0
        %6698 = vmatprep.subr.bf16.mxu0 0
        %6699 = vmatpush1.bf16.msra.mxu0 0
        %6700 = vmatprep.subr.bf16.mxu0 0
        %6701 = vmatpush1.bf16.msra.mxu0 0
        %6702 = vmatprep.subr.bf16.mxu0 0
        %6703 = vmatpush1.bf16.msra.mxu0 0
        %6704 = vmatprep.subr.bf16.mxu0 0
        %6705 = vmatpush1.bf16.msra.mxu0 0
        %6706 = vmatprep.subr.bf16.mxu0 0
        %6707 = vmatpush1.bf16.msra.mxu0 0
        %6708 = vmatprep.subr.bf16.mxu0 0
        %6709 = vmatpush1.bf16.msra.mxu0 0
        %6710 = vmatprep.subr.bf16.mxu0 0
        %6711 = vmatpush1.bf16.msra.mxu0 0
        %6712 = vmatprep.subr.bf16.mxu0 0
        %6713 = vmatpush1.bf16.msra.mxu0 0
        %6714 = vmatprep.subr.bf16.mxu0 0
        %6715 = vmatpush1.bf16.msra.mxu0 0
        %6716 = vmatprep.subr.bf16.mxu0 0
        %6717 = vmatpush1.bf16.msra.mxu0 0
        %6718 = vmatprep.mubr.bf16.mxu0 0
        %6719 = vmatmul.mubr.bf16.gmra.mrb[0].mxu0 %v6681
        %v6720 = vpop.f32.mrb[0].mxu0
        %v6721 = vadd.f32 0.0, %v6720
        %v6722 = vpop.f32.mrb[0].mxu0
        %v6723 = vpop.f32.mrb[0].mxu0
        %v6724 = vpop.f32.mrb[0].mxu0
        %6725 = vdwg.mxu0
        %v6726 = vadd.f32 %v6672, %v6721
        %s6727 = scalar_lea.vmem [#allocation5], 476
        %v6728 = vld [vmem:[%s6727] sm:$0xf]
        %6729 = vrot.lane.b32.xlu0 %v5755, 100
        %v6730 = vpop.permute.xlu0 %6729
        %6731 = vrot.lane.b32.xlu0 %v5756, 100
        %v6732 = vpop.permute.xlu0 %6731
        %v6733 = vsel %vm1291, %v6730, %v6732
        %v6735 = vsel %vm253, %v6728, 0
        %v6738 = vand.u32 %v6733, %v260
        %6740 = vmatprep.subr.bf16.mxu0 0
        %6741 = vmatpush1.bf16.msra.mxu0 %v6738
        %6742 = vmatprep.subr.bf16.mxu0 0
        %6743 = vmatpush1.bf16.msra.mxu0 0
        %6744 = vmatprep.subr.bf16.mxu0 0
        %6745 = vmatpush1.bf16.msra.mxu0 0
        %6746 = vmatprep.subr.bf16.mxu0 0
        %6747 = vmatpush1.bf16.msra.mxu0 0
        %6748 = vmatprep.subr.bf16.mxu0 0
        %6749 = vmatpush1.bf16.msra.mxu0 0
        %6750 = vmatprep.subr.bf16.mxu0 0
        %6751 = vmatpush1.bf16.msra.mxu0 0
        %6752 = vmatprep.subr.bf16.mxu0 0
        %6753 = vmatpush1.bf16.msra.mxu0 0
        %6754 = vmatprep.subr.bf16.mxu0 0
        %6755 = vmatpush1.bf16.msra.mxu0 0
        %6756 = vmatprep.subr.bf16.mxu0 0
        %6757 = vmatpush1.bf16.msra.mxu0 0
        %6758 = vmatprep.subr.bf16.mxu0 0
        %6759 = vmatpush1.bf16.msra.mxu0 0
        %6760 = vmatprep.subr.bf16.mxu0 0
        %6761 = vmatpush1.bf16.msra.mxu0 0
        %6762 = vmatprep.subr.bf16.mxu0 0
        %6763 = vmatpush1.bf16.msra.mxu0 0
        %6764 = vmatprep.subr.bf16.mxu0 0
        %6765 = vmatpush1.bf16.msra.mxu0 0
        %6766 = vmatprep.subr.bf16.mxu0 0
        %6767 = vmatpush1.bf16.msra.mxu0 0
        %6768 = vmatprep.subr.bf16.mxu0 0
        %6769 = vmatpush1.bf16.msra.mxu0 0
        %6770 = vmatprep.subr.bf16.mxu0 0
        %6771 = vmatpush1.bf16.msra.mxu0 0
        %6772 = vmatprep.mubr.bf16.mxu0 0
        %6773 = vmatmul.mubr.bf16.gmra.mrb[0].mxu0 %v6735
        %v6774 = vpop.f32.mrb[0].mxu0
        %v6775 = vadd.f32 0.0, %v6774
        %v6776 = vpop.f32.mrb[0].mxu0
        %v6777 = vpop.f32.mrb[0].mxu0
        %v6778 = vpop.f32.mrb[0].mxu0
        %6779 = vdwg.mxu0
        %v6780 = vadd.f32 %v6726, %v6775
        %s6781 = scalar_lea.vmem [#allocation5], 480
        %v6782 = vld [vmem:[%s6781] sm:$0xf]
        %6783 = vrot.lane.b32.xlu0 %v5755, 96
        %v6784 = vpop.permute.xlu0 %6783
        %6785 = vrot.lane.b32.xlu0 %v5756, 96
        %v6786 = vpop.permute.xlu0 %6785
        %v6787 = vsel %vm1346, %v6784, %v6786
        %v6789 = vsel %vm253, %v6782, 0
        %v6792 = vand.u32 %v6787, %v260
        %6794 = vmatprep.subr.bf16.mxu0 0
        %6795 = vmatpush1.bf16.msra.mxu0 %v6792
        %6796 = vmatprep.subr.bf16.mxu0 0
        %6797 = vmatpush1.bf16.msra.mxu0 0
        %6798 = vmatprep.subr.bf16.mxu0 0
        %6799 = vmatpush1.bf16.msra.mxu0 0
        %6800 = vmatprep.subr.bf16.mxu0 0
        %6801 = vmatpush1.bf16.msra.mxu0 0
        %6802 = vmatprep.subr.bf16.mxu0 0
        %6803 = vmatpush1.bf16.msra.mxu0 0
        %6804 = vmatprep.subr.bf16.mxu0 0
        %6805 = vmatpush1.bf16.msra.mxu0 0
        %6806 = vmatprep.subr.bf16.mxu0 0
        %6807 = vmatpush1.bf16.msra.mxu0 0
        %6808 = vmatprep.subr.bf16.mxu0 0
        %6809 = vmatpush1.bf16.msra.mxu0 0
        %6810 = vmatprep.subr.bf16.mxu0 0
        %6811 = vmatpush1.bf16.msra.mxu0 0
        %6812 = vmatprep.subr.bf16.mxu0 0
        %6813 = vmatpush1.bf16.msra.mxu0 0
        %6814 = vmatprep.subr.bf16.mxu0 0
        %6815 = vmatpush1.bf16.msra.mxu0 0
        %6816 = vmatprep.subr.bf16.mxu0 0
        %6817 = vmatpush1.bf16.msra.mxu0 0
        %6818 = vmatprep.subr.bf16.mxu0 0
        %6819 = vmatpush1.bf16.msra.mxu0 0
        %6820 = vmatprep.subr.bf16.mxu0 0
        %6821 = vmatpush1.bf16.msra.mxu0 0
        %6822 = vmatprep.subr.bf16.mxu0 0
        %6823 = vmatpush1.bf16.msra.mxu0 0
        %6824 = vmatprep.subr.bf16.mxu0 0
        %6825 = vmatpush1.bf16.msra.mxu0 0
        %6826 = vmatprep.mubr.bf16.mxu0 0
        %6827 = vmatmul.mubr.bf16.gmra.mrb[0].mxu0 %v6789
        %v6828 = vpop.f32.mrb[0].mxu0
        %v6829 = vadd.f32 0.0, %v6828
        %v6830 = vpop.f32.mrb[0].mxu0
        %v6831 = vpop.f32.mrb[0].mxu0
        %v6832 = vpop.f32.mrb[0].mxu0
        %6833 = vdwg.mxu0
        %v6834 = vadd.f32 %v6780, %v6829
        %s6835 = scalar_lea.vmem [#allocation5], 484
        %v6836 = vld [vmem:[%s6835] sm:$0xf]
        %6837 = vrot.lane.b32.xlu0 %v5755, 95
        %v6838 = vpop.permute.xlu0 %6837
        %6839 = vrot.lane.b32.xlu0 %v5756, 95
        %v6840 = vpop.permute.xlu0 %6839
        %v6841 = vsel %vm1401, %v6838, %v6840
        %v6843 = vsel %vm253, %v6836, 0
        %v6846 = vand.u32 %v6841, %v260
        %6848 = vmatprep.subr.bf16.mxu0 0
        %6849 = vmatpush1.bf16.msra.mxu0 %v6846
        %6850 = vmatprep.subr.bf16.mxu0 0
        %6851 = vmatpush1.bf16.msra.mxu0 0
        %6852 = vmatprep.subr.bf16.mxu0 0
        %6853 = vmatpush1.bf16.msra.mxu0 0
        %6854 = vmatprep.subr.bf16.mxu0 0
        %6855 = vmatpush1.bf16.msra.mxu0 0
        %6856 = vmatprep.subr.bf16.mxu0 0
        %6857 = vmatpush1.bf16.msra.mxu0 0
        %6858 = vmatprep.subr.bf16.mxu0 0
        %6859 = vmatpush1.bf16.msra.mxu0 0
        %6860 = vmatprep.subr.bf16.mxu0 0
        %6861 = vmatpush1.bf16.msra.mxu0 0
        %6862 = vmatprep.subr.bf16.mxu0 0
        %6863 = vmatpush1.bf16.msra.mxu0 0
        %6864 = vmatprep.subr.bf16.mxu0 0
        %6865 = vmatpush1.bf16.msra.mxu0 0
        %6866 = vmatprep.subr.bf16.mxu0 0
        %6867 = vmatpush1.bf16.msra.mxu0 0
        %6868 = vmatprep.subr.bf16.mxu0 0
        %6869 = vmatpush1.bf16.msra.mxu0 0
        %6870 = vmatprep.subr.bf16.mxu0 0
        %6871 = vmatpush1.bf16.msra.mxu0 0
        %6872 = vmatprep.subr.bf16.mxu0 0
        %6873 = vmatpush1.bf16.msra.mxu0 0
        %6874 = vmatprep.subr.bf16.mxu0 0
        %6875 = vmatpush1.bf16.msra.mxu0 0
        %6876 = vmatprep.subr.bf16.mxu0 0
        %6877 = vmatpush1.bf16.msra.mxu0 0
        %6878 = vmatprep.subr.bf16.mxu0 0
        %6879 = vmatpush1.bf16.msra.mxu0 0
        %6880 = vmatprep.mubr.bf16.mxu0 0
        %6881 = vmatmul.mubr.bf16.gmra.mrb[0].mxu0 %v6843
        %v6882 = vpop.f32.mrb[0].mxu0
        %v6883 = vadd.f32 0.0, %v6882
        %v6884 = vpop.f32.mrb[0].mxu0
        %v6885 = vpop.f32.mrb[0].mxu0
        %v6886 = vpop.f32.mrb[0].mxu0
        %6887 = vdwg.mxu0
        %v6888 = vadd.f32 %v6834, %v6883
        %s6889 = scalar_lea.vmem [#allocation5], 488
        %v6890 = vld [vmem:[%s6889] sm:$0xf]
        %6891 = vrot.lane.b32.xlu0 %v5755, 94
        %v6892 = vpop.permute.xlu0 %6891
        %6893 = vrot.lane.b32.xlu0 %v5756, 94
        %v6894 = vpop.permute.xlu0 %6893
        %v6895 = vsel %vm1456, %v6892, %v6894
        %v6897 = vsel %vm253, %v6890, 0
        %v6900 = vand.u32 %v6895, %v260
        %6902 = vmatprep.subr.bf16.mxu0 0
        %6903 = vmatpush1.bf16.msra.mxu0 %v6900
        %6904 = vmatprep.subr.bf16.mxu0 0
        %6905 = vmatpush1.bf16.msra.mxu0 0
        %6906 = vmatprep.subr.bf16.mxu0 0
        %6907 = vmatpush1.bf16.msra.mxu0 0
        %6908 = vmatprep.subr.bf16.mxu0 0
        %6909 = vmatpush1.bf16.msra.mxu0 0
        %6910 = vmatprep.subr.bf16.mxu0 0
        %6911 = vmatpush1.bf16.msra.mxu0 0
        %6912 = vmatprep.subr.bf16.mxu0 0
        %6913 = vmatpush1.bf16.msra.mxu0 0
        %6914 = vmatprep.subr.bf16.mxu0 0
        %6915 = vmatpush1.bf16.msra.mxu0 0
        %6916 = vmatprep.subr.bf16.mxu0 0
        %6917 = vmatpush1.bf16.msra.mxu0 0
        %6918 = vmatprep.subr.bf16.mxu0 0
        %6919 = vmatpush1.bf16.msra.mxu0 0
        %6920 = vmatprep.subr.bf16.mxu0 0
        %6921 = vmatpush1.bf16.msra.mxu0 0
        %6922 = vmatprep.subr.bf16.mxu0 0
        %6923 = vmatpush1.bf16.msra.mxu0 0
        %6924 = vmatprep.subr.bf16.mxu0 0
        %6925 = vmatpush1.bf16.msra.mxu0 0
        %6926 = vmatprep.subr.bf16.mxu0 0
        %6927 = vmatpush1.bf16.msra.mxu0 0
        %6928 = vmatprep.subr.bf16.mxu0 0
        %6929 = vmatpush1.bf16.msra.mxu0 0
        %6930 = vmatprep.subr.bf16.mxu0 0
        %6931 = vmatpush1.bf16.msra.mxu0 0
        %6932 = vmatprep.subr.bf16.mxu0 0
        %6933 = vmatpush1.bf16.msra.mxu0 0
        %6934 = vmatprep.mubr.bf16.mxu0 0
        %6935 = vmatmul.mubr.bf16.gmra.mrb[0].mxu0 %v6897
        %v6936 = vpop.f32.mrb[0].mxu0
        %v6937 = vadd.f32 0.0, %v6936
        %v6938 = vpop.f32.mrb[0].mxu0
        %v6939 = vpop.f32.mrb[0].mxu0
        %v6940 = vpop.f32.mrb[0].mxu0
        %6941 = vdwg.mxu0
        %v6942 = vadd.f32 %v6888, %v6937
        %s6943 = scalar_lea.vmem [#allocation5], 492
        %v6944 = vld [vmem:[%s6943] sm:$0xf]
        %6945 = vrot.lane.b32.xlu0 %v5755, 93
        %v6946 = vpop.permute.xlu0 %6945
        %6947 = vrot.lane.b32.xlu0 %v5756, 93
        %v6948 = vpop.permute.xlu0 %6947
        %v6949 = vsel %vm1511, %v6946, %v6948
        %v6951 = vsel %vm253, %v6944, 0
        %v6954 = vand.u32 %v6949, %v260
        %6956 = vmatprep.subr.bf16.mxu0 0
        %6957 = vmatpush1.bf16.msra.mxu0 %v6954
        %6958 = vmatprep.subr.bf16.mxu0 0
        %6959 = vmatpush1.bf16.msra.mxu0 0
        %6960 = vmatprep.subr.bf16.mxu0 0
        %6961 = vmatpush1.bf16.msra.mxu0 0
        %6962 = vmatprep.subr.bf16.mxu0 0
        %6963 = vmatpush1.bf16.msra.mxu0 0
        %6964 = vmatprep.subr.bf16.mxu0 0
        %6965 = vmatpush1.bf16.msra.mxu0 0
        %6966 = vmatprep.subr.bf16.mxu0 0
        %6967 = vmatpush1.bf16.msra.mxu0 0
        %6968 = vmatprep.subr.bf16.mxu0 0
        %6969 = vmatpush1.bf16.msra.mxu0 0
        %6970 = vmatprep.subr.bf16.mxu0 0
        %6971 = vmatpush1.bf16.msra.mxu0 0
        %6972 = vmatprep.subr.bf16.mxu0 0
        %6973 = vmatpush1.bf16.msra.mxu0 0
        %6974 = vmatprep.subr.bf16.mxu0 0
        %6975 = vmatpush1.bf16.msra.mxu0 0
        %6976 = vmatprep.subr.bf16.mxu0 0
        %6977 = vmatpush1.bf16.msra.mxu0 0
        %6978 = vmatprep.subr.bf16.mxu0 0
        %6979 = vmatpush1.bf16.msra.mxu0 0
        %6980 = vmatprep.subr.bf16.mxu0 0
        %6981 = vmatpush1.bf16.msra.mxu0 0
        %6982 = vmatprep.subr.bf16.mxu0 0
        %6983 = vmatpush1.bf16.msra.mxu0 0
        %6984 = vmatprep.subr.bf16.mxu0 0
        %6985 = vmatpush1.bf16.msra.mxu0 0
        %6986 = vmatprep.subr.bf16.mxu0 0
        %6987 = vmatpush1.bf16.msra.mxu0 0
        %6988 = vmatprep.mubr.bf16.mxu0 0
        %6989 = vmatmul.mubr.bf16.gmra.mrb[0].mxu0 %v6951
        %v6990 = vpop.f32.mrb[0].mxu0
        %v6991 = vadd.f32 0.0, %v6990
        %v6992 = vpop.f32.mrb[0].mxu0
        %v6993 = vpop.f32.mrb[0].mxu0
        %v6994 = vpop.f32.mrb[0].mxu0
        %6995 = vdwg.mxu0
        %v6996 = vadd.f32 %v6942, %v6991
        %s6997 = scalar_lea.vmem [#allocation5], 496
        %v6998 = vld [vmem:[%s6997] sm:$0xf]
        %6999 = vrot.lane.b32.xlu0 %v5755, 92
        %v7000 = vpop.permute.xlu0 %6999
        %7001 = vrot.lane.b32.xlu0 %v5756, 92
        %v7002 = vpop.permute.xlu0 %7001
        %v7003 = vsel %vm1566, %v7000, %v7002
        %v7005 = vsel %vm253, %v6998, 0
        %v7008 = vand.u32 %v7003, %v260
        %7010 = vmatprep.subr.bf16.mxu0 0
        %7011 = vmatpush1.bf16.msra.mxu0 %v7008
        %7012 = vmatprep.subr.bf16.mxu0 0
        %7013 = vmatpush1.bf16.msra.mxu0 0
        %7014 = vmatprep.subr.bf16.mxu0 0
        %7015 = vmatpush1.bf16.msra.mxu0 0
        %7016 = vmatprep.subr.bf16.mxu0 0
        %7017 = vmatpush1.bf16.msra.mxu0 0
        %7018 = vmatprep.subr.bf16.mxu0 0
        %7019 = vmatpush1.bf16.msra.mxu0 0
        %7020 = vmatprep.subr.bf16.mxu0 0
        %7021 = vmatpush1.bf16.msra.mxu0 0
        %7022 = vmatprep.subr.bf16.mxu0 0
        %7023 = vmatpush1.bf16.msra.mxu0 0
        %7024 = vmatprep.subr.bf16.mxu0 0
        %7025 = vmatpush1.bf16.msra.mxu0 0
        %7026 = vmatprep.subr.bf16.mxu0 0
        %7027 = vmatpush1.bf16.msra.mxu0 0
        %7028 = vmatprep.subr.bf16.mxu0 0
        %7029 = vmatpush1.bf16.msra.mxu0 0
        %7030 = vmatprep.subr.bf16.mxu0 0
        %7031 = vmatpush1.bf16.msra.mxu0 0
        %7032 = vmatprep.subr.bf16.mxu0 0
        %7033 = vmatpush1.bf16.msra.mxu0 0
        %7034 = vmatprep.subr.bf16.mxu0 0
        %7035 = vmatpush1.bf16.msra.mxu0 0
        %7036 = vmatprep.subr.bf16.mxu0 0
        %7037 = vmatpush1.bf16.msra.mxu0 0
        %7038 = vmatprep.subr.bf16.mxu0 0
        %7039 = vmatpush1.bf16.msra.mxu0 0
        %7040 = vmatprep.subr.bf16.mxu0 0
        %7041 = vmatpush1.bf16.msra.mxu0 0
        %7042 = vmatprep.mubr.bf16.mxu0 0
        %7043 = vmatmul.mubr.bf16.gmra.mrb[0].mxu0 %v7005
        %v7044 = vpop.f32.mrb[0].mxu0
        %v7045 = vadd.f32 0.0, %v7044
        %v7046 = vpop.f32.mrb[0].mxu0
        %v7047 = vpop.f32.mrb[0].mxu0
        %v7048 = vpop.f32.mrb[0].mxu0
        %7049 = vdwg.mxu0
        %v7050 = vadd.f32 %v6996, %v7045
        %v7051 = vld [vmem:[#allocation7] sm:$0xff]
        %7053 = vset.pattern.permute.xlu0 0
        %7054 = vperm.xlu0 %7053, %v7051
        %v7055 = vpop.permute.xlu0 %7054
        %v7057 = vadd.f32 %v7050, %v7055
        %7058 = vst [vmem:[%s229] sm:$0xff] %v7057
        %s7059 = sand.u32 %s111, 1
        %s7060 = scalar_lea.sflag [#allocation4], %s7059
        %s7061 = sand.u32 %s111, 1
        %s7062 = smul.addr %s7061, 8
        %s7063 = scalar_lea.vmem [#allocation8], %s7062
        // Predicated region
        $region45: #{conv3dnet_forward.1} parent=31 // pred_check
          %p7064 = pneg %p121
        $region46: #{conv3dnet_forward.1} parent=31 // pred_check_branch
          %7066 = sbr.rel (%p7064) target = $region48
        $region47: #{conv3dnet_forward.1} parent=31 // pred_region
          %s7068 = ssub.s32 128, 128
          %7069 = vsyncadd %s7060, %s7068
          %s7070 = smul.addr %s25, 4
          %s7071 = sadd.s32 %s26, %s7070
          %s7072 = smul.addr %s7071, 128
          %s7073 = scalar_lea.hbm %s3, %s7072
          %s7075 = sshll.u32 %s7063, 4
          %s7076 = int_to_ptr.vmem [resolvable:$true] %s7075
          %7078 = dma.vmem_to_hbm [thread:$0]  %s7076, 128, %s7073, %s7060
        $region48: #{conv3dnet_forward.1} parent=31 // pred_fallthru
          _
      $region32: #{conv3dnet_forward.1} parent=5 // pred_fallthru
        _
      %p7079 = scmp.le.s32.totalorder 2, %s16
      // Predicated region
      $region49: #{conv3dnet_forward.1} parent=5 // pred_check
        %p7080 = pneg %p7079
      $region50: #{conv3dnet_forward.1} parent=5 // pred_check_branch
        %7082 = sbr.rel (%p7080) target = $region52
      $region51: #{conv3dnet_forward.1} parent=5 // pred_region
        %s7083 = ssub.s32 %s16, 2
        // Predicated region
        $region53: #{conv3dnet_forward.1} parent=51 // pred_check
          %p7084 = pneg %p127
        $region54: #{conv3dnet_forward.1} parent=51 // pred_check_branch
          %7086 = sbr.rel (%p7084) target = $region56
        $region55: #{conv3dnet_forward.1} parent=51 // pred_region
          %s7087 = sand.u32 %s112, 1
          %s7088 = scalar_lea.sflag [#allocation4], %s7087
          %s7089 = sand.u32 %s112, 1
          %s7090 = smul.addr %s7089, 8
          %s7091 = scalar_lea.vmem [#allocation8], %s7090
          %7092 = dma.done %s7088, 128
        $region56: #{conv3dnet_forward.1} parent=51 // pred_fallthru
          _
      $region52: #{conv3dnet_forward.1} parent=5 // pred_fallthru
        _
    $region6: #{conv3dnet_forward.1} parent=1 // loop_footer
      %s20 = sadd.s32 1, %s16
    $region7: #{conv3dnet_forward.1} parent=1 // loop_footer_branch
      %15 = sbr.rel target = $region3
    $region8: #{conv3dnet_forward.1} parent=1 // loop_exit
      _
    %7093 = vsyncpa [#allocation3], 1
    %s7094 = scalar_lea.sflag [#allocation3], 1
    %7095 = vsyncpa %s7094, 1
    %7096 = vsyncpa [#allocation6], 1
    %7097 = vsyncpa [#allocation4], 1
    %s7098 = scalar_lea.sflag [#allocation4], 1
    %7099 = vsyncpa %s7098, 1

</llo_original>
